<compile_context>
chip_gen: v7x
topology: tpu7x:2x2x1
jax: 0.10.0
libtpu: 0.0.40
codegen_flags: <defaults>
</compile_context>

<pallas_src>
import jax
import jax.numpy as jnp
import numpy as np
from jax.experimental import pallas as pl
from jax.experimental.pallas import tpu as pltpu

# ------------------------------------------------------------------ dimensions
C_IN, C1, C2 = 3, 8, 16          # channels: input, conv1 out, conv2 out
IMG = 32                         # input spatial size (32 x 32)
Q = IMG * IMG                    # 1024 = flattened spatial lanes per image
N_FEAT = C2 * 8 * 8              # 1024 = fc1 input features
N_HID, N_OUT = 64, 10

# wide-flat layout constants (per image)
OFF1, XP1_W = 64, 1152           # stage-1 padded input: pixel (r, c)  at lane OFF1 + 32*r + c
OFF2, XP2_W = 128, 1280          # stage-2 padded input: feature (i,j) at lane OFF2 + 64*i + 2*j
A1_W, A2_W = 1152, 1152          # conv accumulator scratch widths (>= Q+33 / Q+66)


# ------------------------------------------------------------------ the kernel
def _cnn_kernel(x_ref, w1_ref, b1_ref, w2_ref, b2_ref, sel_ref,
                fw1_ref, fb1_ref, fw2_ref, fb2_ref, o_ref,
                xp1, a1, xp2, a2, f2, f1):
    bf16 = jnp.bfloat16

    def keep_mask(mod, drop):
        # 1.0 everywhere except output lanes whose column hits the zero border.
        lane = jax.lax.broadcasted_iota(jnp.int32, (1, Q), 1)
        return (lane % mod != drop).astype(bf16)

    # ---------------- stage 1: conv1 (3 -> 8, 3x3, pad=1) + bias -------------
    xp1[...] = jnp.zeros_like(xp1)
    xp1[:, OFF1:OFF1 + Q] = x_ref[...].astype(bf16)

    acc = jnp.broadcast_to(b1_ref[...], (C1, Q))           # f32, 8 vregs
    for kh in range(3):
        for kw in range(3):
            s = OFF1 + IMG * (kh - 1) + (kw - 1)
            patch = xp1[:, s:s + Q]                        # (3, 1024) bf16
            if kw == 0:
                patch = patch * keep_mask(32, 0)           # left border (w == 0)
            elif kw == 2:
                patch = patch * keep_mask(32, 31)          # right border (w == 31)
            acc = acc + jnp.dot(w1_ref[3 * kh + kw], patch,
                                preferred_element_type=jnp.float32)

    # ReLU + 2x2 max-pool, vectorized via 4 shifted slices of the accumulator.
    a1[:, Q:] = jnp.zeros((C1, A1_W - Q), jnp.float32)
    a1[:, 0:Q] = acc
    p1 = jnp.maximum(jnp.maximum(a1[:, 0:Q], a1[:, 1:Q + 1]),
                     jnp.maximum(a1[:, 32:Q + 32], a1[:, 33:Q + 33]))
    p1 = jnp.maximum(p1, 0.0)      # pooled feature (i, j) lives at lane 64*i + 2*j

    # ---------------- stage 2: conv2 (8 -> 16, 3x3, pad=1) + bias ------------
    xp2[...] = jnp.zeros_like(xp2)
    xp2[:, OFF2:OFF2 + Q] = p1.astype(bf16)

    acc2 = jnp.broadcast_to(b2_ref[...], (C2, Q))          # f32, 16 vregs
    for kh in range(3):
        for kw in range(3):
            s = OFF2 + 64 * (kh - 1) + 2 * (kw - 1)
            patch = xp2[:, s:s + Q]                        # (8, 1024) bf16
            if kw == 0:
                patch = patch * keep_mask(64, 0)           # j == 0
            elif kw == 2:
                patch = patch * keep_mask(64, 30)          # j == 15
            acc2 = acc2 + jnp.dot(w2_ref[3 * kh + kw], patch,
                                  preferred_element_type=jnp.float32)

    a2[:, Q:] = jnp.zeros((C2, A2_W - Q), jnp.float32)
    a2[:, 0:Q] = acc2
    p2 = jnp.maximum(jnp.maximum(a2[:, 0:Q], a2[:, 2:Q + 2]),
                     jnp.maximum(a2[:, 64:Q + 64], a2[:, 66:Q + 66]))
    p2 = jnp.maximum(p2, 0.0)      # pooled feature (i, j) lives at lane 128*i + 4*j

    # ------------- flatten (NCHW order) + fc1 + ReLU + fc2 -------------------
    # Gather the 64 valid lanes per channel with a constant 0/1 matmul, then
    # lay the (16, 64) block out as a dense (1, 1024) feature row (c-major),
    # matching PyTorch's x.view(-1, 16*8*8) flatten exactly.
    d = jnp.dot(p2.astype(bf16), sel_ref[...],
                preferred_element_type=jnp.float32)        # (16, 64)
    f2[...] = d.astype(bf16)
    for c in range(C2):
        f1[0:1, c * 64:(c + 1) * 64] = f2[c:c + 1, :]

    h = jnp.dot(f1[...], fw1_ref[...],
                preferred_element_type=jnp.float32) + fb1_ref[...]
    h = jnp.maximum(h, 0.0).astype(bf16)
    y = jnp.dot(h, fw2_ref[...],
                preferred_element_type=jnp.float32) + fb2_ref[...]
    o_ref[...] = y


# ------------------------------------------------------------------- wrapper
def cnn_forward(prep, x_nchw):
    B, c, h, w = x_nchw.shape
    assert (c, h, w) == (C_IN, IMG, IMG), "CNNArchitecture1 expects (B, 3, 32, 32) NCHW"
    x_flat = x_nchw.reshape(B, C_IN, Q)          # free (bitcast) reshape, stays NCHW

    grid_spec = pltpu.PrefetchScalarGridSpec(
        num_scalar_prefetch=0,
        grid=(B,),
        in_specs=[
            pl.BlockSpec((None, C_IN, Q), lambda b: (b, 0, 0)),   # one image / step
            pl.BlockSpec((9, C1, C_IN), lambda b: (0, 0, 0)),     # conv1 w (resident)
            pl.BlockSpec((C1, 1), lambda b: (0, 0)),              # conv1 b
            pl.BlockSpec((9, C2, C1), lambda b: (0, 0, 0)),       # conv2 w
            pl.BlockSpec((C2, 1), lambda b: (0, 0)),              # conv2 b
            pl.BlockSpec((Q, 64), lambda b: (0, 0)),              # lane-selection matrix
            pl.BlockSpec((N_FEAT, N_HID), lambda b: (0, 0)),      # fc1 w
            pl.BlockSpec((1, N_HID), lambda b: (0, 0)),           # fc1 b
            pl.BlockSpec((N_HID, N_OUT), lambda b: (0, 0)),       # fc2 w
            pl.BlockSpec((1, N_OUT), lambda b: (0, 0)),           # fc2 b
        ],
        out_specs=pl.BlockSpec((None, 1, N_OUT), lambda b: (b, 0, 0)),
        scratch_shapes=[
            pltpu.VMEM((C_IN, XP1_W), jnp.bfloat16),   # padded stage-1 input
            pltpu.VMEM((C1, A1_W), jnp.float32),       # conv1 accumulator / pool source
            pltpu.VMEM((C1, XP2_W), jnp.bfloat16),     # padded stage-2 input
            pltpu.VMEM((C2, A2_W), jnp.float32),       # conv2 accumulator / pool source
            pltpu.VMEM((C2, 64), jnp.bfloat16),        # compact (16, 64) features
            pltpu.VMEM((1, N_FEAT), jnp.bfloat16),     # flattened fc1 input row
        ],
    )
    out = pl.pallas_call(
        _cnn_kernel,
        out_shape=jax.ShapeDtypeStruct((B, 1, N_OUT), jnp.float32),
        grid_spec=grid_spec,
        compiler_params=pltpu.CompilerParams(
            dimension_semantics=("parallel",)),        # megacore sharding on v7x
    )(x_flat, prep["c1_w"], prep["c1_b"], prep["c2_w"], prep["c2_b"],
      prep["sel"], prep["f1_w"], prep["f1_b"], prep["f2_w"], prep["f2_b"])
    return out.reshape(B, N_OUT)


# --------------------------------------------------------- parameters & prep
def init_params(key):
    ks = jax.random.split(key, 8)
    s = 0.05
    return {
        # PyTorch-convention shapes: conv (Cout, Cin, KH, KW), linear (out, in)
        "conv1_w": s * jax.random.normal(ks[0], (C1, C_IN, 3, 3), jnp.float32),
        "conv1_b": s * jax.random.normal(ks[1], (C1,), jnp.float32),
        "conv2_w": s * jax.random.normal(ks[2], (C2, C1, 3, 3), jnp.float32),
        "conv2_b": s * jax.random.normal(ks[3], (C2,), jnp.float32),
        "fc1_w": s * jax.random.normal(ks[4], (N_HID, N_FEAT), jnp.float32),
        "fc1_b": s * jax.random.normal(ks[5], (N_HID,), jnp.float32),
        "fc2_w": s * jax.random.normal(ks[6], (N_OUT, N_HID), jnp.float32),
        "fc2_b": s * jax.random.normal(ks[7], (N_OUT,), jnp.float32),
    }


def prepare_params(params):
    """One-time, outside jit: kernel-ready weight layouts (bf16 for the MXU)."""
    bf, f32 = jnp.bfloat16, jnp.float32
    # conv weights (Cout, Cin, KH, KW) -> tap-major (KH*KW, Cout, Cin)
    c1 = jnp.transpose(params["conv1_w"], (2, 3, 0, 1)).reshape(9, C1, C_IN)
    c2 = jnp.transpose(params["conv2_w"], (2, 3, 0, 1)).reshape(9, C2, C1)
    # 0/1 matrix gathering the 64 valid pooled-feature lanes (128*i + 4*j) into
    # a dense column (8*i + j); identical for every channel.
    sel = np.zeros((Q, 64), np.float32)
    for i in range(8):
        for j in range(8):
            sel[128 * i + 4 * j, 8 * i + j] = 1.0
    return {
        "c1_w": c1.astype(bf), "c1_b": params["conv1_b"].reshape(C1, 1).astype(f32),
        "c2_w": c2.astype(bf), "c2_b": params["conv2_b"].reshape(C2, 1).astype(f32),
        "sel": jnp.asarray(sel, bf),
        # fc weights transposed to (in, out); the kernel's flatten already matches
        # PyTorch's NCHW x.view(-1, 16*8*8) ordering, so no permutation needed.
        "f1_w": params["fc1_w"].T.astype(bf),
        "f1_b": params["fc1_b"].reshape(1, N_HID).astype(f32),
        "f2_w": params["fc2_w"].T.astype(bf),
        "f2_b": params["fc2_b"].reshape(1, N_OUT).astype(f32),
    }


if __name__ == "__main__":
    key = jax.random.PRNGKey(0)
    k_param, k_x = jax.random.split(key)
    params = init_params(k_param)
    prep = prepare_params(params)
    # Input implied by fc1 = Linear(16*8*8, 64): NCHW (B, 3, 32, 32); batch=2.
    x = jax.random.normal(k_x, (2, 3, 32, 32), jnp.float32)

    y = jax.jit(cnn_forward)(prep, x)
    y = jax.block_until_ready(y)
    assert y.shape == (2, 10), y.shape
    print("KERNEL_OK")
</pallas_src>

<mosaic_0001>
module attributes {stable_mosaic.version = 11 : i64} {
  func.func @_cnn_kernel(%arg0: i32, %arg1: memref<1x3x1024xf32, #tpu.memory_space<vmem>>, %arg2: memref<9x8x3xbf16, #tpu.memory_space<vmem>>, %arg3: memref<8x1xf32, #tpu.memory_space<vmem>>, %arg4: memref<9x16x8xbf16, #tpu.memory_space<vmem>>, %arg5: memref<16x1xf32, #tpu.memory_space<vmem>>, %arg6: memref<1024x64xbf16, #tpu.memory_space<vmem>>, %arg7: memref<1024x64xbf16, #tpu.memory_space<vmem>>, %arg8: memref<1x64xf32, #tpu.memory_space<vmem>>, %arg9: memref<64x10xbf16, #tpu.memory_space<vmem>>, %arg10: memref<1x10xf32, #tpu.memory_space<vmem>>, %arg11: memref<1x1x10xf32, #tpu.memory_space<vmem>>, %arg12: memref<3x1152xbf16, #tpu.memory_space<vmem>>, %arg13: memref<8x1152xf32, #tpu.memory_space<vmem>>, %arg14: memref<8x1280xbf16, #tpu.memory_space<vmem>>, %arg15: memref<16x1152xf32, #tpu.memory_space<vmem>>, %arg16: memref<16x64xbf16, #tpu.memory_space<vmem>>, %arg17: memref<1x1024xbf16, #tpu.memory_space<vmem>>) attributes {dimension_semantics = [#tpu.dimension_semantics<parallel>], iteration_bounds = array<i64: 2>, scalar_prefetch = 0 : i64, scratch_operands = 6 : i64, tpu.core_type = #tpu.core_type<tc>, window_params = [{transform_indices = @transform_0, window_bounds = array<i64: 1, 3, 1024>}, {pipeline_mode = #tpu.pipeline_mode<synchronous>, transform_indices = @transform_1, window_bounds = array<i64: 9, 8, 3>}, {pipeline_mode = #tpu.pipeline_mode<synchronous>, transform_indices = @transform_2, window_bounds = array<i64: 8, 1>}, {pipeline_mode = #tpu.pipeline_mode<synchronous>, transform_indices = @transform_3, window_bounds = array<i64: 9, 16, 8>}, {pipeline_mode = #tpu.pipeline_mode<synchronous>, transform_indices = @transform_4, window_bounds = array<i64: 16, 1>}, {pipeline_mode = #tpu.pipeline_mode<synchronous>, transform_indices = @transform_5, window_bounds = array<i64: 1024, 64>}, {pipeline_mode = #tpu.pipeline_mode<synchronous>, transform_indices = @transform_6, window_bounds = array<i64: 1024, 64>}, {pipeline_mode = #tpu.pipeline_mode<synchronous>, transform_indices = @transform_7, window_bounds = array<i64: 1, 64>}, {pipeline_mode = #tpu.pipeline_mode<synchronous>, transform_indices = @transform_8, window_bounds = array<i64: 64, 10>}, {pipeline_mode = #tpu.pipeline_mode<synchronous>, transform_indices = @transform_9, window_bounds = array<i64: 1, 10>}, {transform_indices = @transform_10, window_bounds = array<i64: 1, 1, 10>}]} {
    %cst = arith.constant 0.000000e+00 : bf16
    %0 = vector.broadcast %cst : bf16 to vector<3x1152xbf16>
    %c0 = arith.constant 0 : index
    %c0_0 = arith.constant 0 : index
    %1 = vector.load %arg12[%c0, %c0_0] : memref<3x1152xbf16, #tpu.memory_space<vmem>>, vector<3x1152xbf16>
    tpu.vector_store %arg12[%c0, %c0_0], %0 {strides = array<i32>} : memref<3x1152xbf16, #tpu.memory_space<vmem>>, vector<3x1152xbf16>,
    %c0_1 = arith.constant 0 : index
    %c0_2 = arith.constant 0 : index
    %c0_3 = arith.constant 0 : index
    %2 = vector.load %arg1[%c0_1, %c0_2, %c0_3] : memref<1x3x1024xf32, #tpu.memory_space<vmem>>, vector<1x3x1024xf32>
    %3 = vector.shape_cast %2 : vector<1x3x1024xf32> to vector<3x1024xf32>
    %4 = arith.truncf %3 : vector<3x1024xf32> to vector<3x1024xbf16>
    %c0_4 = arith.constant 0 : index
    %c64 = arith.constant 64 : index
    %5 = vector.load %arg12[%c0_4, %c64] : memref<3x1152xbf16, #tpu.memory_space<vmem>>, vector<3x1024xbf16>
    tpu.vector_store %arg12[%c0_4, %c64], %4 {strides = array<i32>} : memref<3x1152xbf16, #tpu.memory_space<vmem>>, vector<3x1024xbf16>,
    %c0_5 = arith.constant 0 : index
    %c0_6 = arith.constant 0 : index
    %6 = vector.load %arg3[%c0_5, %c0_6] : memref<8x1xf32, #tpu.memory_space<vmem>>, vector<8x1xf32>
    %7 = vector.shape_cast %6 : vector<8x1xf32> to vector<8x1xf32>
    %8 = vector.broadcast %7 : vector<8x1xf32> to vector<8x1024xf32>
    %c0_7 = arith.constant 0 : index
    %c31 = arith.constant 31 : index
    %9 = vector.load %arg12[%c0_7, %c31] : memref<3x1152xbf16, #tpu.memory_space<vmem>>, vector<3x1024xbf16>
    %10 = tpu.iota {dimensions = array<i32: 1>} : vector<1x1024xi32>
    %c32_i32 = arith.constant 32 : i32
    %c0_i32 = arith.constant 0 : i32
    %11 = arith.cmpi eq, %c32_i32, %c0_i32 : i32
    %c1_i32 = arith.constant 1 : i32
    %12 = arith.select %11, %c1_i32, %c32_i32 : i32
    %13 = vector.broadcast %12 : i32 to vector<1x1024xi32>
    %14 = arith.remsi %10, %13 : vector<1x1024xi32>
    %c0_i32_8 = arith.constant 0 : i32
    %15 = vector.broadcast %c0_i32_8 : i32 to vector<1x1024xi32>
    %16 = arith.cmpi ne, %14, %15 : vector<1x1024xi32>
    %c0_i32_9 = arith.constant 0 : i32
    %17 = vector.broadcast %c0_i32_9 : i32 to vector<1x1024xi32>
    %18 = arith.cmpi slt, %14, %17 : vector<1x1024xi32>
    %c0_i32_10 = arith.constant 0 : i32
    %19 = arith.cmpi slt, %12, %c0_i32_10 : i32
    %20 = vector.broadcast %19 : i1 to vector<1x1024xi1>
    %21 = vector.broadcast %20 : vector<1x1024xi1> to vector<1x1024xi1>
    %22 = arith.xori %18, %21 : vector<1x1024xi1>
    %23 = arith.andi %22, %16 : vector<1x1024xi1>
    %24 = vector.broadcast %12 : i32 to vector<1x1024xi32>
    %25 = arith.addi %14, %24 : vector<1x1024xi32>
    %26 = arith.select %23, %25, %14 : vector<1x1024xi1>, vector<1x1024xi32>
    %c0_i32_11 = arith.constant 0 : i32
    %27 = vector.broadcast %c0_i32_11 : i32 to vector<1x1024xi32>
    %28 = arith.cmpi ne, %26, %27 : vector<1x1024xi32>
    %29 = arith.extui %28 : vector<1x1024xi1> to vector<1x1024xi32>
    %30 = arith.sitofp %29 : vector<1x1024xi32> to vector<1x1024xf32>
    %31 = arith.truncf %30 : vector<1x1024xf32> to vector<1x1024xbf16>
    %32 = vector.broadcast %31 : vector<1x1024xbf16> to vector<3x1024xbf16>
    %33 = arith.mulf %9, %32 : vector<3x1024xbf16>
    %c0_12 = arith.constant 0 : index
    %c0_13 = arith.constant 0 : index
    %c0_14 = arith.constant 0 : index
    %34 = vector.load %arg2[%c0_12, %c0_13, %c0_14] : memref<9x8x3xbf16, #tpu.memory_space<vmem>>, vector<1x8x3xbf16>
    %35 = vector.shape_cast %34 : vector<1x8x3xbf16> to vector<8x3xbf16>
    %cst_15 = arith.constant dense<0.000000e+00> : vector<8x1024xf32>
    %36 = tpu.matmul %35, %33, %cst_15 {dimension_numbers = #tpu.dot_dimension_numbers<[1], [0], [0], [1], [0, 0, 1, 1], [], []>} : vector<8x3xbf16>, vector<3x1024xbf16>, vector<8x1024xf32> -> vector<8x1024xf32>
    %37 = arith.addf %8, %36 : vector<8x1024xf32>
    %c0_16 = arith.constant 0 : index
    %c32 = arith.constant 32 : index
    %38 = vector.load %arg12[%c0_16, %c32] : memref<3x1152xbf16, #tpu.memory_space<vmem>>, vector<3x1024xbf16>
    %c1 = arith.constant 1 : index
    %c0_17 = arith.constant 0 : index
    %c0_18 = arith.constant 0 : index
    %39 = vector.load %arg2[%c1, %c0_17, %c0_18] : memref<9x8x3xbf16, #tpu.memory_space<vmem>>, vector<1x8x3xbf16>
    %40 = vector.shape_cast %39 : vector<1x8x3xbf16> to vector<8x3xbf16>
    %cst_19 = arith.constant dense<0.000000e+00> : vector<8x1024xf32>
    %41 = tpu.matmul %40, %38, %cst_19 {dimension_numbers = #tpu.dot_dimension_numbers<[1], [0], [0], [1], [0, 0, 1, 1], [], []>} : vector<8x3xbf16>, vector<3x1024xbf16>, vector<8x1024xf32> -> vector<8x1024xf32>
    %42 = arith.addf %37, %41 : vector<8x1024xf32>
    %c0_20 = arith.constant 0 : index
    %c33 = arith.constant 33 : index
    %43 = vector.load %arg12[%c0_20, %c33] : memref<3x1152xbf16, #tpu.memory_space<vmem>>, vector<3x1024xbf16>
    %44 = tpu.iota {dimensions = array<i32: 1>} : vector<1x1024xi32>
    %c32_i32_21 = arith.constant 32 : i32
    %c0_i32_22 = arith.constant 0 : i32
    %45 = arith.cmpi eq, %c32_i32_21, %c0_i32_22 : i32
    %c1_i32_23 = arith.constant 1 : i32
    %46 = arith.select %45, %c1_i32_23, %c32_i32_21 : i32
    %47 = vector.broadcast %46 : i32 to vector<1x1024xi32>
    %48 = arith.remsi %44, %47 : vector<1x1024xi32>
    %c0_i32_24 = arith.constant 0 : i32
    %49 = vector.broadcast %c0_i32_24 : i32 to vector<1x1024xi32>
    %50 = arith.cmpi ne, %48, %49 : vector<1x1024xi32>
    %c0_i32_25 = arith.constant 0 : i32
    %51 = vector.broadcast %c0_i32_25 : i32 to vector<1x1024xi32>
    %52 = arith.cmpi slt, %48, %51 : vector<1x1024xi32>
    %c0_i32_26 = arith.constant 0 : i32
    %53 = arith.cmpi slt, %46, %c0_i32_26 : i32
    %54 = vector.broadcast %53 : i1 to vector<1x1024xi1>
    %55 = vector.broadcast %54 : vector<1x1024xi1> to vector<1x1024xi1>
    %56 = arith.xori %52, %55 : vector<1x1024xi1>
    %57 = arith.andi %56, %50 : vector<1x1024xi1>
    %58 = vector.broadcast %46 : i32 to vector<1x1024xi32>
    %59 = arith.addi %48, %58 : vector<1x1024xi32>
    %60 = arith.select %57, %59, %48 : vector<1x1024xi1>, vector<1x1024xi32>
    %c31_i32 = arith.constant 31 : i32
    %61 = vector.broadcast %c31_i32 : i32 to vector<1x1024xi32>
    %62 = arith.cmpi ne, %60, %61 : vector<1x1024xi32>
    %63 = arith.extui %62 : vector<1x1024xi1> to vector<1x1024xi32>
    %64 = arith.sitofp %63 : vector<1x1024xi32> to vector<1x1024xf32>
    %65 = arith.truncf %64 : vector<1x1024xf32> to vector<1x1024xbf16>
    %66 = vector.broadcast %65 : vector<1x1024xbf16> to vector<3x1024xbf16>
    %67 = arith.mulf %43, %66 : vector<3x1024xbf16>
    %c2 = arith.constant 2 : index
    %c0_27 = arith.constant 0 : index
    %c0_28 = arith.constant 0 : index
    %68 = vector.load %arg2[%c2, %c0_27, %c0_28] : memref<9x8x3xbf16, #tpu.memory_space<vmem>>, vector<1x8x3xbf16>
    %69 = vector.shape_cast %68 : vector<1x8x3xbf16> to vector<8x3xbf16>
    %cst_29 = arith.constant dense<0.000000e+00> : vector<8x1024xf32>
    %70 = tpu.matmul %69, %67, %cst_29 {dimension_numbers = #tpu.dot_dimension_numbers<[1], [0], [0], [1], [0, 0, 1, 1], [], []>} : vector<8x3xbf16>, vector<3x1024xbf16>, vector<8x1024xf32> -> vector<8x1024xf32>
    %71 = arith.addf %42, %70 : vector<8x1024xf32>
    %c0_30 = arith.constant 0 : index
    %c63 = arith.constant 63 : index
    %72 = vector.load %arg12[%c0_30, %c63] : memref<3x1152xbf16, #tpu.memory_space<vmem>>, vector<3x1024xbf16>
    %73 = tpu.iota {dimensions = array<i32: 1>} : vector<1x1024xi32>
    %c32_i32_31 = arith.constant 32 : i32
    %c0_i32_32 = arith.constant 0 : i32
    %74 = arith.cmpi eq, %c32_i32_31, %c0_i32_32 : i32
    %c1_i32_33 = arith.constant 1 : i32
    %75 = arith.select %74, %c1_i32_33, %c32_i32_31 : i32
    %76 = vector.broadcast %75 : i32 to vector<1x1024xi32>
    %77 = arith.remsi %73, %76 : vector<1x1024xi32>
    %c0_i32_34 = arith.constant 0 : i32
    %78 = vector.broadcast %c0_i32_34 : i32 to vector<1x1024xi32>
    %79 = arith.cmpi ne, %77, %78 : vector<1x1024xi32>
    %c0_i32_35 = arith.constant 0 : i32
    %80 = vector.broadcast %c0_i32_35 : i32 to vector<1x1024xi32>
    %81 = arith.cmpi slt, %77, %80 : vector<1x1024xi32>
    %c0_i32_36 = arith.constant 0 : i32
    %82 = arith.cmpi slt, %75, %c0_i32_36 : i32
    %83 = vector.broadcast %82 : i1 to vector<1x1024xi1>
    %84 = vector.broadcast %83 : vector<1x1024xi1> to vector<1x1024xi1>
    %85 = arith.xori %81, %84 : vector<1x1024xi1>
    %86 = arith.andi %85, %79 : vector<1x1024xi1>
    %87 = vector.broadcast %75 : i32 to vector<1x1024xi32>
    %88 = arith.addi %77, %87 : vector<1x1024xi32>
    %89 = arith.select %86, %88, %77 : vector<1x1024xi1>, vector<1x1024xi32>
    %c0_i32_37 = arith.constant 0 : i32
    %90 = vector.broadcast %c0_i32_37 : i32 to vector<1x1024xi32>
    %91 = arith.cmpi ne, %89, %90 : vector<1x1024xi32>
    %92 = arith.extui %91 : vector<1x1024xi1> to vector<1x1024xi32>
    %93 = arith.sitofp %92 : vector<1x1024xi32> to vector<1x1024xf32>
    %94 = arith.truncf %93 : vector<1x1024xf32> to vector<1x1024xbf16>
    %95 = vector.broadcast %94 : vector<1x1024xbf16> to vector<3x1024xbf16>
    %96 = arith.mulf %72, %95 : vector<3x1024xbf16>
    %c3 = arith.constant 3 : index
    %c0_38 = arith.constant 0 : index
    %c0_39 = arith.constant 0 : index
    %97 = vector.load %arg2[%c3, %c0_38, %c0_39] : memref<9x8x3xbf16, #tpu.memory_space<vmem>>, vector<1x8x3xbf16>
    %98 = vector.shape_cast %97 : vector<1x8x3xbf16> to vector<8x3xbf16>
    %cst_40 = arith.constant dense<0.000000e+00> : vector<8x1024xf32>
    %99 = tpu.matmul %98, %96, %cst_40 {dimension_numbers = #tpu.dot_dimension_numbers<[1], [0], [0], [1], [0, 0, 1, 1], [], []>} : vector<8x3xbf16>, vector<3x1024xbf16>, vector<8x1024xf32> -> vector<8x1024xf32>
    %100 = arith.addf %71, %99 : vector<8x1024xf32>
    %c0_41 = arith.constant 0 : index
    %c64_42 = arith.constant 64 : index
    %101 = vector.load %arg12[%c0_41, %c64_42] : memref<3x1152xbf16, #tpu.memory_space<vmem>>, vector<3x1024xbf16>
    %c4 = arith.constant 4 : index
    %c0_43 = arith.constant 0 : index
    %c0_44 = arith.constant 0 : index
    %102 = vector.load %arg2[%c4, %c0_43, %c0_44] : memref<9x8x3xbf16, #tpu.memory_space<vmem>>, vector<1x8x3xbf16>
    %103 = vector.shape_cast %102 : vector<1x8x3xbf16> to vector<8x3xbf16>
    %cst_45 = arith.constant dense<0.000000e+00> : vector<8x1024xf32>
    %104 = tpu.matmul %103, %101, %cst_45 {dimension_numbers = #tpu.dot_dimension_numbers<[1], [0], [0], [1], [0, 0, 1, 1], [], []>} : vector<8x3xbf16>, vector<3x1024xbf16>, vector<8x1024xf32> -> vector<8x1024xf32>
    %105 = arith.addf %100, %104 : vector<8x1024xf32>
    %c0_46 = arith.constant 0 : index
    %c65 = arith.constant 65 : index
    %106 = vector.load %arg12[%c0_46, %c65] : memref<3x1152xbf16, #tpu.memory_space<vmem>>, vector<3x1024xbf16>
    %107 = tpu.iota {dimensions = array<i32: 1>} : vector<1x1024xi32>
    %c32_i32_47 = arith.constant 32 : i32
    %c0_i32_48 = arith.constant 0 : i32
    %108 = arith.cmpi eq, %c32_i32_47, %c0_i32_48 : i32
    %c1_i32_49 = arith.constant 1 : i32
    %109 = arith.select %108, %c1_i32_49, %c32_i32_47 : i32
    %110 = vector.broadcast %109 : i32 to vector<1x1024xi32>
    %111 = arith.remsi %107, %110 : vector<1x1024xi32>
    %c0_i32_50 = arith.constant 0 : i32
    %112 = vector.broadcast %c0_i32_50 : i32 to vector<1x1024xi32>
    %113 = arith.cmpi ne, %111, %112 : vector<1x1024xi32>
    %c0_i32_51 = arith.constant 0 : i32
    %114 = vector.broadcast %c0_i32_51 : i32 to vector<1x1024xi32>
    %115 = arith.cmpi slt, %111, %114 : vector<1x1024xi32>
    %c0_i32_52 = arith.constant 0 : i32
    %116 = arith.cmpi slt, %109, %c0_i32_52 : i32
    %117 = vector.broadcast %116 : i1 to vector<1x1024xi1>
    %118 = vector.broadcast %117 : vector<1x1024xi1> to vector<1x1024xi1>
    %119 = arith.xori %115, %118 : vector<1x1024xi1>
    %120 = arith.andi %119, %113 : vector<1x1024xi1>
    %121 = vector.broadcast %109 : i32 to vector<1x1024xi32>
    %122 = arith.addi %111, %121 : vector<1x1024xi32>
    %123 = arith.select %120, %122, %111 : vector<1x1024xi1>, vector<1x1024xi32>
    %c31_i32_53 = arith.constant 31 : i32
    %124 = vector.broadcast %c31_i32_53 : i32 to vector<1x1024xi32>
    %125 = arith.cmpi ne, %123, %124 : vector<1x1024xi32>
    %126 = arith.extui %125 : vector<1x1024xi1> to vector<1x1024xi32>
    %127 = arith.sitofp %126 : vector<1x1024xi32> to vector<1x1024xf32>
    %128 = arith.truncf %127 : vector<1x1024xf32> to vector<1x1024xbf16>
    %129 = vector.broadcast %128 : vector<1x1024xbf16> to vector<3x1024xbf16>
    %130 = arith.mulf %106, %129 : vector<3x1024xbf16>
    %c5 = arith.constant 5 : index
    %c0_54 = arith.constant 0 : index
    %c0_55 = arith.constant 0 : index
    %131 = vector.load %arg2[%c5, %c0_54, %c0_55] : memref<9x8x3xbf16, #tpu.memory_space<vmem>>, vector<1x8x3xbf16>
    %132 = vector.shape_cast %131 : vector<1x8x3xbf16> to vector<8x3xbf16>
    %cst_56 = arith.constant dense<0.000000e+00> : vector<8x1024xf32>
    %133 = tpu.matmul %132, %130, %cst_56 {dimension_numbers = #tpu.dot_dimension_numbers<[1], [0], [0], [1], [0, 0, 1, 1], [], []>} : vector<8x3xbf16>, vector<3x1024xbf16>, vector<8x1024xf32> -> vector<8x1024xf32>
    %134 = arith.addf %105, %133 : vector<8x1024xf32>
    %c0_57 = arith.constant 0 : index
    %c95 = arith.constant 95 : index
    %135 = vector.load %arg12[%c0_57, %c95] : memref<3x1152xbf16, #tpu.memory_space<vmem>>, vector<3x1024xbf16>
    %136 = tpu.iota {dimensions = array<i32: 1>} : vector<1x1024xi32>
    %c32_i32_58 = arith.constant 32 : i32
    %c0_i32_59 = arith.constant 0 : i32
    %137 = arith.cmpi eq, %c32_i32_58, %c0_i32_59 : i32
    %c1_i32_60 = arith.constant 1 : i32
    %138 = arith.select %137, %c1_i32_60, %c32_i32_58 : i32
    %139 = vector.broadcast %138 : i32 to vector<1x1024xi32>
    %140 = arith.remsi %136, %139 : vector<1x1024xi32>
    %c0_i32_61 = arith.constant 0 : i32
    %141 = vector.broadcast %c0_i32_61 : i32 to vector<1x1024xi32>
    %142 = arith.cmpi ne, %140, %141 : vector<1x1024xi32>
    %c0_i32_62 = arith.constant 0 : i32
    %143 = vector.broadcast %c0_i32_62 : i32 to vector<1x1024xi32>
    %144 = arith.cmpi slt, %140, %143 : vector<1x1024xi32>
    %c0_i32_63 = arith.constant 0 : i32
    %145 = arith.cmpi slt, %138, %c0_i32_63 : i32
    %146 = vector.broadcast %145 : i1 to vector<1x1024xi1>
    %147 = vector.broadcast %146 : vector<1x1024xi1> to vector<1x1024xi1>
    %148 = arith.xori %144, %147 : vector<1x1024xi1>
    %149 = arith.andi %148, %142 : vector<1x1024xi1>
    %150 = vector.broadcast %138 : i32 to vector<1x1024xi32>
    %151 = arith.addi %140, %150 : vector<1x1024xi32>
    %152 = arith.select %149, %151, %140 : vector<1x1024xi1>, vector<1x1024xi32>
    %c0_i32_64 = arith.constant 0 : i32
    %153 = vector.broadcast %c0_i32_64 : i32 to vector<1x1024xi32>
    %154 = arith.cmpi ne, %152, %153 : vector<1x1024xi32>
    %155 = arith.extui %154 : vector<1x1024xi1> to vector<1x1024xi32>
    %156 = arith.sitofp %155 : vector<1x1024xi32> to vector<1x1024xf32>
    %157 = arith.truncf %156 : vector<1x1024xf32> to vector<1x1024xbf16>
    %158 = vector.broadcast %157 : vector<1x1024xbf16> to vector<3x1024xbf16>
    %159 = arith.mulf %135, %158 : vector<3x1024xbf16>
    %c6 = arith.constant 6 : index
    %c0_65 = arith.constant 0 : index
    %c0_66 = arith.constant 0 : index
    %160 = vector.load %arg2[%c6, %c0_65, %c0_66] : memref<9x8x3xbf16, #tpu.memory_space<vmem>>, vector<1x8x3xbf16>
    %161 = vector.shape_cast %160 : vector<1x8x3xbf16> to vector<8x3xbf16>
    %cst_67 = arith.constant dense<0.000000e+00> : vector<8x1024xf32>
    %162 = tpu.matmul %161, %159, %cst_67 {dimension_numbers = #tpu.dot_dimension_numbers<[1], [0], [0], [1], [0, 0, 1, 1], [], []>} : vector<8x3xbf16>, vector<3x1024xbf16>, vector<8x1024xf32> -> vector<8x1024xf32>
    %163 = arith.addf %134, %162 : vector<8x1024xf32>
    %c0_68 = arith.constant 0 : index
    %c96 = arith.constant 96 : index
    %164 = vector.load %arg12[%c0_68, %c96] : memref<3x1152xbf16, #tpu.memory_space<vmem>>, vector<3x1024xbf16>
    %c7 = arith.constant 7 : index
    %c0_69 = arith.constant 0 : index
    %c0_70 = arith.constant 0 : index
    %165 = vector.load %arg2[%c7, %c0_69, %c0_70] : memref<9x8x3xbf16, #tpu.memory_space<vmem>>, vector<1x8x3xbf16>
    %166 = vector.shape_cast %165 : vector<1x8x3xbf16> to vector<8x3xbf16>
    %cst_71 = arith.constant dense<0.000000e+00> : vector<8x1024xf32>
    %167 = tpu.matmul %166, %164, %cst_71 {dimension_numbers = #tpu.dot_dimension_numbers<[1], [0], [0], [1], [0, 0, 1, 1], [], []>} : vector<8x3xbf16>, vector<3x1024xbf16>, vector<8x1024xf32> -> vector<8x1024xf32>
    %168 = arith.addf %163, %167 : vector<8x1024xf32>
    %c0_72 = arith.constant 0 : index
    %c97 = arith.constant 97 : index
    %169 = vector.load %arg12[%c0_72, %c97] : memref<3x1152xbf16, #tpu.memory_space<vmem>>, vector<3x1024xbf16>
    %170 = tpu.iota {dimensions = array<i32: 1>} : vector<1x1024xi32>
    %c32_i32_73 = arith.constant 32 : i32
    %c0_i32_74 = arith.constant 0 : i32
    %171 = arith.cmpi eq, %c32_i32_73, %c0_i32_74 : i32
    %c1_i32_75 = arith.constant 1 : i32
    %172 = arith.select %171, %c1_i32_75, %c32_i32_73 : i32
    %173 = vector.broadcast %172 : i32 to vector<1x1024xi32>
    %174 = arith.remsi %170, %173 : vector<1x1024xi32>
    %c0_i32_76 = arith.constant 0 : i32
    %175 = vector.broadcast %c0_i32_76 : i32 to vector<1x1024xi32>
    %176 = arith.cmpi ne, %174, %175 : vector<1x1024xi32>
    %c0_i32_77 = arith.constant 0 : i32
    %177 = vector.broadcast %c0_i32_77 : i32 to vector<1x1024xi32>
    %178 = arith.cmpi slt, %174, %177 : vector<1x1024xi32>
    %c0_i32_78 = arith.constant 0 : i32
    %179 = arith.cmpi slt, %172, %c0_i32_78 : i32
    %180 = vector.broadcast %179 : i1 to vector<1x1024xi1>
    %181 = vector.broadcast %180 : vector<1x1024xi1> to vector<1x1024xi1>
    %182 = arith.xori %178, %181 : vector<1x1024xi1>
    %183 = arith.andi %182, %176 : vector<1x1024xi1>
    %184 = vector.broadcast %172 : i32 to vector<1x1024xi32>
    %185 = arith.addi %174, %184 : vector<1x1024xi32>
    %186 = arith.select %183, %185, %174 : vector<1x1024xi1>, vector<1x1024xi32>
    %c31_i32_79 = arith.constant 31 : i32
    %187 = vector.broadcast %c31_i32_79 : i32 to vector<1x1024xi32>
    %188 = arith.cmpi ne, %186, %187 : vector<1x1024xi32>
    %189 = arith.extui %188 : vector<1x1024xi1> to vector<1x1024xi32>
    %190 = arith.sitofp %189 : vector<1x1024xi32> to vector<1x1024xf32>
    %191 = arith.truncf %190 : vector<1x1024xf32> to vector<1x1024xbf16>
    %192 = vector.broadcast %191 : vector<1x1024xbf16> to vector<3x1024xbf16>
    %193 = arith.mulf %169, %192 : vector<3x1024xbf16>
    %c8 = arith.constant 8 : index
    %c0_80 = arith.constant 0 : index
    %c0_81 = arith.constant 0 : index
    %194 = vector.load %arg2[%c8, %c0_80, %c0_81] : memref<9x8x3xbf16, #tpu.memory_space<vmem>>, vector<1x8x3xbf16>
    %195 = vector.shape_cast %194 : vector<1x8x3xbf16> to vector<8x3xbf16>
    %cst_82 = arith.constant dense<0.000000e+00> : vector<8x1024xf32>
    %196 = tpu.matmul %195, %193, %cst_82 {dimension_numbers = #tpu.dot_dimension_numbers<[1], [0], [0], [1], [0, 0, 1, 1], [], []>} : vector<8x3xbf16>, vector<3x1024xbf16>, vector<8x1024xf32> -> vector<8x1024xf32>
    %197 = arith.addf %168, %196 : vector<8x1024xf32>
    %cst_83 = arith.constant 0.000000e+00 : f32
    %198 = vector.broadcast %cst_83 : f32 to vector<8x128xf32>
    %c0_84 = arith.constant 0 : index
    %c1024 = arith.constant 1024 : index
    %199 = vector.load %arg13[%c0_84, %c1024] : memref<8x1152xf32, #tpu.memory_space<vmem>>, vector<8x128xf32>
    tpu.vector_store %arg13[%c0_84, %c1024], %198 {strides = array<i32>} : memref<8x1152xf32, #tpu.memory_space<vmem>>, vector<8x128xf32>,
    %c0_85 = arith.constant 0 : index
    %c0_86 = arith.constant 0 : index
    %200 = vector.load %arg13[%c0_85, %c0_86] : memref<8x1152xf32, #tpu.memory_space<vmem>>, vector<8x1024xf32>
    tpu.vector_store %arg13[%c0_85, %c0_86], %197 {strides = array<i32>} : memref<8x1152xf32, #tpu.memory_space<vmem>>, vector<8x1024xf32>,
    %c0_87 = arith.constant 0 : index
    %c0_88 = arith.constant 0 : index
    %201 = vector.load %arg13[%c0_87, %c0_88] : memref<8x1152xf32, #tpu.memory_space<vmem>>, vector<8x1024xf32>
    %c0_89 = arith.constant 0 : index
    %c1_90 = arith.constant 1 : index
    %202 = vector.load %arg13[%c0_89, %c1_90] : memref<8x1152xf32, #tpu.memory_space<vmem>>, vector<8x1024xf32>
    %203 = arith.maximumf %201, %202 : vector<8x1024xf32>
    %c0_91 = arith.constant 0 : index
    %c32_92 = arith.constant 32 : index
    %204 = vector.load %arg13[%c0_91, %c32_92] : memref<8x1152xf32, #tpu.memory_space<vmem>>, vector<8x1024xf32>
    %c0_93 = arith.constant 0 : index
    %c33_94 = arith.constant 33 : index
    %205 = vector.load %arg13[%c0_93, %c33_94] : memref<8x1152xf32, #tpu.memory_space<vmem>>, vector<8x1024xf32>
    %206 = arith.maximumf %204, %205 : vector<8x1024xf32>
    %207 = arith.maximumf %203, %206 : vector<8x1024xf32>
    %cst_95 = arith.constant 0.000000e+00 : f32
    %208 = vector.broadcast %cst_95 : f32 to vector<8x1024xf32>
    %209 = arith.maximumf %207, %208 : vector<8x1024xf32>
    %cst_96 = arith.constant 0.000000e+00 : bf16
    %210 = vector.broadcast %cst_96 : bf16 to vector<8x1280xbf16>
    %c0_97 = arith.constant 0 : index
    %c0_98 = arith.constant 0 : index
    %211 = vector.load %arg14[%c0_97, %c0_98] : memref<8x1280xbf16, #tpu.memory_space<vmem>>, vector<8x1280xbf16>
    tpu.vector_store %arg14[%c0_97, %c0_98], %210 {strides = array<i32>} : memref<8x1280xbf16, #tpu.memory_space<vmem>>, vector<8x1280xbf16>,
    %212 = arith.truncf %209 : vector<8x1024xf32> to vector<8x1024xbf16>
    %c0_99 = arith.constant 0 : index
    %c128 = arith.constant 128 : index
    %213 = vector.load %arg14[%c0_99, %c128] : memref<8x1280xbf16, #tpu.memory_space<vmem>>, vector<8x1024xbf16>
    tpu.vector_store %arg14[%c0_99, %c128], %212 {strides = array<i32>} : memref<8x1280xbf16, #tpu.memory_space<vmem>>, vector<8x1024xbf16>,
    %c0_100 = arith.constant 0 : index
    %c0_101 = arith.constant 0 : index
    %214 = vector.load %arg5[%c0_100, %c0_101] : memref<16x1xf32, #tpu.memory_space<vmem>>, vector<16x1xf32>
    %215 = vector.shape_cast %214 : vector<16x1xf32> to vector<16x1xf32>
    %216 = vector.broadcast %215 : vector<16x1xf32> to vector<16x1024xf32>
    %c0_102 = arith.constant 0 : index
    %c62 = arith.constant 62 : index
    %217 = vector.load %arg14[%c0_102, %c62] : memref<8x1280xbf16, #tpu.memory_space<vmem>>, vector<8x1024xbf16>
    %218 = tpu.iota {dimensions = array<i32: 1>} : vector<1x1024xi32>
    %c64_i32 = arith.constant 64 : i32
    %c0_i32_103 = arith.constant 0 : i32
    %219 = arith.cmpi eq, %c64_i32, %c0_i32_103 : i32
    %c1_i32_104 = arith.constant 1 : i32
    %220 = arith.select %219, %c1_i32_104, %c64_i32 : i32
    %221 = vector.broadcast %220 : i32 to vector<1x1024xi32>
    %222 = arith.remsi %218, %221 : vector<1x1024xi32>
    %c0_i32_105 = arith.constant 0 : i32
    %223 = vector.broadcast %c0_i32_105 : i32 to vector<1x1024xi32>
    %224 = arith.cmpi ne, %222, %223 : vector<1x1024xi32>
    %c0_i32_106 = arith.constant 0 : i32
    %225 = vector.broadcast %c0_i32_106 : i32 to vector<1x1024xi32>
    %226 = arith.cmpi slt, %222, %225 : vector<1x1024xi32>
    %c0_i32_107 = arith.constant 0 : i32
    %227 = arith.cmpi slt, %220, %c0_i32_107 : i32
    %228 = vector.broadcast %227 : i1 to vector<1x1024xi1>
    %229 = vector.broadcast %228 : vector<1x1024xi1> to vector<1x1024xi1>
    %230 = arith.xori %226, %229 : vector<1x1024xi1>
    %231 = arith.andi %230, %224 : vector<1x1024xi1>
    %232 = vector.broadcast %220 : i32 to vector<1x1024xi32>
    %233 = arith.addi %222, %232 : vector<1x1024xi32>
    %234 = arith.select %231, %233, %222 : vector<1x1024xi1>, vector<1x1024xi32>
    %c0_i32_108 = arith.constant 0 : i32
    %235 = vector.broadcast %c0_i32_108 : i32 to vector<1x1024xi32>
    %236 = arith.cmpi ne, %234, %235 : vector<1x1024xi32>
    %237 = arith.extui %236 : vector<1x1024xi1> to vector<1x1024xi32>
    %238 = arith.sitofp %237 : vector<1x1024xi32> to vector<1x1024xf32>
    %239 = arith.truncf %238 : vector<1x1024xf32> to vector<1x1024xbf16>
    %240 = vector.broadcast %239 : vector<1x1024xbf16> to vector<8x1024xbf16>
    %241 = arith.mulf %217, %240 : vector<8x1024xbf16>
    %c0_109 = arith.constant 0 : index
    %c0_110 = arith.constant 0 : index
    %c0_111 = arith.constant 0 : index
    %242 = vector.load %arg4[%c0_109, %c0_110, %c0_111] : memref<9x16x8xbf16, #tpu.memory_space<vmem>>, vector<1x16x8xbf16>
    %243 = vector.shape_cast %242 : vector<1x16x8xbf16> to vector<16x8xbf16>
    %cst_112 = arith.constant dense<0.000000e+00> : vector<16x1024xf32>
    %244 = tpu.matmul %243, %241, %cst_112 {dimension_numbers = #tpu.dot_dimension_numbers<[1], [0], [0], [1], [0, 0, 1, 1], [], []>} : vector<16x8xbf16>, vector<8x1024xbf16>, vector<16x1024xf32> -> vector<16x1024xf32>
    %245 = arith.addf %216, %244 : vector<16x1024xf32>
    %c0_113 = arith.constant 0 : index
    %c64_114 = arith.constant 64 : index
    %246 = vector.load %arg14[%c0_113, %c64_114] : memref<8x1280xbf16, #tpu.memory_space<vmem>>, vector<8x1024xbf16>
    %c1_115 = arith.constant 1 : index
    %c0_116 = arith.constant 0 : index
    %c0_117 = arith.constant 0 : index
    %247 = vector.load %arg4[%c1_115, %c0_116, %c0_117] : memref<9x16x8xbf16, #tpu.memory_space<vmem>>, vector<1x16x8xbf16>
    %248 = vector.shape_cast %247 : vector<1x16x8xbf16> to vector<16x8xbf16>
    %cst_118 = arith.constant dense<0.000000e+00> : vector<16x1024xf32>
    %249 = tpu.matmul %248, %246, %cst_118 {dimension_numbers = #tpu.dot_dimension_numbers<[1], [0], [0], [1], [0, 0, 1, 1], [], []>} : vector<16x8xbf16>, vector<8x1024xbf16>, vector<16x1024xf32> -> vector<16x1024xf32>
    %250 = arith.addf %245, %249 : vector<16x1024xf32>
    %c0_119 = arith.constant 0 : index
    %c66 = arith.constant 66 : index
    %251 = vector.load %arg14[%c0_119, %c66] : memref<8x1280xbf16, #tpu.memory_space<vmem>>, vector<8x1024xbf16>
    %252 = tpu.iota {dimensions = array<i32: 1>} : vector<1x1024xi32>
    %c64_i32_120 = arith.constant 64 : i32
    %c0_i32_121 = arith.constant 0 : i32
    %253 = arith.cmpi eq, %c64_i32_120, %c0_i32_121 : i32
    %c1_i32_122 = arith.constant 1 : i32
    %254 = arith.select %253, %c1_i32_122, %c64_i32_120 : i32
    %255 = vector.broadcast %254 : i32 to vector<1x1024xi32>
    %256 = arith.remsi %252, %255 : vector<1x1024xi32>
    %c0_i32_123 = arith.constant 0 : i32
    %257 = vector.broadcast %c0_i32_123 : i32 to vector<1x1024xi32>
    %258 = arith.cmpi ne, %256, %257 : vector<1x1024xi32>
    %c0_i32_124 = arith.constant 0 : i32
    %259 = vector.broadcast %c0_i32_124 : i32 to vector<1x1024xi32>
    %260 = arith.cmpi slt, %256, %259 : vector<1x1024xi32>
    %c0_i32_125 = arith.constant 0 : i32
    %261 = arith.cmpi slt, %254, %c0_i32_125 : i32
    %262 = vector.broadcast %261 : i1 to vector<1x1024xi1>
    %263 = vector.broadcast %262 : vector<1x1024xi1> to vector<1x1024xi1>
    %264 = arith.xori %260, %263 : vector<1x1024xi1>
    %265 = arith.andi %264, %258 : vector<1x1024xi1>
    %266 = vector.broadcast %254 : i32 to vector<1x1024xi32>
    %267 = arith.addi %256, %266 : vector<1x1024xi32>
    %268 = arith.select %265, %267, %256 : vector<1x1024xi1>, vector<1x1024xi32>
    %c30_i32 = arith.constant 30 : i32
    %269 = vector.broadcast %c30_i32 : i32 to vector<1x1024xi32>
    %270 = arith.cmpi ne, %268, %269 : vector<1x1024xi32>
    %271 = arith.extui %270 : vector<1x1024xi1> to vector<1x1024xi32>
    %272 = arith.sitofp %271 : vector<1x1024xi32> to vector<1x1024xf32>
    %273 = arith.truncf %272 : vector<1x1024xf32> to vector<1x1024xbf16>
    %274 = vector.broadcast %273 : vector<1x1024xbf16> to vector<8x1024xbf16>
    %275 = arith.mulf %251, %274 : vector<8x1024xbf16>
    %c2_126 = arith.constant 2 : index
    %c0_127 = arith.constant 0 : index
    %c0_128 = arith.constant 0 : index
    %276 = vector.load %arg4[%c2_126, %c0_127, %c0_128] : memref<9x16x8xbf16, #tpu.memory_space<vmem>>, vector<1x16x8xbf16>
    %277 = vector.shape_cast %276 : vector<1x16x8xbf16> to vector<16x8xbf16>
    %cst_129 = arith.constant dense<0.000000e+00> : vector<16x1024xf32>
    %278 = tpu.matmul %277, %275, %cst_129 {dimension_numbers = #tpu.dot_dimension_numbers<[1], [0], [0], [1], [0, 0, 1, 1], [], []>} : vector<16x8xbf16>, vector<8x1024xbf16>, vector<16x1024xf32> -> vector<16x1024xf32>
    %279 = arith.addf %250, %278 : vector<16x1024xf32>
    %c0_130 = arith.constant 0 : index
    %c126 = arith.constant 126 : index
    %280 = vector.load %arg14[%c0_130, %c126] : memref<8x1280xbf16, #tpu.memory_space<vmem>>, vector<8x1024xbf16>
    %281 = tpu.iota {dimensions = array<i32: 1>} : vector<1x1024xi32>
    %c64_i32_131 = arith.constant 64 : i32
    %c0_i32_132 = arith.constant 0 : i32
    %282 = arith.cmpi eq, %c64_i32_131, %c0_i32_132 : i32
    %c1_i32_133 = arith.constant 1 : i32
    %283 = arith.select %282, %c1_i32_133, %c64_i32_131 : i32
    %284 = vector.broadcast %283 : i32 to vector<1x1024xi32>
    %285 = arith.remsi %281, %284 : vector<1x1024xi32>
    %c0_i32_134 = arith.constant 0 : i32
    %286 = vector.broadcast %c0_i32_134 : i32 to vector<1x1024xi32>
    %287 = arith.cmpi ne, %285, %286 : vector<1x1024xi32>
    %c0_i32_135 = arith.constant 0 : i32
    %288 = vector.broadcast %c0_i32_135 : i32 to vector<1x1024xi32>
    %289 = arith.cmpi slt, %285, %288 : vector<1x1024xi32>
    %c0_i32_136 = arith.constant 0 : i32
    %290 = arith.cmpi slt, %283, %c0_i32_136 : i32
    %291 = vector.broadcast %290 : i1 to vector<1x1024xi1>
    %292 = vector.broadcast %291 : vector<1x1024xi1> to vector<1x1024xi1>
    %293 = arith.xori %289, %292 : vector<1x1024xi1>
    %294 = arith.andi %293, %287 : vector<1x1024xi1>
    %295 = vector.broadcast %283 : i32 to vector<1x1024xi32>
    %296 = arith.addi %285, %295 : vector<1x1024xi32>
    %297 = arith.select %294, %296, %285 : vector<1x1024xi1>, vector<1x1024xi32>
    %c0_i32_137 = arith.constant 0 : i32
    %298 = vector.broadcast %c0_i32_137 : i32 to vector<1x1024xi32>
    %299 = arith.cmpi ne, %297, %298 : vector<1x1024xi32>
    %300 = arith.extui %299 : vector<1x1024xi1> to vector<1x1024xi32>
    %301 = arith.sitofp %300 : vector<1x1024xi32> to vector<1x1024xf32>
    %302 = arith.truncf %301 : vector<1x1024xf32> to vector<1x1024xbf16>
    %303 = vector.broadcast %302 : vector<1x1024xbf16> to vector<8x1024xbf16>
    %304 = arith.mulf %280, %303 : vector<8x1024xbf16>
    %c3_138 = arith.constant 3 : index
    %c0_139 = arith.constant 0 : index
    %c0_140 = arith.constant 0 : index
    %305 = vector.load %arg4[%c3_138, %c0_139, %c0_140] : memref<9x16x8xbf16, #tpu.memory_space<vmem>>, vector<1x16x8xbf16>
    %306 = vector.shape_cast %305 : vector<1x16x8xbf16> to vector<16x8xbf16>
    %cst_141 = arith.constant dense<0.000000e+00> : vector<16x1024xf32>
    %307 = tpu.matmul %306, %304, %cst_141 {dimension_numbers = #tpu.dot_dimension_numbers<[1], [0], [0], [1], [0, 0, 1, 1], [], []>} : vector<16x8xbf16>, vector<8x1024xbf16>, vector<16x1024xf32> -> vector<16x1024xf32>
    %308 = arith.addf %279, %307 : vector<16x1024xf32>
    %c0_142 = arith.constant 0 : index
    %c128_143 = arith.constant 128 : index
    %309 = vector.load %arg14[%c0_142, %c128_143] : memref<8x1280xbf16, #tpu.memory_space<vmem>>, vector<8x1024xbf16>
    %c4_144 = arith.constant 4 : index
    %c0_145 = arith.constant 0 : index
    %c0_146 = arith.constant 0 : index
    %310 = vector.load %arg4[%c4_144, %c0_145, %c0_146] : memref<9x16x8xbf16, #tpu.memory_space<vmem>>, vector<1x16x8xbf16>
    %311 = vector.shape_cast %310 : vector<1x16x8xbf16> to vector<16x8xbf16>
    %cst_147 = arith.constant dense<0.000000e+00> : vector<16x1024xf32>
    %312 = tpu.matmul %311, %309, %cst_147 {dimension_numbers = #tpu.dot_dimension_numbers<[1], [0], [0], [1], [0, 0, 1, 1], [], []>} : vector<16x8xbf16>, vector<8x1024xbf16>, vector<16x1024xf32> -> vector<16x1024xf32>
    %313 = arith.addf %308, %312 : vector<16x1024xf32>
    %c0_148 = arith.constant 0 : index
    %c130 = arith.constant 130 : index
    %314 = vector.load %arg14[%c0_148, %c130] : memref<8x1280xbf16, #tpu.memory_space<vmem>>, vector<8x1024xbf16>
    %315 = tpu.iota {dimensions = array<i32: 1>} : vector<1x1024xi32>
    %c64_i32_149 = arith.constant 64 : i32
    %c0_i32_150 = arith.constant 0 : i32
    %316 = arith.cmpi eq, %c64_i32_149, %c0_i32_150 : i32
    %c1_i32_151 = arith.constant 1 : i32
    %317 = arith.select %316, %c1_i32_151, %c64_i32_149 : i32
    %318 = vector.broadcast %317 : i32 to vector<1x1024xi32>
    %319 = arith.remsi %315, %318 : vector<1x1024xi32>
    %c0_i32_152 = arith.constant 0 : i32
    %320 = vector.broadcast %c0_i32_152 : i32 to vector<1x1024xi32>
    %321 = arith.cmpi ne, %319, %320 : vector<1x1024xi32>
    %c0_i32_153 = arith.constant 0 : i32
    %322 = vector.broadcast %c0_i32_153 : i32 to vector<1x1024xi32>
    %323 = arith.cmpi slt, %319, %322 : vector<1x1024xi32>
    %c0_i32_154 = arith.constant 0 : i32
    %324 = arith.cmpi slt, %317, %c0_i32_154 : i32
    %325 = vector.broadcast %324 : i1 to vector<1x1024xi1>
    %326 = vector.broadcast %325 : vector<1x1024xi1> to vector<1x1024xi1>
    %327 = arith.xori %323, %326 : vector<1x1024xi1>
    %328 = arith.andi %327, %321 : vector<1x1024xi1>
    %329 = vector.broadcast %317 : i32 to vector<1x1024xi32>
    %330 = arith.addi %319, %329 : vector<1x1024xi32>
    %331 = arith.select %328, %330, %319 : vector<1x1024xi1>, vector<1x1024xi32>
    %c30_i32_155 = arith.constant 30 : i32
    %332 = vector.broadcast %c30_i32_155 : i32 to vector<1x1024xi32>
    %333 = arith.cmpi ne, %331, %332 : vector<1x1024xi32>
    %334 = arith.extui %333 : vector<1x1024xi1> to vector<1x1024xi32>
    %335 = arith.sitofp %334 : vector<1x1024xi32> to vector<1x1024xf32>
    %336 = arith.truncf %335 : vector<1x1024xf32> to vector<1x1024xbf16>
    %337 = vector.broadcast %336 : vector<1x1024xbf16> to vector<8x1024xbf16>
    %338 = arith.mulf %314, %337 : vector<8x1024xbf16>
    %c5_156 = arith.constant 5 : index
    %c0_157 = arith.constant 0 : index
    %c0_158 = arith.constant 0 : index
    %339 = vector.load %arg4[%c5_156, %c0_157, %c0_158] : memref<9x16x8xbf16, #tpu.memory_space<vmem>>, vector<1x16x8xbf16>
    %340 = vector.shape_cast %339 : vector<1x16x8xbf16> to vector<16x8xbf16>
    %cst_159 = arith.constant dense<0.000000e+00> : vector<16x1024xf32>
    %341 = tpu.matmul %340, %338, %cst_159 {dimension_numbers = #tpu.dot_dimension_numbers<[1], [0], [0], [1], [0, 0, 1, 1], [], []>} : vector<16x8xbf16>, vector<8x1024xbf16>, vector<16x1024xf32> -> vector<16x1024xf32>
    %342 = arith.addf %313, %341 : vector<16x1024xf32>
    %c0_160 = arith.constant 0 : index
    %c190 = arith.constant 190 : index
    %343 = vector.load %arg14[%c0_160, %c190] : memref<8x1280xbf16, #tpu.memory_space<vmem>>, vector<8x1024xbf16>
    %344 = tpu.iota {dimensions = array<i32: 1>} : vector<1x1024xi32>
    %c64_i32_161 = arith.constant 64 : i32
    %c0_i32_162 = arith.constant 0 : i32
    %345 = arith.cmpi eq, %c64_i32_161, %c0_i32_162 : i32
    %c1_i32_163 = arith.constant 1 : i32
    %346 = arith.select %345, %c1_i32_163, %c64_i32_161 : i32
    %347 = vector.broadcast %346 : i32 to vector<1x1024xi32>
    %348 = arith.remsi %344, %347 : vector<1x1024xi32>
    %c0_i32_164 = arith.constant 0 : i32
    %349 = vector.broadcast %c0_i32_164 : i32 to vector<1x1024xi32>
    %350 = arith.cmpi ne, %348, %349 : vector<1x1024xi32>
    %c0_i32_165 = arith.constant 0 : i32
    %351 = vector.broadcast %c0_i32_165 : i32 to vector<1x1024xi32>
    %352 = arith.cmpi slt, %348, %351 : vector<1x1024xi32>
    %c0_i32_166 = arith.constant 0 : i32
    %353 = arith.cmpi slt, %346, %c0_i32_166 : i32
    %354 = vector.broadcast %353 : i1 to vector<1x1024xi1>
    %355 = vector.broadcast %354 : vector<1x1024xi1> to vector<1x1024xi1>
    %356 = arith.xori %352, %355 : vector<1x1024xi1>
    %357 = arith.andi %356, %350 : vector<1x1024xi1>
    %358 = vector.broadcast %346 : i32 to vector<1x1024xi32>
    %359 = arith.addi %348, %358 : vector<1x1024xi32>
    %360 = arith.select %357, %359, %348 : vector<1x1024xi1>, vector<1x1024xi32>
    %c0_i32_167 = arith.constant 0 : i32
    %361 = vector.broadcast %c0_i32_167 : i32 to vector<1x1024xi32>
    %362 = arith.cmpi ne, %360, %361 : vector<1x1024xi32>
    %363 = arith.extui %362 : vector<1x1024xi1> to vector<1x1024xi32>
    %364 = arith.sitofp %363 : vector<1x1024xi32> to vector<1x1024xf32>
    %365 = arith.truncf %364 : vector<1x1024xf32> to vector<1x1024xbf16>
    %366 = vector.broadcast %365 : vector<1x1024xbf16> to vector<8x1024xbf16>
    %367 = arith.mulf %343, %366 : vector<8x1024xbf16>
    %c6_168 = arith.constant 6 : index
    %c0_169 = arith.constant 0 : index
    %c0_170 = arith.constant 0 : index
    %368 = vector.load %arg4[%c6_168, %c0_169, %c0_170] : memref<9x16x8xbf16, #tpu.memory_space<vmem>>, vector<1x16x8xbf16>
    %369 = vector.shape_cast %368 : vector<1x16x8xbf16> to vector<16x8xbf16>
    %cst_171 = arith.constant dense<0.000000e+00> : vector<16x1024xf32>
    %370 = tpu.matmul %369, %367, %cst_171 {dimension_numbers = #tpu.dot_dimension_numbers<[1], [0], [0], [1], [0, 0, 1, 1], [], []>} : vector<16x8xbf16>, vector<8x1024xbf16>, vector<16x1024xf32> -> vector<16x1024xf32>
    %371 = arith.addf %342, %370 : vector<16x1024xf32>
    %c0_172 = arith.constant 0 : index
    %c192 = arith.constant 192 : index
    %372 = vector.load %arg14[%c0_172, %c192] : memref<8x1280xbf16, #tpu.memory_space<vmem>>, vector<8x1024xbf16>
    %c7_173 = arith.constant 7 : index
    %c0_174 = arith.constant 0 : index
    %c0_175 = arith.constant 0 : index
    %373 = vector.load %arg4[%c7_173, %c0_174, %c0_175] : memref<9x16x8xbf16, #tpu.memory_space<vmem>>, vector<1x16x8xbf16>
    %374 = vector.shape_cast %373 : vector<1x16x8xbf16> to vector<16x8xbf16>
    %cst_176 = arith.constant dense<0.000000e+00> : vector<16x1024xf32>
    %375 = tpu.matmul %374, %372, %cst_176 {dimension_numbers = #tpu.dot_dimension_numbers<[1], [0], [0], [1], [0, 0, 1, 1], [], []>} : vector<16x8xbf16>, vector<8x1024xbf16>, vector<16x1024xf32> -> vector<16x1024xf32>
    %376 = arith.addf %371, %375 : vector<16x1024xf32>
    %c0_177 = arith.constant 0 : index
    %c194 = arith.constant 194 : index
    %377 = vector.load %arg14[%c0_177, %c194] : memref<8x1280xbf16, #tpu.memory_space<vmem>>, vector<8x1024xbf16>
    %378 = tpu.iota {dimensions = array<i32: 1>} : vector<1x1024xi32>
    %c64_i32_178 = arith.constant 64 : i32
    %c0_i32_179 = arith.constant 0 : i32
    %379 = arith.cmpi eq, %c64_i32_178, %c0_i32_179 : i32
    %c1_i32_180 = arith.constant 1 : i32
    %380 = arith.select %379, %c1_i32_180, %c64_i32_178 : i32
    %381 = vector.broadcast %380 : i32 to vector<1x1024xi32>
    %382 = arith.remsi %378, %381 : vector<1x1024xi32>
    %c0_i32_181 = arith.constant 0 : i32
    %383 = vector.broadcast %c0_i32_181 : i32 to vector<1x1024xi32>
    %384 = arith.cmpi ne, %382, %383 : vector<1x1024xi32>
    %c0_i32_182 = arith.constant 0 : i32
    %385 = vector.broadcast %c0_i32_182 : i32 to vector<1x1024xi32>
    %386 = arith.cmpi slt, %382, %385 : vector<1x1024xi32>
    %c0_i32_183 = arith.constant 0 : i32
    %387 = arith.cmpi slt, %380, %c0_i32_183 : i32
    %388 = vector.broadcast %387 : i1 to vector<1x1024xi1>
    %389 = vector.broadcast %388 : vector<1x1024xi1> to vector<1x1024xi1>
    %390 = arith.xori %386, %389 : vector<1x1024xi1>
    %391 = arith.andi %390, %384 : vector<1x1024xi1>
    %392 = vector.broadcast %380 : i32 to vector<1x1024xi32>
    %393 = arith.addi %382, %392 : vector<1x1024xi32>
    %394 = arith.select %391, %393, %382 : vector<1x1024xi1>, vector<1x1024xi32>
    %c30_i32_184 = arith.constant 30 : i32
    %395 = vector.broadcast %c30_i32_184 : i32 to vector<1x1024xi32>
    %396 = arith.cmpi ne, %394, %395 : vector<1x1024xi32>
    %397 = arith.extui %396 : vector<1x1024xi1> to vector<1x1024xi32>
    %398 = arith.sitofp %397 : vector<1x1024xi32> to vector<1x1024xf32>
    %399 = arith.truncf %398 : vector<1x1024xf32> to vector<1x1024xbf16>
    %400 = vector.broadcast %399 : vector<1x1024xbf16> to vector<8x1024xbf16>
    %401 = arith.mulf %377, %400 : vector<8x1024xbf16>
    %c8_185 = arith.constant 8 : index
    %c0_186 = arith.constant 0 : index
    %c0_187 = arith.constant 0 : index
    %402 = vector.load %arg4[%c8_185, %c0_186, %c0_187] : memref<9x16x8xbf16, #tpu.memory_space<vmem>>, vector<1x16x8xbf16>
    %403 = vector.shape_cast %402 : vector<1x16x8xbf16> to vector<16x8xbf16>
    %cst_188 = arith.constant dense<0.000000e+00> : vector<16x1024xf32>
    %404 = tpu.matmul %403, %401, %cst_188 {dimension_numbers = #tpu.dot_dimension_numbers<[1], [0], [0], [1], [0, 0, 1, 1], [], []>} : vector<16x8xbf16>, vector<8x1024xbf16>, vector<16x1024xf32> -> vector<16x1024xf32>
    %405 = arith.addf %376, %404 : vector<16x1024xf32>
    %cst_189 = arith.constant 0.000000e+00 : f32
    %406 = vector.broadcast %cst_189 : f32 to vector<16x128xf32>
    %c0_190 = arith.constant 0 : index
    %c1024_191 = arith.constant 1024 : index
    %407 = vector.load %arg15[%c0_190, %c1024_191] : memref<16x1152xf32, #tpu.memory_space<vmem>>, vector<16x128xf32>
    tpu.vector_store %arg15[%c0_190, %c1024_191], %406 {strides = array<i32>} : memref<16x1152xf32, #tpu.memory_space<vmem>>, vector<16x128xf32>,
    %c0_192 = arith.constant 0 : index
    %c0_193 = arith.constant 0 : index
    %408 = vector.load %arg15[%c0_192, %c0_193] : memref<16x1152xf32, #tpu.memory_space<vmem>>, vector<16x1024xf32>
    tpu.vector_store %arg15[%c0_192, %c0_193], %405 {strides = array<i32>} : memref<16x1152xf32, #tpu.memory_space<vmem>>, vector<16x1024xf32>,
    %c0_194 = arith.constant 0 : index
    %c0_195 = arith.constant 0 : index
    %409 = vector.load %arg15[%c0_194, %c0_195] : memref<16x1152xf32, #tpu.memory_space<vmem>>, vector<16x1024xf32>
    %c0_196 = arith.constant 0 : index
    %c2_197 = arith.constant 2 : index
    %410 = vector.load %arg15[%c0_196, %c2_197] : memref<16x1152xf32, #tpu.memory_space<vmem>>, vector<16x1024xf32>
    %411 = arith.maximumf %409, %410 : vector<16x1024xf32>
    %c0_198 = arith.constant 0 : index
    %c64_199 = arith.constant 64 : index
    %412 = vector.load %arg15[%c0_198, %c64_199] : memref<16x1152xf32, #tpu.memory_space<vmem>>, vector<16x1024xf32>
    %c0_200 = arith.constant 0 : index
    %c66_201 = arith.constant 66 : index
    %413 = vector.load %arg15[%c0_200, %c66_201] : memref<16x1152xf32, #tpu.memory_space<vmem>>, vector<16x1024xf32>
    %414 = arith.maximumf %412, %413 : vector<16x1024xf32>
    %415 = arith.maximumf %411, %414 : vector<16x1024xf32>
    %cst_202 = arith.constant 0.000000e+00 : f32
    %416 = vector.broadcast %cst_202 : f32 to vector<16x1024xf32>
    %417 = arith.maximumf %415, %416 : vector<16x1024xf32>
    %418 = arith.truncf %417 : vector<16x1024xf32> to vector<16x1024xbf16>
    %c0_203 = arith.constant 0 : index
    %c0_204 = arith.constant 0 : index
    %419 = vector.load %arg6[%c0_203, %c0_204] : memref<1024x64xbf16, #tpu.memory_space<vmem>>, vector<1024x64xbf16>
    %cst_205 = arith.constant dense<0.000000e+00> : vector<16x64xf32>
    %420 = tpu.matmul %418, %419, %cst_205 {dimension_numbers = #tpu.dot_dimension_numbers<[1], [0], [0], [1], [0, 0, 1, 1], [], []>} : vector<16x1024xbf16>, vector<1024x64xbf16>, vector<16x64xf32> -> vector<16x64xf32>
    %421 = arith.truncf %420 : vector<16x64xf32> to vector<16x64xbf16>
    %c0_206 = arith.constant 0 : index
    %c0_207 = arith.constant 0 : index
    %422 = vector.load %arg16[%c0_206, %c0_207] : memref<16x64xbf16, #tpu.memory_space<vmem>>, vector<16x64xbf16>
    tpu.vector_store %arg16[%c0_206, %c0_207], %421 {strides = array<i32>} : memref<16x64xbf16, #tpu.memory_space<vmem>>, vector<16x64xbf16>,
    %c0_208 = arith.constant 0 : index
    %c0_209 = arith.constant 0 : index
    %423 = vector.load %arg16[%c0_208, %c0_209] : memref<16x64xbf16, #tpu.memory_space<vmem>>, vector<1x64xbf16>
    %c0_210 = arith.constant 0 : index
    %c0_211 = arith.constant 0 : index
    %424 = vector.load %arg17[%c0_210, %c0_211] : memref<1x1024xbf16, #tpu.memory_space<vmem>>, vector<1x64xbf16>
    tpu.vector_store %arg17[%c0_210, %c0_211], %423 {strides = array<i32>} : memref<1x1024xbf16, #tpu.memory_space<vmem>>, vector<1x64xbf16>,
    %c1_212 = arith.constant 1 : index
    %c0_213 = arith.constant 0 : index
    %425 = vector.load %arg16[%c1_212, %c0_213] : memref<16x64xbf16, #tpu.memory_space<vmem>>, vector<1x64xbf16>
    %c0_214 = arith.constant 0 : index
    %c64_215 = arith.constant 64 : index
    %426 = vector.load %arg17[%c0_214, %c64_215] : memref<1x1024xbf16, #tpu.memory_space<vmem>>, vector<1x64xbf16>
    tpu.vector_store %arg17[%c0_214, %c64_215], %425 {strides = array<i32>} : memref<1x1024xbf16, #tpu.memory_space<vmem>>, vector<1x64xbf16>,
    %c2_216 = arith.constant 2 : index
    %c0_217 = arith.constant 0 : index
    %427 = vector.load %arg16[%c2_216, %c0_217] : memref<16x64xbf16, #tpu.memory_space<vmem>>, vector<1x64xbf16>
    %c0_218 = arith.constant 0 : index
    %c128_219 = arith.constant 128 : index
    %428 = vector.load %arg17[%c0_218, %c128_219] : memref<1x1024xbf16, #tpu.memory_space<vmem>>, vector<1x64xbf16>
    tpu.vector_store %arg17[%c0_218, %c128_219], %427 {strides = array<i32>} : memref<1x1024xbf16, #tpu.memory_space<vmem>>, vector<1x64xbf16>,
    %c3_220 = arith.constant 3 : index
    %c0_221 = arith.constant 0 : index
    %429 = vector.load %arg16[%c3_220, %c0_221] : memref<16x64xbf16, #tpu.memory_space<vmem>>, vector<1x64xbf16>
    %c0_222 = arith.constant 0 : index
    %c192_223 = arith.constant 192 : index
    %430 = vector.load %arg17[%c0_222, %c192_223] : memref<1x1024xbf16, #tpu.memory_space<vmem>>, vector<1x64xbf16>
    tpu.vector_store %arg17[%c0_222, %c192_223], %429 {strides = array<i32>} : memref<1x1024xbf16, #tpu.memory_space<vmem>>, vector<1x64xbf16>,
    %c4_224 = arith.constant 4 : index
    %c0_225 = arith.constant 0 : index
    %431 = vector.load %arg16[%c4_224, %c0_225] : memref<16x64xbf16, #tpu.memory_space<vmem>>, vector<1x64xbf16>
    %c0_226 = arith.constant 0 : index
    %c256 = arith.constant 256 : index
    %432 = vector.load %arg17[%c0_226, %c256] : memref<1x1024xbf16, #tpu.memory_space<vmem>>, vector<1x64xbf16>
    tpu.vector_store %arg17[%c0_226, %c256], %431 {strides = array<i32>} : memref<1x1024xbf16, #tpu.memory_space<vmem>>, vector<1x64xbf16>,
    %c5_227 = arith.constant 5 : index
    %c0_228 = arith.constant 0 : index
    %433 = vector.load %arg16[%c5_227, %c0_228] : memref<16x64xbf16, #tpu.memory_space<vmem>>, vector<1x64xbf16>
    %c0_229 = arith.constant 0 : index
    %c320 = arith.constant 320 : index
    %434 = vector.load %arg17[%c0_229, %c320] : memref<1x1024xbf16, #tpu.memory_space<vmem>>, vector<1x64xbf16>
    tpu.vector_store %arg17[%c0_229, %c320], %433 {strides = array<i32>} : memref<1x1024xbf16, #tpu.memory_space<vmem>>, vector<1x64xbf16>,
    %c6_230 = arith.constant 6 : index
    %c0_231 = arith.constant 0 : index
    %435 = vector.load %arg16[%c6_230, %c0_231] : memref<16x64xbf16, #tpu.memory_space<vmem>>, vector<1x64xbf16>
    %c0_232 = arith.constant 0 : index
    %c384 = arith.constant 384 : index
    %436 = vector.load %arg17[%c0_232, %c384] : memref<1x1024xbf16, #tpu.memory_space<vmem>>, vector<1x64xbf16>
    tpu.vector_store %arg17[%c0_232, %c384], %435 {strides = array<i32>} : memref<1x1024xbf16, #tpu.memory_space<vmem>>, vector<1x64xbf16>,
    %c7_233 = arith.constant 7 : index
    %c0_234 = arith.constant 0 : index
    %437 = vector.load %arg16[%c7_233, %c0_234] : memref<16x64xbf16, #tpu.memory_space<vmem>>, vector<1x64xbf16>
    %c0_235 = arith.constant 0 : index
    %c448 = arith.constant 448 : index
    %438 = vector.load %arg17[%c0_235, %c448] : memref<1x1024xbf16, #tpu.memory_space<vmem>>, vector<1x64xbf16>
    tpu.vector_store %arg17[%c0_235, %c448], %437 {strides = array<i32>} : memref<1x1024xbf16, #tpu.memory_space<vmem>>, vector<1x64xbf16>,
    %c8_236 = arith.constant 8 : index
    %c0_237 = arith.constant 0 : index
    %439 = vector.load %arg16[%c8_236, %c0_237] : memref<16x64xbf16, #tpu.memory_space<vmem>>, vector<1x64xbf16>
    %c0_238 = arith.constant 0 : index
    %c512 = arith.constant 512 : index
    %440 = vector.load %arg17[%c0_238, %c512] : memref<1x1024xbf16, #tpu.memory_space<vmem>>, vector<1x64xbf16>
    tpu.vector_store %arg17[%c0_238, %c512], %439 {strides = array<i32>} : memref<1x1024xbf16, #tpu.memory_space<vmem>>, vector<1x64xbf16>,
    %c9 = arith.constant 9 : index
    %c0_239 = arith.constant 0 : index
    %441 = vector.load %arg16[%c9, %c0_239] : memref<16x64xbf16, #tpu.memory_space<vmem>>, vector<1x64xbf16>
    %c0_240 = arith.constant 0 : index
    %c576 = arith.constant 576 : index
    %442 = vector.load %arg17[%c0_240, %c576] : memref<1x1024xbf16, #tpu.memory_space<vmem>>, vector<1x64xbf16>
    tpu.vector_store %arg17[%c0_240, %c576], %441 {strides = array<i32>} : memref<1x1024xbf16, #tpu.memory_space<vmem>>, vector<1x64xbf16>,
    %c10 = arith.constant 10 : index
    %c0_241 = arith.constant 0 : index
    %443 = vector.load %arg16[%c10, %c0_241] : memref<16x64xbf16, #tpu.memory_space<vmem>>, vector<1x64xbf16>
    %c0_242 = arith.constant 0 : index
    %c640 = arith.constant 640 : index
    %444 = vector.load %arg17[%c0_242, %c640] : memref<1x1024xbf16, #tpu.memory_space<vmem>>, vector<1x64xbf16>
    tpu.vector_store %arg17[%c0_242, %c640], %443 {strides = array<i32>} : memref<1x1024xbf16, #tpu.memory_space<vmem>>, vector<1x64xbf16>,
    %c11 = arith.constant 11 : index
    %c0_243 = arith.constant 0 : index
    %445 = vector.load %arg16[%c11, %c0_243] : memref<16x64xbf16, #tpu.memory_space<vmem>>, vector<1x64xbf16>
    %c0_244 = arith.constant 0 : index
    %c704 = arith.constant 704 : index
    %446 = vector.load %arg17[%c0_244, %c704] : memref<1x1024xbf16, #tpu.memory_space<vmem>>, vector<1x64xbf16>
    tpu.vector_store %arg17[%c0_244, %c704], %445 {strides = array<i32>} : memref<1x1024xbf16, #tpu.memory_space<vmem>>, vector<1x64xbf16>,
    %c12 = arith.constant 12 : index
    %c0_245 = arith.constant 0 : index
    %447 = vector.load %arg16[%c12, %c0_245] : memref<16x64xbf16, #tpu.memory_space<vmem>>, vector<1x64xbf16>
    %c0_246 = arith.constant 0 : index
    %c768 = arith.constant 768 : index
    %448 = vector.load %arg17[%c0_246, %c768] : memref<1x1024xbf16, #tpu.memory_space<vmem>>, vector<1x64xbf16>
    tpu.vector_store %arg17[%c0_246, %c768], %447 {strides = array<i32>} : memref<1x1024xbf16, #tpu.memory_space<vmem>>, vector<1x64xbf16>,
    %c13 = arith.constant 13 : index
    %c0_247 = arith.constant 0 : index
    %449 = vector.load %arg16[%c13, %c0_247] : memref<16x64xbf16, #tpu.memory_space<vmem>>, vector<1x64xbf16>
    %c0_248 = arith.constant 0 : index
    %c832 = arith.constant 832 : index
    %450 = vector.load %arg17[%c0_248, %c832] : memref<1x1024xbf16, #tpu.memory_space<vmem>>, vector<1x64xbf16>
    tpu.vector_store %arg17[%c0_248, %c832], %449 {strides = array<i32>} : memref<1x1024xbf16, #tpu.memory_space<vmem>>, vector<1x64xbf16>,
    %c14 = arith.constant 14 : index
    %c0_249 = arith.constant 0 : index
    %451 = vector.load %arg16[%c14, %c0_249] : memref<16x64xbf16, #tpu.memory_space<vmem>>, vector<1x64xbf16>
    %c0_250 = arith.constant 0 : index
    %c896 = arith.constant 896 : index
    %452 = vector.load %arg17[%c0_250, %c896] : memref<1x1024xbf16, #tpu.memory_space<vmem>>, vector<1x64xbf16>
    tpu.vector_store %arg17[%c0_250, %c896], %451 {strides = array<i32>} : memref<1x1024xbf16, #tpu.memory_space<vmem>>, vector<1x64xbf16>,
    %c15 = arith.constant 15 : index
    %c0_251 = arith.constant 0 : index
    %453 = vector.load %arg16[%c15, %c0_251] : memref<16x64xbf16, #tpu.memory_space<vmem>>, vector<1x64xbf16>
    %c0_252 = arith.constant 0 : index
    %c960 = arith.constant 960 : index
    %454 = vector.load %arg17[%c0_252, %c960] : memref<1x1024xbf16, #tpu.memory_space<vmem>>, vector<1x64xbf16>
    tpu.vector_store %arg17[%c0_252, %c960], %453 {strides = array<i32>} : memref<1x1024xbf16, #tpu.memory_space<vmem>>, vector<1x64xbf16>,
    %c0_253 = arith.constant 0 : index
    %c0_254 = arith.constant 0 : index
    %455 = vector.load %arg17[%c0_253, %c0_254] : memref<1x1024xbf16, #tpu.memory_space<vmem>>, vector<1x1024xbf16>
    %c0_255 = arith.constant 0 : index
    %c0_256 = arith.constant 0 : index
    %456 = vector.load %arg7[%c0_255, %c0_256] : memref<1024x64xbf16, #tpu.memory_space<vmem>>, vector<1024x64xbf16>
    %cst_257 = arith.constant dense<0.000000e+00> : vector<1x64xf32>
    %457 = tpu.matmul %455, %456, %cst_257 {dimension_numbers = #tpu.dot_dimension_numbers<[1], [0], [0], [1], [0, 0, 1, 1], [], []>} : vector<1x1024xbf16>, vector<1024x64xbf16>, vector<1x64xf32> -> vector<1x64xf32>
    %c0_258 = arith.constant 0 : index
    %c0_259 = arith.constant 0 : index
    %458 = vector.load %arg8[%c0_258, %c0_259] : memref<1x64xf32, #tpu.memory_space<vmem>>, vector<1x64xf32>
    %459 = arith.addf %457, %458 : vector<1x64xf32>
    %cst_260 = arith.constant 0.000000e+00 : f32
    %460 = vector.broadcast %cst_260 : f32 to vector<1x64xf32>
    %461 = arith.maximumf %459, %460 : vector<1x64xf32>
    %462 = arith.truncf %461 : vector<1x64xf32> to vector<1x64xbf16>
    %c0_261 = arith.constant 0 : index
    %c0_262 = arith.constant 0 : index
    %463 = vector.load %arg9[%c0_261, %c0_262] : memref<64x10xbf16, #tpu.memory_space<vmem>>, vector<64x10xbf16>
    %cst_263 = arith.constant dense<0.000000e+00> : vector<1x10xf32>
    %464 = tpu.matmul %462, %463, %cst_263 {dimension_numbers = #tpu.dot_dimension_numbers<[1], [0], [0], [1], [0, 0, 1, 1], [], []>} : vector<1x64xbf16>, vector<64x10xbf16>, vector<1x10xf32> -> vector<1x10xf32>
    %c0_264 = arith.constant 0 : index
    %c0_265 = arith.constant 0 : index
    %465 = vector.load %arg10[%c0_264, %c0_265] : memref<1x10xf32, #tpu.memory_space<vmem>>, vector<1x10xf32>
    %466 = arith.addf %464, %465 : vector<1x10xf32>
    %c0_266 = arith.constant 0 : index
    %c0_267 = arith.constant 0 : index
    %c0_268 = arith.constant 0 : index
    %467 = vector.load %arg11[%c0_266, %c0_267, %c0_268] : memref<1x1x10xf32, #tpu.memory_space<vmem>>, vector<1x1x10xf32>
    %468 = vector.shape_cast %467 : vector<1x1x10xf32> to vector<1x10xf32>
    %469 = vector.shape_cast %466 : vector<1x10xf32> to vector<1x1x10xf32>
    tpu.vector_store %arg11[%c0_266, %c0_267, %c0_268], %469 {strides = array<i32>} : memref<1x1x10xf32, #tpu.memory_space<vmem>>, vector<1x1x10xf32>,
    return
  }
  func.func @transform_0(%arg0: i32) -> (i32, i32, i32) {
    %c0_i32 = arith.constant 0 : i32
    %c0_i32_0 = arith.constant 0 : i32
    %c0_i32_1 = arith.constant 0 : i32
    return %arg0, %c0_i32, %c0_i32_0 : i32, i32, i32
  }
  func.func @transform_1(%arg0: i32) -> (i32, i32, i32) {
    %c0_i32 = arith.constant 0 : i32
    %c0_i32_0 = arith.constant 0 : i32
    %c0_i32_1 = arith.constant 0 : i32
    %c0_i32_2 = arith.constant 0 : i32
    return %c0_i32, %c0_i32_0, %c0_i32_1 : i32, i32, i32
  }
  func.func @transform_2(%arg0: i32) -> (i32, i32) {
    %c0_i32 = arith.constant 0 : i32
    %c0_i32_0 = arith.constant 0 : i32
    %c0_i32_1 = arith.constant 0 : i32
    return %c0_i32, %c0_i32_0 : i32, i32
  }
  func.func @transform_3(%arg0: i32) -> (i32, i32, i32) {
    %c0_i32 = arith.constant 0 : i32
    %c0_i32_0 = arith.constant 0 : i32
    %c0_i32_1 = arith.constant 0 : i32
    %c0_i32_2 = arith.constant 0 : i32
    return %c0_i32, %c0_i32_0, %c0_i32_1 : i32, i32, i32
  }
  func.func @transform_4(%arg0: i32) -> (i32, i32) {
    %c0_i32 = arith.constant 0 : i32
    %c0_i32_0 = arith.constant 0 : i32
    %c0_i32_1 = arith.constant 0 : i32
    return %c0_i32, %c0_i32_0 : i32, i32
  }
  func.func @transform_5(%arg0: i32) -> (i32, i32) {
    %c0_i32 = arith.constant 0 : i32
    %c0_i32_0 = arith.constant 0 : i32
    %c0_i32_1 = arith.constant 0 : i32
    return %c0_i32, %c0_i32_0 : i32, i32
  }
  func.func @transform_6(%arg0: i32) -> (i32, i32) {
    %c0_i32 = arith.constant 0 : i32
    %c0_i32_0 = arith.constant 0 : i32
    %c0_i32_1 = arith.constant 0 : i32
    return %c0_i32, %c0_i32_0 : i32, i32
  }
  func.func @transform_7(%arg0: i32) -> (i32, i32) {
    %c0_i32 = arith.constant 0 : i32
    %c0_i32_0 = arith.constant 0 : i32
    %c0_i32_1 = arith.constant 0 : i32
    return %c0_i32, %c0_i32_0 : i32, i32
  }
  func.func @transform_8(%arg0: i32) -> (i32, i32) {
    %c0_i32 = arith.constant 0 : i32
    %c0_i32_0 = arith.constant 0 : i32
    %c0_i32_1 = arith.constant 0 : i32
    return %c0_i32, %c0_i32_0 : i32, i32
  }
  func.func @transform_9(%arg0: i32) -> (i32, i32) {
    %c0_i32 = arith.constant 0 : i32
    %c0_i32_0 = arith.constant 0 : i32
    %c0_i32_1 = arith.constant 0 : i32
    return %c0_i32, %c0_i32_0 : i32, i32
  }
  func.func @transform_10(%arg0: i32) -> (i32, i32, i32) {
    %c0_i32 = arith.constant 0 : i32
    %c0_i32_0 = arith.constant 0 : i32
    %c0_i32_1 = arith.constant 0 : i32
    return %arg0, %c0_i32, %c0_i32_0 : i32, i32, i32
  }
}

</mosaic_0001>

<llo_original>
// kernel: cnn_forward.1
$region0: #{cnn_forward.1}
  #allocation0 [shape = 'u32[]', space=smem, size = 0x4, offset = 0x4, fixed_abs, tag = 'smem constant byte address 0x4 - core index']
  #allocation1 [shape = 'u32[144,128]{1,0:T(1,128)}', space=vmem, size = 0x12000, scoped, tag = 'internal scratch']
  #allocation2 [shape = 'bf16[3,1152]{1,0:T(4,128)(2,1)}', space=vmem, size = 0x2400, scoped, tag = 'scratch operand']
  #allocation3 [shape = 'f32[8,1152]{1,0:T(8,128)}', space=vmem, size = 0x9000, scoped, tag = 'scratch operand']
  #allocation4 [shape = 'bf16[8,1280]{1,0:T(8,128)(2,1)}', space=vmem, size = 0x5000, scoped, tag = 'scratch operand']
  #allocation5 [shape = 'f32[16,1152]{1,0:T(8,128)}', space=vmem, size = 0x12000, scoped, tag = 'scratch operand']
  #allocation6 [shape = 'bf16[16,64]{1,0:T(16,128)(2,1)}', space=vmem, size = 0x1000, scoped, tag = 'scratch operand']
  #allocation7 [shape = 'bf16[1,1024]{1,0:T(2,128)(2,1)}', space=vmem, size = 0x1000, scoped, tag = 'scratch operand']
  %s0 = inlined_call_operand.vmem [shape: f32[2,3,1024], index: 0, kind: input, shape index: {}]
  %s1 = inlined_call_operand.vmem [shape: bf16[9,8,3], index: 1, kind: input, shape index: {}]
  %s2 = inlined_call_operand.vmem [shape: f32[8,1], index: 2, kind: input, shape index: {}]
  %s3 = inlined_call_operand.vmem [shape: bf16[9,16,8], index: 3, kind: input, shape index: {}]
  %s4 = inlined_call_operand.vmem [shape: f32[16,1], index: 4, kind: input, shape index: {}]
  %s5 = inlined_call_operand.vmem [shape: bf16[1024,64], index: 5, kind: input, shape index: {}]
  %s6 = inlined_call_operand.vmem [shape: bf16[1024,64], index: 6, kind: input, shape index: {}]
  %s7 = inlined_call_operand.vmem [shape: f32[1,64], index: 7, kind: input, shape index: {}]
  %s8 = inlined_call_operand.vmem [shape: bf16[64,10], index: 8, kind: input, shape index: {}]
  %s9 = inlined_call_operand.vmem [shape: f32[1,10], index: 9, kind: input, shape index: {}]
  %s10 = inlined_call_operand.hbm [shape: f32[2,1,10], index: 10, kind: output, shape index: {}]
  %s11 = sld [smem:[#allocation0]]
  $region73: #{cnn_forward.1} parent=0
    _
  %s13 = ssub.s32 1, %s11
  %s14 = scalar_select 0, %s13, %s11
  $region1: #{cnn_forward.1} parent=0
    #allocation8 [shape = 'u8[1024]{0}', space=vmem, size = 0x400, scoped, tag = 'output window, operand 0']
    #allocation9 [shape = 's32[2]{0}', space=sflag, size = 0x8, scoped, tag = 'scoped memory for cnn_forward.1']
    %15 = vsyncpa [#allocation9], 0
    %s16 = scalar_lea.sflag [#allocation9], 1
    %17 = vsyncpa %s16, 0
    loop: start=0, step=1, limit=4
    $region2: #{cnn_forward.1} parent=1 // loop_pre_header
      _
    $region3: #{cnn_forward.1} parent=1 // loop_header
      %s19 = sphi 0, %s23
      %p20 = scmp.ge.s32.totalorder %s19, 4
      %s29 = sphi 0, %s31
      %s32 = sphi 0, %s29
      %s33 = sphi 0, %s32
      %s49 = sphi 0, %s33
      %s53 = sphi 0, %s53
      %s55 = sphi 0, %s53
      %s56 = sphi 0, %s55
      %s70 = sphi 0, %s56
      %s74 = sphi 0, %s74
      %s76 = sphi 0, %s74
      %s77 = sphi 0, %s76
      %s91 = sphi 0, %s77
      %s95 = sphi 0, %s95
      %s97 = sphi 0, %s95
      %s98 = sphi 0, %s97
      %s112 = sphi 0, %s98
      %s116 = sphi 0, %s116
      %s118 = sphi 0, %s116
      %s119 = sphi 0, %s118
      %s133 = sphi 0, %s119
      %s137 = sphi 0, %s137
      %s139 = sphi 0, %s137
      %s140 = sphi 0, %s139
      %s154 = sphi 0, %s140
      %s158 = sphi 0, %s158
      %s160 = sphi 0, %s158
      %s161 = sphi 0, %s160
      %s175 = sphi 0, %s161
      %s179 = sphi 0, %s179
      %s181 = sphi 0, %s179
      %s182 = sphi 0, %s181
      %s196 = sphi 0, %s182
      %s200 = sphi 0, %s200
      %s202 = sphi 0, %s200
      %s203 = sphi 0, %s202
      %s217 = sphi 0, %s203
      %s221 = sphi 0, %s221
      %s223 = sphi 0, %s221
      %s224 = sphi 0, %s223
      %s238 = sphi 0, %s224
      %s244 = sphi 0, %s246
      %s247 = sphi 0, %s244
      %s248 = sphi 0, %s247
      %s264 = sphi 0, %s248
    $region4: #{cnn_forward.1} parent=1 // loop_header_branch
      %22 = sbr.rel (%p20) target = $region8
    $region5: #{cnn_forward.1} parent=1 // loop_body
      %s24 = ssub.s32 %s19, 1
      %s25 = ssub.s32 %s19, 2
      %s26 = sadd.s32 %s19, 1
      %s27 = ssub.s32 %s19, %s26
      %p28 = scmp.eq.s32.totalorder %s27, 0
      %s30 = sadd.s32 %s29, 1
      %s31 = scalar_select %p28, %s29, %s30
      %p34 = pneg %p28
      %p35 = scmp.eq.s32.totalorder %s19, 1
      %p36 = por %p34, %p35
      %p37 = scmp.ne.s32.totalorder %s29, %s32
      %p38 = scmp.eq.s32.totalorder %s19, 0
      %p39 = por %p37, %p38
      %p40 = scmp.ne.s32.totalorder %s29, %s32
      %p41 = scmp.eq.s32.totalorder %s24, 1
      %p42 = por %p40, %p41
      %p43 = scmp.ne.s32.totalorder %s32, %s33
      %p44 = scmp.eq.s32.totalorder %s24, 0
      %p45 = por %p43, %p44
      %p46 = scmp.ne.s32.totalorder %s32, %s33
      %p47 = scmp.eq.s32.totalorder %s25, 1
      %p48 = por %p46, %p47
      %p50 = scmp.ne.s32.totalorder %s33, %s49
      %p51 = scmp.eq.s32.totalorder %s25, 0
      %p52 = por %p50, %p51
      %s54 = sadd.s32 %s53, 1
      %p57 = scmp.eq.s32.totalorder %s19, 1
      %p58 = scmp.ne.s32.totalorder %s53, %s55
      %p59 = scmp.eq.s32.totalorder %s19, 0
      %p60 = por %p58, %p59
      %p61 = scmp.ne.s32.totalorder %s53, %s55
      %p62 = scmp.eq.s32.totalorder %s24, 1
      %p63 = por %p61, %p62
      %p64 = scmp.ne.s32.totalorder %s55, %s56
      %p65 = scmp.eq.s32.totalorder %s24, 0
      %p66 = por %p64, %p65
      %p67 = scmp.ne.s32.totalorder %s55, %s56
      %p68 = scmp.eq.s32.totalorder %s25, 1
      %p69 = por %p67, %p68
      %p71 = scmp.ne.s32.totalorder %s56, %s70
      %p72 = scmp.eq.s32.totalorder %s25, 0
      %p73 = por %p71, %p72
      %s75 = sadd.s32 %s74, 1
      %p78 = scmp.eq.s32.totalorder %s19, 1
      %p79 = scmp.ne.s32.totalorder %s74, %s76
      %p80 = scmp.eq.s32.totalorder %s19, 0
      %p81 = por %p79, %p80
      %p82 = scmp.ne.s32.totalorder %s74, %s76
      %p83 = scmp.eq.s32.totalorder %s24, 1
      %p84 = por %p82, %p83
      %p85 = scmp.ne.s32.totalorder %s76, %s77
      %p86 = scmp.eq.s32.totalorder %s24, 0
      %p87 = por %p85, %p86
      %p88 = scmp.ne.s32.totalorder %s76, %s77
      %p89 = scmp.eq.s32.totalorder %s25, 1
      %p90 = por %p88, %p89
      %p92 = scmp.ne.s32.totalorder %s77, %s91
      %p93 = scmp.eq.s32.totalorder %s25, 0
      %p94 = por %p92, %p93
      %s96 = sadd.s32 %s95, 1
      %p99 = scmp.eq.s32.totalorder %s19, 1
      %p100 = scmp.ne.s32.totalorder %s95, %s97
      %p101 = scmp.eq.s32.totalorder %s19, 0
      %p102 = por %p100, %p101
      %p103 = scmp.ne.s32.totalorder %s95, %s97
      %p104 = scmp.eq.s32.totalorder %s24, 1
      %p105 = por %p103, %p104
      %p106 = scmp.ne.s32.totalorder %s97, %s98
      %p107 = scmp.eq.s32.totalorder %s24, 0
      %p108 = por %p106, %p107
      %p109 = scmp.ne.s32.totalorder %s97, %s98
      %p110 = scmp.eq.s32.totalorder %s25, 1
      %p111 = por %p109, %p110
      %p113 = scmp.ne.s32.totalorder %s98, %s112
      %p114 = scmp.eq.s32.totalorder %s25, 0
      %p115 = por %p113, %p114
      %s117 = sadd.s32 %s116, 1
      %p120 = scmp.eq.s32.totalorder %s19, 1
      %p121 = scmp.ne.s32.totalorder %s116, %s118
      %p122 = scmp.eq.s32.totalorder %s19, 0
      %p123 = por %p121, %p122
      %p124 = scmp.ne.s32.totalorder %s116, %s118
      %p125 = scmp.eq.s32.totalorder %s24, 1
      %p126 = por %p124, %p125
      %p127 = scmp.ne.s32.totalorder %s118, %s119
      %p128 = scmp.eq.s32.totalorder %s24, 0
      %p129 = por %p127, %p128
      %p130 = scmp.ne.s32.totalorder %s118, %s119
      %p131 = scmp.eq.s32.totalorder %s25, 1
      %p132 = por %p130, %p131
      %p134 = scmp.ne.s32.totalorder %s119, %s133
      %p135 = scmp.eq.s32.totalorder %s25, 0
      %p136 = por %p134, %p135
      %s138 = sadd.s32 %s137, 1
      %p141 = scmp.eq.s32.totalorder %s19, 1
      %p142 = scmp.ne.s32.totalorder %s137, %s139
      %p143 = scmp.eq.s32.totalorder %s19, 0
      %p144 = por %p142, %p143
      %p145 = scmp.ne.s32.totalorder %s137, %s139
      %p146 = scmp.eq.s32.totalorder %s24, 1
      %p147 = por %p145, %p146
      %p148 = scmp.ne.s32.totalorder %s139, %s140
      %p149 = scmp.eq.s32.totalorder %s24, 0
      %p150 = por %p148, %p149
      %p151 = scmp.ne.s32.totalorder %s139, %s140
      %p152 = scmp.eq.s32.totalorder %s25, 1
      %p153 = por %p151, %p152
      %p155 = scmp.ne.s32.totalorder %s140, %s154
      %p156 = scmp.eq.s32.totalorder %s25, 0
      %p157 = por %p155, %p156
      %s159 = sadd.s32 %s158, 1
      %p162 = scmp.eq.s32.totalorder %s19, 1
      %p163 = scmp.ne.s32.totalorder %s158, %s160
      %p164 = scmp.eq.s32.totalorder %s19, 0
      %p165 = por %p163, %p164
      %p166 = scmp.ne.s32.totalorder %s158, %s160
      %p167 = scmp.eq.s32.totalorder %s24, 1
      %p168 = por %p166, %p167
      %p169 = scmp.ne.s32.totalorder %s160, %s161
      %p170 = scmp.eq.s32.totalorder %s24, 0
      %p171 = por %p169, %p170
      %p172 = scmp.ne.s32.totalorder %s160, %s161
      %p173 = scmp.eq.s32.totalorder %s25, 1
      %p174 = por %p172, %p173
      %p176 = scmp.ne.s32.totalorder %s161, %s175
      %p177 = scmp.eq.s32.totalorder %s25, 0
      %p178 = por %p176, %p177
      %s180 = sadd.s32 %s179, 1
      %p183 = scmp.eq.s32.totalorder %s19, 1
      %p184 = scmp.ne.s32.totalorder %s179, %s181
      %p185 = scmp.eq.s32.totalorder %s19, 0
      %p186 = por %p184, %p185
      %p187 = scmp.ne.s32.totalorder %s179, %s181
      %p188 = scmp.eq.s32.totalorder %s24, 1
      %p189 = por %p187, %p188
      %p190 = scmp.ne.s32.totalorder %s181, %s182
      %p191 = scmp.eq.s32.totalorder %s24, 0
      %p192 = por %p190, %p191
      %p193 = scmp.ne.s32.totalorder %s181, %s182
      %p194 = scmp.eq.s32.totalorder %s25, 1
      %p195 = por %p193, %p194
      %p197 = scmp.ne.s32.totalorder %s182, %s196
      %p198 = scmp.eq.s32.totalorder %s25, 0
      %p199 = por %p197, %p198
      %s201 = sadd.s32 %s200, 1
      %p204 = scmp.eq.s32.totalorder %s19, 1
      %p205 = scmp.ne.s32.totalorder %s200, %s202
      %p206 = scmp.eq.s32.totalorder %s19, 0
      %p207 = por %p205, %p206
      %p208 = scmp.ne.s32.totalorder %s200, %s202
      %p209 = scmp.eq.s32.totalorder %s24, 1
      %p210 = por %p208, %p209
      %p211 = scmp.ne.s32.totalorder %s202, %s203
      %p212 = scmp.eq.s32.totalorder %s24, 0
      %p213 = por %p211, %p212
      %p214 = scmp.ne.s32.totalorder %s202, %s203
      %p215 = scmp.eq.s32.totalorder %s25, 1
      %p216 = por %p214, %p215
      %p218 = scmp.ne.s32.totalorder %s203, %s217
      %p219 = scmp.eq.s32.totalorder %s25, 0
      %p220 = por %p218, %p219
      %s222 = sadd.s32 %s221, 1
      %p225 = scmp.eq.s32.totalorder %s19, 1
      %p226 = scmp.ne.s32.totalorder %s221, %s223
      %p227 = scmp.eq.s32.totalorder %s19, 0
      %p228 = por %p226, %p227
      %p229 = scmp.ne.s32.totalorder %s221, %s223
      %p230 = scmp.eq.s32.totalorder %s24, 1
      %p231 = por %p229, %p230
      %p232 = scmp.ne.s32.totalorder %s223, %s224
      %p233 = scmp.eq.s32.totalorder %s24, 0
      %p234 = por %p232, %p233
      %p235 = scmp.ne.s32.totalorder %s223, %s224
      %p236 = scmp.eq.s32.totalorder %s25, 1
      %p237 = por %p235, %p236
      %p239 = scmp.ne.s32.totalorder %s224, %s238
      %p240 = scmp.eq.s32.totalorder %s25, 0
      %p241 = por %p239, %p240
      %s242 = ssub.s32 %s19, %s26
      %p243 = scmp.eq.s32.totalorder %s242, 0
      %s245 = sadd.s32 %s244, 1
      %s246 = scalar_select %p243, %s244, %s245
      %p249 = pneg %p243
      %p250 = scmp.eq.s32.totalorder %s19, 1
      %p251 = por %p249, %p250
      %p252 = scmp.ne.s32.totalorder %s244, %s247
      %p253 = scmp.eq.s32.totalorder %s19, 0
      %p254 = por %p252, %p253
      %p255 = scmp.ne.s32.totalorder %s244, %s247
      %p256 = scmp.eq.s32.totalorder %s24, 1
      %p257 = por %p255, %p256
      %p258 = scmp.ne.s32.totalorder %s247, %s248
      %p259 = scmp.eq.s32.totalorder %s24, 0
      %p260 = por %p258, %p259
      %p261 = scmp.ne.s32.totalorder %s247, %s248
      %p262 = scmp.eq.s32.totalorder %s25, 1
      %p263 = por %p261, %p262
      %p265 = scmp.ne.s32.totalorder %s248, %s264
      %p266 = scmp.eq.s32.totalorder %s25, 0
      %p267 = por %p265, %p266
      %p268 = scmp.le.s32.totalorder 1, %s19
      %p269 = scmp.lt.s32.totalorder %s19, 3
      %p270 = pnand %p268, %p269
      %p271 = pneg %p270
      // Predicated region
      $region9: #{cnn_forward.1} parent=5 // pred_check
        _
      $region10: #{cnn_forward.1} parent=5 // pred_check_branch
        %273 = sbr.rel (%p270) target = $region12
      $region11: #{cnn_forward.1} parent=5 // pred_region
        %s274 = ssub.s32 %s19, 1
        // Predicated region
        $region13: #{cnn_forward.1} parent=11 // pred_check
          %p275 = pneg %p66
        $region14: #{cnn_forward.1} parent=11 // pred_check_branch
          %277 = sbr.rel (%p275) target = $region16
        $region15: #{cnn_forward.1} parent=11 // pred_region
          _
        $region16: #{cnn_forward.1} parent=11 // pred_fallthru
          _
        // Predicated region
        $region17: #{cnn_forward.1} parent=11 // pred_check
          %p278 = pneg %p87
        $region18: #{cnn_forward.1} parent=11 // pred_check_branch
          %280 = sbr.rel (%p278) target = $region20
        $region19: #{cnn_forward.1} parent=11 // pred_region
          _
        $region20: #{cnn_forward.1} parent=11 // pred_fallthru
          _
        // Predicated region
        $region21: #{cnn_forward.1} parent=11 // pred_check
          %p281 = pneg %p108
        $region22: #{cnn_forward.1} parent=11 // pred_check_branch
          %283 = sbr.rel (%p281) target = $region24
        $region23: #{cnn_forward.1} parent=11 // pred_region
          _
        $region24: #{cnn_forward.1} parent=11 // pred_fallthru
          _
        // Predicated region
        $region25: #{cnn_forward.1} parent=11 // pred_check
          %p284 = pneg %p129
        $region26: #{cnn_forward.1} parent=11 // pred_check_branch
          %286 = sbr.rel (%p284) target = $region28
        $region27: #{cnn_forward.1} parent=11 // pred_region
          _
        $region28: #{cnn_forward.1} parent=11 // pred_fallthru
          _
        // Predicated region
        $region29: #{cnn_forward.1} parent=11 // pred_check
          %p287 = pneg %p150
        $region30: #{cnn_forward.1} parent=11 // pred_check_branch
          %289 = sbr.rel (%p287) target = $region32
        $region31: #{cnn_forward.1} parent=11 // pred_region
          _
        $region32: #{cnn_forward.1} parent=11 // pred_fallthru
          _
        // Predicated region
        $region33: #{cnn_forward.1} parent=11 // pred_check
          %p290 = pneg %p171
        $region34: #{cnn_forward.1} parent=11 // pred_check_branch
          %292 = sbr.rel (%p290) target = $region36
        $region35: #{cnn_forward.1} parent=11 // pred_region
          _
        $region36: #{cnn_forward.1} parent=11 // pred_fallthru
          _
        // Predicated region
        $region37: #{cnn_forward.1} parent=11 // pred_check
          %p293 = pneg %p192
        $region38: #{cnn_forward.1} parent=11 // pred_check_branch
          %295 = sbr.rel (%p293) target = $region40
        $region39: #{cnn_forward.1} parent=11 // pred_region
          _
        $region40: #{cnn_forward.1} parent=11 // pred_fallthru
          _
        // Predicated region
        $region41: #{cnn_forward.1} parent=11 // pred_check
          %p296 = pneg %p213
        $region42: #{cnn_forward.1} parent=11 // pred_check_branch
          %298 = sbr.rel (%p296) target = $region44
        $region43: #{cnn_forward.1} parent=11 // pred_region
          _
        $region44: #{cnn_forward.1} parent=11 // pred_fallthru
          _
        // Predicated region
        $region45: #{cnn_forward.1} parent=11 // pred_check
          %p299 = pneg %p234
        $region46: #{cnn_forward.1} parent=11 // pred_check_branch
          %301 = sbr.rel (%p299) target = $region48
        $region47: #{cnn_forward.1} parent=11 // pred_region
          _
        $region48: #{cnn_forward.1} parent=11 // pred_fallthru
          _
      $region12: #{cnn_forward.1} parent=5 // pred_fallthru
        _
      %p302 = scmp.lt.s32.totalorder %s19, 2
      // Predicated region
      $region49: #{cnn_forward.1} parent=5 // pred_check
        %p303 = pneg %p302
      $region50: #{cnn_forward.1} parent=5 // pred_check_branch
        %305 = sbr.rel (%p303) target = $region52
      $region51: #{cnn_forward.1} parent=5 // pred_region
        // Predicated region
        $region53: #{cnn_forward.1} parent=51 // pred_check
          %p306 = pneg %p39
        $region54: #{cnn_forward.1} parent=51 // pred_check_branch
          %308 = sbr.rel (%p306) target = $region56
        $region55: #{cnn_forward.1} parent=51 // pred_region
          %p309 = scmp.lt.s32.totalorder %s19, 1
          %s310 = scalar_select %p309, %s19, 1
          %s311 = smul.addr %s310, 8
          %s312 = smul.addr %s311, 4
          %s313 = scalar_lea.vmem %s0, %s312
        $region56: #{cnn_forward.1} parent=51 // pred_fallthru
          _
      $region52: #{cnn_forward.1} parent=5 // pred_fallthru
        _
      %p314 = scmp.le.s32.totalorder 1, %s19
      %p315 = scmp.lt.s32.totalorder %s19, 3
      %p316 = pnand %p314, %p315
      %p317 = pneg %p316
      // Predicated region
      $region57: #{cnn_forward.1} parent=5 // pred_check
        _
      $region58: #{cnn_forward.1} parent=5 // pred_check_branch
        %319 = sbr.rel (%p316) target = $region60
      $region59: #{cnn_forward.1} parent=5 // pred_region
        %s320 = ssub.s32 %s19, 1
        %p321 = scmp.lt.s32.totalorder %s24, 1
        %s322 = scalar_select %p321, %s24, 1
        %s323 = smul.addr %s322, 8
        %s324 = smul.addr %s323, 4
        %s325 = scalar_lea.vmem %s0, %s324
        %p326 = pneg %p45
        %p327 = pneg %p42
        %p328 = pneg %p66
        %p329 = pneg %p63
        %p330 = pneg %p87
        %p331 = pneg %p84
        %p332 = pneg %p108
        %p333 = pneg %p105
        %p334 = pneg %p129
        %p335 = pneg %p126
        %p336 = pneg %p150
        %p337 = pneg %p147
        %p338 = pneg %p171
        %p339 = pneg %p168
        %p340 = pneg %p192
        %p341 = pneg %p189
        %p342 = pneg %p213
        %p343 = pneg %p210
        %p344 = pneg %p234
        %p345 = pneg %p231
        %p346 = pneg %p260
        %p347 = pneg %p257
        %s348 = sand.u32 %s247, 1
        %s349 = scalar_lea.sflag [#allocation9], %s348
        %s350 = sand.u32 %s247, 1
        %s351 = scalar_lea.vmem [#allocation8], %s350
        %p352 = scmp.lt.s32.totalorder %s24, 1
        %s353 = scalar_select %p352, %s24, 1
        %s354 = smul.addr %s353, 8
        %s355 = smul.addr %s354, 4
        %s356 = scalar_lea.vmem %s0, %s355
        %vm358 = vcmask 1041408
        %vm359 = vsmask.f32 1280
        %vm360 = vmand %vm358, %vm359
        %vm361 = vcmask 1043458
        %vm362 = vsmask.f32 3328
        %vm363 = vmand %vm361, %vm362
        %vm364 = vmor %vm363, %vm360
        %vm365 = vcmask 1045508
        %vm366 = vsmask.f32 5376
        %vm367 = vmand %vm365, %vm366
        %vm368 = vmor %vm367, %vm364
        %vm369 = vcmask 1047558
        %vm370 = vsmask.f32 7424
        %vm371 = vmand %vm369, %vm370
        %vm372 = vmor %vm371, %vm368
        %v373 = vld [vmem:[#allocation2] sm:$0xff]
        %v374 = vsel %vm372, 0, %v373
        %375 = vst [vmem:[#allocation2] sm:$0xff] %v374
        %v376 = vld [vmem:[#allocation2 + $0x8] sm:$0xff]
        %v377 = vsel %vm372, 0, %v376
        %378 = vst [vmem:[#allocation2 + $0x8] sm:$0xff] %v377
        %v379 = vld [vmem:[#allocation2 + $0x10] sm:$0x3]
        %v380 = vsel %vm360, 0, %v379
        %381 = vst [vmem:[#allocation2 + $0x10] sm:$0x3] %v380
        %v382 = vld [vmem:[%s356] sm:$0x77]
        %v383 = vld [vmem:[%s356 + $0x8] sm:$0x77]
        %v384 = vld [vmem:[%s356 + $0x10] sm:$0x77]
        %v385 = vld [vmem:[%s356 + $0x18] sm:$0x77]
        %v390 = vcombine.high %v382, %v382
        %v391 = vcombine.high %v383, %v383
        %v392 = vcombine.high %v384, %v384
        %v393 = vcombine.high %v385, %v385
        %v398 = vpack.c.bf16 %v382, %v382
        %v399 = vpack.c.bf16 %v390, %v390
        %v400 = vpack.c.bf16 %v383, %v383
        %v401 = vpack.c.bf16 %v391, %v391
        %v402 = vpack.c.bf16 %v384, %v384
        %v403 = vpack.c.bf16 %v392, %v392
        %v404 = vpack.c.bf16 %v385, %v385
        %v405 = vpack.c.bf16 %v393, %v393
        %v414 = vcombine.low %v398, %v399
        %v415 = vcombine.low %v400, %v401
        %v417 = vunpack.c.l.s4 1983009808
        %v418 = vunpack.c.0.s8 %v417
        %v419 = vlaneseq
        %v420 = vshrl.u32 %v419, 7
        %v421 = vsub.s32 %v418, %v420
        %v422 = vrot.slane %v414, %v421
        %v424 = vunpack.c.l.s4 1983009808
        %v425 = vunpack.c.0.s8 %v424
        %v426 = vlaneseq
        %v427 = vshrl.u32 %v426, 7
        %v428 = vsub.s32 %v425, %v427
        %v429 = vrot.slane %v415, %v428
        %v430 = vcombine.low %v422, %v429
        %v431 = vcombine.low %v402, %v403
        %v432 = vcombine.low %v404, %v405
        %v434 = vunpack.c.l.s4 1983009808
        %v435 = vunpack.c.0.s8 %v434
        %v436 = vlaneseq
        %v437 = vshrl.u32 %v436, 7
        %v438 = vsub.s32 %v435, %v437
        %v439 = vrot.slane %v431, %v438
        %v441 = vunpack.c.l.s4 1983009808
        %v442 = vunpack.c.0.s8 %v441
        %v443 = vlaneseq
        %v444 = vshrl.u32 %v443, 7
        %v445 = vsub.s32 %v442, %v444
        %v446 = vrot.slane %v432, %v445
        %v447 = vcombine.low %v439, %v446
        %448 = vrot.lane.b32.xlu0 %v430, 64
        %v449 = vpop.permute.xlu0 %448
        %450 = vrot.lane.b32.xlu0 %v447, 64
        %v451 = vpop.permute.xlu0 %450
        %v452 = vrot.slane %v449, 6
        %v453 = vrot.slane %v451, 6
        %vm454 = vcmask 523264
        %v455 = vsel %vm454, %v452, %v449
        %v456 = vsel %vm358, %v452, %v453
        %v457 = vsel %vm454, %v456, %v451
        %vm461 = vcmask 1041920
        %vm462 = vmand %vm461, %vm359
        %vm463 = vmor %vm363, %vm462
        %vm464 = vmor %vm367, %vm463
        %vm465 = vmor %vm371, %vm464
        %v466 = vld [vmem:[#allocation2] sm:$0xff]
        %v467 = vsel %vm465, %v455, %v466
        %468 = vst [vmem:[#allocation2] sm:$0xff] %v467
        %v469 = vld [vmem:[#allocation2 + $0x8] sm:$0xff]
        %v470 = vsel %vm372, %v457, %v469
        %471 = vst [vmem:[#allocation2 + $0x8] sm:$0xff] %v470
        %vm472 = vcmask 517120
        %vm473 = vmand %vm472, %vm359
        %v474 = vld [vmem:[#allocation2 + $0x10] sm:$0x3]
        %v475 = vsel %vm473, %v453, %v474
        %476 = vst [vmem:[#allocation2 + $0x10] sm:$0x3] %v475
        %v477 = vld [vmem:[%s2] sm:$0xff]
        %479 = vset.pattern.permute.xlu0 0
        %480 = vperm.xlu0 %479, %v477
        %v481 = vpop.permute.xlu0 %480
        %v483 = vld [vmem:[#allocation2] sm:$0xff]
        %v484 = vld [vmem:[#allocation2 + $0x8] sm:$0xff]
        %v485 = vld [vmem:[#allocation2 + $0x10] sm:$0x3]
        %v486 = vlaneseq
        %v487 = vand.u32 %v486, 127
        %v488 = vadd.s32 %v487, 128
        %v489 = vadd.s32 %v487, 256
        %v490 = vadd.s32 %v487, 384
        %v491 = vadd.s32 %v487, 512
        %v492 = vadd.s32 %v487, 640
        %v493 = vadd.s32 %v487, 768
        %v494 = vadd.s32 %v487, 896
        %vm495 = vcmp.lt.s32.totalorder %v487, 0
        %v496 = vsub.s32 0, %v487
        %v497 = vsel %vm495, %v496, %v487
        %v498 = vshrl.u32 %v497, 5
        %v499 = vand.u32 %v497, 31
        %v500 = vsub.s32 0, %v499
        %v501 = vsel %vm495, %v500, %v499
        %vm502 = vcmp.lt.s32.totalorder %v488, 0
        %v503 = vsub.s32 0, %v488
        %v504 = vsel %vm502, %v503, %v488
        %v505 = vshrl.u32 %v504, 5
        %v506 = vand.u32 %v504, 31
        %v507 = vsub.s32 0, %v506
        %v508 = vsel %vm502, %v507, %v506
        %vm509 = vcmp.lt.s32.totalorder %v489, 0
        %v510 = vsub.s32 0, %v489
        %v511 = vsel %vm509, %v510, %v489
        %v512 = vshrl.u32 %v511, 5
        %v513 = vand.u32 %v511, 31
        %v514 = vsub.s32 0, %v513
        %v515 = vsel %vm509, %v514, %v513
        %vm516 = vcmp.lt.s32.totalorder %v490, 0
        %v517 = vsub.s32 0, %v490
        %v518 = vsel %vm516, %v517, %v490
        %v519 = vshrl.u32 %v518, 5
        %v520 = vand.u32 %v518, 31
        %v521 = vsub.s32 0, %v520
        %v522 = vsel %vm516, %v521, %v520
        %vm523 = vcmp.lt.s32.totalorder %v491, 0
        %v524 = vsub.s32 0, %v491
        %v525 = vsel %vm523, %v524, %v491
        %v526 = vshrl.u32 %v525, 5
        %v527 = vand.u32 %v525, 31
        %v528 = vsub.s32 0, %v527
        %v529 = vsel %vm523, %v528, %v527
        %vm530 = vcmp.lt.s32.totalorder %v492, 0
        %v531 = vsub.s32 0, %v492
        %v532 = vsel %vm530, %v531, %v492
        %v533 = vshrl.u32 %v532, 5
        %v534 = vand.u32 %v532, 31
        %v535 = vsub.s32 0, %v534
        %v536 = vsel %vm530, %v535, %v534
        %vm537 = vcmp.lt.s32.totalorder %v493, 0
        %v538 = vsub.s32 0, %v493
        %v539 = vsel %vm537, %v538, %v493
        %v540 = vshrl.u32 %v539, 5
        %v541 = vand.u32 %v539, 31
        %v542 = vsub.s32 0, %v541
        %v543 = vsel %vm537, %v542, %v541
        %vm544 = vcmp.lt.s32.totalorder %v494, 0
        %v545 = vsub.s32 0, %v494
        %v546 = vsel %vm544, %v545, %v494
        %v547 = vshrl.u32 %v546, 5
        %v548 = vand.u32 %v546, 31
        %v549 = vsub.s32 0, %v548
        %v550 = vsel %vm544, %v549, %v548
        %vm551 = vcmp.ne.s32.totalorder %v501, 0
        %vm552 = vcmp.ne.s32.totalorder %v508, 0
        %vm553 = vcmp.ne.s32.totalorder %v515, 0
        %vm554 = vcmp.ne.s32.totalorder %v522, 0
        %vm555 = vcmp.ne.s32.totalorder %v529, 0
        %vm556 = vcmp.ne.s32.totalorder %v536, 0
        %vm557 = vcmp.ne.s32.totalorder %v543, 0
        %vm558 = vcmp.ne.s32.totalorder %v550, 0
        %vm559 = vcmp.lt.s32.totalorder %v501, 0
        %vm560 = vcmp.lt.s32.totalorder %v508, 0
        %vm561 = vcmp.lt.s32.totalorder %v515, 0
        %vm562 = vcmp.lt.s32.totalorder %v522, 0
        %vm563 = vcmp.lt.s32.totalorder %v529, 0
        %vm564 = vcmp.lt.s32.totalorder %v536, 0
        %vm565 = vcmp.lt.s32.totalorder %v543, 0
        %vm566 = vcmp.lt.s32.totalorder %v550, 0
        %vm567 = vmand %vm559, %vm551
        %vm568 = vmand %vm560, %vm552
        %vm569 = vmand %vm561, %vm553
        %vm570 = vmand %vm562, %vm554
        %vm571 = vmand %vm563, %vm555
        %vm572 = vmand %vm564, %vm556
        %vm573 = vmand %vm565, %vm557
        %vm574 = vmand %vm566, %vm558
        %v575 = vadd.s32 %v501, 32
        %v576 = vadd.s32 %v508, 32
        %v577 = vadd.s32 %v515, 32
        %v578 = vadd.s32 %v522, 32
        %v579 = vadd.s32 %v529, 32
        %v580 = vadd.s32 %v536, 32
        %v581 = vadd.s32 %v543, 32
        %v582 = vadd.s32 %v550, 32
        %v583 = vsel %vm567, %v575, %v501
        %v584 = vsel %vm568, %v576, %v508
        %v585 = vsel %vm569, %v577, %v515
        %v586 = vsel %vm570, %v578, %v522
        %v587 = vsel %vm571, %v579, %v529
        %v588 = vsel %vm572, %v580, %v536
        %v589 = vsel %vm573, %v581, %v543
        %v590 = vsel %vm574, %v582, %v550
        %vm591 = vcmp.ne.s32.totalorder %v583, 0
        %vm592 = vcmp.ne.s32.totalorder %v584, 0
        %vm593 = vcmp.ne.s32.totalorder %v585, 0
        %vm594 = vcmp.ne.s32.totalorder %v586, 0
        %vm595 = vcmp.ne.s32.totalorder %v587, 0
        %vm596 = vcmp.ne.s32.totalorder %v588, 0
        %vm597 = vcmp.ne.s32.totalorder %v589, 0
        %vm598 = vcmp.ne.s32.totalorder %v590, 0
        %v599 = vsel %vm591, 1, 0
        %v600 = vsel %vm592, 1, 0
        %v601 = vsel %vm593, 1, 0
        %v602 = vsel %vm594, 1, 0
        %v603 = vsel %vm595, 1, 0
        %v604 = vsel %vm596, 1, 0
        %v605 = vsel %vm597, 1, 0
        %v606 = vsel %vm598, 1, 0
        %v607 = vcvt.s32.f32 %v599
        %v608 = vcvt.s32.f32 %v600
        %v609 = vcvt.s32.f32 %v601
        %v610 = vcvt.s32.f32 %v602
        %v611 = vcvt.s32.f32 %v603
        %v612 = vcvt.s32.f32 %v604
        %v613 = vcvt.s32.f32 %v605
        %v614 = vcvt.s32.f32 %v606
        %v615 = vpack.c.bf16 %v607, %v607
        %v616 = vpack.c.bf16 %v608, %v608
        %v617 = vpack.c.bf16 %v609, %v609
        %v618 = vpack.c.bf16 %v610, %v610
        %v619 = vpack.c.bf16 %v611, %v611
        %v620 = vpack.c.bf16 %v612, %v612
        %v621 = vpack.c.bf16 %v613, %v613
        %v622 = vpack.c.bf16 %v614, %v614
        %v631 = vcombine.low %v615, %v616
        %v632 = vcombine.low %v617, %v618
        %v634 = vunpack.c.l.s4 1983009808
        %v635 = vunpack.c.0.s8 %v634
        %v636 = vlaneseq
        %v637 = vshrl.u32 %v636, 7
        %v638 = vsub.s32 %v635, %v637
        %v639 = vrot.slane %v631, %v638
        %v641 = vunpack.c.l.s4 1983009808
        %v642 = vunpack.c.0.s8 %v641
        %v643 = vlaneseq
        %v644 = vshrl.u32 %v643, 7
        %v645 = vsub.s32 %v642, %v644
        %v646 = vrot.slane %v632, %v645
        %v647 = vcombine.low %v639, %v646
        %v648 = vcombine.low %v619, %v620
        %v649 = vcombine.low %v621, %v622
        %v651 = vunpack.c.l.s4 1983009808
        %v652 = vunpack.c.0.s8 %v651
        %v653 = vlaneseq
        %v654 = vshrl.u32 %v653, 7
        %v655 = vsub.s32 %v652, %v654
        %v656 = vrot.slane %v648, %v655
        %v658 = vunpack.c.l.s4 1983009808
        %v659 = vunpack.c.0.s8 %v658
        %v660 = vlaneseq
        %v661 = vshrl.u32 %v660, 7
        %v662 = vsub.s32 %v659, %v661
        %v663 = vrot.slane %v649, %v662
        %v664 = vcombine.low %v656, %v663
        %665 = vrot.lane.b32.xlu0 %v647, 31
        %v666 = vpop.permute.xlu0 %665
        %667 = vrot.lane.b32.xlu0 %v664, 31
        %v668 = vpop.permute.xlu0 %667
        %v669 = vrot.slane %v666, 6
        %v670 = vrot.slane %v668, 6
        %vm671 = vcmask 252928
        %v672 = vsel %vm671, %v669, %v666
        %v673 = vsel %vm358, %v669, %v670
        %v674 = vsel %vm671, %v673, %v668
        %v678 = vmul.bf16 %v483, %v672
        %v679 = vmul.bf16 %v484, %v674
        %v680 = vmul.bf16 %v485, %v670
        %v681 = vld [vmem:[%s1] sm:$0xf]
        %v685 = vcombine.high %v678, %v678
        %v687 = vunpack.c.l.s4 1983009808
        %v688 = vunpack.c.0.s8 %v687
        %v689 = vlaneseq
        %v690 = vshrl.u32 %v689, 7
        %v691 = vsub.s32 %v688, %v690
        %v692 = vrot.slane %v678, %v691
        %v694 = vunpack.c.l.s4 1983009808
        %v695 = vunpack.c.0.s8 %v694
        %v696 = vlaneseq
        %v697 = vshrl.u32 %v696, 7
        %v698 = vsub.s32 %v695, %v697
        %v699 = vrot.slane %v685, %v698
        %v700 = vcombine.high %v692, %v692
        %v701 = vcombine.high %v699, %v699
        %v702 = vcombine.high %v679, %v679
        %v704 = vunpack.c.l.s4 1983009808
        %v705 = vunpack.c.0.s8 %v704
        %v706 = vlaneseq
        %v707 = vshrl.u32 %v706, 7
        %v708 = vsub.s32 %v705, %v707
        %v709 = vrot.slane %v679, %v708
        %v711 = vunpack.c.l.s4 1983009808
        %v712 = vunpack.c.0.s8 %v711
        %v713 = vlaneseq
        %v714 = vshrl.u32 %v713, 7
        %v715 = vsub.s32 %v712, %v714
        %v716 = vrot.slane %v702, %v715
        %v717 = vcombine.high %v709, %v709
        %v718 = vcombine.high %v716, %v716
        %v720 = vunpack.c.l.s4 1983009808
        %v721 = vunpack.c.0.s8 %v720
        %v722 = vlaneseq
        %v723 = vshrl.u32 %v722, 7
        %v724 = vsub.s32 %v721, %v723
        %v725 = vrot.slane %v680, %v724
        %726 = vrot.lane.b32.xlu0 %v692, 97
        %v727 = vpop.permute.xlu0 %726
        %728 = vrot.lane.b32.xlu0 %v700, 97
        %v729 = vpop.permute.xlu0 %728
        %730 = vrot.lane.b32.xlu0 %v699, 97
        %v731 = vpop.permute.xlu0 %730
        %732 = vrot.lane.b32.xlu0 %v701, 97
        %v733 = vpop.permute.xlu0 %732
        %734 = vrot.lane.b32.xlu0 %v709, 97
        %v735 = vpop.permute.xlu0 %734
        %736 = vrot.lane.b32.xlu0 %v717, 97
        %v737 = vpop.permute.xlu0 %736
        %738 = vrot.lane.b32.xlu0 %v716, 97
        %v739 = vpop.permute.xlu0 %738
        %740 = vrot.lane.b32.xlu0 %v718, 97
        %v741 = vpop.permute.xlu0 %740
        %742 = vrot.lane.b32.xlu0 %v725, 97
        %v743 = vpop.permute.xlu0 %742
        %vm744 = vcmask 793600
        %v745 = vsel %vm744, %v727, %v729
        %v746 = vsel %vm744, %v729, %v731
        %v747 = vsel %vm744, %v731, %v733
        %v748 = vsel %vm744, %v733, %v735
        %v749 = vsel %vm744, %v735, %v737
        %v750 = vsel %vm744, %v737, %v739
        %v751 = vsel %vm744, %v739, %v741
        %v752 = vsel %vm744, %v741, %v743
        %vm753 = vcmask 23552
        %v755 = vsel %vm753, %v681, 0
        %vm757 = vcmask 1040384
        %vm758 = vcmask 1041408
        %v759 = vsel %vm757, 4294967295, 65535
        %v760 = vsel %vm758, %v759, 0
        %v762 = vand.u32 %v745, %v760
        %v765 = vand.u32 %v746, %v760
        %v768 = vand.u32 %v747, %v760
        %v771 = vand.u32 %v748, %v760
        %v774 = vand.u32 %v749, %v760
        %v777 = vand.u32 %v750, %v760
        %v780 = vand.u32 %v751, %v760
        %v783 = vand.u32 %v752, %v760
        %785 = vmatprep.subr.bf16.mxu0 %v765
        %786 = vmatpush1.bf16.msra.mxu0 %v762
        %787 = vmatprep.subr.bf16.mxu0 0
        %788 = vmatpush1.bf16.msra.mxu0 0
        %789 = vmatprep.subr.bf16.mxu0 0
        %790 = vmatpush1.bf16.msra.mxu0 0
        %791 = vmatprep.subr.bf16.mxu0 0
        %792 = vmatpush1.bf16.msra.mxu0 0
        %793 = vmatprep.subr.bf16.mxu0 0
        %794 = vmatpush1.bf16.msra.mxu0 0
        %795 = vmatprep.subr.bf16.mxu0 0
        %796 = vmatpush1.bf16.msra.mxu0 0
        %797 = vmatprep.subr.bf16.mxu0 0
        %798 = vmatpush1.bf16.msra.mxu0 0
        %799 = vmatprep.subr.bf16.mxu0 0
        %800 = vmatpush1.bf16.msra.mxu0 0
        %801 = vmatprep.subr.bf16.mxu0 0
        %802 = vmatpush1.bf16.msra.mxu0 0
        %803 = vmatprep.subr.bf16.mxu0 0
        %804 = vmatpush1.bf16.msra.mxu0 0
        %805 = vmatprep.subr.bf16.mxu0 0
        %806 = vmatpush1.bf16.msra.mxu0 0
        %807 = vmatprep.subr.bf16.mxu0 0
        %808 = vmatpush1.bf16.msra.mxu0 0
        %809 = vmatprep.subr.bf16.mxu0 0
        %810 = vmatpush1.bf16.msra.mxu0 0
        %811 = vmatprep.subr.bf16.mxu0 0
        %812 = vmatpush1.bf16.msra.mxu0 0
        %813 = vmatprep.subr.bf16.mxu0 0
        %814 = vmatpush1.bf16.msra.mxu0 0
        %815 = vmatprep.subr.bf16.mxu0 0
        %816 = vmatpush1.bf16.msra.mxu0 0
        %817 = vmatprep.mubr.bf16.mxu0 0
        %818 = vmatmul.mubr.bf16.gmra.mrb[0].mxu0 %v755
        %v819 = vpop.f32.mrb[0].mxu0
        %v820 = vadd.f32 0.0, %v819
        %v821 = vpop.f32.mrb[0].mxu0
        %v822 = vadd.f32 0.0, %v821
        %v823 = vpop.f32.mrb[0].mxu0
        %v824 = vpop.f32.mrb[0].mxu0
        %825 = vdwg.mxu0
        %826 = vmatprep.subr.bf16.mxu0 %v771
        %827 = vmatpush1.bf16.msra.mxu0 %v768
        %828 = vmatprep.subr.bf16.mxu0 0
        %829 = vmatpush1.bf16.msra.mxu0 0
        %830 = vmatprep.subr.bf16.mxu0 0
        %831 = vmatpush1.bf16.msra.mxu0 0
        %832 = vmatprep.subr.bf16.mxu0 0
        %833 = vmatpush1.bf16.msra.mxu0 0
        %834 = vmatprep.subr.bf16.mxu0 0
        %835 = vmatpush1.bf16.msra.mxu0 0
        %836 = vmatprep.subr.bf16.mxu0 0
        %837 = vmatpush1.bf16.msra.mxu0 0
        %838 = vmatprep.subr.bf16.mxu0 0
        %839 = vmatpush1.bf16.msra.mxu0 0
        %840 = vmatprep.subr.bf16.mxu0 0
        %841 = vmatpush1.bf16.msra.mxu0 0
        %842 = vmatprep.subr.bf16.mxu0 0
        %843 = vmatpush1.bf16.msra.mxu0 0
        %844 = vmatprep.subr.bf16.mxu0 0
        %845 = vmatpush1.bf16.msra.mxu0 0
        %846 = vmatprep.subr.bf16.mxu0 0
        %847 = vmatpush1.bf16.msra.mxu0 0
        %848 = vmatprep.subr.bf16.mxu0 0
        %849 = vmatpush1.bf16.msra.mxu0 0
        %850 = vmatprep.subr.bf16.mxu0 0
        %851 = vmatpush1.bf16.msra.mxu0 0
        %852 = vmatprep.subr.bf16.mxu0 0
        %853 = vmatpush1.bf16.msra.mxu0 0
        %854 = vmatprep.subr.bf16.mxu0 0
        %855 = vmatpush1.bf16.msra.mxu0 0
        %856 = vmatprep.subr.bf16.mxu0 0
        %857 = vmatpush1.bf16.msra.mxu0 0
        %858 = vmatprep.mubr.bf16.mxu0 0
        %859 = vmatmul.mubr.bf16.gmra.mrb[0].mxu0 %v755
        %v860 = vpop.f32.mrb[0].mxu0
        %v861 = vadd.f32 0.0, %v860
        %v862 = vpop.f32.mrb[0].mxu0
        %v863 = vadd.f32 0.0, %v862
        %v864 = vpop.f32.mrb[0].mxu0
        %v865 = vpop.f32.mrb[0].mxu0
        %866 = vdwg.mxu0
        %867 = vmatprep.subr.bf16.mxu0 %v777
        %868 = vmatpush1.bf16.msra.mxu0 %v774
        %869 = vmatprep.subr.bf16.mxu0 0
        %870 = vmatpush1.bf16.msra.mxu0 0
        %871 = vmatprep.subr.bf16.mxu0 0
        %872 = vmatpush1.bf16.msra.mxu0 0
        %873 = vmatprep.subr.bf16.mxu0 0
        %874 = vmatpush1.bf16.msra.mxu0 0
        %875 = vmatprep.subr.bf16.mxu0 0
        %876 = vmatpush1.bf16.msra.mxu0 0
        %877 = vmatprep.subr.bf16.mxu0 0
        %878 = vmatpush1.bf16.msra.mxu0 0
        %879 = vmatprep.subr.bf16.mxu0 0
        %880 = vmatpush1.bf16.msra.mxu0 0
        %881 = vmatprep.subr.bf16.mxu0 0
        %882 = vmatpush1.bf16.msra.mxu0 0
        %883 = vmatprep.subr.bf16.mxu0 0
        %884 = vmatpush1.bf16.msra.mxu0 0
        %885 = vmatprep.subr.bf16.mxu0 0
        %886 = vmatpush1.bf16.msra.mxu0 0
        %887 = vmatprep.subr.bf16.mxu0 0
        %888 = vmatpush1.bf16.msra.mxu0 0
        %889 = vmatprep.subr.bf16.mxu0 0
        %890 = vmatpush1.bf16.msra.mxu0 0
        %891 = vmatprep.subr.bf16.mxu0 0
        %892 = vmatpush1.bf16.msra.mxu0 0
        %893 = vmatprep.subr.bf16.mxu0 0
        %894 = vmatpush1.bf16.msra.mxu0 0
        %895 = vmatprep.subr.bf16.mxu0 0
        %896 = vmatpush1.bf16.msra.mxu0 0
        %897 = vmatprep.subr.bf16.mxu0 0
        %898 = vmatpush1.bf16.msra.mxu0 0
        %899 = vmatprep.mubr.bf16.mxu0 0
        %900 = vmatmul.mubr.bf16.gmra.mrb[0].mxu0 %v755
        %v901 = vpop.f32.mrb[0].mxu0
        %v902 = vadd.f32 0.0, %v901
        %v903 = vpop.f32.mrb[0].mxu0
        %v904 = vadd.f32 0.0, %v903
        %v905 = vpop.f32.mrb[0].mxu0
        %v906 = vpop.f32.mrb[0].mxu0
        %907 = vdwg.mxu0
        %908 = vmatprep.subr.bf16.mxu0 %v783
        %909 = vmatpush1.bf16.msra.mxu0 %v780
        %910 = vmatprep.subr.bf16.mxu0 0
        %911 = vmatpush1.bf16.msra.mxu0 0
        %912 = vmatprep.subr.bf16.mxu0 0
        %913 = vmatpush1.bf16.msra.mxu0 0
        %914 = vmatprep.subr.bf16.mxu0 0
        %915 = vmatpush1.bf16.msra.mxu0 0
        %916 = vmatprep.subr.bf16.mxu0 0
        %917 = vmatpush1.bf16.msra.mxu0 0
        %918 = vmatprep.subr.bf16.mxu0 0
        %919 = vmatpush1.bf16.msra.mxu0 0
        %920 = vmatprep.subr.bf16.mxu0 0
        %921 = vmatpush1.bf16.msra.mxu0 0
        %922 = vmatprep.subr.bf16.mxu0 0
        %923 = vmatpush1.bf16.msra.mxu0 0
        %924 = vmatprep.subr.bf16.mxu0 0
        %925 = vmatpush1.bf16.msra.mxu0 0
        %926 = vmatprep.subr.bf16.mxu0 0
        %927 = vmatpush1.bf16.msra.mxu0 0
        %928 = vmatprep.subr.bf16.mxu0 0
        %929 = vmatpush1.bf16.msra.mxu0 0
        %930 = vmatprep.subr.bf16.mxu0 0
        %931 = vmatpush1.bf16.msra.mxu0 0
        %932 = vmatprep.subr.bf16.mxu0 0
        %933 = vmatpush1.bf16.msra.mxu0 0
        %934 = vmatprep.subr.bf16.mxu0 0
        %935 = vmatpush1.bf16.msra.mxu0 0
        %936 = vmatprep.subr.bf16.mxu0 0
        %937 = vmatpush1.bf16.msra.mxu0 0
        %938 = vmatprep.subr.bf16.mxu0 0
        %939 = vmatpush1.bf16.msra.mxu0 0
        %940 = vmatprep.mubr.bf16.mxu0 0
        %941 = vmatmul.mubr.bf16.gmra.mrb[0].mxu0 %v755
        %v942 = vpop.f32.mrb[0].mxu0
        %v943 = vadd.f32 0.0, %v942
        %v944 = vpop.f32.mrb[0].mxu0
        %v945 = vadd.f32 0.0, %v944
        %v946 = vpop.f32.mrb[0].mxu0
        %v947 = vpop.f32.mrb[0].mxu0
        %948 = vdwg.mxu0
        %v949 = vadd.f32 %v481, %v820
        %v950 = vadd.f32 %v481, %v822
        %v951 = vadd.f32 %v481, %v861
        %v952 = vadd.f32 %v481, %v863
        %v953 = vadd.f32 %v481, %v902
        %v954 = vadd.f32 %v481, %v904
        %v955 = vadd.f32 %v481, %v943
        %v956 = vadd.f32 %v481, %v945
        %v957 = vld [vmem:[#allocation2] sm:$0xff]
        %v958 = vld [vmem:[#allocation2 + $0x8] sm:$0xff]
        %v959 = vld [vmem:[#allocation2 + $0x10] sm:$0x3]
        %s960 = scalar_lea.vmem %s1, 4
        %v961 = vld [vmem:[%s960] sm:$0xf]
        %v965 = vcombine.high %v957, %v957
        %v967 = vunpack.c.l.s4 1983009808
        %v968 = vunpack.c.0.s8 %v967
        %v969 = vlaneseq
        %v970 = vshrl.u32 %v969, 7
        %v971 = vsub.s32 %v968, %v970
        %v972 = vrot.slane %v957, %v971
        %v974 = vunpack.c.l.s4 1983009808
        %v975 = vunpack.c.0.s8 %v974
        %v976 = vlaneseq
        %v977 = vshrl.u32 %v976, 7
        %v978 = vsub.s32 %v975, %v977
        %v979 = vrot.slane %v965, %v978
        %v980 = vcombine.high %v972, %v972
        %v981 = vcombine.high %v979, %v979
        %v982 = vcombine.high %v958, %v958
        %v984 = vunpack.c.l.s4 1983009808
        %v985 = vunpack.c.0.s8 %v984
        %v986 = vlaneseq
        %v987 = vshrl.u32 %v986, 7
        %v988 = vsub.s32 %v985, %v987
        %v989 = vrot.slane %v958, %v988
        %v991 = vunpack.c.l.s4 1983009808
        %v992 = vunpack.c.0.s8 %v991
        %v993 = vlaneseq
        %v994 = vshrl.u32 %v993, 7
        %v995 = vsub.s32 %v992, %v994
        %v996 = vrot.slane %v982, %v995
        %v997 = vcombine.high %v989, %v989
        %v998 = vcombine.high %v996, %v996
        %v1000 = vunpack.c.l.s4 1983009808
        %v1001 = vunpack.c.0.s8 %v1000
        %v1002 = vlaneseq
        %v1003 = vshrl.u32 %v1002, 7
        %v1004 = vsub.s32 %v1001, %v1003
        %v1005 = vrot.slane %v959, %v1004
        %1006 = vrot.lane.b32.xlu0 %v972, 96
        %v1007 = vpop.permute.xlu0 %1006
        %1008 = vrot.lane.b32.xlu0 %v980, 96
        %v1009 = vpop.permute.xlu0 %1008
        %1010 = vrot.lane.b32.xlu0 %v979, 96
        %v1011 = vpop.permute.xlu0 %1010
        %1012 = vrot.lane.b32.xlu0 %v981, 96
        %v1013 = vpop.permute.xlu0 %1012
        %1014 = vrot.lane.b32.xlu0 %v989, 96
        %v1015 = vpop.permute.xlu0 %1014
        %1016 = vrot.lane.b32.xlu0 %v997, 96
        %v1017 = vpop.permute.xlu0 %1016
        %1018 = vrot.lane.b32.xlu0 %v996, 96
        %v1019 = vpop.permute.xlu0 %1018
        %1020 = vrot.lane.b32.xlu0 %v998, 96
        %v1021 = vpop.permute.xlu0 %1020
        %1022 = vrot.lane.b32.xlu0 %v1005, 96
        %v1023 = vpop.permute.xlu0 %1022
        %vm1024 = vcmask 785408
        %v1025 = vsel %vm1024, %v1007, %v1009
        %v1026 = vsel %vm1024, %v1009, %v1011
        %v1027 = vsel %vm1024, %v1011, %v1013
        %v1028 = vsel %vm1024, %v1013, %v1015
        %v1029 = vsel %vm1024, %v1015, %v1017
        %v1030 = vsel %vm1024, %v1017, %v1019
        %v1031 = vsel %vm1024, %v1019, %v1021
        %v1032 = vsel %vm1024, %v1021, %v1023
        %v1034 = vsel %vm753, %v961, 0
        %v1037 = vand.u32 %v1025, %v760
        %v1040 = vand.u32 %v1026, %v760
        %v1043 = vand.u32 %v1027, %v760
        %v1046 = vand.u32 %v1028, %v760
        %v1049 = vand.u32 %v1029, %v760
        %v1052 = vand.u32 %v1030, %v760
        %v1055 = vand.u32 %v1031, %v760
        %v1058 = vand.u32 %v1032, %v760
        %1060 = vmatprep.subr.bf16.mxu0 %v1040
        %1061 = vmatpush1.bf16.msra.mxu0 %v1037
        %1062 = vmatprep.subr.bf16.mxu0 0
        %1063 = vmatpush1.bf16.msra.mxu0 0
        %1064 = vmatprep.subr.bf16.mxu0 0
        %1065 = vmatpush1.bf16.msra.mxu0 0
        %1066 = vmatprep.subr.bf16.mxu0 0
        %1067 = vmatpush1.bf16.msra.mxu0 0
        %1068 = vmatprep.subr.bf16.mxu0 0
        %1069 = vmatpush1.bf16.msra.mxu0 0
        %1070 = vmatprep.subr.bf16.mxu0 0
        %1071 = vmatpush1.bf16.msra.mxu0 0
        %1072 = vmatprep.subr.bf16.mxu0 0
        %1073 = vmatpush1.bf16.msra.mxu0 0
        %1074 = vmatprep.subr.bf16.mxu0 0
        %1075 = vmatpush1.bf16.msra.mxu0 0
        %1076 = vmatprep.subr.bf16.mxu0 0
        %1077 = vmatpush1.bf16.msra.mxu0 0
        %1078 = vmatprep.subr.bf16.mxu0 0
        %1079 = vmatpush1.bf16.msra.mxu0 0
        %1080 = vmatprep.subr.bf16.mxu0 0
        %1081 = vmatpush1.bf16.msra.mxu0 0
        %1082 = vmatprep.subr.bf16.mxu0 0
        %1083 = vmatpush1.bf16.msra.mxu0 0
        %1084 = vmatprep.subr.bf16.mxu0 0
        %1085 = vmatpush1.bf16.msra.mxu0 0
        %1086 = vmatprep.subr.bf16.mxu0 0
        %1087 = vmatpush1.bf16.msra.mxu0 0
        %1088 = vmatprep.subr.bf16.mxu0 0
        %1089 = vmatpush1.bf16.msra.mxu0 0
        %1090 = vmatprep.subr.bf16.mxu0 0
        %1091 = vmatpush1.bf16.msra.mxu0 0
        %1092 = vmatprep.mubr.bf16.mxu0 0
        %1093 = vmatmul.mubr.bf16.gmra.mrb[0].mxu0 %v1034
        %v1094 = vpop.f32.mrb[0].mxu0
        %v1095 = vadd.f32 0.0, %v1094
        %v1096 = vpop.f32.mrb[0].mxu0
        %v1097 = vadd.f32 0.0, %v1096
        %v1098 = vpop.f32.mrb[0].mxu0
        %v1099 = vpop.f32.mrb[0].mxu0
        %1100 = vdwg.mxu0
        %1101 = vmatprep.subr.bf16.mxu0 %v1046
        %1102 = vmatpush1.bf16.msra.mxu0 %v1043
        %1103 = vmatprep.subr.bf16.mxu0 0
        %1104 = vmatpush1.bf16.msra.mxu0 0
        %1105 = vmatprep.subr.bf16.mxu0 0
        %1106 = vmatpush1.bf16.msra.mxu0 0
        %1107 = vmatprep.subr.bf16.mxu0 0
        %1108 = vmatpush1.bf16.msra.mxu0 0
        %1109 = vmatprep.subr.bf16.mxu0 0
        %1110 = vmatpush1.bf16.msra.mxu0 0
        %1111 = vmatprep.subr.bf16.mxu0 0
        %1112 = vmatpush1.bf16.msra.mxu0 0
        %1113 = vmatprep.subr.bf16.mxu0 0
        %1114 = vmatpush1.bf16.msra.mxu0 0
        %1115 = vmatprep.subr.bf16.mxu0 0
        %1116 = vmatpush1.bf16.msra.mxu0 0
        %1117 = vmatprep.subr.bf16.mxu0 0
        %1118 = vmatpush1.bf16.msra.mxu0 0
        %1119 = vmatprep.subr.bf16.mxu0 0
        %1120 = vmatpush1.bf16.msra.mxu0 0
        %1121 = vmatprep.subr.bf16.mxu0 0
        %1122 = vmatpush1.bf16.msra.mxu0 0
        %1123 = vmatprep.subr.bf16.mxu0 0
        %1124 = vmatpush1.bf16.msra.mxu0 0
        %1125 = vmatprep.subr.bf16.mxu0 0
        %1126 = vmatpush1.bf16.msra.mxu0 0
        %1127 = vmatprep.subr.bf16.mxu0 0
        %1128 = vmatpush1.bf16.msra.mxu0 0
        %1129 = vmatprep.subr.bf16.mxu0 0
        %1130 = vmatpush1.bf16.msra.mxu0 0
        %1131 = vmatprep.subr.bf16.mxu0 0
        %1132 = vmatpush1.bf16.msra.mxu0 0
        %1133 = vmatprep.mubr.bf16.mxu0 0
        %1134 = vmatmul.mubr.bf16.gmra.mrb[0].mxu0 %v1034
        %v1135 = vpop.f32.mrb[0].mxu0
        %v1136 = vadd.f32 0.0, %v1135
        %v1137 = vpop.f32.mrb[0].mxu0
        %v1138 = vadd.f32 0.0, %v1137
        %v1139 = vpop.f32.mrb[0].mxu0
        %v1140 = vpop.f32.mrb[0].mxu0
        %1141 = vdwg.mxu0
        %1142 = vmatprep.subr.bf16.mxu0 %v1052
        %1143 = vmatpush1.bf16.msra.mxu0 %v1049
        %1144 = vmatprep.subr.bf16.mxu0 0
        %1145 = vmatpush1.bf16.msra.mxu0 0
        %1146 = vmatprep.subr.bf16.mxu0 0
        %1147 = vmatpush1.bf16.msra.mxu0 0
        %1148 = vmatprep.subr.bf16.mxu0 0
        %1149 = vmatpush1.bf16.msra.mxu0 0
        %1150 = vmatprep.subr.bf16.mxu0 0
        %1151 = vmatpush1.bf16.msra.mxu0 0
        %1152 = vmatprep.subr.bf16.mxu0 0
        %1153 = vmatpush1.bf16.msra.mxu0 0
        %1154 = vmatprep.subr.bf16.mxu0 0
        %1155 = vmatpush1.bf16.msra.mxu0 0
        %1156 = vmatprep.subr.bf16.mxu0 0
        %1157 = vmatpush1.bf16.msra.mxu0 0
        %1158 = vmatprep.subr.bf16.mxu0 0
        %1159 = vmatpush1.bf16.msra.mxu0 0
        %1160 = vmatprep.subr.bf16.mxu0 0
        %1161 = vmatpush1.bf16.msra.mxu0 0
        %1162 = vmatprep.subr.bf16.mxu0 0
        %1163 = vmatpush1.bf16.msra.mxu0 0
        %1164 = vmatprep.subr.bf16.mxu0 0
        %1165 = vmatpush1.bf16.msra.mxu0 0
        %1166 = vmatprep.subr.bf16.mxu0 0
        %1167 = vmatpush1.bf16.msra.mxu0 0
        %1168 = vmatprep.subr.bf16.mxu0 0
        %1169 = vmatpush1.bf16.msra.mxu0 0
        %1170 = vmatprep.subr.bf16.mxu0 0
        %1171 = vmatpush1.bf16.msra.mxu0 0
        %1172 = vmatprep.subr.bf16.mxu0 0
        %1173 = vmatpush1.bf16.msra.mxu0 0
        %1174 = vmatprep.mubr.bf16.mxu0 0
        %1175 = vmatmul.mubr.bf16.gmra.mrb[0].mxu0 %v1034
        %v1176 = vpop.f32.mrb[0].mxu0
        %v1177 = vadd.f32 0.0, %v1176
        %v1178 = vpop.f32.mrb[0].mxu0
        %v1179 = vadd.f32 0.0, %v1178
        %v1180 = vpop.f32.mrb[0].mxu0
        %v1181 = vpop.f32.mrb[0].mxu0
        %1182 = vdwg.mxu0
        %1183 = vmatprep.subr.bf16.mxu0 %v1058
        %1184 = vmatpush1.bf16.msra.mxu0 %v1055
        %1185 = vmatprep.subr.bf16.mxu0 0
        %1186 = vmatpush1.bf16.msra.mxu0 0
        %1187 = vmatprep.subr.bf16.mxu0 0
        %1188 = vmatpush1.bf16.msra.mxu0 0
        %1189 = vmatprep.subr.bf16.mxu0 0
        %1190 = vmatpush1.bf16.msra.mxu0 0
        %1191 = vmatprep.subr.bf16.mxu0 0
        %1192 = vmatpush1.bf16.msra.mxu0 0
        %1193 = vmatprep.subr.bf16.mxu0 0
        %1194 = vmatpush1.bf16.msra.mxu0 0
        %1195 = vmatprep.subr.bf16.mxu0 0
        %1196 = vmatpush1.bf16.msra.mxu0 0
        %1197 = vmatprep.subr.bf16.mxu0 0
        %1198 = vmatpush1.bf16.msra.mxu0 0
        %1199 = vmatprep.subr.bf16.mxu0 0
        %1200 = vmatpush1.bf16.msra.mxu0 0
        %1201 = vmatprep.subr.bf16.mxu0 0
        %1202 = vmatpush1.bf16.msra.mxu0 0
        %1203 = vmatprep.subr.bf16.mxu0 0
        %1204 = vmatpush1.bf16.msra.mxu0 0
        %1205 = vmatprep.subr.bf16.mxu0 0
        %1206 = vmatpush1.bf16.msra.mxu0 0
        %1207 = vmatprep.subr.bf16.mxu0 0
        %1208 = vmatpush1.bf16.msra.mxu0 0
        %1209 = vmatprep.subr.bf16.mxu0 0
        %1210 = vmatpush1.bf16.msra.mxu0 0
        %1211 = vmatprep.subr.bf16.mxu0 0
        %1212 = vmatpush1.bf16.msra.mxu0 0
        %1213 = vmatprep.subr.bf16.mxu0 0
        %1214 = vmatpush1.bf16.msra.mxu0 0
        %1215 = vmatprep.mubr.bf16.mxu0 0
        %1216 = vmatmul.mubr.bf16.gmra.mrb[0].mxu0 %v1034
        %v1217 = vpop.f32.mrb[0].mxu0
        %v1218 = vadd.f32 0.0, %v1217
        %v1219 = vpop.f32.mrb[0].mxu0
        %v1220 = vadd.f32 0.0, %v1219
        %v1221 = vpop.f32.mrb[0].mxu0
        %v1222 = vpop.f32.mrb[0].mxu0
        %1223 = vdwg.mxu0
        %v1224 = vadd.f32 %v949, %v1095
        %v1225 = vadd.f32 %v950, %v1097
        %v1226 = vadd.f32 %v951, %v1136
        %v1227 = vadd.f32 %v952, %v1138
        %v1228 = vadd.f32 %v953, %v1177
        %v1229 = vadd.f32 %v954, %v1179
        %v1230 = vadd.f32 %v955, %v1218
        %v1231 = vadd.f32 %v956, %v1220
        %v1232 = vld [vmem:[#allocation2] sm:$0xff]
        %v1233 = vld [vmem:[#allocation2 + $0x8] sm:$0xff]
        %v1234 = vld [vmem:[#allocation2 + $0x10] sm:$0x3]
        %vm1235 = vcmp.ne.s32.totalorder %v583, 31
        %vm1236 = vcmp.ne.s32.totalorder %v584, 31
        %vm1237 = vcmp.ne.s32.totalorder %v585, 31
        %vm1238 = vcmp.ne.s32.totalorder %v586, 31
        %vm1239 = vcmp.ne.s32.totalorder %v587, 31
        %vm1240 = vcmp.ne.s32.totalorder %v588, 31
        %vm1241 = vcmp.ne.s32.totalorder %v589, 31
        %vm1242 = vcmp.ne.s32.totalorder %v590, 31
        %v1243 = vsel %vm1235, 1, 0
        %v1244 = vsel %vm1236, 1, 0
        %v1245 = vsel %vm1237, 1, 0
        %v1246 = vsel %vm1238, 1, 0
        %v1247 = vsel %vm1239, 1, 0
        %v1248 = vsel %vm1240, 1, 0
        %v1249 = vsel %vm1241, 1, 0
        %v1250 = vsel %vm1242, 1, 0
        %v1251 = vcvt.s32.f32 %v1243
        %v1252 = vcvt.s32.f32 %v1244
        %v1253 = vcvt.s32.f32 %v1245
        %v1254 = vcvt.s32.f32 %v1246
        %v1255 = vcvt.s32.f32 %v1247
        %v1256 = vcvt.s32.f32 %v1248
        %v1257 = vcvt.s32.f32 %v1249
        %v1258 = vcvt.s32.f32 %v1250
        %v1259 = vpack.c.bf16 %v1251, %v1251
        %v1260 = vpack.c.bf16 %v1252, %v1252
        %v1261 = vpack.c.bf16 %v1253, %v1253
        %v1262 = vpack.c.bf16 %v1254, %v1254
        %v1263 = vpack.c.bf16 %v1255, %v1255
        %v1264 = vpack.c.bf16 %v1256, %v1256
        %v1265 = vpack.c.bf16 %v1257, %v1257
        %v1266 = vpack.c.bf16 %v1258, %v1258
        %v1275 = vcombine.low %v1259, %v1260
        %v1276 = vcombine.low %v1261, %v1262
        %v1278 = vunpack.c.l.s4 1983009808
        %v1279 = vunpack.c.0.s8 %v1278
        %v1280 = vlaneseq
        %v1281 = vshrl.u32 %v1280, 7
        %v1282 = vsub.s32 %v1279, %v1281
        %v1283 = vrot.slane %v1275, %v1282
        %v1285 = vunpack.c.l.s4 1983009808
        %v1286 = vunpack.c.0.s8 %v1285
        %v1287 = vlaneseq
        %v1288 = vshrl.u32 %v1287, 7
        %v1289 = vsub.s32 %v1286, %v1288
        %v1290 = vrot.slane %v1276, %v1289
        %v1291 = vcombine.low %v1283, %v1290
        %v1292 = vcombine.low %v1263, %v1264
        %v1293 = vcombine.low %v1265, %v1266
        %v1295 = vunpack.c.l.s4 1983009808
        %v1296 = vunpack.c.0.s8 %v1295
        %v1297 = vlaneseq
        %v1298 = vshrl.u32 %v1297, 7
        %v1299 = vsub.s32 %v1296, %v1298
        %v1300 = vrot.slane %v1292, %v1299
        %v1302 = vunpack.c.l.s4 1983009808
        %v1303 = vunpack.c.0.s8 %v1302
        %v1304 = vlaneseq
        %v1305 = vshrl.u32 %v1304, 7
        %v1306 = vsub.s32 %v1303, %v1305
        %v1307 = vrot.slane %v1293, %v1306
        %v1308 = vcombine.low %v1300, %v1307
        %1309 = vrot.lane.b32.xlu0 %v1291, 33
        %v1310 = vpop.permute.xlu0 %1309
        %1311 = vrot.lane.b32.xlu0 %v1308, 33
        %v1312 = vpop.permute.xlu0 %1311
        %v1313 = vrot.slane %v1310, 6
        %v1314 = vrot.slane %v1312, 6
        %vm1315 = vcmask 269312
        %v1316 = vsel %vm1315, %v1313, %v1310
        %v1317 = vsel %vm358, %v1313, %v1314
        %v1318 = vsel %vm1315, %v1317, %v1312
        %v1322 = vmul.bf16 %v1232, %v1316
        %v1323 = vmul.bf16 %v1233, %v1318
        %v1324 = vmul.bf16 %v1234, %v1314
        %s1325 = scalar_lea.vmem %s1, 8
        %v1326 = vld [vmem:[%s1325] sm:$0xf]
        %v1330 = vcombine.high %v1322, %v1322
        %v1332 = vunpack.c.l.s4 1983009808
        %v1333 = vunpack.c.0.s8 %v1332
        %v1334 = vlaneseq
        %v1335 = vshrl.u32 %v1334, 7
        %v1336 = vsub.s32 %v1333, %v1335
        %v1337 = vrot.slane %v1322, %v1336
        %v1339 = vunpack.c.l.s4 1983009808
        %v1340 = vunpack.c.0.s8 %v1339
        %v1341 = vlaneseq
        %v1342 = vshrl.u32 %v1341, 7
        %v1343 = vsub.s32 %v1340, %v1342
        %v1344 = vrot.slane %v1330, %v1343
        %v1345 = vcombine.high %v1337, %v1337
        %v1346 = vcombine.high %v1344, %v1344
        %v1347 = vcombine.high %v1323, %v1323
        %v1349 = vunpack.c.l.s4 1983009808
        %v1350 = vunpack.c.0.s8 %v1349
        %v1351 = vlaneseq
        %v1352 = vshrl.u32 %v1351, 7
        %v1353 = vsub.s32 %v1350, %v1352
        %v1354 = vrot.slane %v1323, %v1353
        %v1356 = vunpack.c.l.s4 1983009808
        %v1357 = vunpack.c.0.s8 %v1356
        %v1358 = vlaneseq
        %v1359 = vshrl.u32 %v1358, 7
        %v1360 = vsub.s32 %v1357, %v1359
        %v1361 = vrot.slane %v1347, %v1360
        %v1362 = vcombine.high %v1354, %v1354
        %v1363 = vcombine.high %v1361, %v1361
        %v1365 = vunpack.c.l.s4 1983009808
        %v1366 = vunpack.c.0.s8 %v1365
        %v1367 = vlaneseq
        %v1368 = vshrl.u32 %v1367, 7
        %v1369 = vsub.s32 %v1366, %v1368
        %v1370 = vrot.slane %v1324, %v1369
        %1371 = vrot.lane.b32.xlu0 %v1337, 95
        %v1372 = vpop.permute.xlu0 %1371
        %1373 = vrot.lane.b32.xlu0 %v1345, 95
        %v1374 = vpop.permute.xlu0 %1373
        %1375 = vrot.lane.b32.xlu0 %v1344, 95
        %v1376 = vpop.permute.xlu0 %1375
        %1377 = vrot.lane.b32.xlu0 %v1346, 95
        %v1378 = vpop.permute.xlu0 %1377
        %1379 = vrot.lane.b32.xlu0 %v1354, 95
        %v1380 = vpop.permute.xlu0 %1379
        %1381 = vrot.lane.b32.xlu0 %v1362, 95
        %v1382 = vpop.permute.xlu0 %1381
        %1383 = vrot.lane.b32.xlu0 %v1361, 95
        %v1384 = vpop.permute.xlu0 %1383
        %1385 = vrot.lane.b32.xlu0 %v1363, 95
        %v1386 = vpop.permute.xlu0 %1385
        %1387 = vrot.lane.b32.xlu0 %v1370, 95
        %v1388 = vpop.permute.xlu0 %1387
        %vm1389 = vcmask 777216
        %v1390 = vsel %vm1389, %v1372, %v1374
        %v1391 = vsel %vm1389, %v1374, %v1376
        %v1392 = vsel %vm1389, %v1376, %v1378
        %v1393 = vsel %vm1389, %v1378, %v1380
        %v1394 = vsel %vm1389, %v1380, %v1382
        %v1395 = vsel %vm1389, %v1382, %v1384
        %v1396 = vsel %vm1389, %v1384, %v1386
        %v1397 = vsel %vm1389, %v1386, %v1388
        %v1399 = vsel %vm753, %v1326, 0
        %v1402 = vand.u32 %v1390, %v760
        %v1405 = vand.u32 %v1391, %v760
        %v1408 = vand.u32 %v1392, %v760
        %v1411 = vand.u32 %v1393, %v760
        %v1414 = vand.u32 %v1394, %v760
        %v1417 = vand.u32 %v1395, %v760
        %v1420 = vand.u32 %v1396, %v760
        %v1423 = vand.u32 %v1397, %v760
        %1425 = vmatprep.subr.bf16.mxu0 %v1405
        %1426 = vmatpush1.bf16.msra.mxu0 %v1402
        %1427 = vmatprep.subr.bf16.mxu0 0
        %1428 = vmatpush1.bf16.msra.mxu0 0
        %1429 = vmatprep.subr.bf16.mxu0 0
        %1430 = vmatpush1.bf16.msra.mxu0 0
        %1431 = vmatprep.subr.bf16.mxu0 0
        %1432 = vmatpush1.bf16.msra.mxu0 0
        %1433 = vmatprep.subr.bf16.mxu0 0
        %1434 = vmatpush1.bf16.msra.mxu0 0
        %1435 = vmatprep.subr.bf16.mxu0 0
        %1436 = vmatpush1.bf16.msra.mxu0 0
        %1437 = vmatprep.subr.bf16.mxu0 0
        %1438 = vmatpush1.bf16.msra.mxu0 0
        %1439 = vmatprep.subr.bf16.mxu0 0
        %1440 = vmatpush1.bf16.msra.mxu0 0
        %1441 = vmatprep.subr.bf16.mxu0 0
        %1442 = vmatpush1.bf16.msra.mxu0 0
        %1443 = vmatprep.subr.bf16.mxu0 0
        %1444 = vmatpush1.bf16.msra.mxu0 0
        %1445 = vmatprep.subr.bf16.mxu0 0
        %1446 = vmatpush1.bf16.msra.mxu0 0
        %1447 = vmatprep.subr.bf16.mxu0 0
        %1448 = vmatpush1.bf16.msra.mxu0 0
        %1449 = vmatprep.subr.bf16.mxu0 0
        %1450 = vmatpush1.bf16.msra.mxu0 0
        %1451 = vmatprep.subr.bf16.mxu0 0
        %1452 = vmatpush1.bf16.msra.mxu0 0
        %1453 = vmatprep.subr.bf16.mxu0 0
        %1454 = vmatpush1.bf16.msra.mxu0 0
        %1455 = vmatprep.subr.bf16.mxu0 0
        %1456 = vmatpush1.bf16.msra.mxu0 0
        %1457 = vmatprep.mubr.bf16.mxu0 0
        %1458 = vmatmul.mubr.bf16.gmra.mrb[0].mxu0 %v1399
        %v1459 = vpop.f32.mrb[0].mxu0
        %v1460 = vadd.f32 0.0, %v1459
        %v1461 = vpop.f32.mrb[0].mxu0
        %v1462 = vadd.f32 0.0, %v1461
        %v1463 = vpop.f32.mrb[0].mxu0
        %v1464 = vpop.f32.mrb[0].mxu0
        %1465 = vdwg.mxu0
        %1466 = vmatprep.subr.bf16.mxu0 %v1411
        %1467 = vmatpush1.bf16.msra.mxu0 %v1408
        %1468 = vmatprep.subr.bf16.mxu0 0
        %1469 = vmatpush1.bf16.msra.mxu0 0
        %1470 = vmatprep.subr.bf16.mxu0 0
        %1471 = vmatpush1.bf16.msra.mxu0 0
        %1472 = vmatprep.subr.bf16.mxu0 0
        %1473 = vmatpush1.bf16.msra.mxu0 0
        %1474 = vmatprep.subr.bf16.mxu0 0
        %1475 = vmatpush1.bf16.msra.mxu0 0
        %1476 = vmatprep.subr.bf16.mxu0 0
        %1477 = vmatpush1.bf16.msra.mxu0 0
        %1478 = vmatprep.subr.bf16.mxu0 0
        %1479 = vmatpush1.bf16.msra.mxu0 0
        %1480 = vmatprep.subr.bf16.mxu0 0
        %1481 = vmatpush1.bf16.msra.mxu0 0
        %1482 = vmatprep.subr.bf16.mxu0 0
        %1483 = vmatpush1.bf16.msra.mxu0 0
        %1484 = vmatprep.subr.bf16.mxu0 0
        %1485 = vmatpush1.bf16.msra.mxu0 0
        %1486 = vmatprep.subr.bf16.mxu0 0
        %1487 = vmatpush1.bf16.msra.mxu0 0
        %1488 = vmatprep.subr.bf16.mxu0 0
        %1489 = vmatpush1.bf16.msra.mxu0 0
        %1490 = vmatprep.subr.bf16.mxu0 0
        %1491 = vmatpush1.bf16.msra.mxu0 0
        %1492 = vmatprep.subr.bf16.mxu0 0
        %1493 = vmatpush1.bf16.msra.mxu0 0
        %1494 = vmatprep.subr.bf16.mxu0 0
        %1495 = vmatpush1.bf16.msra.mxu0 0
        %1496 = vmatprep.subr.bf16.mxu0 0
        %1497 = vmatpush1.bf16.msra.mxu0 0
        %1498 = vmatprep.mubr.bf16.mxu0 0
        %1499 = vmatmul.mubr.bf16.gmra.mrb[0].mxu0 %v1399
        %v1500 = vpop.f32.mrb[0].mxu0
        %v1501 = vadd.f32 0.0, %v1500
        %v1502 = vpop.f32.mrb[0].mxu0
        %v1503 = vadd.f32 0.0, %v1502
        %v1504 = vpop.f32.mrb[0].mxu0
        %v1505 = vpop.f32.mrb[0].mxu0
        %1506 = vdwg.mxu0
        %1507 = vmatprep.subr.bf16.mxu0 %v1417
        %1508 = vmatpush1.bf16.msra.mxu0 %v1414
        %1509 = vmatprep.subr.bf16.mxu0 0
        %1510 = vmatpush1.bf16.msra.mxu0 0
        %1511 = vmatprep.subr.bf16.mxu0 0
        %1512 = vmatpush1.bf16.msra.mxu0 0
        %1513 = vmatprep.subr.bf16.mxu0 0
        %1514 = vmatpush1.bf16.msra.mxu0 0
        %1515 = vmatprep.subr.bf16.mxu0 0
        %1516 = vmatpush1.bf16.msra.mxu0 0
        %1517 = vmatprep.subr.bf16.mxu0 0
        %1518 = vmatpush1.bf16.msra.mxu0 0
        %1519 = vmatprep.subr.bf16.mxu0 0
        %1520 = vmatpush1.bf16.msra.mxu0 0
        %1521 = vmatprep.subr.bf16.mxu0 0
        %1522 = vmatpush1.bf16.msra.mxu0 0
        %1523 = vmatprep.subr.bf16.mxu0 0
        %1524 = vmatpush1.bf16.msra.mxu0 0
        %1525 = vmatprep.subr.bf16.mxu0 0
        %1526 = vmatpush1.bf16.msra.mxu0 0
        %1527 = vmatprep.subr.bf16.mxu0 0
        %1528 = vmatpush1.bf16.msra.mxu0 0
        %1529 = vmatprep.subr.bf16.mxu0 0
        %1530 = vmatpush1.bf16.msra.mxu0 0
        %1531 = vmatprep.subr.bf16.mxu0 0
        %1532 = vmatpush1.bf16.msra.mxu0 0
        %1533 = vmatprep.subr.bf16.mxu0 0
        %1534 = vmatpush1.bf16.msra.mxu0 0
        %1535 = vmatprep.subr.bf16.mxu0 0
        %1536 = vmatpush1.bf16.msra.mxu0 0
        %1537 = vmatprep.subr.bf16.mxu0 0
        %1538 = vmatpush1.bf16.msra.mxu0 0
        %1539 = vmatprep.mubr.bf16.mxu0 0
        %1540 = vmatmul.mubr.bf16.gmra.mrb[0].mxu0 %v1399
        %v1541 = vpop.f32.mrb[0].mxu0
        %v1542 = vadd.f32 0.0, %v1541
        %v1543 = vpop.f32.mrb[0].mxu0
        %v1544 = vadd.f32 0.0, %v1543
        %v1545 = vpop.f32.mrb[0].mxu0
        %v1546 = vpop.f32.mrb[0].mxu0
        %1547 = vdwg.mxu0
        %1548 = vmatprep.subr.bf16.mxu0 %v1423
        %1549 = vmatpush1.bf16.msra.mxu0 %v1420
        %1550 = vmatprep.subr.bf16.mxu0 0
        %1551 = vmatpush1.bf16.msra.mxu0 0
        %1552 = vmatprep.subr.bf16.mxu0 0
        %1553 = vmatpush1.bf16.msra.mxu0 0
        %1554 = vmatprep.subr.bf16.mxu0 0
        %1555 = vmatpush1.bf16.msra.mxu0 0
        %1556 = vmatprep.subr.bf16.mxu0 0
        %1557 = vmatpush1.bf16.msra.mxu0 0
        %1558 = vmatprep.subr.bf16.mxu0 0
        %1559 = vmatpush1.bf16.msra.mxu0 0
        %1560 = vmatprep.subr.bf16.mxu0 0
        %1561 = vmatpush1.bf16.msra.mxu0 0
        %1562 = vmatprep.subr.bf16.mxu0 0
        %1563 = vmatpush1.bf16.msra.mxu0 0
        %1564 = vmatprep.subr.bf16.mxu0 0
        %1565 = vmatpush1.bf16.msra.mxu0 0
        %1566 = vmatprep.subr.bf16.mxu0 0
        %1567 = vmatpush1.bf16.msra.mxu0 0
        %1568 = vmatprep.subr.bf16.mxu0 0
        %1569 = vmatpush1.bf16.msra.mxu0 0
        %1570 = vmatprep.subr.bf16.mxu0 0
        %1571 = vmatpush1.bf16.msra.mxu0 0
        %1572 = vmatprep.subr.bf16.mxu0 0
        %1573 = vmatpush1.bf16.msra.mxu0 0
        %1574 = vmatprep.subr.bf16.mxu0 0
        %1575 = vmatpush1.bf16.msra.mxu0 0
        %1576 = vmatprep.subr.bf16.mxu0 0
        %1577 = vmatpush1.bf16.msra.mxu0 0
        %1578 = vmatprep.subr.bf16.mxu0 0
        %1579 = vmatpush1.bf16.msra.mxu0 0
        %1580 = vmatprep.mubr.bf16.mxu0 0
        %1581 = vmatmul.mubr.bf16.gmra.mrb[0].mxu0 %v1399
        %v1582 = vpop.f32.mrb[0].mxu0
        %v1583 = vadd.f32 0.0, %v1582
        %v1584 = vpop.f32.mrb[0].mxu0
        %v1585 = vadd.f32 0.0, %v1584
        %v1586 = vpop.f32.mrb[0].mxu0
        %v1587 = vpop.f32.mrb[0].mxu0
        %1588 = vdwg.mxu0
        %v1589 = vadd.f32 %v1224, %v1460
        %v1590 = vadd.f32 %v1225, %v1462
        %v1591 = vadd.f32 %v1226, %v1501
        %v1592 = vadd.f32 %v1227, %v1503
        %v1593 = vadd.f32 %v1228, %v1542
        %v1594 = vadd.f32 %v1229, %v1544
        %v1595 = vadd.f32 %v1230, %v1583
        %v1596 = vadd.f32 %v1231, %v1585
        %v1597 = vld [vmem:[#allocation2] sm:$0xff]
        %v1598 = vld [vmem:[#allocation2 + $0x8] sm:$0xff]
        %v1599 = vld [vmem:[#allocation2 + $0x10] sm:$0x3]
        %1600 = vrot.lane.b32.xlu0 %v647, 63
        %v1601 = vpop.permute.xlu0 %1600
        %1602 = vrot.lane.b32.xlu0 %v664, 63
        %v1603 = vpop.permute.xlu0 %1602
        %v1604 = vrot.slane %v1601, 6
        %v1605 = vrot.slane %v1603, 6
        %vm1606 = vcmask 515072
        %v1607 = vsel %vm1606, %v1604, %v1601
        %v1608 = vsel %vm358, %v1604, %v1605
        %v1609 = vsel %vm1606, %v1608, %v1603
        %v1613 = vmul.bf16 %v1597, %v1607
        %v1614 = vmul.bf16 %v1598, %v1609
        %v1615 = vmul.bf16 %v1599, %v1605
        %s1616 = scalar_lea.vmem %s1, 12
        %v1617 = vld [vmem:[%s1616] sm:$0xf]
        %v1621 = vcombine.high %v1613, %v1613
        %v1623 = vunpack.c.l.s4 1983009808
        %v1624 = vunpack.c.0.s8 %v1623
        %v1625 = vlaneseq
        %v1626 = vshrl.u32 %v1625, 7
        %v1627 = vsub.s32 %v1624, %v1626
        %v1628 = vrot.slane %v1613, %v1627
        %v1630 = vunpack.c.l.s4 1983009808
        %v1631 = vunpack.c.0.s8 %v1630
        %v1632 = vlaneseq
        %v1633 = vshrl.u32 %v1632, 7
        %v1634 = vsub.s32 %v1631, %v1633
        %v1635 = vrot.slane %v1621, %v1634
        %v1636 = vcombine.high %v1628, %v1628
        %v1637 = vcombine.high %v1635, %v1635
        %v1638 = vcombine.high %v1614, %v1614
        %v1640 = vunpack.c.l.s4 1983009808
        %v1641 = vunpack.c.0.s8 %v1640
        %v1642 = vlaneseq
        %v1643 = vshrl.u32 %v1642, 7
        %v1644 = vsub.s32 %v1641, %v1643
        %v1645 = vrot.slane %v1614, %v1644
        %v1647 = vunpack.c.l.s4 1983009808
        %v1648 = vunpack.c.0.s8 %v1647
        %v1649 = vlaneseq
        %v1650 = vshrl.u32 %v1649, 7
        %v1651 = vsub.s32 %v1648, %v1650
        %v1652 = vrot.slane %v1638, %v1651
        %v1653 = vcombine.high %v1645, %v1645
        %v1654 = vcombine.high %v1652, %v1652
        %v1656 = vunpack.c.l.s4 1983009808
        %v1657 = vunpack.c.0.s8 %v1656
        %v1658 = vlaneseq
        %v1659 = vshrl.u32 %v1658, 7
        %v1660 = vsub.s32 %v1657, %v1659
        %v1661 = vrot.slane %v1615, %v1660
        %1662 = vrot.lane.b32.xlu0 %v1628, 65
        %v1663 = vpop.permute.xlu0 %1662
        %1664 = vrot.lane.b32.xlu0 %v1636, 65
        %v1665 = vpop.permute.xlu0 %1664
        %1666 = vrot.lane.b32.xlu0 %v1635, 65
        %v1667 = vpop.permute.xlu0 %1666
        %1668 = vrot.lane.b32.xlu0 %v1637, 65
        %v1669 = vpop.permute.xlu0 %1668
        %1670 = vrot.lane.b32.xlu0 %v1645, 65
        %v1671 = vpop.permute.xlu0 %1670
        %1672 = vrot.lane.b32.xlu0 %v1653, 65
        %v1673 = vpop.permute.xlu0 %1672
        %1674 = vrot.lane.b32.xlu0 %v1652, 65
        %v1675 = vpop.permute.xlu0 %1674
        %1676 = vrot.lane.b32.xlu0 %v1654, 65
        %v1677 = vpop.permute.xlu0 %1676
        %1678 = vrot.lane.b32.xlu0 %v1661, 65
        %v1679 = vpop.permute.xlu0 %1678
        %vm1680 = vcmask 531456
        %v1681 = vsel %vm1680, %v1663, %v1665
        %v1682 = vsel %vm1680, %v1665, %v1667
        %v1683 = vsel %vm1680, %v1667, %v1669
        %v1684 = vsel %vm1680, %v1669, %v1671
        %v1685 = vsel %vm1680, %v1671, %v1673
        %v1686 = vsel %vm1680, %v1673, %v1675
        %v1687 = vsel %vm1680, %v1675, %v1677
        %v1688 = vsel %vm1680, %v1677, %v1679
        %v1690 = vsel %vm753, %v1617, 0
        %v1693 = vand.u32 %v1681, %v760
        %v1696 = vand.u32 %v1682, %v760
        %v1699 = vand.u32 %v1683, %v760
        %v1702 = vand.u32 %v1684, %v760
        %v1705 = vand.u32 %v1685, %v760
        %v1708 = vand.u32 %v1686, %v760
        %v1711 = vand.u32 %v1687, %v760
        %v1714 = vand.u32 %v1688, %v760
        %1716 = vmatprep.subr.bf16.mxu0 %v1696
        %1717 = vmatpush1.bf16.msra.mxu0 %v1693
        %1718 = vmatprep.subr.bf16.mxu0 0
        %1719 = vmatpush1.bf16.msra.mxu0 0
        %1720 = vmatprep.subr.bf16.mxu0 0
        %1721 = vmatpush1.bf16.msra.mxu0 0
        %1722 = vmatprep.subr.bf16.mxu0 0
        %1723 = vmatpush1.bf16.msra.mxu0 0
        %1724 = vmatprep.subr.bf16.mxu0 0
        %1725 = vmatpush1.bf16.msra.mxu0 0
        %1726 = vmatprep.subr.bf16.mxu0 0
        %1727 = vmatpush1.bf16.msra.mxu0 0
        %1728 = vmatprep.subr.bf16.mxu0 0
        %1729 = vmatpush1.bf16.msra.mxu0 0
        %1730 = vmatprep.subr.bf16.mxu0 0
        %1731 = vmatpush1.bf16.msra.mxu0 0
        %1732 = vmatprep.subr.bf16.mxu0 0
        %1733 = vmatpush1.bf16.msra.mxu0 0
        %1734 = vmatprep.subr.bf16.mxu0 0
        %1735 = vmatpush1.bf16.msra.mxu0 0
        %1736 = vmatprep.subr.bf16.mxu0 0
        %1737 = vmatpush1.bf16.msra.mxu0 0
        %1738 = vmatprep.subr.bf16.mxu0 0
        %1739 = vmatpush1.bf16.msra.mxu0 0
        %1740 = vmatprep.subr.bf16.mxu0 0
        %1741 = vmatpush1.bf16.msra.mxu0 0
        %1742 = vmatprep.subr.bf16.mxu0 0
        %1743 = vmatpush1.bf16.msra.mxu0 0
        %1744 = vmatprep.subr.bf16.mxu0 0
        %1745 = vmatpush1.bf16.msra.mxu0 0
        %1746 = vmatprep.subr.bf16.mxu0 0
        %1747 = vmatpush1.bf16.msra.mxu0 0
        %1748 = vmatprep.mubr.bf16.mxu0 0
        %1749 = vmatmul.mubr.bf16.gmra.mrb[0].mxu0 %v1690
        %v1750 = vpop.f32.mrb[0].mxu0
        %v1751 = vadd.f32 0.0, %v1750
        %v1752 = vpop.f32.mrb[0].mxu0
        %v1753 = vadd.f32 0.0, %v1752
        %v1754 = vpop.f32.mrb[0].mxu0
        %v1755 = vpop.f32.mrb[0].mxu0
        %1756 = vdwg.mxu0
        %1757 = vmatprep.subr.bf16.mxu0 %v1702
        %1758 = vmatpush1.bf16.msra.mxu0 %v1699
        %1759 = vmatprep.subr.bf16.mxu0 0
        %1760 = vmatpush1.bf16.msra.mxu0 0
        %1761 = vmatprep.subr.bf16.mxu0 0
        %1762 = vmatpush1.bf16.msra.mxu0 0
        %1763 = vmatprep.subr.bf16.mxu0 0
        %1764 = vmatpush1.bf16.msra.mxu0 0
        %1765 = vmatprep.subr.bf16.mxu0 0
        %1766 = vmatpush1.bf16.msra.mxu0 0
        %1767 = vmatprep.subr.bf16.mxu0 0
        %1768 = vmatpush1.bf16.msra.mxu0 0
        %1769 = vmatprep.subr.bf16.mxu0 0
        %1770 = vmatpush1.bf16.msra.mxu0 0
        %1771 = vmatprep.subr.bf16.mxu0 0
        %1772 = vmatpush1.bf16.msra.mxu0 0
        %1773 = vmatprep.subr.bf16.mxu0 0
        %1774 = vmatpush1.bf16.msra.mxu0 0
        %1775 = vmatprep.subr.bf16.mxu0 0
        %1776 = vmatpush1.bf16.msra.mxu0 0
        %1777 = vmatprep.subr.bf16.mxu0 0
        %1778 = vmatpush1.bf16.msra.mxu0 0
        %1779 = vmatprep.subr.bf16.mxu0 0
        %1780 = vmatpush1.bf16.msra.mxu0 0
        %1781 = vmatprep.subr.bf16.mxu0 0
        %1782 = vmatpush1.bf16.msra.mxu0 0
        %1783 = vmatprep.subr.bf16.mxu0 0
        %1784 = vmatpush1.bf16.msra.mxu0 0
        %1785 = vmatprep.subr.bf16.mxu0 0
        %1786 = vmatpush1.bf16.msra.mxu0 0
        %1787 = vmatprep.subr.bf16.mxu0 0
        %1788 = vmatpush1.bf16.msra.mxu0 0
        %1789 = vmatprep.mubr.bf16.mxu0 0
        %1790 = vmatmul.mubr.bf16.gmra.mrb[0].mxu0 %v1690
        %v1791 = vpop.f32.mrb[0].mxu0
        %v1792 = vadd.f32 0.0, %v1791
        %v1793 = vpop.f32.mrb[0].mxu0
        %v1794 = vadd.f32 0.0, %v1793
        %v1795 = vpop.f32.mrb[0].mxu0
        %v1796 = vpop.f32.mrb[0].mxu0
        %1797 = vdwg.mxu0
        %1798 = vmatprep.subr.bf16.mxu0 %v1708
        %1799 = vmatpush1.bf16.msra.mxu0 %v1705
        %1800 = vmatprep.subr.bf16.mxu0 0
        %1801 = vmatpush1.bf16.msra.mxu0 0
        %1802 = vmatprep.subr.bf16.mxu0 0
        %1803 = vmatpush1.bf16.msra.mxu0 0
        %1804 = vmatprep.subr.bf16.mxu0 0
        %1805 = vmatpush1.bf16.msra.mxu0 0
        %1806 = vmatprep.subr.bf16.mxu0 0
        %1807 = vmatpush1.bf16.msra.mxu0 0
        %1808 = vmatprep.subr.bf16.mxu0 0
        %1809 = vmatpush1.bf16.msra.mxu0 0
        %1810 = vmatprep.subr.bf16.mxu0 0
        %1811 = vmatpush1.bf16.msra.mxu0 0
        %1812 = vmatprep.subr.bf16.mxu0 0
        %1813 = vmatpush1.bf16.msra.mxu0 0
        %1814 = vmatprep.subr.bf16.mxu0 0
        %1815 = vmatpush1.bf16.msra.mxu0 0
        %1816 = vmatprep.subr.bf16.mxu0 0
        %1817 = vmatpush1.bf16.msra.mxu0 0
        %1818 = vmatprep.subr.bf16.mxu0 0
        %1819 = vmatpush1.bf16.msra.mxu0 0
        %1820 = vmatprep.subr.bf16.mxu0 0
        %1821 = vmatpush1.bf16.msra.mxu0 0
        %1822 = vmatprep.subr.bf16.mxu0 0
        %1823 = vmatpush1.bf16.msra.mxu0 0
        %1824 = vmatprep.subr.bf16.mxu0 0
        %1825 = vmatpush1.bf16.msra.mxu0 0
        %1826 = vmatprep.subr.bf16.mxu0 0
        %1827 = vmatpush1.bf16.msra.mxu0 0
        %1828 = vmatprep.subr.bf16.mxu0 0
        %1829 = vmatpush1.bf16.msra.mxu0 0
        %1830 = vmatprep.mubr.bf16.mxu0 0
        %1831 = vmatmul.mubr.bf16.gmra.mrb[0].mxu0 %v1690
        %v1832 = vpop.f32.mrb[0].mxu0
        %v1833 = vadd.f32 0.0, %v1832
        %v1834 = vpop.f32.mrb[0].mxu0
        %v1835 = vadd.f32 0.0, %v1834
        %v1836 = vpop.f32.mrb[0].mxu0
        %v1837 = vpop.f32.mrb[0].mxu0
        %1838 = vdwg.mxu0
        %1839 = vmatprep.subr.bf16.mxu0 %v1714
        %1840 = vmatpush1.bf16.msra.mxu0 %v1711
        %1841 = vmatprep.subr.bf16.mxu0 0
        %1842 = vmatpush1.bf16.msra.mxu0 0
        %1843 = vmatprep.subr.bf16.mxu0 0
        %1844 = vmatpush1.bf16.msra.mxu0 0
        %1845 = vmatprep.subr.bf16.mxu0 0
        %1846 = vmatpush1.bf16.msra.mxu0 0
        %1847 = vmatprep.subr.bf16.mxu0 0
        %1848 = vmatpush1.bf16.msra.mxu0 0
        %1849 = vmatprep.subr.bf16.mxu0 0
        %1850 = vmatpush1.bf16.msra.mxu0 0
        %1851 = vmatprep.subr.bf16.mxu0 0
        %1852 = vmatpush1.bf16.msra.mxu0 0
        %1853 = vmatprep.subr.bf16.mxu0 0
        %1854 = vmatpush1.bf16.msra.mxu0 0
        %1855 = vmatprep.subr.bf16.mxu0 0
        %1856 = vmatpush1.bf16.msra.mxu0 0
        %1857 = vmatprep.subr.bf16.mxu0 0
        %1858 = vmatpush1.bf16.msra.mxu0 0
        %1859 = vmatprep.subr.bf16.mxu0 0
        %1860 = vmatpush1.bf16.msra.mxu0 0
        %1861 = vmatprep.subr.bf16.mxu0 0
        %1862 = vmatpush1.bf16.msra.mxu0 0
        %1863 = vmatprep.subr.bf16.mxu0 0
        %1864 = vmatpush1.bf16.msra.mxu0 0
        %1865 = vmatprep.subr.bf16.mxu0 0
        %1866 = vmatpush1.bf16.msra.mxu0 0
        %1867 = vmatprep.subr.bf16.mxu0 0
        %1868 = vmatpush1.bf16.msra.mxu0 0
        %1869 = vmatprep.subr.bf16.mxu0 0
        %1870 = vmatpush1.bf16.msra.mxu0 0
        %1871 = vmatprep.mubr.bf16.mxu0 0
        %1872 = vmatmul.mubr.bf16.gmra.mrb[0].mxu0 %v1690
        %v1873 = vpop.f32.mrb[0].mxu0
        %v1874 = vadd.f32 0.0, %v1873
        %v1875 = vpop.f32.mrb[0].mxu0
        %v1876 = vadd.f32 0.0, %v1875
        %v1877 = vpop.f32.mrb[0].mxu0
        %v1878 = vpop.f32.mrb[0].mxu0
        %1879 = vdwg.mxu0
        %v1880 = vadd.f32 %v1589, %v1751
        %v1881 = vadd.f32 %v1590, %v1753
        %v1882 = vadd.f32 %v1591, %v1792
        %v1883 = vadd.f32 %v1592, %v1794
        %v1884 = vadd.f32 %v1593, %v1833
        %v1885 = vadd.f32 %v1594, %v1835
        %v1886 = vadd.f32 %v1595, %v1874
        %v1887 = vadd.f32 %v1596, %v1876
        %v1888 = vld [vmem:[#allocation2] sm:$0xff]
        %v1889 = vld [vmem:[#allocation2 + $0x8] sm:$0xff]
        %v1890 = vld [vmem:[#allocation2 + $0x10] sm:$0x3]
        %s1891 = scalar_lea.vmem %s1, 16
        %v1892 = vld [vmem:[%s1891] sm:$0xf]
        %v1896 = vcombine.high %v1888, %v1888
        %v1898 = vunpack.c.l.s4 1983009808
        %v1899 = vunpack.c.0.s8 %v1898
        %v1900 = vlaneseq
        %v1901 = vshrl.u32 %v1900, 7
        %v1902 = vsub.s32 %v1899, %v1901
        %v1903 = vrot.slane %v1888, %v1902
        %v1905 = vunpack.c.l.s4 1983009808
        %v1906 = vunpack.c.0.s8 %v1905
        %v1907 = vlaneseq
        %v1908 = vshrl.u32 %v1907, 7
        %v1909 = vsub.s32 %v1906, %v1908
        %v1910 = vrot.slane %v1896, %v1909
        %v1911 = vcombine.high %v1903, %v1903
        %v1912 = vcombine.high %v1910, %v1910
        %v1913 = vcombine.high %v1889, %v1889
        %v1915 = vunpack.c.l.s4 1983009808
        %v1916 = vunpack.c.0.s8 %v1915
        %v1917 = vlaneseq
        %v1918 = vshrl.u32 %v1917, 7
        %v1919 = vsub.s32 %v1916, %v1918
        %v1920 = vrot.slane %v1889, %v1919
        %v1922 = vunpack.c.l.s4 1983009808
        %v1923 = vunpack.c.0.s8 %v1922
        %v1924 = vlaneseq
        %v1925 = vshrl.u32 %v1924, 7
        %v1926 = vsub.s32 %v1923, %v1925
        %v1927 = vrot.slane %v1913, %v1926
        %v1928 = vcombine.high %v1920, %v1920
        %v1929 = vcombine.high %v1927, %v1927
        %v1931 = vunpack.c.l.s4 1983009808
        %v1932 = vunpack.c.0.s8 %v1931
        %v1933 = vlaneseq
        %v1934 = vshrl.u32 %v1933, 7
        %v1935 = vsub.s32 %v1932, %v1934
        %v1936 = vrot.slane %v1890, %v1935
        %1937 = vrot.lane.b32.xlu0 %v1903, 64
        %v1938 = vpop.permute.xlu0 %1937
        %1939 = vrot.lane.b32.xlu0 %v1911, 64
        %v1940 = vpop.permute.xlu0 %1939
        %1941 = vrot.lane.b32.xlu0 %v1910, 64
        %v1942 = vpop.permute.xlu0 %1941
        %1943 = vrot.lane.b32.xlu0 %v1912, 64
        %v1944 = vpop.permute.xlu0 %1943
        %1945 = vrot.lane.b32.xlu0 %v1920, 64
        %v1946 = vpop.permute.xlu0 %1945
        %1947 = vrot.lane.b32.xlu0 %v1928, 64
        %v1948 = vpop.permute.xlu0 %1947
        %1949 = vrot.lane.b32.xlu0 %v1927, 64
        %v1950 = vpop.permute.xlu0 %1949
        %1951 = vrot.lane.b32.xlu0 %v1929, 64
        %v1952 = vpop.permute.xlu0 %1951
        %1953 = vrot.lane.b32.xlu0 %v1936, 64
        %v1954 = vpop.permute.xlu0 %1953
        %v1955 = vsel %vm454, %v1938, %v1940
        %v1956 = vsel %vm454, %v1940, %v1942
        %v1957 = vsel %vm454, %v1942, %v1944
        %v1958 = vsel %vm454, %v1944, %v1946
        %v1959 = vsel %vm454, %v1946, %v1948
        %v1960 = vsel %vm454, %v1948, %v1950
        %v1961 = vsel %vm454, %v1950, %v1952
        %v1962 = vsel %vm454, %v1952, %v1954
        %v1964 = vsel %vm753, %v1892, 0
        %v1967 = vand.u32 %v1955, %v760
        %v1970 = vand.u32 %v1956, %v760
        %v1973 = vand.u32 %v1957, %v760
        %v1976 = vand.u32 %v1958, %v760
        %v1979 = vand.u32 %v1959, %v760
        %v1982 = vand.u32 %v1960, %v760
        %v1985 = vand.u32 %v1961, %v760
        %v1988 = vand.u32 %v1962, %v760
        %1990 = vmatprep.subr.bf16.mxu0 %v1970
        %1991 = vmatpush1.bf16.msra.mxu0 %v1967
        %1992 = vmatprep.subr.bf16.mxu0 0
        %1993 = vmatpush1.bf16.msra.mxu0 0
        %1994 = vmatprep.subr.bf16.mxu0 0
        %1995 = vmatpush1.bf16.msra.mxu0 0
        %1996 = vmatprep.subr.bf16.mxu0 0
        %1997 = vmatpush1.bf16.msra.mxu0 0
        %1998 = vmatprep.subr.bf16.mxu0 0
        %1999 = vmatpush1.bf16.msra.mxu0 0
        %2000 = vmatprep.subr.bf16.mxu0 0
        %2001 = vmatpush1.bf16.msra.mxu0 0
        %2002 = vmatprep.subr.bf16.mxu0 0
        %2003 = vmatpush1.bf16.msra.mxu0 0
        %2004 = vmatprep.subr.bf16.mxu0 0
        %2005 = vmatpush1.bf16.msra.mxu0 0
        %2006 = vmatprep.subr.bf16.mxu0 0
        %2007 = vmatpush1.bf16.msra.mxu0 0
        %2008 = vmatprep.subr.bf16.mxu0 0
        %2009 = vmatpush1.bf16.msra.mxu0 0
        %2010 = vmatprep.subr.bf16.mxu0 0
        %2011 = vmatpush1.bf16.msra.mxu0 0
        %2012 = vmatprep.subr.bf16.mxu0 0
        %2013 = vmatpush1.bf16.msra.mxu0 0
        %2014 = vmatprep.subr.bf16.mxu0 0
        %2015 = vmatpush1.bf16.msra.mxu0 0
        %2016 = vmatprep.subr.bf16.mxu0 0
        %2017 = vmatpush1.bf16.msra.mxu0 0
        %2018 = vmatprep.subr.bf16.mxu0 0
        %2019 = vmatpush1.bf16.msra.mxu0 0
        %2020 = vmatprep.subr.bf16.mxu0 0
        %2021 = vmatpush1.bf16.msra.mxu0 0
        %2022 = vmatprep.mubr.bf16.mxu0 0
        %2023 = vmatmul.mubr.bf16.gmra.mrb[0].mxu0 %v1964
        %v2024 = vpop.f32.mrb[0].mxu0
        %v2025 = vadd.f32 0.0, %v2024
        %v2026 = vpop.f32.mrb[0].mxu0
        %v2027 = vadd.f32 0.0, %v2026
        %v2028 = vpop.f32.mrb[0].mxu0
        %v2029 = vpop.f32.mrb[0].mxu0
        %2030 = vdwg.mxu0
        %2031 = vmatprep.subr.bf16.mxu0 %v1976
        %2032 = vmatpush1.bf16.msra.mxu0 %v1973
        %2033 = vmatprep.subr.bf16.mxu0 0
        %2034 = vmatpush1.bf16.msra.mxu0 0
        %2035 = vmatprep.subr.bf16.mxu0 0
        %2036 = vmatpush1.bf16.msra.mxu0 0
        %2037 = vmatprep.subr.bf16.mxu0 0
        %2038 = vmatpush1.bf16.msra.mxu0 0
        %2039 = vmatprep.subr.bf16.mxu0 0
        %2040 = vmatpush1.bf16.msra.mxu0 0
        %2041 = vmatprep.subr.bf16.mxu0 0
        %2042 = vmatpush1.bf16.msra.mxu0 0
        %2043 = vmatprep.subr.bf16.mxu0 0
        %2044 = vmatpush1.bf16.msra.mxu0 0
        %2045 = vmatprep.subr.bf16.mxu0 0
        %2046 = vmatpush1.bf16.msra.mxu0 0
        %2047 = vmatprep.subr.bf16.mxu0 0
        %2048 = vmatpush1.bf16.msra.mxu0 0
        %2049 = vmatprep.subr.bf16.mxu0 0
        %2050 = vmatpush1.bf16.msra.mxu0 0
        %2051 = vmatprep.subr.bf16.mxu0 0
        %2052 = vmatpush1.bf16.msra.mxu0 0
        %2053 = vmatprep.subr.bf16.mxu0 0
        %2054 = vmatpush1.bf16.msra.mxu0 0
        %2055 = vmatprep.subr.bf16.mxu0 0
        %2056 = vmatpush1.bf16.msra.mxu0 0
        %2057 = vmatprep.subr.bf16.mxu0 0
        %2058 = vmatpush1.bf16.msra.mxu0 0
        %2059 = vmatprep.subr.bf16.mxu0 0
        %2060 = vmatpush1.bf16.msra.mxu0 0
        %2061 = vmatprep.subr.bf16.mxu0 0
        %2062 = vmatpush1.bf16.msra.mxu0 0
        %2063 = vmatprep.mubr.bf16.mxu0 0
        %2064 = vmatmul.mubr.bf16.gmra.mrb[0].mxu0 %v1964
        %v2065 = vpop.f32.mrb[0].mxu0
        %v2066 = vadd.f32 0.0, %v2065
        %v2067 = vpop.f32.mrb[0].mxu0
        %v2068 = vadd.f32 0.0, %v2067
        %v2069 = vpop.f32.mrb[0].mxu0
        %v2070 = vpop.f32.mrb[0].mxu0
        %2071 = vdwg.mxu0
        %2072 = vmatprep.subr.bf16.mxu0 %v1982
        %2073 = vmatpush1.bf16.msra.mxu0 %v1979
        %2074 = vmatprep.subr.bf16.mxu0 0
        %2075 = vmatpush1.bf16.msra.mxu0 0
        %2076 = vmatprep.subr.bf16.mxu0 0
        %2077 = vmatpush1.bf16.msra.mxu0 0
        %2078 = vmatprep.subr.bf16.mxu0 0
        %2079 = vmatpush1.bf16.msra.mxu0 0
        %2080 = vmatprep.subr.bf16.mxu0 0
        %2081 = vmatpush1.bf16.msra.mxu0 0
        %2082 = vmatprep.subr.bf16.mxu0 0
        %2083 = vmatpush1.bf16.msra.mxu0 0
        %2084 = vmatprep.subr.bf16.mxu0 0
        %2085 = vmatpush1.bf16.msra.mxu0 0
        %2086 = vmatprep.subr.bf16.mxu0 0
        %2087 = vmatpush1.bf16.msra.mxu0 0
        %2088 = vmatprep.subr.bf16.mxu0 0
        %2089 = vmatpush1.bf16.msra.mxu0 0
        %2090 = vmatprep.subr.bf16.mxu0 0
        %2091 = vmatpush1.bf16.msra.mxu0 0
        %2092 = vmatprep.subr.bf16.mxu0 0
        %2093 = vmatpush1.bf16.msra.mxu0 0
        %2094 = vmatprep.subr.bf16.mxu0 0
        %2095 = vmatpush1.bf16.msra.mxu0 0
        %2096 = vmatprep.subr.bf16.mxu0 0
        %2097 = vmatpush1.bf16.msra.mxu0 0
        %2098 = vmatprep.subr.bf16.mxu0 0
        %2099 = vmatpush1.bf16.msra.mxu0 0
        %2100 = vmatprep.subr.bf16.mxu0 0
        %2101 = vmatpush1.bf16.msra.mxu0 0
        %2102 = vmatprep.subr.bf16.mxu0 0
        %2103 = vmatpush1.bf16.msra.mxu0 0
        %2104 = vmatprep.mubr.bf16.mxu0 0
        %2105 = vmatmul.mubr.bf16.gmra.mrb[0].mxu0 %v1964
        %v2106 = vpop.f32.mrb[0].mxu0
        %v2107 = vadd.f32 0.0, %v2106
        %v2108 = vpop.f32.mrb[0].mxu0
        %v2109 = vadd.f32 0.0, %v2108
        %v2110 = vpop.f32.mrb[0].mxu0
        %v2111 = vpop.f32.mrb[0].mxu0
        %2112 = vdwg.mxu0
        %2113 = vmatprep.subr.bf16.mxu0 %v1988
        %2114 = vmatpush1.bf16.msra.mxu0 %v1985
        %2115 = vmatprep.subr.bf16.mxu0 0
        %2116 = vmatpush1.bf16.msra.mxu0 0
        %2117 = vmatprep.subr.bf16.mxu0 0
        %2118 = vmatpush1.bf16.msra.mxu0 0
        %2119 = vmatprep.subr.bf16.mxu0 0
        %2120 = vmatpush1.bf16.msra.mxu0 0
        %2121 = vmatprep.subr.bf16.mxu0 0
        %2122 = vmatpush1.bf16.msra.mxu0 0
        %2123 = vmatprep.subr.bf16.mxu0 0
        %2124 = vmatpush1.bf16.msra.mxu0 0
        %2125 = vmatprep.subr.bf16.mxu0 0
        %2126 = vmatpush1.bf16.msra.mxu0 0
        %2127 = vmatprep.subr.bf16.mxu0 0
        %2128 = vmatpush1.bf16.msra.mxu0 0
        %2129 = vmatprep.subr.bf16.mxu0 0
        %2130 = vmatpush1.bf16.msra.mxu0 0
        %2131 = vmatprep.subr.bf16.mxu0 0
        %2132 = vmatpush1.bf16.msra.mxu0 0
        %2133 = vmatprep.subr.bf16.mxu0 0
        %2134 = vmatpush1.bf16.msra.mxu0 0
        %2135 = vmatprep.subr.bf16.mxu0 0
        %2136 = vmatpush1.bf16.msra.mxu0 0
        %2137 = vmatprep.subr.bf16.mxu0 0
        %2138 = vmatpush1.bf16.msra.mxu0 0
        %2139 = vmatprep.subr.bf16.mxu0 0
        %2140 = vmatpush1.bf16.msra.mxu0 0
        %2141 = vmatprep.subr.bf16.mxu0 0
        %2142 = vmatpush1.bf16.msra.mxu0 0
        %2143 = vmatprep.subr.bf16.mxu0 0
        %2144 = vmatpush1.bf16.msra.mxu0 0
        %2145 = vmatprep.mubr.bf16.mxu0 0
        %2146 = vmatmul.mubr.bf16.gmra.mrb[0].mxu0 %v1964
        %v2147 = vpop.f32.mrb[0].mxu0
        %v2148 = vadd.f32 0.0, %v2147
        %v2149 = vpop.f32.mrb[0].mxu0
        %v2150 = vadd.f32 0.0, %v2149
        %v2151 = vpop.f32.mrb[0].mxu0
        %v2152 = vpop.f32.mrb[0].mxu0
        %2153 = vdwg.mxu0
        %v2154 = vadd.f32 %v1880, %v2025
        %v2155 = vadd.f32 %v1881, %v2027
        %v2156 = vadd.f32 %v1882, %v2066
        %v2157 = vadd.f32 %v1883, %v2068
        %v2158 = vadd.f32 %v1884, %v2107
        %v2159 = vadd.f32 %v1885, %v2109
        %v2160 = vadd.f32 %v1886, %v2148
        %v2161 = vadd.f32 %v1887, %v2150
        %v2162 = vld [vmem:[#allocation2] sm:$0xff]
        %v2163 = vld [vmem:[#allocation2 + $0x8] sm:$0xff]
        %v2164 = vld [vmem:[#allocation2 + $0x10] sm:$0x3]
        %2165 = vrot.lane.b32.xlu0 %v1291, 65
        %v2166 = vpop.permute.xlu0 %2165
        %2167 = vrot.lane.b32.xlu0 %v1308, 65
        %v2168 = vpop.permute.xlu0 %2167
        %v2169 = vrot.slane %v2166, 6
        %v2170 = vrot.slane %v2168, 6
        %v2171 = vsel %vm1680, %v2169, %v2166
        %v2172 = vsel %vm358, %v2169, %v2170
        %v2173 = vsel %vm1680, %v2172, %v2168
        %v2177 = vmul.bf16 %v2162, %v2171
        %v2178 = vmul.bf16 %v2163, %v2173
        %v2179 = vmul.bf16 %v2164, %v2170
        %s2180 = scalar_lea.vmem %s1, 20
        %v2181 = vld [vmem:[%s2180] sm:$0xf]
        %v2185 = vcombine.high %v2177, %v2177
        %v2187 = vunpack.c.l.s4 1983009808
        %v2188 = vunpack.c.0.s8 %v2187
        %v2189 = vlaneseq
        %v2190 = vshrl.u32 %v2189, 7
        %v2191 = vsub.s32 %v2188, %v2190
        %v2192 = vrot.slane %v2177, %v2191
        %v2194 = vunpack.c.l.s4 1983009808
        %v2195 = vunpack.c.0.s8 %v2194
        %v2196 = vlaneseq
        %v2197 = vshrl.u32 %v2196, 7
        %v2198 = vsub.s32 %v2195, %v2197
        %v2199 = vrot.slane %v2185, %v2198
        %v2200 = vcombine.high %v2192, %v2192
        %v2201 = vcombine.high %v2199, %v2199
        %v2202 = vcombine.high %v2178, %v2178
        %v2204 = vunpack.c.l.s4 1983009808
        %v2205 = vunpack.c.0.s8 %v2204
        %v2206 = vlaneseq
        %v2207 = vshrl.u32 %v2206, 7
        %v2208 = vsub.s32 %v2205, %v2207
        %v2209 = vrot.slane %v2178, %v2208
        %v2211 = vunpack.c.l.s4 1983009808
        %v2212 = vunpack.c.0.s8 %v2211
        %v2213 = vlaneseq
        %v2214 = vshrl.u32 %v2213, 7
        %v2215 = vsub.s32 %v2212, %v2214
        %v2216 = vrot.slane %v2202, %v2215
        %v2217 = vcombine.high %v2209, %v2209
        %v2218 = vcombine.high %v2216, %v2216
        %v2220 = vunpack.c.l.s4 1983009808
        %v2221 = vunpack.c.0.s8 %v2220
        %v2222 = vlaneseq
        %v2223 = vshrl.u32 %v2222, 7
        %v2224 = vsub.s32 %v2221, %v2223
        %v2225 = vrot.slane %v2179, %v2224
        %2226 = vrot.lane.b32.xlu0 %v2192, 63
        %v2227 = vpop.permute.xlu0 %2226
        %2228 = vrot.lane.b32.xlu0 %v2200, 63
        %v2229 = vpop.permute.xlu0 %2228
        %2230 = vrot.lane.b32.xlu0 %v2199, 63
        %v2231 = vpop.permute.xlu0 %2230
        %2232 = vrot.lane.b32.xlu0 %v2201, 63
        %v2233 = vpop.permute.xlu0 %2232
        %2234 = vrot.lane.b32.xlu0 %v2209, 63
        %v2235 = vpop.permute.xlu0 %2234
        %2236 = vrot.lane.b32.xlu0 %v2217, 63
        %v2237 = vpop.permute.xlu0 %2236
        %2238 = vrot.lane.b32.xlu0 %v2216, 63
        %v2239 = vpop.permute.xlu0 %2238
        %2240 = vrot.lane.b32.xlu0 %v2218, 63
        %v2241 = vpop.permute.xlu0 %2240
        %2242 = vrot.lane.b32.xlu0 %v2225, 63
        %v2243 = vpop.permute.xlu0 %2242
        %v2244 = vsel %vm1606, %v2227, %v2229
        %v2245 = vsel %vm1606, %v2229, %v2231
        %v2246 = vsel %vm1606, %v2231, %v2233
        %v2247 = vsel %vm1606, %v2233, %v2235
        %v2248 = vsel %vm1606, %v2235, %v2237
        %v2249 = vsel %vm1606, %v2237, %v2239
        %v2250 = vsel %vm1606, %v2239, %v2241
        %v2251 = vsel %vm1606, %v2241, %v2243
        %v2253 = vsel %vm753, %v2181, 0
        %v2256 = vand.u32 %v2244, %v760
        %v2259 = vand.u32 %v2245, %v760
        %v2262 = vand.u32 %v2246, %v760
        %v2265 = vand.u32 %v2247, %v760
        %v2268 = vand.u32 %v2248, %v760
        %v2271 = vand.u32 %v2249, %v760
        %v2274 = vand.u32 %v2250, %v760
        %v2277 = vand.u32 %v2251, %v760
        %2279 = vmatprep.subr.bf16.mxu0 %v2259
        %2280 = vmatpush1.bf16.msra.mxu0 %v2256
        %2281 = vmatprep.subr.bf16.mxu0 0
        %2282 = vmatpush1.bf16.msra.mxu0 0
        %2283 = vmatprep.subr.bf16.mxu0 0
        %2284 = vmatpush1.bf16.msra.mxu0 0
        %2285 = vmatprep.subr.bf16.mxu0 0
        %2286 = vmatpush1.bf16.msra.mxu0 0
        %2287 = vmatprep.subr.bf16.mxu0 0
        %2288 = vmatpush1.bf16.msra.mxu0 0
        %2289 = vmatprep.subr.bf16.mxu0 0
        %2290 = vmatpush1.bf16.msra.mxu0 0
        %2291 = vmatprep.subr.bf16.mxu0 0
        %2292 = vmatpush1.bf16.msra.mxu0 0
        %2293 = vmatprep.subr.bf16.mxu0 0
        %2294 = vmatpush1.bf16.msra.mxu0 0
        %2295 = vmatprep.subr.bf16.mxu0 0
        %2296 = vmatpush1.bf16.msra.mxu0 0
        %2297 = vmatprep.subr.bf16.mxu0 0
        %2298 = vmatpush1.bf16.msra.mxu0 0
        %2299 = vmatprep.subr.bf16.mxu0 0
        %2300 = vmatpush1.bf16.msra.mxu0 0
        %2301 = vmatprep.subr.bf16.mxu0 0
        %2302 = vmatpush1.bf16.msra.mxu0 0
        %2303 = vmatprep.subr.bf16.mxu0 0
        %2304 = vmatpush1.bf16.msra.mxu0 0
        %2305 = vmatprep.subr.bf16.mxu0 0
        %2306 = vmatpush1.bf16.msra.mxu0 0
        %2307 = vmatprep.subr.bf16.mxu0 0
        %2308 = vmatpush1.bf16.msra.mxu0 0
        %2309 = vmatprep.subr.bf16.mxu0 0
        %2310 = vmatpush1.bf16.msra.mxu0 0
        %2311 = vmatprep.mubr.bf16.mxu0 0
        %2312 = vmatmul.mubr.bf16.gmra.mrb[0].mxu0 %v2253
        %v2313 = vpop.f32.mrb[0].mxu0
        %v2314 = vadd.f32 0.0, %v2313
        %v2315 = vpop.f32.mrb[0].mxu0
        %v2316 = vadd.f32 0.0, %v2315
        %v2317 = vpop.f32.mrb[0].mxu0
        %v2318 = vpop.f32.mrb[0].mxu0
        %2319 = vdwg.mxu0
        %2320 = vmatprep.subr.bf16.mxu0 %v2265
        %2321 = vmatpush1.bf16.msra.mxu0 %v2262
        %2322 = vmatprep.subr.bf16.mxu0 0
        %2323 = vmatpush1.bf16.msra.mxu0 0
        %2324 = vmatprep.subr.bf16.mxu0 0
        %2325 = vmatpush1.bf16.msra.mxu0 0
        %2326 = vmatprep.subr.bf16.mxu0 0
        %2327 = vmatpush1.bf16.msra.mxu0 0
        %2328 = vmatprep.subr.bf16.mxu0 0
        %2329 = vmatpush1.bf16.msra.mxu0 0
        %2330 = vmatprep.subr.bf16.mxu0 0
        %2331 = vmatpush1.bf16.msra.mxu0 0
        %2332 = vmatprep.subr.bf16.mxu0 0
        %2333 = vmatpush1.bf16.msra.mxu0 0
        %2334 = vmatprep.subr.bf16.mxu0 0
        %2335 = vmatpush1.bf16.msra.mxu0 0
        %2336 = vmatprep.subr.bf16.mxu0 0
        %2337 = vmatpush1.bf16.msra.mxu0 0
        %2338 = vmatprep.subr.bf16.mxu0 0
        %2339 = vmatpush1.bf16.msra.mxu0 0
        %2340 = vmatprep.subr.bf16.mxu0 0
        %2341 = vmatpush1.bf16.msra.mxu0 0
        %2342 = vmatprep.subr.bf16.mxu0 0
        %2343 = vmatpush1.bf16.msra.mxu0 0
        %2344 = vmatprep.subr.bf16.mxu0 0
        %2345 = vmatpush1.bf16.msra.mxu0 0
        %2346 = vmatprep.subr.bf16.mxu0 0
        %2347 = vmatpush1.bf16.msra.mxu0 0
        %2348 = vmatprep.subr.bf16.mxu0 0
        %2349 = vmatpush1.bf16.msra.mxu0 0
        %2350 = vmatprep.subr.bf16.mxu0 0
        %2351 = vmatpush1.bf16.msra.mxu0 0
        %2352 = vmatprep.mubr.bf16.mxu0 0
        %2353 = vmatmul.mubr.bf16.gmra.mrb[0].mxu0 %v2253
        %v2354 = vpop.f32.mrb[0].mxu0
        %v2355 = vadd.f32 0.0, %v2354
        %v2356 = vpop.f32.mrb[0].mxu0
        %v2357 = vadd.f32 0.0, %v2356
        %v2358 = vpop.f32.mrb[0].mxu0
        %v2359 = vpop.f32.mrb[0].mxu0
        %2360 = vdwg.mxu0
        %2361 = vmatprep.subr.bf16.mxu0 %v2271
        %2362 = vmatpush1.bf16.msra.mxu0 %v2268
        %2363 = vmatprep.subr.bf16.mxu0 0
        %2364 = vmatpush1.bf16.msra.mxu0 0
        %2365 = vmatprep.subr.bf16.mxu0 0
        %2366 = vmatpush1.bf16.msra.mxu0 0
        %2367 = vmatprep.subr.bf16.mxu0 0
        %2368 = vmatpush1.bf16.msra.mxu0 0
        %2369 = vmatprep.subr.bf16.mxu0 0
        %2370 = vmatpush1.bf16.msra.mxu0 0
        %2371 = vmatprep.subr.bf16.mxu0 0
        %2372 = vmatpush1.bf16.msra.mxu0 0
        %2373 = vmatprep.subr.bf16.mxu0 0
        %2374 = vmatpush1.bf16.msra.mxu0 0
        %2375 = vmatprep.subr.bf16.mxu0 0
        %2376 = vmatpush1.bf16.msra.mxu0 0
        %2377 = vmatprep.subr.bf16.mxu0 0
        %2378 = vmatpush1.bf16.msra.mxu0 0
        %2379 = vmatprep.subr.bf16.mxu0 0
        %2380 = vmatpush1.bf16.msra.mxu0 0
        %2381 = vmatprep.subr.bf16.mxu0 0
        %2382 = vmatpush1.bf16.msra.mxu0 0
        %2383 = vmatprep.subr.bf16.mxu0 0
        %2384 = vmatpush1.bf16.msra.mxu0 0
        %2385 = vmatprep.subr.bf16.mxu0 0
        %2386 = vmatpush1.bf16.msra.mxu0 0
        %2387 = vmatprep.subr.bf16.mxu0 0
        %2388 = vmatpush1.bf16.msra.mxu0 0
        %2389 = vmatprep.subr.bf16.mxu0 0
        %2390 = vmatpush1.bf16.msra.mxu0 0
        %2391 = vmatprep.subr.bf16.mxu0 0
        %2392 = vmatpush1.bf16.msra.mxu0 0
        %2393 = vmatprep.mubr.bf16.mxu0 0
        %2394 = vmatmul.mubr.bf16.gmra.mrb[0].mxu0 %v2253
        %v2395 = vpop.f32.mrb[0].mxu0
        %v2396 = vadd.f32 0.0, %v2395
        %v2397 = vpop.f32.mrb[0].mxu0
        %v2398 = vadd.f32 0.0, %v2397
        %v2399 = vpop.f32.mrb[0].mxu0
        %v2400 = vpop.f32.mrb[0].mxu0
        %2401 = vdwg.mxu0
        %2402 = vmatprep.subr.bf16.mxu0 %v2277
        %2403 = vmatpush1.bf16.msra.mxu0 %v2274
        %2404 = vmatprep.subr.bf16.mxu0 0
        %2405 = vmatpush1.bf16.msra.mxu0 0
        %2406 = vmatprep.subr.bf16.mxu0 0
        %2407 = vmatpush1.bf16.msra.mxu0 0
        %2408 = vmatprep.subr.bf16.mxu0 0
        %2409 = vmatpush1.bf16.msra.mxu0 0
        %2410 = vmatprep.subr.bf16.mxu0 0
        %2411 = vmatpush1.bf16.msra.mxu0 0
        %2412 = vmatprep.subr.bf16.mxu0 0
        %2413 = vmatpush1.bf16.msra.mxu0 0
        %2414 = vmatprep.subr.bf16.mxu0 0
        %2415 = vmatpush1.bf16.msra.mxu0 0
        %2416 = vmatprep.subr.bf16.mxu0 0
        %2417 = vmatpush1.bf16.msra.mxu0 0
        %2418 = vmatprep.subr.bf16.mxu0 0
        %2419 = vmatpush1.bf16.msra.mxu0 0
        %2420 = vmatprep.subr.bf16.mxu0 0
        %2421 = vmatpush1.bf16.msra.mxu0 0
        %2422 = vmatprep.subr.bf16.mxu0 0
        %2423 = vmatpush1.bf16.msra.mxu0 0
        %2424 = vmatprep.subr.bf16.mxu0 0
        %2425 = vmatpush1.bf16.msra.mxu0 0
        %2426 = vmatprep.subr.bf16.mxu0 0
        %2427 = vmatpush1.bf16.msra.mxu0 0
        %2428 = vmatprep.subr.bf16.mxu0 0
        %2429 = vmatpush1.bf16.msra.mxu0 0
        %2430 = vmatprep.subr.bf16.mxu0 0
        %2431 = vmatpush1.bf16.msra.mxu0 0
        %2432 = vmatprep.subr.bf16.mxu0 0
        %2433 = vmatpush1.bf16.msra.mxu0 0
        %2434 = vmatprep.mubr.bf16.mxu0 0
        %2435 = vmatmul.mubr.bf16.gmra.mrb[0].mxu0 %v2253
        %v2436 = vpop.f32.mrb[0].mxu0
        %v2437 = vadd.f32 0.0, %v2436
        %v2438 = vpop.f32.mrb[0].mxu0
        %v2439 = vadd.f32 0.0, %v2438
        %v2440 = vpop.f32.mrb[0].mxu0
        %v2441 = vpop.f32.mrb[0].mxu0
        %2442 = vdwg.mxu0
        %v2443 = vadd.f32 %v2154, %v2314
        %v2444 = vadd.f32 %v2155, %v2316
        %v2445 = vadd.f32 %v2156, %v2355
        %v2446 = vadd.f32 %v2157, %v2357
        %v2447 = vadd.f32 %v2158, %v2396
        %v2448 = vadd.f32 %v2159, %v2398
        %v2449 = vadd.f32 %v2160, %v2437
        %v2450 = vadd.f32 %v2161, %v2439
        %v2451 = vld [vmem:[#allocation2] sm:$0xff]
        %v2452 = vld [vmem:[#allocation2 + $0x8] sm:$0xff]
        %v2453 = vld [vmem:[#allocation2 + $0x10] sm:$0x3]
        %2454 = vrot.lane.b32.xlu0 %v647, 95
        %v2455 = vpop.permute.xlu0 %2454
        %2456 = vrot.lane.b32.xlu0 %v664, 95
        %v2457 = vpop.permute.xlu0 %2456
        %v2458 = vrot.slane %v2455, 6
        %v2459 = vrot.slane %v2457, 6
        %v2460 = vsel %vm1389, %v2458, %v2455
        %v2461 = vsel %vm358, %v2458, %v2459
        %v2462 = vsel %vm1389, %v2461, %v2457
        %v2466 = vmul.bf16 %v2451, %v2460
        %v2467 = vmul.bf16 %v2452, %v2462
        %v2468 = vmul.bf16 %v2453, %v2459
        %s2469 = scalar_lea.vmem %s1, 24
        %v2470 = vld [vmem:[%s2469] sm:$0xf]
        %v2474 = vcombine.high %v2466, %v2466
        %v2476 = vunpack.c.l.s4 1983009808
        %v2477 = vunpack.c.0.s8 %v2476
        %v2478 = vlaneseq
        %v2479 = vshrl.u32 %v2478, 7
        %v2480 = vsub.s32 %v2477, %v2479
        %v2481 = vrot.slane %v2466, %v2480
        %v2483 = vunpack.c.l.s4 1983009808
        %v2484 = vunpack.c.0.s8 %v2483
        %v2485 = vlaneseq
        %v2486 = vshrl.u32 %v2485, 7
        %v2487 = vsub.s32 %v2484, %v2486
        %v2488 = vrot.slane %v2474, %v2487
        %v2489 = vcombine.high %v2481, %v2481
        %v2490 = vcombine.high %v2488, %v2488
        %v2491 = vcombine.high %v2467, %v2467
        %v2493 = vunpack.c.l.s4 1983009808
        %v2494 = vunpack.c.0.s8 %v2493
        %v2495 = vlaneseq
        %v2496 = vshrl.u32 %v2495, 7
        %v2497 = vsub.s32 %v2494, %v2496
        %v2498 = vrot.slane %v2467, %v2497
        %v2500 = vunpack.c.l.s4 1983009808
        %v2501 = vunpack.c.0.s8 %v2500
        %v2502 = vlaneseq
        %v2503 = vshrl.u32 %v2502, 7
        %v2504 = vsub.s32 %v2501, %v2503
        %v2505 = vrot.slane %v2491, %v2504
        %v2506 = vcombine.high %v2498, %v2498
        %v2507 = vcombine.high %v2505, %v2505
        %v2509 = vunpack.c.l.s4 1983009808
        %v2510 = vunpack.c.0.s8 %v2509
        %v2511 = vlaneseq
        %v2512 = vshrl.u32 %v2511, 7
        %v2513 = vsub.s32 %v2510, %v2512
        %v2514 = vrot.slane %v2468, %v2513
        %2515 = vrot.lane.b32.xlu0 %v2481, 33
        %v2516 = vpop.permute.xlu0 %2515
        %2517 = vrot.lane.b32.xlu0 %v2489, 33
        %v2518 = vpop.permute.xlu0 %2517
        %2519 = vrot.lane.b32.xlu0 %v2488, 33
        %v2520 = vpop.permute.xlu0 %2519
        %2521 = vrot.lane.b32.xlu0 %v2490, 33
        %v2522 = vpop.permute.xlu0 %2521
        %2523 = vrot.lane.b32.xlu0 %v2498, 33
        %v2524 = vpop.permute.xlu0 %2523
        %2525 = vrot.lane.b32.xlu0 %v2506, 33
        %v2526 = vpop.permute.xlu0 %2525
        %2527 = vrot.lane.b32.xlu0 %v2505, 33
        %v2528 = vpop.permute.xlu0 %2527
        %2529 = vrot.lane.b32.xlu0 %v2507, 33
        %v2530 = vpop.permute.xlu0 %2529
        %2531 = vrot.lane.b32.xlu0 %v2514, 33
        %v2532 = vpop.permute.xlu0 %2531
        %v2533 = vsel %vm1315, %v2516, %v2518
        %v2534 = vsel %vm1315, %v2518, %v2520
        %v2535 = vsel %vm1315, %v2520, %v2522
        %v2536 = vsel %vm1315, %v2522, %v2524
        %v2537 = vsel %vm1315, %v2524, %v2526
        %v2538 = vsel %vm1315, %v2526, %v2528
        %v2539 = vsel %vm1315, %v2528, %v2530
        %v2540 = vsel %vm1315, %v2530, %v2532
        %v2542 = vsel %vm753, %v2470, 0
        %v2545 = vand.u32 %v2533, %v760
        %v2548 = vand.u32 %v2534, %v760
        %v2551 = vand.u32 %v2535, %v760
        %v2554 = vand.u32 %v2536, %v760
        %v2557 = vand.u32 %v2537, %v760
        %v2560 = vand.u32 %v2538, %v760
        %v2563 = vand.u32 %v2539, %v760
        %v2566 = vand.u32 %v2540, %v760
        %2568 = vmatprep.subr.bf16.mxu0 %v2548
        %2569 = vmatpush1.bf16.msra.mxu0 %v2545
        %2570 = vmatprep.subr.bf16.mxu0 0
        %2571 = vmatpush1.bf16.msra.mxu0 0
        %2572 = vmatprep.subr.bf16.mxu0 0
        %2573 = vmatpush1.bf16.msra.mxu0 0
        %2574 = vmatprep.subr.bf16.mxu0 0
        %2575 = vmatpush1.bf16.msra.mxu0 0
        %2576 = vmatprep.subr.bf16.mxu0 0
        %2577 = vmatpush1.bf16.msra.mxu0 0
        %2578 = vmatprep.subr.bf16.mxu0 0
        %2579 = vmatpush1.bf16.msra.mxu0 0
        %2580 = vmatprep.subr.bf16.mxu0 0
        %2581 = vmatpush1.bf16.msra.mxu0 0
        %2582 = vmatprep.subr.bf16.mxu0 0
        %2583 = vmatpush1.bf16.msra.mxu0 0
        %2584 = vmatprep.subr.bf16.mxu0 0
        %2585 = vmatpush1.bf16.msra.mxu0 0
        %2586 = vmatprep.subr.bf16.mxu0 0
        %2587 = vmatpush1.bf16.msra.mxu0 0
        %2588 = vmatprep.subr.bf16.mxu0 0
        %2589 = vmatpush1.bf16.msra.mxu0 0
        %2590 = vmatprep.subr.bf16.mxu0 0
        %2591 = vmatpush1.bf16.msra.mxu0 0
        %2592 = vmatprep.subr.bf16.mxu0 0
        %2593 = vmatpush1.bf16.msra.mxu0 0
        %2594 = vmatprep.subr.bf16.mxu0 0
        %2595 = vmatpush1.bf16.msra.mxu0 0
        %2596 = vmatprep.subr.bf16.mxu0 0
        %2597 = vmatpush1.bf16.msra.mxu0 0
        %2598 = vmatprep.subr.bf16.mxu0 0
        %2599 = vmatpush1.bf16.msra.mxu0 0
        %2600 = vmatprep.mubr.bf16.mxu0 0
        %2601 = vmatmul.mubr.bf16.gmra.mrb[0].mxu0 %v2542
        %v2602 = vpop.f32.mrb[0].mxu0
        %v2603 = vadd.f32 0.0, %v2602
        %v2604 = vpop.f32.mrb[0].mxu0
        %v2605 = vadd.f32 0.0, %v2604
        %v2606 = vpop.f32.mrb[0].mxu0
        %v2607 = vpop.f32.mrb[0].mxu0
        %2608 = vdwg.mxu0
        %2609 = vmatprep.subr.bf16.mxu0 %v2554
        %2610 = vmatpush1.bf16.msra.mxu0 %v2551
        %2611 = vmatprep.subr.bf16.mxu0 0
        %2612 = vmatpush1.bf16.msra.mxu0 0
        %2613 = vmatprep.subr.bf16.mxu0 0
        %2614 = vmatpush1.bf16.msra.mxu0 0
        %2615 = vmatprep.subr.bf16.mxu0 0
        %2616 = vmatpush1.bf16.msra.mxu0 0
        %2617 = vmatprep.subr.bf16.mxu0 0
        %2618 = vmatpush1.bf16.msra.mxu0 0
        %2619 = vmatprep.subr.bf16.mxu0 0
        %2620 = vmatpush1.bf16.msra.mxu0 0
        %2621 = vmatprep.subr.bf16.mxu0 0
        %2622 = vmatpush1.bf16.msra.mxu0 0
        %2623 = vmatprep.subr.bf16.mxu0 0
        %2624 = vmatpush1.bf16.msra.mxu0 0
        %2625 = vmatprep.subr.bf16.mxu0 0
        %2626 = vmatpush1.bf16.msra.mxu0 0
        %2627 = vmatprep.subr.bf16.mxu0 0
        %2628 = vmatpush1.bf16.msra.mxu0 0
        %2629 = vmatprep.subr.bf16.mxu0 0
        %2630 = vmatpush1.bf16.msra.mxu0 0
        %2631 = vmatprep.subr.bf16.mxu0 0
        %2632 = vmatpush1.bf16.msra.mxu0 0
        %2633 = vmatprep.subr.bf16.mxu0 0
        %2634 = vmatpush1.bf16.msra.mxu0 0
        %2635 = vmatprep.subr.bf16.mxu0 0
        %2636 = vmatpush1.bf16.msra.mxu0 0
        %2637 = vmatprep.subr.bf16.mxu0 0
        %2638 = vmatpush1.bf16.msra.mxu0 0
        %2639 = vmatprep.subr.bf16.mxu0 0
        %2640 = vmatpush1.bf16.msra.mxu0 0
        %2641 = vmatprep.mubr.bf16.mxu0 0
        %2642 = vmatmul.mubr.bf16.gmra.mrb[0].mxu0 %v2542
        %v2643 = vpop.f32.mrb[0].mxu0
        %v2644 = vadd.f32 0.0, %v2643
        %v2645 = vpop.f32.mrb[0].mxu0
        %v2646 = vadd.f32 0.0, %v2645
        %v2647 = vpop.f32.mrb[0].mxu0
        %v2648 = vpop.f32.mrb[0].mxu0
        %2649 = vdwg.mxu0
        %2650 = vmatprep.subr.bf16.mxu0 %v2560
        %2651 = vmatpush1.bf16.msra.mxu0 %v2557
        %2652 = vmatprep.subr.bf16.mxu0 0
        %2653 = vmatpush1.bf16.msra.mxu0 0
        %2654 = vmatprep.subr.bf16.mxu0 0
        %2655 = vmatpush1.bf16.msra.mxu0 0
        %2656 = vmatprep.subr.bf16.mxu0 0
        %2657 = vmatpush1.bf16.msra.mxu0 0
        %2658 = vmatprep.subr.bf16.mxu0 0
        %2659 = vmatpush1.bf16.msra.mxu0 0
        %2660 = vmatprep.subr.bf16.mxu0 0
        %2661 = vmatpush1.bf16.msra.mxu0 0
        %2662 = vmatprep.subr.bf16.mxu0 0
        %2663 = vmatpush1.bf16.msra.mxu0 0
        %2664 = vmatprep.subr.bf16.mxu0 0
        %2665 = vmatpush1.bf16.msra.mxu0 0
        %2666 = vmatprep.subr.bf16.mxu0 0
        %2667 = vmatpush1.bf16.msra.mxu0 0
        %2668 = vmatprep.subr.bf16.mxu0 0
        %2669 = vmatpush1.bf16.msra.mxu0 0
        %2670 = vmatprep.subr.bf16.mxu0 0
        %2671 = vmatpush1.bf16.msra.mxu0 0
        %2672 = vmatprep.subr.bf16.mxu0 0
        %2673 = vmatpush1.bf16.msra.mxu0 0
        %2674 = vmatprep.subr.bf16.mxu0 0
        %2675 = vmatpush1.bf16.msra.mxu0 0
        %2676 = vmatprep.subr.bf16.mxu0 0
        %2677 = vmatpush1.bf16.msra.mxu0 0
        %2678 = vmatprep.subr.bf16.mxu0 0
        %2679 = vmatpush1.bf16.msra.mxu0 0
        %2680 = vmatprep.subr.bf16.mxu0 0
        %2681 = vmatpush1.bf16.msra.mxu0 0
        %2682 = vmatprep.mubr.bf16.mxu0 0
        %2683 = vmatmul.mubr.bf16.gmra.mrb[0].mxu0 %v2542
        %v2684 = vpop.f32.mrb[0].mxu0
        %v2685 = vadd.f32 0.0, %v2684
        %v2686 = vpop.f32.mrb[0].mxu0
        %v2687 = vadd.f32 0.0, %v2686
        %v2688 = vpop.f32.mrb[0].mxu0
        %v2689 = vpop.f32.mrb[0].mxu0
        %2690 = vdwg.mxu0
        %2691 = vmatprep.subr.bf16.mxu0 %v2566
        %2692 = vmatpush1.bf16.msra.mxu0 %v2563
        %2693 = vmatprep.subr.bf16.mxu0 0
        %2694 = vmatpush1.bf16.msra.mxu0 0
        %2695 = vmatprep.subr.bf16.mxu0 0
        %2696 = vmatpush1.bf16.msra.mxu0 0
        %2697 = vmatprep.subr.bf16.mxu0 0
        %2698 = vmatpush1.bf16.msra.mxu0 0
        %2699 = vmatprep.subr.bf16.mxu0 0
        %2700 = vmatpush1.bf16.msra.mxu0 0
        %2701 = vmatprep.subr.bf16.mxu0 0
        %2702 = vmatpush1.bf16.msra.mxu0 0
        %2703 = vmatprep.subr.bf16.mxu0 0
        %2704 = vmatpush1.bf16.msra.mxu0 0
        %2705 = vmatprep.subr.bf16.mxu0 0
        %2706 = vmatpush1.bf16.msra.mxu0 0
        %2707 = vmatprep.subr.bf16.mxu0 0
        %2708 = vmatpush1.bf16.msra.mxu0 0
        %2709 = vmatprep.subr.bf16.mxu0 0
        %2710 = vmatpush1.bf16.msra.mxu0 0
        %2711 = vmatprep.subr.bf16.mxu0 0
        %2712 = vmatpush1.bf16.msra.mxu0 0
        %2713 = vmatprep.subr.bf16.mxu0 0
        %2714 = vmatpush1.bf16.msra.mxu0 0
        %2715 = vmatprep.subr.bf16.mxu0 0
        %2716 = vmatpush1.bf16.msra.mxu0 0
        %2717 = vmatprep.subr.bf16.mxu0 0
        %2718 = vmatpush1.bf16.msra.mxu0 0
        %2719 = vmatprep.subr.bf16.mxu0 0
        %2720 = vmatpush1.bf16.msra.mxu0 0
        %2721 = vmatprep.subr.bf16.mxu0 0
        %2722 = vmatpush1.bf16.msra.mxu0 0
        %2723 = vmatprep.mubr.bf16.mxu0 0
        %2724 = vmatmul.mubr.bf16.gmra.mrb[0].mxu0 %v2542
        %v2725 = vpop.f32.mrb[0].mxu0
        %v2726 = vadd.f32 0.0, %v2725
        %v2727 = vpop.f32.mrb[0].mxu0
        %v2728 = vadd.f32 0.0, %v2727
        %v2729 = vpop.f32.mrb[0].mxu0
        %v2730 = vpop.f32.mrb[0].mxu0
        %2731 = vdwg.mxu0
        %v2732 = vadd.f32 %v2443, %v2603
        %v2733 = vadd.f32 %v2444, %v2605
        %v2734 = vadd.f32 %v2445, %v2644
        %v2735 = vadd.f32 %v2446, %v2646
        %v2736 = vadd.f32 %v2447, %v2685
        %v2737 = vadd.f32 %v2448, %v2687
        %v2738 = vadd.f32 %v2449, %v2726
        %v2739 = vadd.f32 %v2450, %v2728
        %v2740 = vld [vmem:[#allocation2] sm:$0xff]
        %v2741 = vld [vmem:[#allocation2 + $0x8] sm:$0xff]
        %v2742 = vld [vmem:[#allocation2 + $0x10] sm:$0x3]
        %s2743 = scalar_lea.vmem %s1, 28
        %v2744 = vld [vmem:[%s2743] sm:$0xf]
        %v2748 = vcombine.high %v2740, %v2740
        %v2750 = vunpack.c.l.s4 1983009808
        %v2751 = vunpack.c.0.s8 %v2750
        %v2752 = vlaneseq
        %v2753 = vshrl.u32 %v2752, 7
        %v2754 = vsub.s32 %v2751, %v2753
        %v2755 = vrot.slane %v2740, %v2754
        %v2757 = vunpack.c.l.s4 1983009808
        %v2758 = vunpack.c.0.s8 %v2757
        %v2759 = vlaneseq
        %v2760 = vshrl.u32 %v2759, 7
        %v2761 = vsub.s32 %v2758, %v2760
        %v2762 = vrot.slane %v2748, %v2761
        %v2763 = vcombine.high %v2755, %v2755
        %v2764 = vcombine.high %v2762, %v2762
        %v2765 = vcombine.high %v2741, %v2741
        %v2767 = vunpack.c.l.s4 1983009808
        %v2768 = vunpack.c.0.s8 %v2767
        %v2769 = vlaneseq
        %v2770 = vshrl.u32 %v2769, 7
        %v2771 = vsub.s32 %v2768, %v2770
        %v2772 = vrot.slane %v2741, %v2771
        %v2774 = vunpack.c.l.s4 1983009808
        %v2775 = vunpack.c.0.s8 %v2774
        %v2776 = vlaneseq
        %v2777 = vshrl.u32 %v2776, 7
        %v2778 = vsub.s32 %v2775, %v2777
        %v2779 = vrot.slane %v2765, %v2778
        %v2780 = vcombine.high %v2772, %v2772
        %v2781 = vcombine.high %v2779, %v2779
        %v2783 = vunpack.c.l.s4 1983009808
        %v2784 = vunpack.c.0.s8 %v2783
        %v2785 = vlaneseq
        %v2786 = vshrl.u32 %v2785, 7
        %v2787 = vsub.s32 %v2784, %v2786
        %v2788 = vrot.slane %v2742, %v2787
        %2789 = vrot.lane.b32.xlu0 %v2755, 32
        %v2790 = vpop.permute.xlu0 %2789
        %2791 = vrot.lane.b32.xlu0 %v2763, 32
        %v2792 = vpop.permute.xlu0 %2791
        %2793 = vrot.lane.b32.xlu0 %v2762, 32
        %v2794 = vpop.permute.xlu0 %2793
        %2795 = vrot.lane.b32.xlu0 %v2764, 32
        %v2796 = vpop.permute.xlu0 %2795
        %2797 = vrot.lane.b32.xlu0 %v2772, 32
        %v2798 = vpop.permute.xlu0 %2797
        %2799 = vrot.lane.b32.xlu0 %v2780, 32
        %v2800 = vpop.permute.xlu0 %2799
        %2801 = vrot.lane.b32.xlu0 %v2779, 32
        %v2802 = vpop.permute.xlu0 %2801
        %2803 = vrot.lane.b32.xlu0 %v2781, 32
        %v2804 = vpop.permute.xlu0 %2803
        %2805 = vrot.lane.b32.xlu0 %v2788, 32
        %v2806 = vpop.permute.xlu0 %2805
        %vm2807 = vcmask 261120
        %v2808 = vsel %vm2807, %v2790, %v2792
        %v2809 = vsel %vm2807, %v2792, %v2794
        %v2810 = vsel %vm2807, %v2794, %v2796
        %v2811 = vsel %vm2807, %v2796, %v2798
        %v2812 = vsel %vm2807, %v2798, %v2800
        %v2813 = vsel %vm2807, %v2800, %v2802
        %v2814 = vsel %vm2807, %v2802, %v2804
        %v2815 = vsel %vm2807, %v2804, %v2806
        %v2817 = vsel %vm753, %v2744, 0
        %v2820 = vand.u32 %v2808, %v760
        %v2823 = vand.u32 %v2809, %v760
        %v2826 = vand.u32 %v2810, %v760
        %v2829 = vand.u32 %v2811, %v760
        %v2832 = vand.u32 %v2812, %v760
        %v2835 = vand.u32 %v2813, %v760
        %v2838 = vand.u32 %v2814, %v760
        %v2841 = vand.u32 %v2815, %v760
        %2843 = vmatprep.subr.bf16.mxu0 %v2823
        %2844 = vmatpush1.bf16.msra.mxu0 %v2820
        %2845 = vmatprep.subr.bf16.mxu0 0
        %2846 = vmatpush1.bf16.msra.mxu0 0
        %2847 = vmatprep.subr.bf16.mxu0 0
        %2848 = vmatpush1.bf16.msra.mxu0 0
        %2849 = vmatprep.subr.bf16.mxu0 0
        %2850 = vmatpush1.bf16.msra.mxu0 0
        %2851 = vmatprep.subr.bf16.mxu0 0
        %2852 = vmatpush1.bf16.msra.mxu0 0
        %2853 = vmatprep.subr.bf16.mxu0 0
        %2854 = vmatpush1.bf16.msra.mxu0 0
        %2855 = vmatprep.subr.bf16.mxu0 0
        %2856 = vmatpush1.bf16.msra.mxu0 0
        %2857 = vmatprep.subr.bf16.mxu0 0
        %2858 = vmatpush1.bf16.msra.mxu0 0
        %2859 = vmatprep.subr.bf16.mxu0 0
        %2860 = vmatpush1.bf16.msra.mxu0 0
        %2861 = vmatprep.subr.bf16.mxu0 0
        %2862 = vmatpush1.bf16.msra.mxu0 0
        %2863 = vmatprep.subr.bf16.mxu0 0
        %2864 = vmatpush1.bf16.msra.mxu0 0
        %2865 = vmatprep.subr.bf16.mxu0 0
        %2866 = vmatpush1.bf16.msra.mxu0 0
        %2867 = vmatprep.subr.bf16.mxu0 0
        %2868 = vmatpush1.bf16.msra.mxu0 0
        %2869 = vmatprep.subr.bf16.mxu0 0
        %2870 = vmatpush1.bf16.msra.mxu0 0
        %2871 = vmatprep.subr.bf16.mxu0 0
        %2872 = vmatpush1.bf16.msra.mxu0 0
        %2873 = vmatprep.subr.bf16.mxu0 0
        %2874 = vmatpush1.bf16.msra.mxu0 0
        %2875 = vmatprep.mubr.bf16.mxu0 0
        %2876 = vmatmul.mubr.bf16.gmra.mrb[0].mxu0 %v2817
        %v2877 = vpop.f32.mrb[0].mxu0
        %v2878 = vadd.f32 0.0, %v2877
        %v2879 = vpop.f32.mrb[0].mxu0
        %v2880 = vadd.f32 0.0, %v2879
        %v2881 = vpop.f32.mrb[0].mxu0
        %v2882 = vpop.f32.mrb[0].mxu0
        %2883 = vdwg.mxu0
        %2884 = vmatprep.subr.bf16.mxu0 %v2829
        %2885 = vmatpush1.bf16.msra.mxu0 %v2826
        %2886 = vmatprep.subr.bf16.mxu0 0
        %2887 = vmatpush1.bf16.msra.mxu0 0
        %2888 = vmatprep.subr.bf16.mxu0 0
        %2889 = vmatpush1.bf16.msra.mxu0 0
        %2890 = vmatprep.subr.bf16.mxu0 0
        %2891 = vmatpush1.bf16.msra.mxu0 0
        %2892 = vmatprep.subr.bf16.mxu0 0
        %2893 = vmatpush1.bf16.msra.mxu0 0
        %2894 = vmatprep.subr.bf16.mxu0 0
        %2895 = vmatpush1.bf16.msra.mxu0 0
        %2896 = vmatprep.subr.bf16.mxu0 0
        %2897 = vmatpush1.bf16.msra.mxu0 0
        %2898 = vmatprep.subr.bf16.mxu0 0
        %2899 = vmatpush1.bf16.msra.mxu0 0
        %2900 = vmatprep.subr.bf16.mxu0 0
        %2901 = vmatpush1.bf16.msra.mxu0 0
        %2902 = vmatprep.subr.bf16.mxu0 0
        %2903 = vmatpush1.bf16.msra.mxu0 0
        %2904 = vmatprep.subr.bf16.mxu0 0
        %2905 = vmatpush1.bf16.msra.mxu0 0
        %2906 = vmatprep.subr.bf16.mxu0 0
        %2907 = vmatpush1.bf16.msra.mxu0 0
        %2908 = vmatprep.subr.bf16.mxu0 0
        %2909 = vmatpush1.bf16.msra.mxu0 0
        %2910 = vmatprep.subr.bf16.mxu0 0
        %2911 = vmatpush1.bf16.msra.mxu0 0
        %2912 = vmatprep.subr.bf16.mxu0 0
        %2913 = vmatpush1.bf16.msra.mxu0 0
        %2914 = vmatprep.subr.bf16.mxu0 0
        %2915 = vmatpush1.bf16.msra.mxu0 0
        %2916 = vmatprep.mubr.bf16.mxu0 0
        %2917 = vmatmul.mubr.bf16.gmra.mrb[0].mxu0 %v2817
        %v2918 = vpop.f32.mrb[0].mxu0
        %v2919 = vadd.f32 0.0, %v2918
        %v2920 = vpop.f32.mrb[0].mxu0
        %v2921 = vadd.f32 0.0, %v2920
        %v2922 = vpop.f32.mrb[0].mxu0
        %v2923 = vpop.f32.mrb[0].mxu0
        %2924 = vdwg.mxu0
        %2925 = vmatprep.subr.bf16.mxu0 %v2835
        %2926 = vmatpush1.bf16.msra.mxu0 %v2832
        %2927 = vmatprep.subr.bf16.mxu0 0
        %2928 = vmatpush1.bf16.msra.mxu0 0
        %2929 = vmatprep.subr.bf16.mxu0 0
        %2930 = vmatpush1.bf16.msra.mxu0 0
        %2931 = vmatprep.subr.bf16.mxu0 0
        %2932 = vmatpush1.bf16.msra.mxu0 0
        %2933 = vmatprep.subr.bf16.mxu0 0
        %2934 = vmatpush1.bf16.msra.mxu0 0
        %2935 = vmatprep.subr.bf16.mxu0 0
        %2936 = vmatpush1.bf16.msra.mxu0 0
        %2937 = vmatprep.subr.bf16.mxu0 0
        %2938 = vmatpush1.bf16.msra.mxu0 0
        %2939 = vmatprep.subr.bf16.mxu0 0
        %2940 = vmatpush1.bf16.msra.mxu0 0
        %2941 = vmatprep.subr.bf16.mxu0 0
        %2942 = vmatpush1.bf16.msra.mxu0 0
        %2943 = vmatprep.subr.bf16.mxu0 0
        %2944 = vmatpush1.bf16.msra.mxu0 0
        %2945 = vmatprep.subr.bf16.mxu0 0
        %2946 = vmatpush1.bf16.msra.mxu0 0
        %2947 = vmatprep.subr.bf16.mxu0 0
        %2948 = vmatpush1.bf16.msra.mxu0 0
        %2949 = vmatprep.subr.bf16.mxu0 0
        %2950 = vmatpush1.bf16.msra.mxu0 0
        %2951 = vmatprep.subr.bf16.mxu0 0
        %2952 = vmatpush1.bf16.msra.mxu0 0
        %2953 = vmatprep.subr.bf16.mxu0 0
        %2954 = vmatpush1.bf16.msra.mxu0 0
        %2955 = vmatprep.subr.bf16.mxu0 0
        %2956 = vmatpush1.bf16.msra.mxu0 0
        %2957 = vmatprep.mubr.bf16.mxu0 0
        %2958 = vmatmul.mubr.bf16.gmra.mrb[0].mxu0 %v2817
        %v2959 = vpop.f32.mrb[0].mxu0
        %v2960 = vadd.f32 0.0, %v2959
        %v2961 = vpop.f32.mrb[0].mxu0
        %v2962 = vadd.f32 0.0, %v2961
        %v2963 = vpop.f32.mrb[0].mxu0
        %v2964 = vpop.f32.mrb[0].mxu0
        %2965 = vdwg.mxu0
        %2966 = vmatprep.subr.bf16.mxu0 %v2841
        %2967 = vmatpush1.bf16.msra.mxu0 %v2838
        %2968 = vmatprep.subr.bf16.mxu0 0
        %2969 = vmatpush1.bf16.msra.mxu0 0
        %2970 = vmatprep.subr.bf16.mxu0 0
        %2971 = vmatpush1.bf16.msra.mxu0 0
        %2972 = vmatprep.subr.bf16.mxu0 0
        %2973 = vmatpush1.bf16.msra.mxu0 0
        %2974 = vmatprep.subr.bf16.mxu0 0
        %2975 = vmatpush1.bf16.msra.mxu0 0
        %2976 = vmatprep.subr.bf16.mxu0 0
        %2977 = vmatpush1.bf16.msra.mxu0 0
        %2978 = vmatprep.subr.bf16.mxu0 0
        %2979 = vmatpush1.bf16.msra.mxu0 0
        %2980 = vmatprep.subr.bf16.mxu0 0
        %2981 = vmatpush1.bf16.msra.mxu0 0
        %2982 = vmatprep.subr.bf16.mxu0 0
        %2983 = vmatpush1.bf16.msra.mxu0 0
        %2984 = vmatprep.subr.bf16.mxu0 0
        %2985 = vmatpush1.bf16.msra.mxu0 0
        %2986 = vmatprep.subr.bf16.mxu0 0
        %2987 = vmatpush1.bf16.msra.mxu0 0
        %2988 = vmatprep.subr.bf16.mxu0 0
        %2989 = vmatpush1.bf16.msra.mxu0 0
        %2990 = vmatprep.subr.bf16.mxu0 0
        %2991 = vmatpush1.bf16.msra.mxu0 0
        %2992 = vmatprep.subr.bf16.mxu0 0
        %2993 = vmatpush1.bf16.msra.mxu0 0
        %2994 = vmatprep.subr.bf16.mxu0 0
        %2995 = vmatpush1.bf16.msra.mxu0 0
        %2996 = vmatprep.subr.bf16.mxu0 0
        %2997 = vmatpush1.bf16.msra.mxu0 0
        %2998 = vmatprep.mubr.bf16.mxu0 0
        %2999 = vmatmul.mubr.bf16.gmra.mrb[0].mxu0 %v2817
        %v3000 = vpop.f32.mrb[0].mxu0
        %v3001 = vadd.f32 0.0, %v3000
        %v3002 = vpop.f32.mrb[0].mxu0
        %v3003 = vadd.f32 0.0, %v3002
        %v3004 = vpop.f32.mrb[0].mxu0
        %v3005 = vpop.f32.mrb[0].mxu0
        %3006 = vdwg.mxu0
        %v3007 = vadd.f32 %v2732, %v2878
        %v3008 = vadd.f32 %v2733, %v2880
        %v3009 = vadd.f32 %v2734, %v2919
        %v3010 = vadd.f32 %v2735, %v2921
        %v3011 = vadd.f32 %v2736, %v2960
        %v3012 = vadd.f32 %v2737, %v2962
        %v3013 = vadd.f32 %v2738, %v3001
        %v3014 = vadd.f32 %v2739, %v3003
        %v3015 = vld [vmem:[#allocation2] sm:$0xff]
        %v3016 = vld [vmem:[#allocation2 + $0x8] sm:$0xff]
        %v3017 = vld [vmem:[#allocation2 + $0x10] sm:$0x3]
        %3018 = vrot.lane.b32.xlu0 %v1291, 97
        %v3019 = vpop.permute.xlu0 %3018
        %3020 = vrot.lane.b32.xlu0 %v1308, 97
        %v3021 = vpop.permute.xlu0 %3020
        %v3022 = vrot.slane %v3019, 6
        %v3023 = vrot.slane %v3021, 6
        %v3024 = vsel %vm744, %v3022, %v3019
        %v3025 = vsel %vm358, %v3022, %v3023
        %v3026 = vsel %vm744, %v3025, %v3021
        %v3030 = vmul.bf16 %v3015, %v3024
        %v3031 = vmul.bf16 %v3016, %v3026
        %v3032 = vmul.bf16 %v3017, %v3023
        %s3033 = scalar_lea.vmem %s1, 32
        %v3034 = vld [vmem:[%s3033] sm:$0xf]
        %v3038 = vcombine.high %v3030, %v3030
        %v3040 = vunpack.c.l.s4 1983009808
        %v3041 = vunpack.c.0.s8 %v3040
        %v3042 = vlaneseq
        %v3043 = vshrl.u32 %v3042, 7
        %v3044 = vsub.s32 %v3041, %v3043
        %v3045 = vrot.slane %v3030, %v3044
        %v3047 = vunpack.c.l.s4 1983009808
        %v3048 = vunpack.c.0.s8 %v3047
        %v3049 = vlaneseq
        %v3050 = vshrl.u32 %v3049, 7
        %v3051 = vsub.s32 %v3048, %v3050
        %v3052 = vrot.slane %v3038, %v3051
        %v3053 = vcombine.high %v3045, %v3045
        %v3054 = vcombine.high %v3052, %v3052
        %v3055 = vcombine.high %v3031, %v3031
        %v3057 = vunpack.c.l.s4 1983009808
        %v3058 = vunpack.c.0.s8 %v3057
        %v3059 = vlaneseq
        %v3060 = vshrl.u32 %v3059, 7
        %v3061 = vsub.s32 %v3058, %v3060
        %v3062 = vrot.slane %v3031, %v3061
        %v3064 = vunpack.c.l.s4 1983009808
        %v3065 = vunpack.c.0.s8 %v3064
        %v3066 = vlaneseq
        %v3067 = vshrl.u32 %v3066, 7
        %v3068 = vsub.s32 %v3065, %v3067
        %v3069 = vrot.slane %v3055, %v3068
        %v3070 = vcombine.high %v3062, %v3062
        %v3071 = vcombine.high %v3069, %v3069
        %v3073 = vunpack.c.l.s4 1983009808
        %v3074 = vunpack.c.0.s8 %v3073
        %v3075 = vlaneseq
        %v3076 = vshrl.u32 %v3075, 7
        %v3077 = vsub.s32 %v3074, %v3076
        %v3078 = vrot.slane %v3032, %v3077
        %3079 = vrot.lane.b32.xlu0 %v3045, 31
        %v3080 = vpop.permute.xlu0 %3079
        %3081 = vrot.lane.b32.xlu0 %v3053, 31
        %v3082 = vpop.permute.xlu0 %3081
        %3083 = vrot.lane.b32.xlu0 %v3052, 31
        %v3084 = vpop.permute.xlu0 %3083
        %3085 = vrot.lane.b32.xlu0 %v3054, 31
        %v3086 = vpop.permute.xlu0 %3085
        %3087 = vrot.lane.b32.xlu0 %v3062, 31
        %v3088 = vpop.permute.xlu0 %3087
        %3089 = vrot.lane.b32.xlu0 %v3070, 31
        %v3090 = vpop.permute.xlu0 %3089
        %3091 = vrot.lane.b32.xlu0 %v3069, 31
        %v3092 = vpop.permute.xlu0 %3091
        %3093 = vrot.lane.b32.xlu0 %v3071, 31
        %v3094 = vpop.permute.xlu0 %3093
        %3095 = vrot.lane.b32.xlu0 %v3078, 31
        %v3096 = vpop.permute.xlu0 %3095
        %v3097 = vsel %vm671, %v3080, %v3082
        %v3098 = vsel %vm671, %v3082, %v3084
        %v3099 = vsel %vm671, %v3084, %v3086
        %v3100 = vsel %vm671, %v3086, %v3088
        %v3101 = vsel %vm671, %v3088, %v3090
        %v3102 = vsel %vm671, %v3090, %v3092
        %v3103 = vsel %vm671, %v3092, %v3094
        %v3104 = vsel %vm671, %v3094, %v3096
        %v3106 = vsel %vm753, %v3034, 0
        %v3109 = vand.u32 %v3097, %v760
        %v3112 = vand.u32 %v3098, %v760
        %v3115 = vand.u32 %v3099, %v760
        %v3118 = vand.u32 %v3100, %v760
        %v3121 = vand.u32 %v3101, %v760
        %v3124 = vand.u32 %v3102, %v760
        %v3127 = vand.u32 %v3103, %v760
        %v3130 = vand.u32 %v3104, %v760
        %3132 = vmatprep.subr.bf16.mxu0 %v3112
        %3133 = vmatpush1.bf16.msra.mxu0 %v3109
        %3134 = vmatprep.subr.bf16.mxu0 0
        %3135 = vmatpush1.bf16.msra.mxu0 0
        %3136 = vmatprep.subr.bf16.mxu0 0
        %3137 = vmatpush1.bf16.msra.mxu0 0
        %3138 = vmatprep.subr.bf16.mxu0 0
        %3139 = vmatpush1.bf16.msra.mxu0 0
        %3140 = vmatprep.subr.bf16.mxu0 0
        %3141 = vmatpush1.bf16.msra.mxu0 0
        %3142 = vmatprep.subr.bf16.mxu0 0
        %3143 = vmatpush1.bf16.msra.mxu0 0
        %3144 = vmatprep.subr.bf16.mxu0 0
        %3145 = vmatpush1.bf16.msra.mxu0 0
        %3146 = vmatprep.subr.bf16.mxu0 0
        %3147 = vmatpush1.bf16.msra.mxu0 0
        %3148 = vmatprep.subr.bf16.mxu0 0
        %3149 = vmatpush1.bf16.msra.mxu0 0
        %3150 = vmatprep.subr.bf16.mxu0 0
        %3151 = vmatpush1.bf16.msra.mxu0 0
        %3152 = vmatprep.subr.bf16.mxu0 0
        %3153 = vmatpush1.bf16.msra.mxu0 0
        %3154 = vmatprep.subr.bf16.mxu0 0
        %3155 = vmatpush1.bf16.msra.mxu0 0
        %3156 = vmatprep.subr.bf16.mxu0 0
        %3157 = vmatpush1.bf16.msra.mxu0 0
        %3158 = vmatprep.subr.bf16.mxu0 0
        %3159 = vmatpush1.bf16.msra.mxu0 0
        %3160 = vmatprep.subr.bf16.mxu0 0
        %3161 = vmatpush1.bf16.msra.mxu0 0
        %3162 = vmatprep.subr.bf16.mxu0 0
        %3163 = vmatpush1.bf16.msra.mxu0 0
        %3164 = vmatprep.mubr.bf16.mxu0 0
        %3165 = vmatmul.mubr.bf16.gmra.mrb[0].mxu0 %v3106
        %v3166 = vpop.f32.mrb[0].mxu0
        %v3167 = vadd.f32 0.0, %v3166
        %v3168 = vpop.f32.mrb[0].mxu0
        %v3169 = vadd.f32 0.0, %v3168
        %v3170 = vpop.f32.mrb[0].mxu0
        %v3171 = vpop.f32.mrb[0].mxu0
        %3172 = vdwg.mxu0
        %3173 = vmatprep.subr.bf16.mxu0 %v3118
        %3174 = vmatpush1.bf16.msra.mxu0 %v3115
        %3175 = vmatprep.subr.bf16.mxu0 0
        %3176 = vmatpush1.bf16.msra.mxu0 0
        %3177 = vmatprep.subr.bf16.mxu0 0
        %3178 = vmatpush1.bf16.msra.mxu0 0
        %3179 = vmatprep.subr.bf16.mxu0 0
        %3180 = vmatpush1.bf16.msra.mxu0 0
        %3181 = vmatprep.subr.bf16.mxu0 0
        %3182 = vmatpush1.bf16.msra.mxu0 0
        %3183 = vmatprep.subr.bf16.mxu0 0
        %3184 = vmatpush1.bf16.msra.mxu0 0
        %3185 = vmatprep.subr.bf16.mxu0 0
        %3186 = vmatpush1.bf16.msra.mxu0 0
        %3187 = vmatprep.subr.bf16.mxu0 0
        %3188 = vmatpush1.bf16.msra.mxu0 0
        %3189 = vmatprep.subr.bf16.mxu0 0
        %3190 = vmatpush1.bf16.msra.mxu0 0
        %3191 = vmatprep.subr.bf16.mxu0 0
        %3192 = vmatpush1.bf16.msra.mxu0 0
        %3193 = vmatprep.subr.bf16.mxu0 0
        %3194 = vmatpush1.bf16.msra.mxu0 0
        %3195 = vmatprep.subr.bf16.mxu0 0
        %3196 = vmatpush1.bf16.msra.mxu0 0
        %3197 = vmatprep.subr.bf16.mxu0 0
        %3198 = vmatpush1.bf16.msra.mxu0 0
        %3199 = vmatprep.subr.bf16.mxu0 0
        %3200 = vmatpush1.bf16.msra.mxu0 0
        %3201 = vmatprep.subr.bf16.mxu0 0
        %3202 = vmatpush1.bf16.msra.mxu0 0
        %3203 = vmatprep.subr.bf16.mxu0 0
        %3204 = vmatpush1.bf16.msra.mxu0 0
        %3205 = vmatprep.mubr.bf16.mxu0 0
        %3206 = vmatmul.mubr.bf16.gmra.mrb[0].mxu0 %v3106
        %v3207 = vpop.f32.mrb[0].mxu0
        %v3208 = vadd.f32 0.0, %v3207
        %v3209 = vpop.f32.mrb[0].mxu0
        %v3210 = vadd.f32 0.0, %v3209
        %v3211 = vpop.f32.mrb[0].mxu0
        %v3212 = vpop.f32.mrb[0].mxu0
        %3213 = vdwg.mxu0
        %3214 = vmatprep.subr.bf16.mxu0 %v3124
        %3215 = vmatpush1.bf16.msra.mxu0 %v3121
        %3216 = vmatprep.subr.bf16.mxu0 0
        %3217 = vmatpush1.bf16.msra.mxu0 0
        %3218 = vmatprep.subr.bf16.mxu0 0
        %3219 = vmatpush1.bf16.msra.mxu0 0
        %3220 = vmatprep.subr.bf16.mxu0 0
        %3221 = vmatpush1.bf16.msra.mxu0 0
        %3222 = vmatprep.subr.bf16.mxu0 0
        %3223 = vmatpush1.bf16.msra.mxu0 0
        %3224 = vmatprep.subr.bf16.mxu0 0
        %3225 = vmatpush1.bf16.msra.mxu0 0
        %3226 = vmatprep.subr.bf16.mxu0 0
        %3227 = vmatpush1.bf16.msra.mxu0 0
        %3228 = vmatprep.subr.bf16.mxu0 0
        %3229 = vmatpush1.bf16.msra.mxu0 0
        %3230 = vmatprep.subr.bf16.mxu0 0
        %3231 = vmatpush1.bf16.msra.mxu0 0
        %3232 = vmatprep.subr.bf16.mxu0 0
        %3233 = vmatpush1.bf16.msra.mxu0 0
        %3234 = vmatprep.subr.bf16.mxu0 0
        %3235 = vmatpush1.bf16.msra.mxu0 0
        %3236 = vmatprep.subr.bf16.mxu0 0
        %3237 = vmatpush1.bf16.msra.mxu0 0
        %3238 = vmatprep.subr.bf16.mxu0 0
        %3239 = vmatpush1.bf16.msra.mxu0 0
        %3240 = vmatprep.subr.bf16.mxu0 0
        %3241 = vmatpush1.bf16.msra.mxu0 0
        %3242 = vmatprep.subr.bf16.mxu0 0
        %3243 = vmatpush1.bf16.msra.mxu0 0
        %3244 = vmatprep.subr.bf16.mxu0 0
        %3245 = vmatpush1.bf16.msra.mxu0 0
        %3246 = vmatprep.mubr.bf16.mxu0 0
        %3247 = vmatmul.mubr.bf16.gmra.mrb[0].mxu0 %v3106
        %v3248 = vpop.f32.mrb[0].mxu0
        %v3249 = vadd.f32 0.0, %v3248
        %v3250 = vpop.f32.mrb[0].mxu0
        %v3251 = vadd.f32 0.0, %v3250
        %v3252 = vpop.f32.mrb[0].mxu0
        %v3253 = vpop.f32.mrb[0].mxu0
        %3254 = vdwg.mxu0
        %3255 = vmatprep.subr.bf16.mxu0 %v3130
        %3256 = vmatpush1.bf16.msra.mxu0 %v3127
        %3257 = vmatprep.subr.bf16.mxu0 0
        %3258 = vmatpush1.bf16.msra.mxu0 0
        %3259 = vmatprep.subr.bf16.mxu0 0
        %3260 = vmatpush1.bf16.msra.mxu0 0
        %3261 = vmatprep.subr.bf16.mxu0 0
        %3262 = vmatpush1.bf16.msra.mxu0 0
        %3263 = vmatprep.subr.bf16.mxu0 0
        %3264 = vmatpush1.bf16.msra.mxu0 0
        %3265 = vmatprep.subr.bf16.mxu0 0
        %3266 = vmatpush1.bf16.msra.mxu0 0
        %3267 = vmatprep.subr.bf16.mxu0 0
        %3268 = vmatpush1.bf16.msra.mxu0 0
        %3269 = vmatprep.subr.bf16.mxu0 0
        %3270 = vmatpush1.bf16.msra.mxu0 0
        %3271 = vmatprep.subr.bf16.mxu0 0
        %3272 = vmatpush1.bf16.msra.mxu0 0
        %3273 = vmatprep.subr.bf16.mxu0 0
        %3274 = vmatpush1.bf16.msra.mxu0 0
        %3275 = vmatprep.subr.bf16.mxu0 0
        %3276 = vmatpush1.bf16.msra.mxu0 0
        %3277 = vmatprep.subr.bf16.mxu0 0
        %3278 = vmatpush1.bf16.msra.mxu0 0
        %3279 = vmatprep.subr.bf16.mxu0 0
        %3280 = vmatpush1.bf16.msra.mxu0 0
        %3281 = vmatprep.subr.bf16.mxu0 0
        %3282 = vmatpush1.bf16.msra.mxu0 0
        %3283 = vmatprep.subr.bf16.mxu0 0
        %3284 = vmatpush1.bf16.msra.mxu0 0
        %3285 = vmatprep.subr.bf16.mxu0 0
        %3286 = vmatpush1.bf16.msra.mxu0 0
        %3287 = vmatprep.mubr.bf16.mxu0 0
        %3288 = vmatmul.mubr.bf16.gmra.mrb[0].mxu0 %v3106
        %v3289 = vpop.f32.mrb[0].mxu0
        %v3290 = vadd.f32 0.0, %v3289
        %v3291 = vpop.f32.mrb[0].mxu0
        %v3292 = vadd.f32 0.0, %v3291
        %v3293 = vpop.f32.mrb[0].mxu0
        %v3294 = vpop.f32.mrb[0].mxu0
        %3295 = vdwg.mxu0
        %v3296 = vadd.f32 %v3007, %v3167
        %v3297 = vadd.f32 %v3008, %v3169
        %v3298 = vadd.f32 %v3009, %v3208
        %v3299 = vadd.f32 %v3010, %v3210
        %v3300 = vadd.f32 %v3011, %v3249
        %v3301 = vadd.f32 %v3012, %v3251
        %v3302 = vadd.f32 %v3013, %v3290
        %v3303 = vadd.f32 %v3014, %v3292
        %3304 = vst [vmem:[#allocation3 + $0x40] sm:$0xff] 0.0
        %3305 = vst [vmem:[#allocation3] sm:$0xff] %v3296
        %3306 = vst [vmem:[#allocation3 + $0x8] sm:$0xff] %v3297
        %3307 = vst [vmem:[#allocation3 + $0x10] sm:$0xff] %v3298
        %3308 = vst [vmem:[#allocation3 + $0x18] sm:$0xff] %v3299
        %3309 = vst [vmem:[#allocation3 + $0x20] sm:$0xff] %v3300
        %3310 = vst [vmem:[#allocation3 + $0x28] sm:$0xff] %v3301
        %3311 = vst [vmem:[#allocation3 + $0x30] sm:$0xff] %v3302
        %3312 = vst [vmem:[#allocation3 + $0x38] sm:$0xff] %v3303
        %v3313 = vld [vmem:[#allocation3] sm:$0xff]
        %v3314 = vld [vmem:[#allocation3 + $0x8] sm:$0xff]
        %v3315 = vld [vmem:[#allocation3 + $0x10] sm:$0xff]
        %v3316 = vld [vmem:[#allocation3 + $0x18] sm:$0xff]
        %v3317 = vld [vmem:[#allocation3 + $0x20] sm:$0xff]
        %v3318 = vld [vmem:[#allocation3 + $0x28] sm:$0xff]
        %v3319 = vld [vmem:[#allocation3 + $0x30] sm:$0xff]
        %v3320 = vld [vmem:[#allocation3 + $0x38] sm:$0xff]
        %v3321 = vld [vmem:[#allocation3] sm:$0xff]
        %v3322 = vld [vmem:[#allocation3 + $0x8] sm:$0xff]
        %v3323 = vld [vmem:[#allocation3 + $0x10] sm:$0xff]
        %v3324 = vld [vmem:[#allocation3 + $0x18] sm:$0xff]
        %v3325 = vld [vmem:[#allocation3 + $0x20] sm:$0xff]
        %v3326 = vld [vmem:[#allocation3 + $0x28] sm:$0xff]
        %v3327 = vld [vmem:[#allocation3 + $0x30] sm:$0xff]
        %v3328 = vld [vmem:[#allocation3 + $0x38] sm:$0xff]
        %v3329 = vld [vmem:[#allocation3 + $0x40] sm:$0xff]
        %3339 = vrot.lane.b32.xlu0 %v3321, 127
        %v3340 = vpop.permute.xlu0 %3339
        %3341 = vrot.lane.b32.xlu0 %v3322, 127
        %v3342 = vpop.permute.xlu0 %3341
        %3343 = vrot.lane.b32.xlu0 %v3323, 127
        %v3344 = vpop.permute.xlu0 %3343
        %3345 = vrot.lane.b32.xlu0 %v3324, 127
        %v3346 = vpop.permute.xlu0 %3345
        %3347 = vrot.lane.b32.xlu0 %v3325, 127
        %v3348 = vpop.permute.xlu0 %3347
        %3349 = vrot.lane.b32.xlu0 %v3326, 127
        %v3350 = vpop.permute.xlu0 %3349
        %3351 = vrot.lane.b32.xlu0 %v3327, 127
        %v3352 = vpop.permute.xlu0 %3351
        %3353 = vrot.lane.b32.xlu0 %v3328, 127
        %v3354 = vpop.permute.xlu0 %3353
        %3355 = vrot.lane.b32.xlu0 %v3329, 127
        %v3356 = vpop.permute.xlu0 %3355
        %vm3357 = vcmask 1039360
        %v3358 = vsel %vm3357, %v3340, %v3342
        %v3359 = vsel %vm3357, %v3342, %v3344
        %v3360 = vsel %vm3357, %v3344, %v3346
        %v3361 = vsel %vm3357, %v3346, %v3348
        %v3362 = vsel %vm3357, %v3348, %v3350
        %v3363 = vsel %vm3357, %v3350, %v3352
        %v3364 = vsel %vm3357, %v3352, %v3354
        %v3365 = vsel %vm3357, %v3354, %v3356
        %v3374 = vmax.f32 %v3313, %v3358
        %v3375 = vmax.f32 %v3314, %v3359
        %v3376 = vmax.f32 %v3315, %v3360
        %v3377 = vmax.f32 %v3316, %v3361
        %v3378 = vmax.f32 %v3317, %v3362
        %v3379 = vmax.f32 %v3318, %v3363
        %v3380 = vmax.f32 %v3319, %v3364
        %v3381 = vmax.f32 %v3320, %v3365
        %v3383 = vmax.f32 %v3321, %v3358
        %v3384 = vmax.f32 %v3322, %v3359
        %v3385 = vmax.f32 %v3323, %v3360
        %v3386 = vmax.f32 %v3324, %v3361
        %v3387 = vmax.f32 %v3325, %v3362
        %v3388 = vmax.f32 %v3326, %v3363
        %v3389 = vmax.f32 %v3327, %v3364
        %v3390 = vmax.f32 %v3328, %v3365
        %v3391 = vmax.f32 %v3329, %v3356
        %3401 = vrot.lane.b32.xlu0 %v3383, 96
        %v3402 = vpop.permute.xlu0 %3401
        %3403 = vrot.lane.b32.xlu0 %v3384, 96
        %v3404 = vpop.permute.xlu0 %3403
        %3405 = vrot.lane.b32.xlu0 %v3385, 96
        %v3406 = vpop.permute.xlu0 %3405
        %3407 = vrot.lane.b32.xlu0 %v3386, 96
        %v3408 = vpop.permute.xlu0 %3407
        %3409 = vrot.lane.b32.xlu0 %v3387, 96
        %v3410 = vpop.permute.xlu0 %3409
        %3411 = vrot.lane.b32.xlu0 %v3388, 96
        %v3412 = vpop.permute.xlu0 %3411
        %3413 = vrot.lane.b32.xlu0 %v3389, 96
        %v3414 = vpop.permute.xlu0 %3413
        %3415 = vrot.lane.b32.xlu0 %v3390, 96
        %v3416 = vpop.permute.xlu0 %3415
        %3417 = vrot.lane.b32.xlu0 %v3391, 96
        %v3418 = vpop.permute.xlu0 %3417
        %vm3419 = vcmask 785408
        %v3420 = vsel %vm3419, %v3402, %v3404
        %v3421 = vsel %vm3419, %v3404, %v3406
        %v3422 = vsel %vm3419, %v3406, %v3408
        %v3423 = vsel %vm3419, %v3408, %v3410
        %v3424 = vsel %vm3419, %v3410, %v3412
        %v3425 = vsel %vm3419, %v3412, %v3414
        %v3426 = vsel %vm3419, %v3414, %v3416
        %v3427 = vsel %vm3419, %v3416, %v3418
        %v3436 = vmax.f32 %v3374, %v3420
        %v3437 = vmax.f32 %v3375, %v3421
        %v3438 = vmax.f32 %v3376, %v3422
        %v3439 = vmax.f32 %v3377, %v3423
        %v3440 = vmax.f32 %v3378, %v3424
        %v3441 = vmax.f32 %v3379, %v3425
        %v3442 = vmax.f32 %v3380, %v3426
        %v3443 = vmax.f32 %v3381, %v3427
        %v3444 = vmax.f32 %v3436, 0.0
        %v3445 = vmax.f32 %v3437, 0.0
        %v3446 = vmax.f32 %v3438, 0.0
        %v3447 = vmax.f32 %v3439, 0.0
        %v3448 = vmax.f32 %v3440, 0.0
        %v3449 = vmax.f32 %v3441, 0.0
        %v3450 = vmax.f32 %v3442, 0.0
        %v3451 = vmax.f32 %v3443, 0.0
        %3452 = vst [vmem:[#allocation4] sm:$0xff] 0
        %3453 = vst [vmem:[#allocation4 + $0x8] sm:$0xff] 0
        %3454 = vst [vmem:[#allocation4 + $0x10] sm:$0xff] 0
        %3455 = vst [vmem:[#allocation4 + $0x18] sm:$0xff] 0
        %3456 = vst [vmem:[#allocation4 + $0x20] sm:$0xff] 0
        %v3457 = vpack.c.bf16 %v3444, %v3444
        %v3458 = vpack.c.bf16 %v3445, %v3445
        %v3459 = vpack.c.bf16 %v3446, %v3446
        %v3460 = vpack.c.bf16 %v3447, %v3447
        %v3461 = vpack.c.bf16 %v3448, %v3448
        %v3462 = vpack.c.bf16 %v3449, %v3449
        %v3463 = vpack.c.bf16 %v3450, %v3450
        %v3464 = vpack.c.bf16 %v3451, %v3451
        %v3473 = vunpack.c.l.b16 %v3457
        %v3474 = vunpack.c.l.b16 %v3458
        %v3475 = vunpack.c.l.b16 %v3459
        %v3476 = vunpack.c.l.b16 %v3460
        %v3477 = vunpack.c.l.b16 %v3461
        %v3478 = vunpack.c.l.b16 %v3462
        %v3479 = vunpack.c.l.b16 %v3463
        %v3480 = vunpack.c.l.b16 %v3464
        %v3481 = vpack.c.b16 %v3474, %v3473
        %v3482 = vpack.c.b16 %v3476, %v3475
        %v3483 = vpack.c.b16 %v3478, %v3477
        %v3484 = vpack.c.b16 %v3480, %v3479
        %3489 = vst [vmem:[#allocation4 + $0x4] sm:$0xff] %v3481
        %3490 = vst [vmem:[#allocation4 + $0xc] sm:$0xff] %v3482
        %3491 = vst [vmem:[#allocation4 + $0x14] sm:$0xff] %v3483
        %3492 = vst [vmem:[#allocation4 + $0x1c] sm:$0xff] %v3484
        %v3493 = vld [vmem:[%s4] sm:$0xff]
        %v3494 = vld [vmem:[%s4 + $0x8] sm:$0xff]
        %3496 = vset.pattern.permute.xlu0 0
        %3497 = vperm.xlu0 %3496, %v3493
        %v3498 = vpop.permute.xlu0 %3497
        %3501 = vset.pattern.permute.xlu0 0
        %3502 = vperm.xlu0 %3501, %v3494
        %v3503 = vpop.permute.xlu0 %3502
        %v3505 = vld [vmem:[#allocation4] sm:$0xff]
        %v3506 = vld [vmem:[#allocation4 + $0x8] sm:$0xff]
        %v3507 = vld [vmem:[#allocation4 + $0x10] sm:$0xff]
        %v3508 = vld [vmem:[#allocation4 + $0x18] sm:$0xff]
        %v3509 = vld [vmem:[#allocation4 + $0x20] sm:$0xf]
        %vm3510 = vcmp.lt.s32.totalorder %v487, 0
        %v3511 = vsub.s32 0, %v487
        %v3512 = vsel %vm3510, %v3511, %v487
        %v3513 = vshrl.u32 %v3512, 6
        %v3514 = vand.u32 %v3512, 63
        %v3515 = vsub.s32 0, %v3514
        %v3516 = vsel %vm3510, %v3515, %v3514
        %vm3517 = vcmp.lt.s32.totalorder %v488, 0
        %v3518 = vsub.s32 0, %v488
        %v3519 = vsel %vm3517, %v3518, %v488
        %v3520 = vshrl.u32 %v3519, 6
        %v3521 = vand.u32 %v3519, 63
        %v3522 = vsub.s32 0, %v3521
        %v3523 = vsel %vm3517, %v3522, %v3521
        %vm3524 = vcmp.lt.s32.totalorder %v489, 0
        %v3525 = vsub.s32 0, %v489
        %v3526 = vsel %vm3524, %v3525, %v489
        %v3527 = vshrl.u32 %v3526, 6
        %v3528 = vand.u32 %v3526, 63
        %v3529 = vsub.s32 0, %v3528
        %v3530 = vsel %vm3524, %v3529, %v3528
        %vm3531 = vcmp.lt.s32.totalorder %v490, 0
        %v3532 = vsub.s32 0, %v490
        %v3533 = vsel %vm3531, %v3532, %v490
        %v3534 = vshrl.u32 %v3533, 6
        %v3535 = vand.u32 %v3533, 63
        %v3536 = vsub.s32 0, %v3535
        %v3537 = vsel %vm3531, %v3536, %v3535
        %vm3538 = vcmp.lt.s32.totalorder %v491, 0
        %v3539 = vsub.s32 0, %v491
        %v3540 = vsel %vm3538, %v3539, %v491
        %v3541 = vshrl.u32 %v3540, 6
        %v3542 = vand.u32 %v3540, 63
        %v3543 = vsub.s32 0, %v3542
        %v3544 = vsel %vm3538, %v3543, %v3542
        %vm3545 = vcmp.lt.s32.totalorder %v492, 0
        %v3546 = vsub.s32 0, %v492
        %v3547 = vsel %vm3545, %v3546, %v492
        %v3548 = vshrl.u32 %v3547, 6
        %v3549 = vand.u32 %v3547, 63
        %v3550 = vsub.s32 0, %v3549
        %v3551 = vsel %vm3545, %v3550, %v3549
        %vm3552 = vcmp.lt.s32.totalorder %v493, 0
        %v3553 = vsub.s32 0, %v493
        %v3554 = vsel %vm3552, %v3553, %v493
        %v3555 = vshrl.u32 %v3554, 6
        %v3556 = vand.u32 %v3554, 63
        %v3557 = vsub.s32 0, %v3556
        %v3558 = vsel %vm3552, %v3557, %v3556
        %vm3559 = vcmp.lt.s32.totalorder %v494, 0
        %v3560 = vsub.s32 0, %v494
        %v3561 = vsel %vm3559, %v3560, %v494
        %v3562 = vshrl.u32 %v3561, 6
        %v3563 = vand.u32 %v3561, 63
        %v3564 = vsub.s32 0, %v3563
        %v3565 = vsel %vm3559, %v3564, %v3563
        %vm3566 = vcmp.ne.s32.totalorder %v3516, 0
        %vm3567 = vcmp.ne.s32.totalorder %v3523, 0
        %vm3568 = vcmp.ne.s32.totalorder %v3530, 0
        %vm3569 = vcmp.ne.s32.totalorder %v3537, 0
        %vm3570 = vcmp.ne.s32.totalorder %v3544, 0
        %vm3571 = vcmp.ne.s32.totalorder %v3551, 0
        %vm3572 = vcmp.ne.s32.totalorder %v3558, 0
        %vm3573 = vcmp.ne.s32.totalorder %v3565, 0
        %vm3574 = vcmp.lt.s32.totalorder %v3516, 0
        %vm3575 = vcmp.lt.s32.totalorder %v3523, 0
        %vm3576 = vcmp.lt.s32.totalorder %v3530, 0
        %vm3577 = vcmp.lt.s32.totalorder %v3537, 0
        %vm3578 = vcmp.lt.s32.totalorder %v3544, 0
        %vm3579 = vcmp.lt.s32.totalorder %v3551, 0
        %vm3580 = vcmp.lt.s32.totalorder %v3558, 0
        %vm3581 = vcmp.lt.s32.totalorder %v3565, 0
        %vm3582 = vmand %vm3574, %vm3566
        %vm3583 = vmand %vm3575, %vm3567
        %vm3584 = vmand %vm3576, %vm3568
        %vm3585 = vmand %vm3577, %vm3569
        %vm3586 = vmand %vm3578, %vm3570
        %vm3587 = vmand %vm3579, %vm3571
        %vm3588 = vmand %vm3580, %vm3572
        %vm3589 = vmand %vm3581, %vm3573
        %v3590 = vadd.s32 %v3516, 64
        %v3591 = vadd.s32 %v3523, 64
        %v3592 = vadd.s32 %v3530, 64
        %v3593 = vadd.s32 %v3537, 64
        %v3594 = vadd.s32 %v3544, 64
        %v3595 = vadd.s32 %v3551, 64
        %v3596 = vadd.s32 %v3558, 64
        %v3597 = vadd.s32 %v3565, 64
        %v3598 = vsel %vm3582, %v3590, %v3516
        %v3599 = vsel %vm3583, %v3591, %v3523
        %v3600 = vsel %vm3584, %v3592, %v3530
        %v3601 = vsel %vm3585, %v3593, %v3537
        %v3602 = vsel %vm3586, %v3594, %v3544
        %v3603 = vsel %vm3587, %v3595, %v3551
        %v3604 = vsel %vm3588, %v3596, %v3558
        %v3605 = vsel %vm3589, %v3597, %v3565
        %vm3606 = vcmp.ne.s32.totalorder %v3598, 0
        %vm3607 = vcmp.ne.s32.totalorder %v3599, 0
        %vm3608 = vcmp.ne.s32.totalorder %v3600, 0
        %vm3609 = vcmp.ne.s32.totalorder %v3601, 0
        %vm3610 = vcmp.ne.s32.totalorder %v3602, 0
        %vm3611 = vcmp.ne.s32.totalorder %v3603, 0
        %vm3612 = vcmp.ne.s32.totalorder %v3604, 0
        %vm3613 = vcmp.ne.s32.totalorder %v3605, 0
        %v3614 = vsel %vm3606, 1, 0
        %v3615 = vsel %vm3607, 1, 0
        %v3616 = vsel %vm3608, 1, 0
        %v3617 = vsel %vm3609, 1, 0
        %v3618 = vsel %vm3610, 1, 0
        %v3619 = vsel %vm3611, 1, 0
        %v3620 = vsel %vm3612, 1, 0
        %v3621 = vsel %vm3613, 1, 0
        %v3622 = vcvt.s32.f32 %v3614
        %v3623 = vcvt.s32.f32 %v3615
        %v3624 = vcvt.s32.f32 %v3616
        %v3625 = vcvt.s32.f32 %v3617
        %v3626 = vcvt.s32.f32 %v3618
        %v3627 = vcvt.s32.f32 %v3619
        %v3628 = vcvt.s32.f32 %v3620
        %v3629 = vcvt.s32.f32 %v3621
        %v3630 = vpack.c.bf16 %v3622, %v3622
        %v3631 = vpack.c.bf16 %v3623, %v3623
        %v3632 = vpack.c.bf16 %v3624, %v3624
        %v3633 = vpack.c.bf16 %v3625, %v3625
        %v3634 = vpack.c.bf16 %v3626, %v3626
        %v3635 = vpack.c.bf16 %v3627, %v3627
        %v3636 = vpack.c.bf16 %v3628, %v3628
        %v3637 = vpack.c.bf16 %v3629, %v3629
        %v3646 = vunpack.c.l.b16 %v3630
        %v3647 = vunpack.c.l.b16 %v3631
        %v3648 = vunpack.c.l.b16 %v3632
        %v3649 = vunpack.c.l.b16 %v3633
        %v3650 = vunpack.c.l.b16 %v3634
        %v3651 = vunpack.c.l.b16 %v3635
        %v3652 = vunpack.c.l.b16 %v3636
        %v3653 = vunpack.c.l.b16 %v3637
        %v3654 = vpack.c.b16 %v3647, %v3646
        %v3655 = vpack.c.b16 %v3649, %v3648
        %v3656 = vpack.c.b16 %v3651, %v3650
        %v3657 = vpack.c.b16 %v3653, %v3652
        %3658 = vrot.lane.b32.xlu0 %v3654, 62
        %v3659 = vpop.permute.xlu0 %3658
        %3660 = vrot.lane.b32.xlu0 %v3655, 62
        %v3661 = vpop.permute.xlu0 %3660
        %3662 = vrot.lane.b32.xlu0 %v3656, 62
        %v3663 = vpop.permute.xlu0 %3662
        %3664 = vrot.lane.b32.xlu0 %v3657, 62
        %v3665 = vpop.permute.xlu0 %3664
        %v3666 = vrot.slane %v3659, 4
        %v3667 = vrot.slane %v3661, 4
        %v3668 = vrot.slane %v3663, 4
        %v3669 = vrot.slane %v3665, 4
        %vm3670 = vcmask 506880
        %v3671 = vsel %vm3670, %v3666, %v3659
        %vm3672 = vcmask 1043456
        %v3673 = vsel %vm3672, %v3666, %v3667
        %v3674 = vsel %vm3670, %v3673, %v3661
        %v3675 = vsel %vm3672, %v3667, %v3668
        %v3676 = vsel %vm3670, %v3675, %v3663
        %v3677 = vsel %vm3672, %v3668, %v3669
        %v3678 = vsel %vm3670, %v3677, %v3665
        %v3684 = vmul.bf16 %v3505, %v3671
        %v3685 = vmul.bf16 %v3506, %v3674
        %v3686 = vmul.bf16 %v3507, %v3676
        %v3687 = vmul.bf16 %v3508, %v3678
        %v3688 = vmul.bf16 %v3509, %v3669
        %v3689 = vld [vmem:[%s3] sm:$0xf]
        %v3690 = vld [vmem:[%s3 + $0x4] sm:$0xf]
        %v3693 = vunpack.c.l.b16 %v3689
        %v3694 = vunpack.c.l.b16 %v3690
        %v3695 = vpack.c.b16 %v3694, %v3693
        %v3701 = vunpack.c.l.b16 %v3684
        %v3702 = vunpack.c.h.b16 %v3684
        %v3703 = vunpack.c.l.b16 %v3685
        %v3704 = vunpack.c.h.b16 %v3685
        %v3705 = vunpack.c.l.b16 %v3686
        %v3706 = vunpack.c.h.b16 %v3686
        %v3707 = vunpack.c.l.b16 %v3687
        %v3708 = vunpack.c.h.b16 %v3687
        %v3709 = vunpack.c.l.b16 %v3688
        %v3710 = vpack.c.b16 %v3701, %v3701
        %v3711 = vpack.c.b16 %v3702, %v3702
        %v3712 = vpack.c.b16 %v3703, %v3703
        %v3713 = vpack.c.b16 %v3704, %v3704
        %v3714 = vpack.c.b16 %v3705, %v3705
        %v3715 = vpack.c.b16 %v3706, %v3706
        %v3716 = vpack.c.b16 %v3707, %v3707
        %v3717 = vpack.c.b16 %v3708, %v3708
        %v3718 = vpack.c.b16 %v3709, %v3709
        %3719 = vrot.lane.b32.xlu0 %v3710, 66
        %v3720 = vpop.permute.xlu0 %3719
        %3721 = vrot.lane.b32.xlu0 %v3711, 66
        %v3722 = vpop.permute.xlu0 %3721
        %3723 = vrot.lane.b32.xlu0 %v3712, 66
        %v3724 = vpop.permute.xlu0 %3723
        %3725 = vrot.lane.b32.xlu0 %v3713, 66
        %v3726 = vpop.permute.xlu0 %3725
        %3727 = vrot.lane.b32.xlu0 %v3714, 66
        %v3728 = vpop.permute.xlu0 %3727
        %3729 = vrot.lane.b32.xlu0 %v3715, 66
        %v3730 = vpop.permute.xlu0 %3729
        %3731 = vrot.lane.b32.xlu0 %v3716, 66
        %v3732 = vpop.permute.xlu0 %3731
        %3733 = vrot.lane.b32.xlu0 %v3717, 66
        %v3734 = vpop.permute.xlu0 %3733
        %3735 = vrot.lane.b32.xlu0 %v3718, 66
        %v3736 = vpop.permute.xlu0 %3735
        %vm3737 = vcmask 539648
        %v3738 = vsel %vm3737, %v3720, %v3722
        %v3739 = vsel %vm3737, %v3722, %v3724
        %v3740 = vsel %vm3737, %v3724, %v3726
        %v3741 = vsel %vm3737, %v3726, %v3728
        %v3742 = vsel %vm3737, %v3728, %v3730
        %v3743 = vsel %vm3737, %v3730, %v3732
        %v3744 = vsel %vm3737, %v3732, %v3734
        %v3745 = vsel %vm3737, %v3734, %v3736
        %vm3746 = vcmask 64512
        %v3748 = vsel %vm3746, %v3695, 0
        %vm3750 = vcmask 1043456
        %v3752 = vsel %vm3750, %v3738, 0
        %v3755 = vsel %vm3750, %v3739, 0
        %v3758 = vsel %vm3750, %v3740, 0
        %v3761 = vsel %vm3750, %v3741, 0
        %v3764 = vsel %vm3750, %v3742, 0
        %v3767 = vsel %vm3750, %v3743, 0
        %v3770 = vsel %vm3750, %v3744, 0
        %v3773 = vsel %vm3750, %v3745, 0
        %3775 = vmatprep.subr.bf16.mxu0 %v3755
        %3776 = vmatpush1.bf16.msra.mxu0 %v3752
        %3777 = vmatprep.subr.bf16.mxu0 0
        %3778 = vmatpush1.bf16.msra.mxu0 0
        %3779 = vmatprep.subr.bf16.mxu0 0
        %3780 = vmatpush1.bf16.msra.mxu0 0
        %3781 = vmatprep.subr.bf16.mxu0 0
        %3782 = vmatpush1.bf16.msra.mxu0 0
        %3783 = vmatprep.subr.bf16.mxu0 0
        %3784 = vmatpush1.bf16.msra.mxu0 0
        %3785 = vmatprep.subr.bf16.mxu0 0
        %3786 = vmatpush1.bf16.msra.mxu0 0
        %3787 = vmatprep.subr.bf16.mxu0 0
        %3788 = vmatpush1.bf16.msra.mxu0 0
        %3789 = vmatprep.subr.bf16.mxu0 0
        %3790 = vmatpush1.bf16.msra.mxu0 0
        %3791 = vmatprep.subr.bf16.mxu0 0
        %3792 = vmatpush1.bf16.msra.mxu0 0
        %3793 = vmatprep.subr.bf16.mxu0 0
        %3794 = vmatpush1.bf16.msra.mxu0 0
        %3795 = vmatprep.subr.bf16.mxu0 0
        %3796 = vmatpush1.bf16.msra.mxu0 0
        %3797 = vmatprep.subr.bf16.mxu0 0
        %3798 = vmatpush1.bf16.msra.mxu0 0
        %3799 = vmatprep.subr.bf16.mxu0 0
        %3800 = vmatpush1.bf16.msra.mxu0 0
        %3801 = vmatprep.subr.bf16.mxu0 0
        %3802 = vmatpush1.bf16.msra.mxu0 0
        %3803 = vmatprep.subr.bf16.mxu0 0
        %3804 = vmatpush1.bf16.msra.mxu0 0
        %3805 = vmatprep.subr.bf16.mxu0 0
        %3806 = vmatpush1.bf16.msra.mxu0 0
        %3807 = vmatprep.mubr.bf16.mxu0 0
        %3808 = vmatmul.mubr.bf16.gmra.mrb[0].mxu0 %v3748
        %v3809 = vpop.f32.mrb[0].mxu0
        %v3810 = vadd.f32 0.0, %v3809
        %v3811 = vpop.f32.mrb[0].mxu0
        %v3812 = vadd.f32 0.0, %v3811
        %v3813 = vpop.f32.mrb[0].mxu0
        %v3814 = vadd.f32 0.0, %v3813
        %v3815 = vpop.f32.mrb[0].mxu0
        %v3816 = vadd.f32 0.0, %v3815
        %3817 = vdwg.mxu0
        %3818 = vmatprep.subr.bf16.mxu0 %v3761
        %3819 = vmatpush1.bf16.msra.mxu0 %v3758
        %3820 = vmatprep.subr.bf16.mxu0 0
        %3821 = vmatpush1.bf16.msra.mxu0 0
        %3822 = vmatprep.subr.bf16.mxu0 0
        %3823 = vmatpush1.bf16.msra.mxu0 0
        %3824 = vmatprep.subr.bf16.mxu0 0
        %3825 = vmatpush1.bf16.msra.mxu0 0
        %3826 = vmatprep.subr.bf16.mxu0 0
        %3827 = vmatpush1.bf16.msra.mxu0 0
        %3828 = vmatprep.subr.bf16.mxu0 0
        %3829 = vmatpush1.bf16.msra.mxu0 0
        %3830 = vmatprep.subr.bf16.mxu0 0
        %3831 = vmatpush1.bf16.msra.mxu0 0
        %3832 = vmatprep.subr.bf16.mxu0 0
        %3833 = vmatpush1.bf16.msra.mxu0 0
        %3834 = vmatprep.subr.bf16.mxu0 0
        %3835 = vmatpush1.bf16.msra.mxu0 0
        %3836 = vmatprep.subr.bf16.mxu0 0
        %3837 = vmatpush1.bf16.msra.mxu0 0
        %3838 = vmatprep.subr.bf16.mxu0 0
        %3839 = vmatpush1.bf16.msra.mxu0 0
        %3840 = vmatprep.subr.bf16.mxu0 0
        %3841 = vmatpush1.bf16.msra.mxu0 0
        %3842 = vmatprep.subr.bf16.mxu0 0
        %3843 = vmatpush1.bf16.msra.mxu0 0
        %3844 = vmatprep.subr.bf16.mxu0 0
        %3845 = vmatpush1.bf16.msra.mxu0 0
        %3846 = vmatprep.subr.bf16.mxu0 0
        %3847 = vmatpush1.bf16.msra.mxu0 0
        %3848 = vmatprep.subr.bf16.mxu0 0
        %3849 = vmatpush1.bf16.msra.mxu0 0
        %3850 = vmatprep.mubr.bf16.mxu0 0
        %3851 = vmatmul.mubr.bf16.gmra.mrb[0].mxu0 %v3748
        %v3852 = vpop.f32.mrb[0].mxu0
        %v3853 = vadd.f32 0.0, %v3852
        %v3854 = vpop.f32.mrb[0].mxu0
        %v3855 = vadd.f32 0.0, %v3854
        %v3856 = vpop.f32.mrb[0].mxu0
        %v3857 = vadd.f32 0.0, %v3856
        %v3858 = vpop.f32.mrb[0].mxu0
        %v3859 = vadd.f32 0.0, %v3858
        %3860 = vdwg.mxu0
        %3861 = vmatprep.subr.bf16.mxu0 %v3767
        %3862 = vmatpush1.bf16.msra.mxu0 %v3764
        %3863 = vmatprep.subr.bf16.mxu0 0
        %3864 = vmatpush1.bf16.msra.mxu0 0
        %3865 = vmatprep.subr.bf16.mxu0 0
        %3866 = vmatpush1.bf16.msra.mxu0 0
        %3867 = vmatprep.subr.bf16.mxu0 0
        %3868 = vmatpush1.bf16.msra.mxu0 0
        %3869 = vmatprep.subr.bf16.mxu0 0
        %3870 = vmatpush1.bf16.msra.mxu0 0
        %3871 = vmatprep.subr.bf16.mxu0 0
        %3872 = vmatpush1.bf16.msra.mxu0 0
        %3873 = vmatprep.subr.bf16.mxu0 0
        %3874 = vmatpush1.bf16.msra.mxu0 0
        %3875 = vmatprep.subr.bf16.mxu0 0
        %3876 = vmatpush1.bf16.msra.mxu0 0
        %3877 = vmatprep.subr.bf16.mxu0 0
        %3878 = vmatpush1.bf16.msra.mxu0 0
        %3879 = vmatprep.subr.bf16.mxu0 0
        %3880 = vmatpush1.bf16.msra.mxu0 0
        %3881 = vmatprep.subr.bf16.mxu0 0
        %3882 = vmatpush1.bf16.msra.mxu0 0
        %3883 = vmatprep.subr.bf16.mxu0 0
        %3884 = vmatpush1.bf16.msra.mxu0 0
        %3885 = vmatprep.subr.bf16.mxu0 0
        %3886 = vmatpush1.bf16.msra.mxu0 0
        %3887 = vmatprep.subr.bf16.mxu0 0
        %3888 = vmatpush1.bf16.msra.mxu0 0
        %3889 = vmatprep.subr.bf16.mxu0 0
        %3890 = vmatpush1.bf16.msra.mxu0 0
        %3891 = vmatprep.subr.bf16.mxu0 0
        %3892 = vmatpush1.bf16.msra.mxu0 0
        %3893 = vmatprep.mubr.bf16.mxu0 0
        %3894 = vmatmul.mubr.bf16.gmra.mrb[0].mxu0 %v3748
        %v3895 = vpop.f32.mrb[0].mxu0
        %v3896 = vadd.f32 0.0, %v3895
        %v3897 = vpop.f32.mrb[0].mxu0
        %v3898 = vadd.f32 0.0, %v3897
        %v3899 = vpop.f32.mrb[0].mxu0
        %v3900 = vadd.f32 0.0, %v3899
        %v3901 = vpop.f32.mrb[0].mxu0
        %v3902 = vadd.f32 0.0, %v3901
        %3903 = vdwg.mxu0
        %3904 = vmatprep.subr.bf16.mxu0 %v3773
        %3905 = vmatpush1.bf16.msra.mxu0 %v3770
        %3906 = vmatprep.subr.bf16.mxu0 0
        %3907 = vmatpush1.bf16.msra.mxu0 0
        %3908 = vmatprep.subr.bf16.mxu0 0
        %3909 = vmatpush1.bf16.msra.mxu0 0
        %3910 = vmatprep.subr.bf16.mxu0 0
        %3911 = vmatpush1.bf16.msra.mxu0 0
        %3912 = vmatprep.subr.bf16.mxu0 0
        %3913 = vmatpush1.bf16.msra.mxu0 0
        %3914 = vmatprep.subr.bf16.mxu0 0
        %3915 = vmatpush1.bf16.msra.mxu0 0
        %3916 = vmatprep.subr.bf16.mxu0 0
        %3917 = vmatpush1.bf16.msra.mxu0 0
        %3918 = vmatprep.subr.bf16.mxu0 0
        %3919 = vmatpush1.bf16.msra.mxu0 0
        %3920 = vmatprep.subr.bf16.mxu0 0
        %3921 = vmatpush1.bf16.msra.mxu0 0
        %3922 = vmatprep.subr.bf16.mxu0 0
        %3923 = vmatpush1.bf16.msra.mxu0 0
        %3924 = vmatprep.subr.bf16.mxu0 0
        %3925 = vmatpush1.bf16.msra.mxu0 0
        %3926 = vmatprep.subr.bf16.mxu0 0
        %3927 = vmatpush1.bf16.msra.mxu0 0
        %3928 = vmatprep.subr.bf16.mxu0 0
        %3929 = vmatpush1.bf16.msra.mxu0 0
        %3930 = vmatprep.subr.bf16.mxu0 0
        %3931 = vmatpush1.bf16.msra.mxu0 0
        %3932 = vmatprep.subr.bf16.mxu0 0
        %3933 = vmatpush1.bf16.msra.mxu0 0
        %3934 = vmatprep.subr.bf16.mxu0 0
        %3935 = vmatpush1.bf16.msra.mxu0 0
        %3936 = vmatprep.mubr.bf16.mxu0 0
        %3937 = vmatmul.mubr.bf16.gmra.mrb[0].mxu0 %v3748
        %v3938 = vpop.f32.mrb[0].mxu0
        %v3939 = vadd.f32 0.0, %v3938
        %v3940 = vpop.f32.mrb[0].mxu0
        %v3941 = vadd.f32 0.0, %v3940
        %v3942 = vpop.f32.mrb[0].mxu0
        %v3943 = vadd.f32 0.0, %v3942
        %v3944 = vpop.f32.mrb[0].mxu0
        %v3945 = vadd.f32 0.0, %v3944
        %3946 = vdwg.mxu0
        %v3947 = vadd.f32 %v3498, %v3810
        %v3948 = vadd.f32 %v3498, %v3812
        %v3949 = vadd.f32 %v3498, %v3853
        %v3950 = vadd.f32 %v3498, %v3855
        %v3951 = vadd.f32 %v3498, %v3896
        %v3952 = vadd.f32 %v3498, %v3898
        %v3953 = vadd.f32 %v3498, %v3939
        %v3954 = vadd.f32 %v3498, %v3941
        %v3955 = vadd.f32 %v3503, %v3814
        %v3956 = vadd.f32 %v3503, %v3816
        %v3957 = vadd.f32 %v3503, %v3857
        %v3958 = vadd.f32 %v3503, %v3859
        %v3959 = vadd.f32 %v3503, %v3900
        %v3960 = vadd.f32 %v3503, %v3902
        %v3961 = vadd.f32 %v3503, %v3943
        %v3962 = vadd.f32 %v3503, %v3945
        %s3963 = scalar_lea.vmem %s3, 8
        %v3964 = vld [vmem:[%s3963] sm:$0xf]
        %v3965 = vld [vmem:[%s3963 + $0x4] sm:$0xf]
        %v3968 = vunpack.c.l.b16 %v3964
        %v3969 = vunpack.c.l.b16 %v3965
        %v3970 = vpack.c.b16 %v3969, %v3968
        %v3976 = vunpack.c.l.b16 %v3505
        %v3977 = vunpack.c.h.b16 %v3505
        %v3978 = vunpack.c.l.b16 %v3506
        %v3979 = vunpack.c.h.b16 %v3506
        %v3980 = vunpack.c.l.b16 %v3507
        %v3981 = vunpack.c.h.b16 %v3507
        %v3982 = vunpack.c.l.b16 %v3508
        %v3983 = vunpack.c.h.b16 %v3508
        %v3984 = vunpack.c.l.b16 %v3509
        %v3985 = vpack.c.b16 %v3976, %v3976
        %v3986 = vpack.c.b16 %v3977, %v3977
        %v3987 = vpack.c.b16 %v3978, %v3978
        %v3988 = vpack.c.b16 %v3979, %v3979
        %v3989 = vpack.c.b16 %v3980, %v3980
        %v3990 = vpack.c.b16 %v3981, %v3981
        %v3991 = vpack.c.b16 %v3982, %v3982
        %v3992 = vpack.c.b16 %v3983, %v3983
        %v3993 = vpack.c.b16 %v3984, %v3984
        %3994 = vrot.lane.b32.xlu0 %v3985, 64
        %v3995 = vpop.permute.xlu0 %3994
        %3996 = vrot.lane.b32.xlu0 %v3986, 64
        %v3997 = vpop.permute.xlu0 %3996
        %3998 = vrot.lane.b32.xlu0 %v3987, 64
        %v3999 = vpop.permute.xlu0 %3998
        %4000 = vrot.lane.b32.xlu0 %v3988, 64
        %v4001 = vpop.permute.xlu0 %4000
        %4002 = vrot.lane.b32.xlu0 %v3989, 64
        %v4003 = vpop.permute.xlu0 %4002
        %4004 = vrot.lane.b32.xlu0 %v3990, 64
        %v4005 = vpop.permute.xlu0 %4004
        %4006 = vrot.lane.b32.xlu0 %v3991, 64
        %v4007 = vpop.permute.xlu0 %4006
        %4008 = vrot.lane.b32.xlu0 %v3992, 64
        %v4009 = vpop.permute.xlu0 %4008
        %4010 = vrot.lane.b32.xlu0 %v3993, 64
        %v4011 = vpop.permute.xlu0 %4010
        %v4012 = vsel %vm454, %v3995, %v3997
        %v4013 = vsel %vm454, %v3997, %v3999
        %v4014 = vsel %vm454, %v3999, %v4001
        %v4015 = vsel %vm454, %v4001, %v4003
        %v4016 = vsel %vm454, %v4003, %v4005
        %v4017 = vsel %vm454, %v4005, %v4007
        %v4018 = vsel %vm454, %v4007, %v4009
        %v4019 = vsel %vm454, %v4009, %v4011
        %v4021 = vsel %vm3746, %v3970, 0
        %v4024 = vsel %vm3750, %v4012, 0
        %v4027 = vsel %vm3750, %v4013, 0
        %v4030 = vsel %vm3750, %v4014, 0
        %v4033 = vsel %vm3750, %v4015, 0
        %v4036 = vsel %vm3750, %v4016, 0
        %v4039 = vsel %vm3750, %v4017, 0
        %v4042 = vsel %vm3750, %v4018, 0
        %v4045 = vsel %vm3750, %v4019, 0
        %4047 = vmatprep.subr.bf16.mxu0 %v4027
        %4048 = vmatpush1.bf16.msra.mxu0 %v4024
        %4049 = vmatprep.subr.bf16.mxu0 0
        %4050 = vmatpush1.bf16.msra.mxu0 0
        %4051 = vmatprep.subr.bf16.mxu0 0
        %4052 = vmatpush1.bf16.msra.mxu0 0
        %4053 = vmatprep.subr.bf16.mxu0 0
        %4054 = vmatpush1.bf16.msra.mxu0 0
        %4055 = vmatprep.subr.bf16.mxu0 0
        %4056 = vmatpush1.bf16.msra.mxu0 0
        %4057 = vmatprep.subr.bf16.mxu0 0
        %4058 = vmatpush1.bf16.msra.mxu0 0
        %4059 = vmatprep.subr.bf16.mxu0 0
        %4060 = vmatpush1.bf16.msra.mxu0 0
        %4061 = vmatprep.subr.bf16.mxu0 0
        %4062 = vmatpush1.bf16.msra.mxu0 0
        %4063 = vmatprep.subr.bf16.mxu0 0
        %4064 = vmatpush1.bf16.msra.mxu0 0
        %4065 = vmatprep.subr.bf16.mxu0 0
        %4066 = vmatpush1.bf16.msra.mxu0 0
        %4067 = vmatprep.subr.bf16.mxu0 0
        %4068 = vmatpush1.bf16.msra.mxu0 0
        %4069 = vmatprep.subr.bf16.mxu0 0
        %4070 = vmatpush1.bf16.msra.mxu0 0
        %4071 = vmatprep.subr.bf16.mxu0 0
        %4072 = vmatpush1.bf16.msra.mxu0 0
        %4073 = vmatprep.subr.bf16.mxu0 0
        %4074 = vmatpush1.bf16.msra.mxu0 0
        %4075 = vmatprep.subr.bf16.mxu0 0
        %4076 = vmatpush1.bf16.msra.mxu0 0
        %4077 = vmatprep.subr.bf16.mxu0 0
        %4078 = vmatpush1.bf16.msra.mxu0 0
        %4079 = vmatprep.mubr.bf16.mxu0 0
        %4080 = vmatmul.mubr.bf16.gmra.mrb[0].mxu0 %v4021
        %v4081 = vpop.f32.mrb[0].mxu0
        %v4082 = vadd.f32 0.0, %v4081
        %v4083 = vpop.f32.mrb[0].mxu0
        %v4084 = vadd.f32 0.0, %v4083
        %v4085 = vpop.f32.mrb[0].mxu0
        %v4086 = vadd.f32 0.0, %v4085
        %v4087 = vpop.f32.mrb[0].mxu0
        %v4088 = vadd.f32 0.0, %v4087
        %4089 = vdwg.mxu0
        %4090 = vmatprep.subr.bf16.mxu0 %v4033
        %4091 = vmatpush1.bf16.msra.mxu0 %v4030
        %4092 = vmatprep.subr.bf16.mxu0 0
        %4093 = vmatpush1.bf16.msra.mxu0 0
        %4094 = vmatprep.subr.bf16.mxu0 0
        %4095 = vmatpush1.bf16.msra.mxu0 0
        %4096 = vmatprep.subr.bf16.mxu0 0
        %4097 = vmatpush1.bf16.msra.mxu0 0
        %4098 = vmatprep.subr.bf16.mxu0 0
        %4099 = vmatpush1.bf16.msra.mxu0 0
        %4100 = vmatprep.subr.bf16.mxu0 0
        %4101 = vmatpush1.bf16.msra.mxu0 0
        %4102 = vmatprep.subr.bf16.mxu0 0
        %4103 = vmatpush1.bf16.msra.mxu0 0
        %4104 = vmatprep.subr.bf16.mxu0 0
        %4105 = vmatpush1.bf16.msra.mxu0 0
        %4106 = vmatprep.subr.bf16.mxu0 0
        %4107 = vmatpush1.bf16.msra.mxu0 0
        %4108 = vmatprep.subr.bf16.mxu0 0
        %4109 = vmatpush1.bf16.msra.mxu0 0
        %4110 = vmatprep.subr.bf16.mxu0 0
        %4111 = vmatpush1.bf16.msra.mxu0 0
        %4112 = vmatprep.subr.bf16.mxu0 0
        %4113 = vmatpush1.bf16.msra.mxu0 0
        %4114 = vmatprep.subr.bf16.mxu0 0
        %4115 = vmatpush1.bf16.msra.mxu0 0
        %4116 = vmatprep.subr.bf16.mxu0 0
        %4117 = vmatpush1.bf16.msra.mxu0 0
        %4118 = vmatprep.subr.bf16.mxu0 0
        %4119 = vmatpush1.bf16.msra.mxu0 0
        %4120 = vmatprep.subr.bf16.mxu0 0
        %4121 = vmatpush1.bf16.msra.mxu0 0
        %4122 = vmatprep.mubr.bf16.mxu0 0
        %4123 = vmatmul.mubr.bf16.gmra.mrb[0].mxu0 %v4021
        %v4124 = vpop.f32.mrb[0].mxu0
        %v4125 = vadd.f32 0.0, %v4124
        %v4126 = vpop.f32.mrb[0].mxu0
        %v4127 = vadd.f32 0.0, %v4126
        %v4128 = vpop.f32.mrb[0].mxu0
        %v4129 = vadd.f32 0.0, %v4128
        %v4130 = vpop.f32.mrb[0].mxu0
        %v4131 = vadd.f32 0.0, %v4130
        %4132 = vdwg.mxu0
        %4133 = vmatprep.subr.bf16.mxu0 %v4039
        %4134 = vmatpush1.bf16.msra.mxu0 %v4036
        %4135 = vmatprep.subr.bf16.mxu0 0
        %4136 = vmatpush1.bf16.msra.mxu0 0
        %4137 = vmatprep.subr.bf16.mxu0 0
        %4138 = vmatpush1.bf16.msra.mxu0 0
        %4139 = vmatprep.subr.bf16.mxu0 0
        %4140 = vmatpush1.bf16.msra.mxu0 0
        %4141 = vmatprep.subr.bf16.mxu0 0
        %4142 = vmatpush1.bf16.msra.mxu0 0
        %4143 = vmatprep.subr.bf16.mxu0 0
        %4144 = vmatpush1.bf16.msra.mxu0 0
        %4145 = vmatprep.subr.bf16.mxu0 0
        %4146 = vmatpush1.bf16.msra.mxu0 0
        %4147 = vmatprep.subr.bf16.mxu0 0
        %4148 = vmatpush1.bf16.msra.mxu0 0
        %4149 = vmatprep.subr.bf16.mxu0 0
        %4150 = vmatpush1.bf16.msra.mxu0 0
        %4151 = vmatprep.subr.bf16.mxu0 0
        %4152 = vmatpush1.bf16.msra.mxu0 0
        %4153 = vmatprep.subr.bf16.mxu0 0
        %4154 = vmatpush1.bf16.msra.mxu0 0
        %4155 = vmatprep.subr.bf16.mxu0 0
        %4156 = vmatpush1.bf16.msra.mxu0 0
        %4157 = vmatprep.subr.bf16.mxu0 0
        %4158 = vmatpush1.bf16.msra.mxu0 0
        %4159 = vmatprep.subr.bf16.mxu0 0
        %4160 = vmatpush1.bf16.msra.mxu0 0
        %4161 = vmatprep.subr.bf16.mxu0 0
        %4162 = vmatpush1.bf16.msra.mxu0 0
        %4163 = vmatprep.subr.bf16.mxu0 0
        %4164 = vmatpush1.bf16.msra.mxu0 0
        %4165 = vmatprep.mubr.bf16.mxu0 0
        %4166 = vmatmul.mubr.bf16.gmra.mrb[0].mxu0 %v4021
        %v4167 = vpop.f32.mrb[0].mxu0
        %v4168 = vadd.f32 0.0, %v4167
        %v4169 = vpop.f32.mrb[0].mxu0
        %v4170 = vadd.f32 0.0, %v4169
        %v4171 = vpop.f32.mrb[0].mxu0
        %v4172 = vadd.f32 0.0, %v4171
        %v4173 = vpop.f32.mrb[0].mxu0
        %v4174 = vadd.f32 0.0, %v4173
        %4175 = vdwg.mxu0
        %4176 = vmatprep.subr.bf16.mxu0 %v4045
        %4177 = vmatpush1.bf16.msra.mxu0 %v4042
        %4178 = vmatprep.subr.bf16.mxu0 0
        %4179 = vmatpush1.bf16.msra.mxu0 0
        %4180 = vmatprep.subr.bf16.mxu0 0
        %4181 = vmatpush1.bf16.msra.mxu0 0
        %4182 = vmatprep.subr.bf16.mxu0 0
        %4183 = vmatpush1.bf16.msra.mxu0 0
        %4184 = vmatprep.subr.bf16.mxu0 0
        %4185 = vmatpush1.bf16.msra.mxu0 0
        %4186 = vmatprep.subr.bf16.mxu0 0
        %4187 = vmatpush1.bf16.msra.mxu0 0
        %4188 = vmatprep.subr.bf16.mxu0 0
        %4189 = vmatpush1.bf16.msra.mxu0 0
        %4190 = vmatprep.subr.bf16.mxu0 0
        %4191 = vmatpush1.bf16.msra.mxu0 0
        %4192 = vmatprep.subr.bf16.mxu0 0
        %4193 = vmatpush1.bf16.msra.mxu0 0
        %4194 = vmatprep.subr.bf16.mxu0 0
        %4195 = vmatpush1.bf16.msra.mxu0 0
        %4196 = vmatprep.subr.bf16.mxu0 0
        %4197 = vmatpush1.bf16.msra.mxu0 0
        %4198 = vmatprep.subr.bf16.mxu0 0
        %4199 = vmatpush1.bf16.msra.mxu0 0
        %4200 = vmatprep.subr.bf16.mxu0 0
        %4201 = vmatpush1.bf16.msra.mxu0 0
        %4202 = vmatprep.subr.bf16.mxu0 0
        %4203 = vmatpush1.bf16.msra.mxu0 0
        %4204 = vmatprep.subr.bf16.mxu0 0
        %4205 = vmatpush1.bf16.msra.mxu0 0
        %4206 = vmatprep.subr.bf16.mxu0 0
        %4207 = vmatpush1.bf16.msra.mxu0 0
        %4208 = vmatprep.mubr.bf16.mxu0 0
        %4209 = vmatmul.mubr.bf16.gmra.mrb[0].mxu0 %v4021
        %v4210 = vpop.f32.mrb[0].mxu0
        %v4211 = vadd.f32 0.0, %v4210
        %v4212 = vpop.f32.mrb[0].mxu0
        %v4213 = vadd.f32 0.0, %v4212
        %v4214 = vpop.f32.mrb[0].mxu0
        %v4215 = vadd.f32 0.0, %v4214
        %v4216 = vpop.f32.mrb[0].mxu0
        %v4217 = vadd.f32 0.0, %v4216
        %4218 = vdwg.mxu0
        %v4219 = vadd.f32 %v3947, %v4082
        %v4220 = vadd.f32 %v3948, %v4084
        %v4221 = vadd.f32 %v3949, %v4125
        %v4222 = vadd.f32 %v3950, %v4127
        %v4223 = vadd.f32 %v3951, %v4168
        %v4224 = vadd.f32 %v3952, %v4170
        %v4225 = vadd.f32 %v3953, %v4211
        %v4226 = vadd.f32 %v3954, %v4213
        %v4227 = vadd.f32 %v3955, %v4086
        %v4228 = vadd.f32 %v3956, %v4088
        %v4229 = vadd.f32 %v3957, %v4129
        %v4230 = vadd.f32 %v3958, %v4131
        %v4231 = vadd.f32 %v3959, %v4172
        %v4232 = vadd.f32 %v3960, %v4174
        %v4233 = vadd.f32 %v3961, %v4215
        %v4234 = vadd.f32 %v3962, %v4217
        %vm4235 = vcmp.ne.s32.totalorder %v3598, 30
        %vm4236 = vcmp.ne.s32.totalorder %v3599, 30
        %vm4237 = vcmp.ne.s32.totalorder %v3600, 30
        %vm4238 = vcmp.ne.s32.totalorder %v3601, 30
        %vm4239 = vcmp.ne.s32.totalorder %v3602, 30
        %vm4240 = vcmp.ne.s32.totalorder %v3603, 30
        %vm4241 = vcmp.ne.s32.totalorder %v3604, 30
        %vm4242 = vcmp.ne.s32.totalorder %v3605, 30
        %v4243 = vsel %vm4235, 1, 0
        %v4244 = vsel %vm4236, 1, 0
        %v4245 = vsel %vm4237, 1, 0
        %v4246 = vsel %vm4238, 1, 0
        %v4247 = vsel %vm4239, 1, 0
        %v4248 = vsel %vm4240, 1, 0
        %v4249 = vsel %vm4241, 1, 0
        %v4250 = vsel %vm4242, 1, 0
        %v4251 = vcvt.s32.f32 %v4243
        %v4252 = vcvt.s32.f32 %v4244
        %v4253 = vcvt.s32.f32 %v4245
        %v4254 = vcvt.s32.f32 %v4246
        %v4255 = vcvt.s32.f32 %v4247
        %v4256 = vcvt.s32.f32 %v4248
        %v4257 = vcvt.s32.f32 %v4249
        %v4258 = vcvt.s32.f32 %v4250
        %v4259 = vpack.c.bf16 %v4251, %v4251
        %v4260 = vpack.c.bf16 %v4252, %v4252
        %v4261 = vpack.c.bf16 %v4253, %v4253
        %v4262 = vpack.c.bf16 %v4254, %v4254
        %v4263 = vpack.c.bf16 %v4255, %v4255
        %v4264 = vpack.c.bf16 %v4256, %v4256
        %v4265 = vpack.c.bf16 %v4257, %v4257
        %v4266 = vpack.c.bf16 %v4258, %v4258
        %v4275 = vunpack.c.l.b16 %v4259
        %v4276 = vunpack.c.l.b16 %v4260
        %v4277 = vunpack.c.l.b16 %v4261
        %v4278 = vunpack.c.l.b16 %v4262
        %v4279 = vunpack.c.l.b16 %v4263
        %v4280 = vunpack.c.l.b16 %v4264
        %v4281 = vunpack.c.l.b16 %v4265
        %v4282 = vunpack.c.l.b16 %v4266
        %v4283 = vpack.c.b16 %v4276, %v4275
        %v4284 = vpack.c.b16 %v4278, %v4277
        %v4285 = vpack.c.b16 %v4280, %v4279
        %v4286 = vpack.c.b16 %v4282, %v4281
        %4287 = vrot.lane.b32.xlu0 %v4283, 66
        %v4288 = vpop.permute.xlu0 %4287
        %4289 = vrot.lane.b32.xlu0 %v4284, 66
        %v4290 = vpop.permute.xlu0 %4289
        %4291 = vrot.lane.b32.xlu0 %v4285, 66
        %v4292 = vpop.permute.xlu0 %4291
        %4293 = vrot.lane.b32.xlu0 %v4286, 66
        %v4294 = vpop.permute.xlu0 %4293
        %v4295 = vrot.slane %v4288, 4
        %v4296 = vrot.slane %v4290, 4
        %v4297 = vrot.slane %v4292, 4
        %v4298 = vrot.slane %v4294, 4
        %v4299 = vsel %vm3737, %v4295, %v4288
        %v4300 = vsel %vm3672, %v4295, %v4296
        %v4301 = vsel %vm3737, %v4300, %v4290
        %v4302 = vsel %vm3672, %v4296, %v4297
        %v4303 = vsel %vm3737, %v4302, %v4292
        %v4304 = vsel %vm3672, %v4297, %v4298
        %v4305 = vsel %vm3737, %v4304, %v4294
        %v4311 = vmul.bf16 %v3505, %v4299
        %v4312 = vmul.bf16 %v3506, %v4301
        %v4313 = vmul.bf16 %v3507, %v4303
        %v4314 = vmul.bf16 %v3508, %v4305
        %v4315 = vmul.bf16 %v3509, %v4298
        %s4316 = scalar_lea.vmem %s3, 16
        %v4317 = vld [vmem:[%s4316] sm:$0xf]
        %v4318 = vld [vmem:[%s4316 + $0x4] sm:$0xf]
        %v4321 = vunpack.c.l.b16 %v4317
        %v4322 = vunpack.c.l.b16 %v4318
        %v4323 = vpack.c.b16 %v4322, %v4321
        %v4329 = vunpack.c.l.b16 %v4311
        %v4330 = vunpack.c.h.b16 %v4311
        %v4331 = vunpack.c.l.b16 %v4312
        %v4332 = vunpack.c.h.b16 %v4312
        %v4333 = vunpack.c.l.b16 %v4313
        %v4334 = vunpack.c.h.b16 %v4313
        %v4335 = vunpack.c.l.b16 %v4314
        %v4336 = vunpack.c.h.b16 %v4314
        %v4337 = vunpack.c.l.b16 %v4315
        %v4338 = vpack.c.b16 %v4329, %v4329
        %v4339 = vpack.c.b16 %v4330, %v4330
        %v4340 = vpack.c.b16 %v4331, %v4331
        %v4341 = vpack.c.b16 %v4332, %v4332
        %v4342 = vpack.c.b16 %v4333, %v4333
        %v4343 = vpack.c.b16 %v4334, %v4334
        %v4344 = vpack.c.b16 %v4335, %v4335
        %v4345 = vpack.c.b16 %v4336, %v4336
        %v4346 = vpack.c.b16 %v4337, %v4337
        %4347 = vrot.lane.b32.xlu0 %v4338, 62
        %v4348 = vpop.permute.xlu0 %4347
        %4349 = vrot.lane.b32.xlu0 %v4339, 62
        %v4350 = vpop.permute.xlu0 %4349
        %4351 = vrot.lane.b32.xlu0 %v4340, 62
        %v4352 = vpop.permute.xlu0 %4351
        %4353 = vrot.lane.b32.xlu0 %v4341, 62
        %v4354 = vpop.permute.xlu0 %4353
        %4355 = vrot.lane.b32.xlu0 %v4342, 62
        %v4356 = vpop.permute.xlu0 %4355
        %4357 = vrot.lane.b32.xlu0 %v4343, 62
        %v4358 = vpop.permute.xlu0 %4357
        %4359 = vrot.lane.b32.xlu0 %v4344, 62
        %v4360 = vpop.permute.xlu0 %4359
        %4361 = vrot.lane.b32.xlu0 %v4345, 62
        %v4362 = vpop.permute.xlu0 %4361
        %4363 = vrot.lane.b32.xlu0 %v4346, 62
        %v4364 = vpop.permute.xlu0 %4363
        %v4365 = vsel %vm3670, %v4348, %v4350
        %v4366 = vsel %vm3670, %v4350, %v4352
        %v4367 = vsel %vm3670, %v4352, %v4354
        %v4368 = vsel %vm3670, %v4354, %v4356
        %v4369 = vsel %vm3670, %v4356, %v4358
        %v4370 = vsel %vm3670, %v4358, %v4360
        %v4371 = vsel %vm3670, %v4360, %v4362
        %v4372 = vsel %vm3670, %v4362, %v4364
        %v4374 = vsel %vm3746, %v4323, 0
        %v4377 = vsel %vm3750, %v4365, 0
        %v4380 = vsel %vm3750, %v4366, 0
        %v4383 = vsel %vm3750, %v4367, 0
        %v4386 = vsel %vm3750, %v4368, 0
        %v4389 = vsel %vm3750, %v4369, 0
        %v4392 = vsel %vm3750, %v4370, 0
        %v4395 = vsel %vm3750, %v4371, 0
        %v4398 = vsel %vm3750, %v4372, 0
        %4400 = vmatprep.subr.bf16.mxu0 %v4380
        %4401 = vmatpush1.bf16.msra.mxu0 %v4377
        %4402 = vmatprep.subr.bf16.mxu0 0
        %4403 = vmatpush1.bf16.msra.mxu0 0
        %4404 = vmatprep.subr.bf16.mxu0 0
        %4405 = vmatpush1.bf16.msra.mxu0 0
        %4406 = vmatprep.subr.bf16.mxu0 0
        %4407 = vmatpush1.bf16.msra.mxu0 0
        %4408 = vmatprep.subr.bf16.mxu0 0
        %4409 = vmatpush1.bf16.msra.mxu0 0
        %4410 = vmatprep.subr.bf16.mxu0 0
        %4411 = vmatpush1.bf16.msra.mxu0 0
        %4412 = vmatprep.subr.bf16.mxu0 0
        %4413 = vmatpush1.bf16.msra.mxu0 0
        %4414 = vmatprep.subr.bf16.mxu0 0
        %4415 = vmatpush1.bf16.msra.mxu0 0
        %4416 = vmatprep.subr.bf16.mxu0 0
        %4417 = vmatpush1.bf16.msra.mxu0 0
        %4418 = vmatprep.subr.bf16.mxu0 0
        %4419 = vmatpush1.bf16.msra.mxu0 0
        %4420 = vmatprep.subr.bf16.mxu0 0
        %4421 = vmatpush1.bf16.msra.mxu0 0
        %4422 = vmatprep.subr.bf16.mxu0 0
        %4423 = vmatpush1.bf16.msra.mxu0 0
        %4424 = vmatprep.subr.bf16.mxu0 0
        %4425 = vmatpush1.bf16.msra.mxu0 0
        %4426 = vmatprep.subr.bf16.mxu0 0
        %4427 = vmatpush1.bf16.msra.mxu0 0
        %4428 = vmatprep.subr.bf16.mxu0 0
        %4429 = vmatpush1.bf16.msra.mxu0 0
        %4430 = vmatprep.subr.bf16.mxu0 0
        %4431 = vmatpush1.bf16.msra.mxu0 0
        %4432 = vmatprep.mubr.bf16.mxu0 0
        %4433 = vmatmul.mubr.bf16.gmra.mrb[0].mxu0 %v4374
        %v4434 = vpop.f32.mrb[0].mxu0
        %v4435 = vadd.f32 0.0, %v4434
        %v4436 = vpop.f32.mrb[0].mxu0
        %v4437 = vadd.f32 0.0, %v4436
        %v4438 = vpop.f32.mrb[0].mxu0
        %v4439 = vadd.f32 0.0, %v4438
        %v4440 = vpop.f32.mrb[0].mxu0
        %v4441 = vadd.f32 0.0, %v4440
        %4442 = vdwg.mxu0
        %4443 = vmatprep.subr.bf16.mxu0 %v4386
        %4444 = vmatpush1.bf16.msra.mxu0 %v4383
        %4445 = vmatprep.subr.bf16.mxu0 0
        %4446 = vmatpush1.bf16.msra.mxu0 0
        %4447 = vmatprep.subr.bf16.mxu0 0
        %4448 = vmatpush1.bf16.msra.mxu0 0
        %4449 = vmatprep.subr.bf16.mxu0 0
        %4450 = vmatpush1.bf16.msra.mxu0 0
        %4451 = vmatprep.subr.bf16.mxu0 0
        %4452 = vmatpush1.bf16.msra.mxu0 0
        %4453 = vmatprep.subr.bf16.mxu0 0
        %4454 = vmatpush1.bf16.msra.mxu0 0
        %4455 = vmatprep.subr.bf16.mxu0 0
        %4456 = vmatpush1.bf16.msra.mxu0 0
        %4457 = vmatprep.subr.bf16.mxu0 0
        %4458 = vmatpush1.bf16.msra.mxu0 0
        %4459 = vmatprep.subr.bf16.mxu0 0
        %4460 = vmatpush1.bf16.msra.mxu0 0
        %4461 = vmatprep.subr.bf16.mxu0 0
        %4462 = vmatpush1.bf16.msra.mxu0 0
        %4463 = vmatprep.subr.bf16.mxu0 0
        %4464 = vmatpush1.bf16.msra.mxu0 0
        %4465 = vmatprep.subr.bf16.mxu0 0
        %4466 = vmatpush1.bf16.msra.mxu0 0
        %4467 = vmatprep.subr.bf16.mxu0 0
        %4468 = vmatpush1.bf16.msra.mxu0 0
        %4469 = vmatprep.subr.bf16.mxu0 0
        %4470 = vmatpush1.bf16.msra.mxu0 0
        %4471 = vmatprep.subr.bf16.mxu0 0
        %4472 = vmatpush1.bf16.msra.mxu0 0
        %4473 = vmatprep.subr.bf16.mxu0 0
        %4474 = vmatpush1.bf16.msra.mxu0 0
        %4475 = vmatprep.mubr.bf16.mxu0 0
        %4476 = vmatmul.mubr.bf16.gmra.mrb[0].mxu0 %v4374
        %v4477 = vpop.f32.mrb[0].mxu0
        %v4478 = vadd.f32 0.0, %v4477
        %v4479 = vpop.f32.mrb[0].mxu0
        %v4480 = vadd.f32 0.0, %v4479
        %v4481 = vpop.f32.mrb[0].mxu0
        %v4482 = vadd.f32 0.0, %v4481
        %v4483 = vpop.f32.mrb[0].mxu0
        %v4484 = vadd.f32 0.0, %v4483
        %4485 = vdwg.mxu0
        %4486 = vmatprep.subr.bf16.mxu0 %v4392
        %4487 = vmatpush1.bf16.msra.mxu0 %v4389
        %4488 = vmatprep.subr.bf16.mxu0 0
        %4489 = vmatpush1.bf16.msra.mxu0 0
        %4490 = vmatprep.subr.bf16.mxu0 0
        %4491 = vmatpush1.bf16.msra.mxu0 0
        %4492 = vmatprep.subr.bf16.mxu0 0
        %4493 = vmatpush1.bf16.msra.mxu0 0
        %4494 = vmatprep.subr.bf16.mxu0 0
        %4495 = vmatpush1.bf16.msra.mxu0 0
        %4496 = vmatprep.subr.bf16.mxu0 0
        %4497 = vmatpush1.bf16.msra.mxu0 0
        %4498 = vmatprep.subr.bf16.mxu0 0
        %4499 = vmatpush1.bf16.msra.mxu0 0
        %4500 = vmatprep.subr.bf16.mxu0 0
        %4501 = vmatpush1.bf16.msra.mxu0 0
        %4502 = vmatprep.subr.bf16.mxu0 0
        %4503 = vmatpush1.bf16.msra.mxu0 0
        %4504 = vmatprep.subr.bf16.mxu0 0
        %4505 = vmatpush1.bf16.msra.mxu0 0
        %4506 = vmatprep.subr.bf16.mxu0 0
        %4507 = vmatpush1.bf16.msra.mxu0 0
        %4508 = vmatprep.subr.bf16.mxu0 0
        %4509 = vmatpush1.bf16.msra.mxu0 0
        %4510 = vmatprep.subr.bf16.mxu0 0
        %4511 = vmatpush1.bf16.msra.mxu0 0
        %4512 = vmatprep.subr.bf16.mxu0 0
        %4513 = vmatpush1.bf16.msra.mxu0 0
        %4514 = vmatprep.subr.bf16.mxu0 0
        %4515 = vmatpush1.bf16.msra.mxu0 0
        %4516 = vmatprep.subr.bf16.mxu0 0
        %4517 = vmatpush1.bf16.msra.mxu0 0
        %4518 = vmatprep.mubr.bf16.mxu0 0
        %4519 = vmatmul.mubr.bf16.gmra.mrb[0].mxu0 %v4374
        %v4520 = vpop.f32.mrb[0].mxu0
        %v4521 = vadd.f32 0.0, %v4520
        %v4522 = vpop.f32.mrb[0].mxu0
        %v4523 = vadd.f32 0.0, %v4522
        %v4524 = vpop.f32.mrb[0].mxu0
        %v4525 = vadd.f32 0.0, %v4524
        %v4526 = vpop.f32.mrb[0].mxu0
        %v4527 = vadd.f32 0.0, %v4526
        %4528 = vdwg.mxu0
        %4529 = vmatprep.subr.bf16.mxu0 %v4398
        %4530 = vmatpush1.bf16.msra.mxu0 %v4395
        %4531 = vmatprep.subr.bf16.mxu0 0
        %4532 = vmatpush1.bf16.msra.mxu0 0
        %4533 = vmatprep.subr.bf16.mxu0 0
        %4534 = vmatpush1.bf16.msra.mxu0 0
        %4535 = vmatprep.subr.bf16.mxu0 0
        %4536 = vmatpush1.bf16.msra.mxu0 0
        %4537 = vmatprep.subr.bf16.mxu0 0
        %4538 = vmatpush1.bf16.msra.mxu0 0
        %4539 = vmatprep.subr.bf16.mxu0 0
        %4540 = vmatpush1.bf16.msra.mxu0 0
        %4541 = vmatprep.subr.bf16.mxu0 0
        %4542 = vmatpush1.bf16.msra.mxu0 0
        %4543 = vmatprep.subr.bf16.mxu0 0
        %4544 = vmatpush1.bf16.msra.mxu0 0
        %4545 = vmatprep.subr.bf16.mxu0 0
        %4546 = vmatpush1.bf16.msra.mxu0 0
        %4547 = vmatprep.subr.bf16.mxu0 0
        %4548 = vmatpush1.bf16.msra.mxu0 0
        %4549 = vmatprep.subr.bf16.mxu0 0
        %4550 = vmatpush1.bf16.msra.mxu0 0
        %4551 = vmatprep.subr.bf16.mxu0 0
        %4552 = vmatpush1.bf16.msra.mxu0 0
        %4553 = vmatprep.subr.bf16.mxu0 0
        %4554 = vmatpush1.bf16.msra.mxu0 0
        %4555 = vmatprep.subr.bf16.mxu0 0
        %4556 = vmatpush1.bf16.msra.mxu0 0
        %4557 = vmatprep.subr.bf16.mxu0 0
        %4558 = vmatpush1.bf16.msra.mxu0 0
        %4559 = vmatprep.subr.bf16.mxu0 0
        %4560 = vmatpush1.bf16.msra.mxu0 0
        %4561 = vmatprep.mubr.bf16.mxu0 0
        %4562 = vmatmul.mubr.bf16.gmra.mrb[0].mxu0 %v4374
        %v4563 = vpop.f32.mrb[0].mxu0
        %v4564 = vadd.f32 0.0, %v4563
        %v4565 = vpop.f32.mrb[0].mxu0
        %v4566 = vadd.f32 0.0, %v4565
        %v4567 = vpop.f32.mrb[0].mxu0
        %v4568 = vadd.f32 0.0, %v4567
        %v4569 = vpop.f32.mrb[0].mxu0
        %v4570 = vadd.f32 0.0, %v4569
        %4571 = vdwg.mxu0
        %v4572 = vadd.f32 %v4219, %v4435
        %v4573 = vadd.f32 %v4220, %v4437
        %v4574 = vadd.f32 %v4221, %v4478
        %v4575 = vadd.f32 %v4222, %v4480
        %v4576 = vadd.f32 %v4223, %v4521
        %v4577 = vadd.f32 %v4224, %v4523
        %v4578 = vadd.f32 %v4225, %v4564
        %v4579 = vadd.f32 %v4226, %v4566
        %v4580 = vadd.f32 %v4227, %v4439
        %v4581 = vadd.f32 %v4228, %v4441
        %v4582 = vadd.f32 %v4229, %v4482
        %v4583 = vadd.f32 %v4230, %v4484
        %v4584 = vadd.f32 %v4231, %v4525
        %v4585 = vadd.f32 %v4232, %v4527
        %v4586 = vadd.f32 %v4233, %v4568
        %v4587 = vadd.f32 %v4234, %v4570
        %4588 = vrot.lane.b32.xlu0 %v3654, 126
        %v4589 = vpop.permute.xlu0 %4588
        %4590 = vrot.lane.b32.xlu0 %v3655, 126
        %v4591 = vpop.permute.xlu0 %4590
        %4592 = vrot.lane.b32.xlu0 %v3656, 126
        %v4593 = vpop.permute.xlu0 %4592
        %4594 = vrot.lane.b32.xlu0 %v3657, 126
        %v4595 = vpop.permute.xlu0 %4594
        %v4596 = vrot.slane %v4589, 4
        %v4597 = vrot.slane %v4591, 4
        %v4598 = vrot.slane %v4593, 4
        %v4599 = vrot.slane %v4595, 4
        %vm4600 = vcmask 1031168
        %v4601 = vsel %vm4600, %v4596, %v4589
        %v4602 = vsel %vm3672, %v4596, %v4597
        %v4603 = vsel %vm4600, %v4602, %v4591
        %v4604 = vsel %vm3672, %v4597, %v4598
        %v4605 = vsel %vm4600, %v4604, %v4593
        %v4606 = vsel %vm3672, %v4598, %v4599
        %v4607 = vsel %vm4600, %v4606, %v4595
        %v4613 = vmul.bf16 %v3505, %v4601
        %v4614 = vmul.bf16 %v3506, %v4603
        %v4615 = vmul.bf16 %v3507, %v4605
        %v4616 = vmul.bf16 %v3508, %v4607
        %v4617 = vmul.bf16 %v3509, %v4599
        %s4618 = scalar_lea.vmem %s3, 24
        %v4619 = vld [vmem:[%s4618] sm:$0xf]
        %v4620 = vld [vmem:[%s4618 + $0x4] sm:$0xf]
        %v4623 = vunpack.c.l.b16 %v4619
        %v4624 = vunpack.c.l.b16 %v4620
        %v4625 = vpack.c.b16 %v4624, %v4623
        %v4631 = vunpack.c.l.b16 %v4613
        %v4632 = vunpack.c.h.b16 %v4613
        %v4633 = vunpack.c.l.b16 %v4614
        %v4634 = vunpack.c.h.b16 %v4614
        %v4635 = vunpack.c.l.b16 %v4615
        %v4636 = vunpack.c.h.b16 %v4615
        %v4637 = vunpack.c.l.b16 %v4616
        %v4638 = vunpack.c.h.b16 %v4616
        %v4639 = vunpack.c.l.b16 %v4617
        %v4640 = vpack.c.b16 %v4631, %v4631
        %v4641 = vpack.c.b16 %v4632, %v4632
        %v4642 = vpack.c.b16 %v4633, %v4633
        %v4643 = vpack.c.b16 %v4634, %v4634
        %v4644 = vpack.c.b16 %v4635, %v4635
        %v4645 = vpack.c.b16 %v4636, %v4636
        %v4646 = vpack.c.b16 %v4637, %v4637
        %v4647 = vpack.c.b16 %v4638, %v4638
        %v4648 = vpack.c.b16 %v4639, %v4639
        %4649 = vrot.lane.b32.xlu0 %v4640, 2
        %v4650 = vpop.permute.xlu0 %4649
        %4651 = vrot.lane.b32.xlu0 %v4641, 2
        %v4652 = vpop.permute.xlu0 %4651
        %4653 = vrot.lane.b32.xlu0 %v4642, 2
        %v4654 = vpop.permute.xlu0 %4653
        %4655 = vrot.lane.b32.xlu0 %v4643, 2
        %v4656 = vpop.permute.xlu0 %4655
        %4657 = vrot.lane.b32.xlu0 %v4644, 2
        %v4658 = vpop.permute.xlu0 %4657
        %4659 = vrot.lane.b32.xlu0 %v4645, 2
        %v4660 = vpop.permute.xlu0 %4659
        %4661 = vrot.lane.b32.xlu0 %v4646, 2
        %v4662 = vpop.permute.xlu0 %4661
        %4663 = vrot.lane.b32.xlu0 %v4647, 2
        %v4664 = vpop.permute.xlu0 %4663
        %4665 = vrot.lane.b32.xlu0 %v4648, 2
        %v4666 = vpop.permute.xlu0 %4665
        %vm4667 = vcmask 15360
        %v4668 = vsel %vm4667, %v4650, %v4652
        %v4669 = vsel %vm4667, %v4652, %v4654
        %v4670 = vsel %vm4667, %v4654, %v4656
        %v4671 = vsel %vm4667, %v4656, %v4658
        %v4672 = vsel %vm4667, %v4658, %v4660
        %v4673 = vsel %vm4667, %v4660, %v4662
        %v4674 = vsel %vm4667, %v4662, %v4664
        %v4675 = vsel %vm4667, %v4664, %v4666
        %v4677 = vsel %vm3746, %v4625, 0
        %v4680 = vsel %vm3750, %v4668, 0
        %v4683 = vsel %vm3750, %v4669, 0
        %v4686 = vsel %vm3750, %v4670, 0
        %v4689 = vsel %vm3750, %v4671, 0
        %v4692 = vsel %vm3750, %v4672, 0
        %v4695 = vsel %vm3750, %v4673, 0
        %v4698 = vsel %vm3750, %v4674, 0
        %v4701 = vsel %vm3750, %v4675, 0
        %4703 = vmatprep.subr.bf16.mxu0 %v4683
        %4704 = vmatpush1.bf16.msra.mxu0 %v4680
        %4705 = vmatprep.subr.bf16.mxu0 0
        %4706 = vmatpush1.bf16.msra.mxu0 0
        %4707 = vmatprep.subr.bf16.mxu0 0
        %4708 = vmatpush1.bf16.msra.mxu0 0
        %4709 = vmatprep.subr.bf16.mxu0 0
        %4710 = vmatpush1.bf16.msra.mxu0 0
        %4711 = vmatprep.subr.bf16.mxu0 0
        %4712 = vmatpush1.bf16.msra.mxu0 0
        %4713 = vmatprep.subr.bf16.mxu0 0
        %4714 = vmatpush1.bf16.msra.mxu0 0
        %4715 = vmatprep.subr.bf16.mxu0 0
        %4716 = vmatpush1.bf16.msra.mxu0 0
        %4717 = vmatprep.subr.bf16.mxu0 0
        %4718 = vmatpush1.bf16.msra.mxu0 0
        %4719 = vmatprep.subr.bf16.mxu0 0
        %4720 = vmatpush1.bf16.msra.mxu0 0
        %4721 = vmatprep.subr.bf16.mxu0 0
        %4722 = vmatpush1.bf16.msra.mxu0 0
        %4723 = vmatprep.subr.bf16.mxu0 0
        %4724 = vmatpush1.bf16.msra.mxu0 0
        %4725 = vmatprep.subr.bf16.mxu0 0
        %4726 = vmatpush1.bf16.msra.mxu0 0
        %4727 = vmatprep.subr.bf16.mxu0 0
        %4728 = vmatpush1.bf16.msra.mxu0 0
        %4729 = vmatprep.subr.bf16.mxu0 0
        %4730 = vmatpush1.bf16.msra.mxu0 0
        %4731 = vmatprep.subr.bf16.mxu0 0
        %4732 = vmatpush1.bf16.msra.mxu0 0
        %4733 = vmatprep.subr.bf16.mxu0 0
        %4734 = vmatpush1.bf16.msra.mxu0 0
        %4735 = vmatprep.mubr.bf16.mxu0 0
        %4736 = vmatmul.mubr.bf16.gmra.mrb[0].mxu0 %v4677
        %v4737 = vpop.f32.mrb[0].mxu0
        %v4738 = vadd.f32 0.0, %v4737
        %v4739 = vpop.f32.mrb[0].mxu0
        %v4740 = vadd.f32 0.0, %v4739
        %v4741 = vpop.f32.mrb[0].mxu0
        %v4742 = vadd.f32 0.0, %v4741
        %v4743 = vpop.f32.mrb[0].mxu0
        %v4744 = vadd.f32 0.0, %v4743
        %4745 = vdwg.mxu0
        %4746 = vmatprep.subr.bf16.mxu0 %v4689
        %4747 = vmatpush1.bf16.msra.mxu0 %v4686
        %4748 = vmatprep.subr.bf16.mxu0 0
        %4749 = vmatpush1.bf16.msra.mxu0 0
        %4750 = vmatprep.subr.bf16.mxu0 0
        %4751 = vmatpush1.bf16.msra.mxu0 0
        %4752 = vmatprep.subr.bf16.mxu0 0
        %4753 = vmatpush1.bf16.msra.mxu0 0
        %4754 = vmatprep.subr.bf16.mxu0 0
        %4755 = vmatpush1.bf16.msra.mxu0 0
        %4756 = vmatprep.subr.bf16.mxu0 0
        %4757 = vmatpush1.bf16.msra.mxu0 0
        %4758 = vmatprep.subr.bf16.mxu0 0
        %4759 = vmatpush1.bf16.msra.mxu0 0
        %4760 = vmatprep.subr.bf16.mxu0 0
        %4761 = vmatpush1.bf16.msra.mxu0 0
        %4762 = vmatprep.subr.bf16.mxu0 0
        %4763 = vmatpush1.bf16.msra.mxu0 0
        %4764 = vmatprep.subr.bf16.mxu0 0
        %4765 = vmatpush1.bf16.msra.mxu0 0
        %4766 = vmatprep.subr.bf16.mxu0 0
        %4767 = vmatpush1.bf16.msra.mxu0 0
        %4768 = vmatprep.subr.bf16.mxu0 0
        %4769 = vmatpush1.bf16.msra.mxu0 0
        %4770 = vmatprep.subr.bf16.mxu0 0
        %4771 = vmatpush1.bf16.msra.mxu0 0
        %4772 = vmatprep.subr.bf16.mxu0 0
        %4773 = vmatpush1.bf16.msra.mxu0 0
        %4774 = vmatprep.subr.bf16.mxu0 0
        %4775 = vmatpush1.bf16.msra.mxu0 0
        %4776 = vmatprep.subr.bf16.mxu0 0
        %4777 = vmatpush1.bf16.msra.mxu0 0
        %4778 = vmatprep.mubr.bf16.mxu0 0
        %4779 = vmatmul.mubr.bf16.gmra.mrb[0].mxu0 %v4677
        %v4780 = vpop.f32.mrb[0].mxu0
        %v4781 = vadd.f32 0.0, %v4780
        %v4782 = vpop.f32.mrb[0].mxu0
        %v4783 = vadd.f32 0.0, %v4782
        %v4784 = vpop.f32.mrb[0].mxu0
        %v4785 = vadd.f32 0.0, %v4784
        %v4786 = vpop.f32.mrb[0].mxu0
        %v4787 = vadd.f32 0.0, %v4786
        %4788 = vdwg.mxu0
        %4789 = vmatprep.subr.bf16.mxu0 %v4695
        %4790 = vmatpush1.bf16.msra.mxu0 %v4692
        %4791 = vmatprep.subr.bf16.mxu0 0
        %4792 = vmatpush1.bf16.msra.mxu0 0
        %4793 = vmatprep.subr.bf16.mxu0 0
        %4794 = vmatpush1.bf16.msra.mxu0 0
        %4795 = vmatprep.subr.bf16.mxu0 0
        %4796 = vmatpush1.bf16.msra.mxu0 0
        %4797 = vmatprep.subr.bf16.mxu0 0
        %4798 = vmatpush1.bf16.msra.mxu0 0
        %4799 = vmatprep.subr.bf16.mxu0 0
        %4800 = vmatpush1.bf16.msra.mxu0 0
        %4801 = vmatprep.subr.bf16.mxu0 0
        %4802 = vmatpush1.bf16.msra.mxu0 0
        %4803 = vmatprep.subr.bf16.mxu0 0
        %4804 = vmatpush1.bf16.msra.mxu0 0
        %4805 = vmatprep.subr.bf16.mxu0 0
        %4806 = vmatpush1.bf16.msra.mxu0 0
        %4807 = vmatprep.subr.bf16.mxu0 0
        %4808 = vmatpush1.bf16.msra.mxu0 0
        %4809 = vmatprep.subr.bf16.mxu0 0
        %4810 = vmatpush1.bf16.msra.mxu0 0
        %4811 = vmatprep.subr.bf16.mxu0 0
        %4812 = vmatpush1.bf16.msra.mxu0 0
        %4813 = vmatprep.subr.bf16.mxu0 0
        %4814 = vmatpush1.bf16.msra.mxu0 0
        %4815 = vmatprep.subr.bf16.mxu0 0
        %4816 = vmatpush1.bf16.msra.mxu0 0
        %4817 = vmatprep.subr.bf16.mxu0 0
        %4818 = vmatpush1.bf16.msra.mxu0 0
        %4819 = vmatprep.subr.bf16.mxu0 0
        %4820 = vmatpush1.bf16.msra.mxu0 0
        %4821 = vmatprep.mubr.bf16.mxu0 0
        %4822 = vmatmul.mubr.bf16.gmra.mrb[0].mxu0 %v4677
        %v4823 = vpop.f32.mrb[0].mxu0
        %v4824 = vadd.f32 0.0, %v4823
        %v4825 = vpop.f32.mrb[0].mxu0
        %v4826 = vadd.f32 0.0, %v4825
        %v4827 = vpop.f32.mrb[0].mxu0
        %v4828 = vadd.f32 0.0, %v4827
        %v4829 = vpop.f32.mrb[0].mxu0
        %v4830 = vadd.f32 0.0, %v4829
        %4831 = vdwg.mxu0
        %4832 = vmatprep.subr.bf16.mxu0 %v4701
        %4833 = vmatpush1.bf16.msra.mxu0 %v4698
        %4834 = vmatprep.subr.bf16.mxu0 0
        %4835 = vmatpush1.bf16.msra.mxu0 0
        %4836 = vmatprep.subr.bf16.mxu0 0
        %4837 = vmatpush1.bf16.msra.mxu0 0
        %4838 = vmatprep.subr.bf16.mxu0 0
        %4839 = vmatpush1.bf16.msra.mxu0 0
        %4840 = vmatprep.subr.bf16.mxu0 0
        %4841 = vmatpush1.bf16.msra.mxu0 0
        %4842 = vmatprep.subr.bf16.mxu0 0
        %4843 = vmatpush1.bf16.msra.mxu0 0
        %4844 = vmatprep.subr.bf16.mxu0 0
        %4845 = vmatpush1.bf16.msra.mxu0 0
        %4846 = vmatprep.subr.bf16.mxu0 0
        %4847 = vmatpush1.bf16.msra.mxu0 0
        %4848 = vmatprep.subr.bf16.mxu0 0
        %4849 = vmatpush1.bf16.msra.mxu0 0
        %4850 = vmatprep.subr.bf16.mxu0 0
        %4851 = vmatpush1.bf16.msra.mxu0 0
        %4852 = vmatprep.subr.bf16.mxu0 0
        %4853 = vmatpush1.bf16.msra.mxu0 0
        %4854 = vmatprep.subr.bf16.mxu0 0
        %4855 = vmatpush1.bf16.msra.mxu0 0
        %4856 = vmatprep.subr.bf16.mxu0 0
        %4857 = vmatpush1.bf16.msra.mxu0 0
        %4858 = vmatprep.subr.bf16.mxu0 0
        %4859 = vmatpush1.bf16.msra.mxu0 0
        %4860 = vmatprep.subr.bf16.mxu0 0
        %4861 = vmatpush1.bf16.msra.mxu0 0
        %4862 = vmatprep.subr.bf16.mxu0 0
        %4863 = vmatpush1.bf16.msra.mxu0 0
        %4864 = vmatprep.mubr.bf16.mxu0 0
        %4865 = vmatmul.mubr.bf16.gmra.mrb[0].mxu0 %v4677
        %v4866 = vpop.f32.mrb[0].mxu0
        %v4867 = vadd.f32 0.0, %v4866
        %v4868 = vpop.f32.mrb[0].mxu0
        %v4869 = vadd.f32 0.0, %v4868
        %v4870 = vpop.f32.mrb[0].mxu0
        %v4871 = vadd.f32 0.0, %v4870
        %v4872 = vpop.f32.mrb[0].mxu0
        %v4873 = vadd.f32 0.0, %v4872
        %4874 = vdwg.mxu0
        %v4875 = vadd.f32 %v4572, %v4738
        %v4876 = vadd.f32 %v4573, %v4740
        %v4877 = vadd.f32 %v4574, %v4781
        %v4878 = vadd.f32 %v4575, %v4783
        %v4879 = vadd.f32 %v4576, %v4824
        %v4880 = vadd.f32 %v4577, %v4826
        %v4881 = vadd.f32 %v4578, %v4867
        %v4882 = vadd.f32 %v4579, %v4869
        %v4883 = vadd.f32 %v4580, %v4742
        %v4884 = vadd.f32 %v4581, %v4744
        %v4885 = vadd.f32 %v4582, %v4785
        %v4886 = vadd.f32 %v4583, %v4787
        %v4887 = vadd.f32 %v4584, %v4828
        %v4888 = vadd.f32 %v4585, %v4830
        %v4889 = vadd.f32 %v4586, %v4871
        %v4890 = vadd.f32 %v4587, %v4873
        %v4891 = vld [vmem:[#allocation4 + $0x4] sm:$0xff]
        %v4892 = vld [vmem:[#allocation4 + $0xc] sm:$0xff]
        %v4893 = vld [vmem:[#allocation4 + $0x14] sm:$0xff]
        %v4894 = vld [vmem:[#allocation4 + $0x1c] sm:$0xff]
        %s4895 = scalar_lea.vmem %s3, 32
        %v4896 = vld [vmem:[%s4895] sm:$0xf]
        %v4897 = vld [vmem:[%s4895 + $0x4] sm:$0xf]
        %v4900 = vunpack.c.l.b16 %v4896
        %v4901 = vunpack.c.l.b16 %v4897
        %v4902 = vpack.c.b16 %v4901, %v4900
        %v4907 = vunpack.c.l.b16 %v4891
        %v4908 = vunpack.c.h.b16 %v4891
        %v4909 = vunpack.c.l.b16 %v4892
        %v4910 = vunpack.c.h.b16 %v4892
        %v4911 = vunpack.c.l.b16 %v4893
        %v4912 = vunpack.c.h.b16 %v4893
        %v4913 = vunpack.c.l.b16 %v4894
        %v4914 = vunpack.c.h.b16 %v4894
        %v4915 = vpack.c.b16 %v4907, %v4907
        %v4916 = vpack.c.b16 %v4908, %v4908
        %v4917 = vpack.c.b16 %v4909, %v4909
        %v4918 = vpack.c.b16 %v4910, %v4910
        %v4919 = vpack.c.b16 %v4911, %v4911
        %v4920 = vpack.c.b16 %v4912, %v4912
        %v4921 = vpack.c.b16 %v4913, %v4913
        %v4922 = vpack.c.b16 %v4914, %v4914
        %v4924 = vsel %vm3746, %v4902, 0
        %v4927 = vsel %vm3750, %v4915, 0
        %v4930 = vsel %vm3750, %v4916, 0
        %v4933 = vsel %vm3750, %v4917, 0
        %v4936 = vsel %vm3750, %v4918, 0
        %v4939 = vsel %vm3750, %v4919, 0
        %v4942 = vsel %vm3750, %v4920, 0
        %v4945 = vsel %vm3750, %v4921, 0
        %v4948 = vsel %vm3750, %v4922, 0
        %4950 = vmatprep.subr.bf16.mxu0 %v4930
        %4951 = vmatpush1.bf16.msra.mxu0 %v4927
        %4952 = vmatprep.subr.bf16.mxu0 0
        %4953 = vmatpush1.bf16.msra.mxu0 0
        %4954 = vmatprep.subr.bf16.mxu0 0
        %4955 = vmatpush1.bf16.msra.mxu0 0
        %4956 = vmatprep.subr.bf16.mxu0 0
        %4957 = vmatpush1.bf16.msra.mxu0 0
        %4958 = vmatprep.subr.bf16.mxu0 0
        %4959 = vmatpush1.bf16.msra.mxu0 0
        %4960 = vmatprep.subr.bf16.mxu0 0
        %4961 = vmatpush1.bf16.msra.mxu0 0
        %4962 = vmatprep.subr.bf16.mxu0 0
        %4963 = vmatpush1.bf16.msra.mxu0 0
        %4964 = vmatprep.subr.bf16.mxu0 0
        %4965 = vmatpush1.bf16.msra.mxu0 0
        %4966 = vmatprep.subr.bf16.mxu0 0
        %4967 = vmatpush1.bf16.msra.mxu0 0
        %4968 = vmatprep.subr.bf16.mxu0 0
        %4969 = vmatpush1.bf16.msra.mxu0 0
        %4970 = vmatprep.subr.bf16.mxu0 0
        %4971 = vmatpush1.bf16.msra.mxu0 0
        %4972 = vmatprep.subr.bf16.mxu0 0
        %4973 = vmatpush1.bf16.msra.mxu0 0
        %4974 = vmatprep.subr.bf16.mxu0 0
        %4975 = vmatpush1.bf16.msra.mxu0 0
        %4976 = vmatprep.subr.bf16.mxu0 0
        %4977 = vmatpush1.bf16.msra.mxu0 0
        %4978 = vmatprep.subr.bf16.mxu0 0
        %4979 = vmatpush1.bf16.msra.mxu0 0
        %4980 = vmatprep.subr.bf16.mxu0 0
        %4981 = vmatpush1.bf16.msra.mxu0 0
        %4982 = vmatprep.mubr.bf16.mxu0 0
        %4983 = vmatmul.mubr.bf16.gmra.mrb[0].mxu0 %v4924
        %v4984 = vpop.f32.mrb[0].mxu0
        %v4985 = vadd.f32 0.0, %v4984
        %v4986 = vpop.f32.mrb[0].mxu0
        %v4987 = vadd.f32 0.0, %v4986
        %v4988 = vpop.f32.mrb[0].mxu0
        %v4989 = vadd.f32 0.0, %v4988
        %v4990 = vpop.f32.mrb[0].mxu0
        %v4991 = vadd.f32 0.0, %v4990
        %4992 = vdwg.mxu0
        %4993 = vmatprep.subr.bf16.mxu0 %v4936
        %4994 = vmatpush1.bf16.msra.mxu0 %v4933
        %4995 = vmatprep.subr.bf16.mxu0 0
        %4996 = vmatpush1.bf16.msra.mxu0 0
        %4997 = vmatprep.subr.bf16.mxu0 0
        %4998 = vmatpush1.bf16.msra.mxu0 0
        %4999 = vmatprep.subr.bf16.mxu0 0
        %5000 = vmatpush1.bf16.msra.mxu0 0
        %5001 = vmatprep.subr.bf16.mxu0 0
        %5002 = vmatpush1.bf16.msra.mxu0 0
        %5003 = vmatprep.subr.bf16.mxu0 0
        %5004 = vmatpush1.bf16.msra.mxu0 0
        %5005 = vmatprep.subr.bf16.mxu0 0
        %5006 = vmatpush1.bf16.msra.mxu0 0
        %5007 = vmatprep.subr.bf16.mxu0 0
        %5008 = vmatpush1.bf16.msra.mxu0 0
        %5009 = vmatprep.subr.bf16.mxu0 0
        %5010 = vmatpush1.bf16.msra.mxu0 0
        %5011 = vmatprep.subr.bf16.mxu0 0
        %5012 = vmatpush1.bf16.msra.mxu0 0
        %5013 = vmatprep.subr.bf16.mxu0 0
        %5014 = vmatpush1.bf16.msra.mxu0 0
        %5015 = vmatprep.subr.bf16.mxu0 0
        %5016 = vmatpush1.bf16.msra.mxu0 0
        %5017 = vmatprep.subr.bf16.mxu0 0
        %5018 = vmatpush1.bf16.msra.mxu0 0
        %5019 = vmatprep.subr.bf16.mxu0 0
        %5020 = vmatpush1.bf16.msra.mxu0 0
        %5021 = vmatprep.subr.bf16.mxu0 0
        %5022 = vmatpush1.bf16.msra.mxu0 0
        %5023 = vmatprep.subr.bf16.mxu0 0
        %5024 = vmatpush1.bf16.msra.mxu0 0
        %5025 = vmatprep.mubr.bf16.mxu0 0
        %5026 = vmatmul.mubr.bf16.gmra.mrb[0].mxu0 %v4924
        %v5027 = vpop.f32.mrb[0].mxu0
        %v5028 = vadd.f32 0.0, %v5027
        %v5029 = vpop.f32.mrb[0].mxu0
        %v5030 = vadd.f32 0.0, %v5029
        %v5031 = vpop.f32.mrb[0].mxu0
        %v5032 = vadd.f32 0.0, %v5031
        %v5033 = vpop.f32.mrb[0].mxu0
        %v5034 = vadd.f32 0.0, %v5033
        %5035 = vdwg.mxu0
        %5036 = vmatprep.subr.bf16.mxu0 %v4942
        %5037 = vmatpush1.bf16.msra.mxu0 %v4939
        %5038 = vmatprep.subr.bf16.mxu0 0
        %5039 = vmatpush1.bf16.msra.mxu0 0
        %5040 = vmatprep.subr.bf16.mxu0 0
        %5041 = vmatpush1.bf16.msra.mxu0 0
        %5042 = vmatprep.subr.bf16.mxu0 0
        %5043 = vmatpush1.bf16.msra.mxu0 0
        %5044 = vmatprep.subr.bf16.mxu0 0
        %5045 = vmatpush1.bf16.msra.mxu0 0
        %5046 = vmatprep.subr.bf16.mxu0 0
        %5047 = vmatpush1.bf16.msra.mxu0 0
        %5048 = vmatprep.subr.bf16.mxu0 0
        %5049 = vmatpush1.bf16.msra.mxu0 0
        %5050 = vmatprep.subr.bf16.mxu0 0
        %5051 = vmatpush1.bf16.msra.mxu0 0
        %5052 = vmatprep.subr.bf16.mxu0 0
        %5053 = vmatpush1.bf16.msra.mxu0 0
        %5054 = vmatprep.subr.bf16.mxu0 0
        %5055 = vmatpush1.bf16.msra.mxu0 0
        %5056 = vmatprep.subr.bf16.mxu0 0
        %5057 = vmatpush1.bf16.msra.mxu0 0
        %5058 = vmatprep.subr.bf16.mxu0 0
        %5059 = vmatpush1.bf16.msra.mxu0 0
        %5060 = vmatprep.subr.bf16.mxu0 0
        %5061 = vmatpush1.bf16.msra.mxu0 0
        %5062 = vmatprep.subr.bf16.mxu0 0
        %5063 = vmatpush1.bf16.msra.mxu0 0
        %5064 = vmatprep.subr.bf16.mxu0 0
        %5065 = vmatpush1.bf16.msra.mxu0 0
        %5066 = vmatprep.subr.bf16.mxu0 0
        %5067 = vmatpush1.bf16.msra.mxu0 0
        %5068 = vmatprep.mubr.bf16.mxu0 0
        %5069 = vmatmul.mubr.bf16.gmra.mrb[0].mxu0 %v4924
        %v5070 = vpop.f32.mrb[0].mxu0
        %v5071 = vadd.f32 0.0, %v5070
        %v5072 = vpop.f32.mrb[0].mxu0
        %v5073 = vadd.f32 0.0, %v5072
        %v5074 = vpop.f32.mrb[0].mxu0
        %v5075 = vadd.f32 0.0, %v5074
        %v5076 = vpop.f32.mrb[0].mxu0
        %v5077 = vadd.f32 0.0, %v5076
        %5078 = vdwg.mxu0
        %5079 = vmatprep.subr.bf16.mxu0 %v4948
        %5080 = vmatpush1.bf16.msra.mxu0 %v4945
        %5081 = vmatprep.subr.bf16.mxu0 0
        %5082 = vmatpush1.bf16.msra.mxu0 0
        %5083 = vmatprep.subr.bf16.mxu0 0
        %5084 = vmatpush1.bf16.msra.mxu0 0
        %5085 = vmatprep.subr.bf16.mxu0 0
        %5086 = vmatpush1.bf16.msra.mxu0 0
        %5087 = vmatprep.subr.bf16.mxu0 0
        %5088 = vmatpush1.bf16.msra.mxu0 0
        %5089 = vmatprep.subr.bf16.mxu0 0
        %5090 = vmatpush1.bf16.msra.mxu0 0
        %5091 = vmatprep.subr.bf16.mxu0 0
        %5092 = vmatpush1.bf16.msra.mxu0 0
        %5093 = vmatprep.subr.bf16.mxu0 0
        %5094 = vmatpush1.bf16.msra.mxu0 0
        %5095 = vmatprep.subr.bf16.mxu0 0
        %5096 = vmatpush1.bf16.msra.mxu0 0
        %5097 = vmatprep.subr.bf16.mxu0 0
        %5098 = vmatpush1.bf16.msra.mxu0 0
        %5099 = vmatprep.subr.bf16.mxu0 0
        %5100 = vmatpush1.bf16.msra.mxu0 0
        %5101 = vmatprep.subr.bf16.mxu0 0
        %5102 = vmatpush1.bf16.msra.mxu0 0
        %5103 = vmatprep.subr.bf16.mxu0 0
        %5104 = vmatpush1.bf16.msra.mxu0 0
        %5105 = vmatprep.subr.bf16.mxu0 0
        %5106 = vmatpush1.bf16.msra.mxu0 0
        %5107 = vmatprep.subr.bf16.mxu0 0
        %5108 = vmatpush1.bf16.msra.mxu0 0
        %5109 = vmatprep.subr.bf16.mxu0 0
        %5110 = vmatpush1.bf16.msra.mxu0 0
        %5111 = vmatprep.mubr.bf16.mxu0 0
        %5112 = vmatmul.mubr.bf16.gmra.mrb[0].mxu0 %v4924
        %v5113 = vpop.f32.mrb[0].mxu0
        %v5114 = vadd.f32 0.0, %v5113
        %v5115 = vpop.f32.mrb[0].mxu0
        %v5116 = vadd.f32 0.0, %v5115
        %v5117 = vpop.f32.mrb[0].mxu0
        %v5118 = vadd.f32 0.0, %v5117
        %v5119 = vpop.f32.mrb[0].mxu0
        %v5120 = vadd.f32 0.0, %v5119
        %5121 = vdwg.mxu0
        %v5122 = vadd.f32 %v4875, %v4985
        %v5123 = vadd.f32 %v4876, %v4987
        %v5124 = vadd.f32 %v4877, %v5028
        %v5125 = vadd.f32 %v4878, %v5030
        %v5126 = vadd.f32 %v4879, %v5071
        %v5127 = vadd.f32 %v4880, %v5073
        %v5128 = vadd.f32 %v4881, %v5114
        %v5129 = vadd.f32 %v4882, %v5116
        %v5130 = vadd.f32 %v4883, %v4989
        %v5131 = vadd.f32 %v4884, %v4991
        %v5132 = vadd.f32 %v4885, %v5032
        %v5133 = vadd.f32 %v4886, %v5034
        %v5134 = vadd.f32 %v4887, %v5075
        %v5135 = vadd.f32 %v4888, %v5077
        %v5136 = vadd.f32 %v4889, %v5118
        %v5137 = vadd.f32 %v4890, %v5120
        %v5138 = vld [vmem:[#allocation4 + $0x4] sm:$0xff]
        %v5139 = vld [vmem:[#allocation4 + $0xc] sm:$0xff]
        %v5140 = vld [vmem:[#allocation4 + $0x14] sm:$0xff]
        %v5141 = vld [vmem:[#allocation4 + $0x1c] sm:$0xff]
        %v5142 = vld [vmem:[#allocation4 + $0x24] sm:$0xf]
        %5143 = vrot.lane.b32.xlu0 %v4283, 2
        %v5144 = vpop.permute.xlu0 %5143
        %5145 = vrot.lane.b32.xlu0 %v4284, 2
        %v5146 = vpop.permute.xlu0 %5145
        %5147 = vrot.lane.b32.xlu0 %v4285, 2
        %v5148 = vpop.permute.xlu0 %5147
        %5149 = vrot.lane.b32.xlu0 %v4286, 2
        %v5150 = vpop.permute.xlu0 %5149
        %v5151 = vrot.slane %v5144, 4
        %v5152 = vrot.slane %v5146, 4
        %v5153 = vrot.slane %v5148, 4
        %v5154 = vrot.slane %v5150, 4
        %v5155 = vsel %vm4667, %v5151, %v5144
        %v5156 = vsel %vm3672, %v5151, %v5152
        %v5157 = vsel %vm4667, %v5156, %v5146
        %v5158 = vsel %vm3672, %v5152, %v5153
        %v5159 = vsel %vm4667, %v5158, %v5148
        %v5160 = vsel %vm3672, %v5153, %v5154
        %v5161 = vsel %vm4667, %v5160, %v5150
        %v5167 = vmul.bf16 %v5138, %v5155
        %v5168 = vmul.bf16 %v5139, %v5157
        %v5169 = vmul.bf16 %v5140, %v5159
        %v5170 = vmul.bf16 %v5141, %v5161
        %v5171 = vmul.bf16 %v5142, %v5154
        %s5172 = scalar_lea.vmem %s3, 40
        %v5173 = vld [vmem:[%s5172] sm:$0xf]
        %v5174 = vld [vmem:[%s5172 + $0x4] sm:$0xf]
        %v5177 = vunpack.c.l.b16 %v5173
        %v5178 = vunpack.c.l.b16 %v5174
        %v5179 = vpack.c.b16 %v5178, %v5177
        %v5185 = vunpack.c.l.b16 %v5167
        %v5186 = vunpack.c.h.b16 %v5167
        %v5187 = vunpack.c.l.b16 %v5168
        %v5188 = vunpack.c.h.b16 %v5168
        %v5189 = vunpack.c.l.b16 %v5169
        %v5190 = vunpack.c.h.b16 %v5169
        %v5191 = vunpack.c.l.b16 %v5170
        %v5192 = vunpack.c.h.b16 %v5170
        %v5193 = vunpack.c.l.b16 %v5171
        %v5194 = vpack.c.b16 %v5185, %v5185
        %v5195 = vpack.c.b16 %v5186, %v5186
        %v5196 = vpack.c.b16 %v5187, %v5187
        %v5197 = vpack.c.b16 %v5188, %v5188
        %v5198 = vpack.c.b16 %v5189, %v5189
        %v5199 = vpack.c.b16 %v5190, %v5190
        %v5200 = vpack.c.b16 %v5191, %v5191
        %v5201 = vpack.c.b16 %v5192, %v5192
        %v5202 = vpack.c.b16 %v5193, %v5193
        %5203 = vrot.lane.b32.xlu0 %v5194, 126
        %v5204 = vpop.permute.xlu0 %5203
        %5205 = vrot.lane.b32.xlu0 %v5195, 126
        %v5206 = vpop.permute.xlu0 %5205
        %5207 = vrot.lane.b32.xlu0 %v5196, 126
        %v5208 = vpop.permute.xlu0 %5207
        %5209 = vrot.lane.b32.xlu0 %v5197, 126
        %v5210 = vpop.permute.xlu0 %5209
        %5211 = vrot.lane.b32.xlu0 %v5198, 126
        %v5212 = vpop.permute.xlu0 %5211
        %5213 = vrot.lane.b32.xlu0 %v5199, 126
        %v5214 = vpop.permute.xlu0 %5213
        %5215 = vrot.lane.b32.xlu0 %v5200, 126
        %v5216 = vpop.permute.xlu0 %5215
        %5217 = vrot.lane.b32.xlu0 %v5201, 126
        %v5218 = vpop.permute.xlu0 %5217
        %5219 = vrot.lane.b32.xlu0 %v5202, 126
        %v5220 = vpop.permute.xlu0 %5219
        %v5221 = vsel %vm4600, %v5204, %v5206
        %v5222 = vsel %vm4600, %v5206, %v5208
        %v5223 = vsel %vm4600, %v5208, %v5210
        %v5224 = vsel %vm4600, %v5210, %v5212
        %v5225 = vsel %vm4600, %v5212, %v5214
        %v5226 = vsel %vm4600, %v5214, %v5216
        %v5227 = vsel %vm4600, %v5216, %v5218
        %v5228 = vsel %vm4600, %v5218, %v5220
        %v5230 = vsel %vm3746, %v5179, 0
        %v5233 = vsel %vm3750, %v5221, 0
        %v5236 = vsel %vm3750, %v5222, 0
        %v5239 = vsel %vm3750, %v5223, 0
        %v5242 = vsel %vm3750, %v5224, 0
        %v5245 = vsel %vm3750, %v5225, 0
        %v5248 = vsel %vm3750, %v5226, 0
        %v5251 = vsel %vm3750, %v5227, 0
        %v5254 = vsel %vm3750, %v5228, 0
        %5256 = vmatprep.subr.bf16.mxu0 %v5236
        %5257 = vmatpush1.bf16.msra.mxu0 %v5233
        %5258 = vmatprep.subr.bf16.mxu0 0
        %5259 = vmatpush1.bf16.msra.mxu0 0
        %5260 = vmatprep.subr.bf16.mxu0 0
        %5261 = vmatpush1.bf16.msra.mxu0 0
        %5262 = vmatprep.subr.bf16.mxu0 0
        %5263 = vmatpush1.bf16.msra.mxu0 0
        %5264 = vmatprep.subr.bf16.mxu0 0
        %5265 = vmatpush1.bf16.msra.mxu0 0
        %5266 = vmatprep.subr.bf16.mxu0 0
        %5267 = vmatpush1.bf16.msra.mxu0 0
        %5268 = vmatprep.subr.bf16.mxu0 0
        %5269 = vmatpush1.bf16.msra.mxu0 0
        %5270 = vmatprep.subr.bf16.mxu0 0
        %5271 = vmatpush1.bf16.msra.mxu0 0
        %5272 = vmatprep.subr.bf16.mxu0 0
        %5273 = vmatpush1.bf16.msra.mxu0 0
        %5274 = vmatprep.subr.bf16.mxu0 0
        %5275 = vmatpush1.bf16.msra.mxu0 0
        %5276 = vmatprep.subr.bf16.mxu0 0
        %5277 = vmatpush1.bf16.msra.mxu0 0
        %5278 = vmatprep.subr.bf16.mxu0 0
        %5279 = vmatpush1.bf16.msra.mxu0 0
        %5280 = vmatprep.subr.bf16.mxu0 0
        %5281 = vmatpush1.bf16.msra.mxu0 0
        %5282 = vmatprep.subr.bf16.mxu0 0
        %5283 = vmatpush1.bf16.msra.mxu0 0
        %5284 = vmatprep.subr.bf16.mxu0 0
        %5285 = vmatpush1.bf16.msra.mxu0 0
        %5286 = vmatprep.subr.bf16.mxu0 0
        %5287 = vmatpush1.bf16.msra.mxu0 0
        %5288 = vmatprep.mubr.bf16.mxu0 0
        %5289 = vmatmul.mubr.bf16.gmra.mrb[0].mxu0 %v5230
        %v5290 = vpop.f32.mrb[0].mxu0
        %v5291 = vadd.f32 0.0, %v5290
        %v5292 = vpop.f32.mrb[0].mxu0
        %v5293 = vadd.f32 0.0, %v5292
        %v5294 = vpop.f32.mrb[0].mxu0
        %v5295 = vadd.f32 0.0, %v5294
        %v5296 = vpop.f32.mrb[0].mxu0
        %v5297 = vadd.f32 0.0, %v5296
        %5298 = vdwg.mxu0
        %5299 = vmatprep.subr.bf16.mxu0 %v5242
        %5300 = vmatpush1.bf16.msra.mxu0 %v5239
        %5301 = vmatprep.subr.bf16.mxu0 0
        %5302 = vmatpush1.bf16.msra.mxu0 0
        %5303 = vmatprep.subr.bf16.mxu0 0
        %5304 = vmatpush1.bf16.msra.mxu0 0
        %5305 = vmatprep.subr.bf16.mxu0 0
        %5306 = vmatpush1.bf16.msra.mxu0 0
        %5307 = vmatprep.subr.bf16.mxu0 0
        %5308 = vmatpush1.bf16.msra.mxu0 0
        %5309 = vmatprep.subr.bf16.mxu0 0
        %5310 = vmatpush1.bf16.msra.mxu0 0
        %5311 = vmatprep.subr.bf16.mxu0 0
        %5312 = vmatpush1.bf16.msra.mxu0 0
        %5313 = vmatprep.subr.bf16.mxu0 0
        %5314 = vmatpush1.bf16.msra.mxu0 0
        %5315 = vmatprep.subr.bf16.mxu0 0
        %5316 = vmatpush1.bf16.msra.mxu0 0
        %5317 = vmatprep.subr.bf16.mxu0 0
        %5318 = vmatpush1.bf16.msra.mxu0 0
        %5319 = vmatprep.subr.bf16.mxu0 0
        %5320 = vmatpush1.bf16.msra.mxu0 0
        %5321 = vmatprep.subr.bf16.mxu0 0
        %5322 = vmatpush1.bf16.msra.mxu0 0
        %5323 = vmatprep.subr.bf16.mxu0 0
        %5324 = vmatpush1.bf16.msra.mxu0 0
        %5325 = vmatprep.subr.bf16.mxu0 0
        %5326 = vmatpush1.bf16.msra.mxu0 0
        %5327 = vmatprep.subr.bf16.mxu0 0
        %5328 = vmatpush1.bf16.msra.mxu0 0
        %5329 = vmatprep.subr.bf16.mxu0 0
        %5330 = vmatpush1.bf16.msra.mxu0 0
        %5331 = vmatprep.mubr.bf16.mxu0 0
        %5332 = vmatmul.mubr.bf16.gmra.mrb[0].mxu0 %v5230
        %v5333 = vpop.f32.mrb[0].mxu0
        %v5334 = vadd.f32 0.0, %v5333
        %v5335 = vpop.f32.mrb[0].mxu0
        %v5336 = vadd.f32 0.0, %v5335
        %v5337 = vpop.f32.mrb[0].mxu0
        %v5338 = vadd.f32 0.0, %v5337
        %v5339 = vpop.f32.mrb[0].mxu0
        %v5340 = vadd.f32 0.0, %v5339
        %5341 = vdwg.mxu0
        %5342 = vmatprep.subr.bf16.mxu0 %v5248
        %5343 = vmatpush1.bf16.msra.mxu0 %v5245
        %5344 = vmatprep.subr.bf16.mxu0 0
        %5345 = vmatpush1.bf16.msra.mxu0 0
        %5346 = vmatprep.subr.bf16.mxu0 0
        %5347 = vmatpush1.bf16.msra.mxu0 0
        %5348 = vmatprep.subr.bf16.mxu0 0
        %5349 = vmatpush1.bf16.msra.mxu0 0
        %5350 = vmatprep.subr.bf16.mxu0 0
        %5351 = vmatpush1.bf16.msra.mxu0 0
        %5352 = vmatprep.subr.bf16.mxu0 0
        %5353 = vmatpush1.bf16.msra.mxu0 0
        %5354 = vmatprep.subr.bf16.mxu0 0
        %5355 = vmatpush1.bf16.msra.mxu0 0
        %5356 = vmatprep.subr.bf16.mxu0 0
        %5357 = vmatpush1.bf16.msra.mxu0 0
        %5358 = vmatprep.subr.bf16.mxu0 0
        %5359 = vmatpush1.bf16.msra.mxu0 0
        %5360 = vmatprep.subr.bf16.mxu0 0
        %5361 = vmatpush1.bf16.msra.mxu0 0
        %5362 = vmatprep.subr.bf16.mxu0 0
        %5363 = vmatpush1.bf16.msra.mxu0 0
        %5364 = vmatprep.subr.bf16.mxu0 0
        %5365 = vmatpush1.bf16.msra.mxu0 0
        %5366 = vmatprep.subr.bf16.mxu0 0
        %5367 = vmatpush1.bf16.msra.mxu0 0
        %5368 = vmatprep.subr.bf16.mxu0 0
        %5369 = vmatpush1.bf16.msra.mxu0 0
        %5370 = vmatprep.subr.bf16.mxu0 0
        %5371 = vmatpush1.bf16.msra.mxu0 0
        %5372 = vmatprep.subr.bf16.mxu0 0
        %5373 = vmatpush1.bf16.msra.mxu0 0
        %5374 = vmatprep.mubr.bf16.mxu0 0
        %5375 = vmatmul.mubr.bf16.gmra.mrb[0].mxu0 %v5230
        %v5376 = vpop.f32.mrb[0].mxu0
        %v5377 = vadd.f32 0.0, %v5376
        %v5378 = vpop.f32.mrb[0].mxu0
        %v5379 = vadd.f32 0.0, %v5378
        %v5380 = vpop.f32.mrb[0].mxu0
        %v5381 = vadd.f32 0.0, %v5380
        %v5382 = vpop.f32.mrb[0].mxu0
        %v5383 = vadd.f32 0.0, %v5382
        %5384 = vdwg.mxu0
        %5385 = vmatprep.subr.bf16.mxu0 %v5254
        %5386 = vmatpush1.bf16.msra.mxu0 %v5251
        %5387 = vmatprep.subr.bf16.mxu0 0
        %5388 = vmatpush1.bf16.msra.mxu0 0
        %5389 = vmatprep.subr.bf16.mxu0 0
        %5390 = vmatpush1.bf16.msra.mxu0 0
        %5391 = vmatprep.subr.bf16.mxu0 0
        %5392 = vmatpush1.bf16.msra.mxu0 0
        %5393 = vmatprep.subr.bf16.mxu0 0
        %5394 = vmatpush1.bf16.msra.mxu0 0
        %5395 = vmatprep.subr.bf16.mxu0 0
        %5396 = vmatpush1.bf16.msra.mxu0 0
        %5397 = vmatprep.subr.bf16.mxu0 0
        %5398 = vmatpush1.bf16.msra.mxu0 0
        %5399 = vmatprep.subr.bf16.mxu0 0
        %5400 = vmatpush1.bf16.msra.mxu0 0
        %5401 = vmatprep.subr.bf16.mxu0 0
        %5402 = vmatpush1.bf16.msra.mxu0 0
        %5403 = vmatprep.subr.bf16.mxu0 0
        %5404 = vmatpush1.bf16.msra.mxu0 0
        %5405 = vmatprep.subr.bf16.mxu0 0
        %5406 = vmatpush1.bf16.msra.mxu0 0
        %5407 = vmatprep.subr.bf16.mxu0 0
        %5408 = vmatpush1.bf16.msra.mxu0 0
        %5409 = vmatprep.subr.bf16.mxu0 0
        %5410 = vmatpush1.bf16.msra.mxu0 0
        %5411 = vmatprep.subr.bf16.mxu0 0
        %5412 = vmatpush1.bf16.msra.mxu0 0
        %5413 = vmatprep.subr.bf16.mxu0 0
        %5414 = vmatpush1.bf16.msra.mxu0 0
        %5415 = vmatprep.subr.bf16.mxu0 0
        %5416 = vmatpush1.bf16.msra.mxu0 0
        %5417 = vmatprep.mubr.bf16.mxu0 0
        %5418 = vmatmul.mubr.bf16.gmra.mrb[0].mxu0 %v5230
        %v5419 = vpop.f32.mrb[0].mxu0
        %v5420 = vadd.f32 0.0, %v5419
        %v5421 = vpop.f32.mrb[0].mxu0
        %v5422 = vadd.f32 0.0, %v5421
        %v5423 = vpop.f32.mrb[0].mxu0
        %v5424 = vadd.f32 0.0, %v5423
        %v5425 = vpop.f32.mrb[0].mxu0
        %v5426 = vadd.f32 0.0, %v5425
        %5427 = vdwg.mxu0
        %v5428 = vadd.f32 %v5122, %v5291
        %v5429 = vadd.f32 %v5123, %v5293
        %v5430 = vadd.f32 %v5124, %v5334
        %v5431 = vadd.f32 %v5125, %v5336
        %v5432 = vadd.f32 %v5126, %v5377
        %v5433 = vadd.f32 %v5127, %v5379
        %v5434 = vadd.f32 %v5128, %v5420
        %v5435 = vadd.f32 %v5129, %v5422
        %v5436 = vadd.f32 %v5130, %v5295
        %v5437 = vadd.f32 %v5131, %v5297
        %v5438 = vadd.f32 %v5132, %v5338
        %v5439 = vadd.f32 %v5133, %v5340
        %v5440 = vadd.f32 %v5134, %v5381
        %v5441 = vadd.f32 %v5135, %v5383
        %v5442 = vadd.f32 %v5136, %v5424
        %v5443 = vadd.f32 %v5137, %v5426
        %v5444 = vmul.bf16 %v5138, %v3671
        %v5445 = vmul.bf16 %v5139, %v3674
        %v5446 = vmul.bf16 %v5140, %v3676
        %v5447 = vmul.bf16 %v5141, %v3678
        %v5448 = vmul.bf16 %v5142, %v3669
        %s5449 = scalar_lea.vmem %s3, 48
        %v5450 = vld [vmem:[%s5449] sm:$0xf]
        %v5451 = vld [vmem:[%s5449 + $0x4] sm:$0xf]
        %v5454 = vunpack.c.l.b16 %v5450
        %v5455 = vunpack.c.l.b16 %v5451
        %v5456 = vpack.c.b16 %v5455, %v5454
        %v5462 = vunpack.c.l.b16 %v5444
        %v5463 = vunpack.c.h.b16 %v5444
        %v5464 = vunpack.c.l.b16 %v5445
        %v5465 = vunpack.c.h.b16 %v5445
        %v5466 = vunpack.c.l.b16 %v5446
        %v5467 = vunpack.c.h.b16 %v5446
        %v5468 = vunpack.c.l.b16 %v5447
        %v5469 = vunpack.c.h.b16 %v5447
        %v5470 = vunpack.c.l.b16 %v5448
        %v5471 = vpack.c.b16 %v5462, %v5462
        %v5472 = vpack.c.b16 %v5463, %v5463
        %v5473 = vpack.c.b16 %v5464, %v5464
        %v5474 = vpack.c.b16 %v5465, %v5465
        %v5475 = vpack.c.b16 %v5466, %v5466
        %v5476 = vpack.c.b16 %v5467, %v5467
        %v5477 = vpack.c.b16 %v5468, %v5468
        %v5478 = vpack.c.b16 %v5469, %v5469
        %v5479 = vpack.c.b16 %v5470, %v5470
        %5480 = vrot.lane.b32.xlu0 %v5471, 66
        %v5481 = vpop.permute.xlu0 %5480
        %5482 = vrot.lane.b32.xlu0 %v5472, 66
        %v5483 = vpop.permute.xlu0 %5482
        %5484 = vrot.lane.b32.xlu0 %v5473, 66
        %v5485 = vpop.permute.xlu0 %5484
        %5486 = vrot.lane.b32.xlu0 %v5474, 66
        %v5487 = vpop.permute.xlu0 %5486
        %5488 = vrot.lane.b32.xlu0 %v5475, 66
        %v5489 = vpop.permute.xlu0 %5488
        %5490 = vrot.lane.b32.xlu0 %v5476, 66
        %v5491 = vpop.permute.xlu0 %5490
        %5492 = vrot.lane.b32.xlu0 %v5477, 66
        %v5493 = vpop.permute.xlu0 %5492
        %5494 = vrot.lane.b32.xlu0 %v5478, 66
        %v5495 = vpop.permute.xlu0 %5494
        %5496 = vrot.lane.b32.xlu0 %v5479, 66
        %v5497 = vpop.permute.xlu0 %5496
        %v5498 = vsel %vm3737, %v5481, %v5483
        %v5499 = vsel %vm3737, %v5483, %v5485
        %v5500 = vsel %vm3737, %v5485, %v5487
        %v5501 = vsel %vm3737, %v5487, %v5489
        %v5502 = vsel %vm3737, %v5489, %v5491
        %v5503 = vsel %vm3737, %v5491, %v5493
        %v5504 = vsel %vm3737, %v5493, %v5495
        %v5505 = vsel %vm3737, %v5495, %v5497
        %v5507 = vsel %vm3746, %v5456, 0
        %v5510 = vsel %vm3750, %v5498, 0
        %v5513 = vsel %vm3750, %v5499, 0
        %v5516 = vsel %vm3750, %v5500, 0
        %v5519 = vsel %vm3750, %v5501, 0
        %v5522 = vsel %vm3750, %v5502, 0
        %v5525 = vsel %vm3750, %v5503, 0
        %v5528 = vsel %vm3750, %v5504, 0
        %v5531 = vsel %vm3750, %v5505, 0
        %5533 = vmatprep.subr.bf16.mxu0 %v5513
        %5534 = vmatpush1.bf16.msra.mxu0 %v5510
        %5535 = vmatprep.subr.bf16.mxu0 0
        %5536 = vmatpush1.bf16.msra.mxu0 0
        %5537 = vmatprep.subr.bf16.mxu0 0
        %5538 = vmatpush1.bf16.msra.mxu0 0
        %5539 = vmatprep.subr.bf16.mxu0 0
        %5540 = vmatpush1.bf16.msra.mxu0 0
        %5541 = vmatprep.subr.bf16.mxu0 0
        %5542 = vmatpush1.bf16.msra.mxu0 0
        %5543 = vmatprep.subr.bf16.mxu0 0
        %5544 = vmatpush1.bf16.msra.mxu0 0
        %5545 = vmatprep.subr.bf16.mxu0 0
        %5546 = vmatpush1.bf16.msra.mxu0 0
        %5547 = vmatprep.subr.bf16.mxu0 0
        %5548 = vmatpush1.bf16.msra.mxu0 0
        %5549 = vmatprep.subr.bf16.mxu0 0
        %5550 = vmatpush1.bf16.msra.mxu0 0
        %5551 = vmatprep.subr.bf16.mxu0 0
        %5552 = vmatpush1.bf16.msra.mxu0 0
        %5553 = vmatprep.subr.bf16.mxu0 0
        %5554 = vmatpush1.bf16.msra.mxu0 0
        %5555 = vmatprep.subr.bf16.mxu0 0
        %5556 = vmatpush1.bf16.msra.mxu0 0
        %5557 = vmatprep.subr.bf16.mxu0 0
        %5558 = vmatpush1.bf16.msra.mxu0 0
        %5559 = vmatprep.subr.bf16.mxu0 0
        %5560 = vmatpush1.bf16.msra.mxu0 0
        %5561 = vmatprep.subr.bf16.mxu0 0
        %5562 = vmatpush1.bf16.msra.mxu0 0
        %5563 = vmatprep.subr.bf16.mxu0 0
        %5564 = vmatpush1.bf16.msra.mxu0 0
        %5565 = vmatprep.mubr.bf16.mxu0 0
        %5566 = vmatmul.mubr.bf16.gmra.mrb[0].mxu0 %v5507
        %v5567 = vpop.f32.mrb[0].mxu0
        %v5568 = vadd.f32 0.0, %v5567
        %v5569 = vpop.f32.mrb[0].mxu0
        %v5570 = vadd.f32 0.0, %v5569
        %v5571 = vpop.f32.mrb[0].mxu0
        %v5572 = vadd.f32 0.0, %v5571
        %v5573 = vpop.f32.mrb[0].mxu0
        %v5574 = vadd.f32 0.0, %v5573
        %5575 = vdwg.mxu0
        %5576 = vmatprep.subr.bf16.mxu0 %v5519
        %5577 = vmatpush1.bf16.msra.mxu0 %v5516
        %5578 = vmatprep.subr.bf16.mxu0 0
        %5579 = vmatpush1.bf16.msra.mxu0 0
        %5580 = vmatprep.subr.bf16.mxu0 0
        %5581 = vmatpush1.bf16.msra.mxu0 0
        %5582 = vmatprep.subr.bf16.mxu0 0
        %5583 = vmatpush1.bf16.msra.mxu0 0
        %5584 = vmatprep.subr.bf16.mxu0 0
        %5585 = vmatpush1.bf16.msra.mxu0 0
        %5586 = vmatprep.subr.bf16.mxu0 0
        %5587 = vmatpush1.bf16.msra.mxu0 0
        %5588 = vmatprep.subr.bf16.mxu0 0
        %5589 = vmatpush1.bf16.msra.mxu0 0
        %5590 = vmatprep.subr.bf16.mxu0 0
        %5591 = vmatpush1.bf16.msra.mxu0 0
        %5592 = vmatprep.subr.bf16.mxu0 0
        %5593 = vmatpush1.bf16.msra.mxu0 0
        %5594 = vmatprep.subr.bf16.mxu0 0
        %5595 = vmatpush1.bf16.msra.mxu0 0
        %5596 = vmatprep.subr.bf16.mxu0 0
        %5597 = vmatpush1.bf16.msra.mxu0 0
        %5598 = vmatprep.subr.bf16.mxu0 0
        %5599 = vmatpush1.bf16.msra.mxu0 0
        %5600 = vmatprep.subr.bf16.mxu0 0
        %5601 = vmatpush1.bf16.msra.mxu0 0
        %5602 = vmatprep.subr.bf16.mxu0 0
        %5603 = vmatpush1.bf16.msra.mxu0 0
        %5604 = vmatprep.subr.bf16.mxu0 0
        %5605 = vmatpush1.bf16.msra.mxu0 0
        %5606 = vmatprep.subr.bf16.mxu0 0
        %5607 = vmatpush1.bf16.msra.mxu0 0
        %5608 = vmatprep.mubr.bf16.mxu0 0
        %5609 = vmatmul.mubr.bf16.gmra.mrb[0].mxu0 %v5507
        %v5610 = vpop.f32.mrb[0].mxu0
        %v5611 = vadd.f32 0.0, %v5610
        %v5612 = vpop.f32.mrb[0].mxu0
        %v5613 = vadd.f32 0.0, %v5612
        %v5614 = vpop.f32.mrb[0].mxu0
        %v5615 = vadd.f32 0.0, %v5614
        %v5616 = vpop.f32.mrb[0].mxu0
        %v5617 = vadd.f32 0.0, %v5616
        %5618 = vdwg.mxu0
        %5619 = vmatprep.subr.bf16.mxu0 %v5525
        %5620 = vmatpush1.bf16.msra.mxu0 %v5522
        %5621 = vmatprep.subr.bf16.mxu0 0
        %5622 = vmatpush1.bf16.msra.mxu0 0
        %5623 = vmatprep.subr.bf16.mxu0 0
        %5624 = vmatpush1.bf16.msra.mxu0 0
        %5625 = vmatprep.subr.bf16.mxu0 0
        %5626 = vmatpush1.bf16.msra.mxu0 0
        %5627 = vmatprep.subr.bf16.mxu0 0
        %5628 = vmatpush1.bf16.msra.mxu0 0
        %5629 = vmatprep.subr.bf16.mxu0 0
        %5630 = vmatpush1.bf16.msra.mxu0 0
        %5631 = vmatprep.subr.bf16.mxu0 0
        %5632 = vmatpush1.bf16.msra.mxu0 0
        %5633 = vmatprep.subr.bf16.mxu0 0
        %5634 = vmatpush1.bf16.msra.mxu0 0
        %5635 = vmatprep.subr.bf16.mxu0 0
        %5636 = vmatpush1.bf16.msra.mxu0 0
        %5637 = vmatprep.subr.bf16.mxu0 0
        %5638 = vmatpush1.bf16.msra.mxu0 0
        %5639 = vmatprep.subr.bf16.mxu0 0
        %5640 = vmatpush1.bf16.msra.mxu0 0
        %5641 = vmatprep.subr.bf16.mxu0 0
        %5642 = vmatpush1.bf16.msra.mxu0 0
        %5643 = vmatprep.subr.bf16.mxu0 0
        %5644 = vmatpush1.bf16.msra.mxu0 0
        %5645 = vmatprep.subr.bf16.mxu0 0
        %5646 = vmatpush1.bf16.msra.mxu0 0
        %5647 = vmatprep.subr.bf16.mxu0 0
        %5648 = vmatpush1.bf16.msra.mxu0 0
        %5649 = vmatprep.subr.bf16.mxu0 0
        %5650 = vmatpush1.bf16.msra.mxu0 0
        %5651 = vmatprep.mubr.bf16.mxu0 0
        %5652 = vmatmul.mubr.bf16.gmra.mrb[0].mxu0 %v5507
        %v5653 = vpop.f32.mrb[0].mxu0
        %v5654 = vadd.f32 0.0, %v5653
        %v5655 = vpop.f32.mrb[0].mxu0
        %v5656 = vadd.f32 0.0, %v5655
        %v5657 = vpop.f32.mrb[0].mxu0
        %v5658 = vadd.f32 0.0, %v5657
        %v5659 = vpop.f32.mrb[0].mxu0
        %v5660 = vadd.f32 0.0, %v5659
        %5661 = vdwg.mxu0
        %5662 = vmatprep.subr.bf16.mxu0 %v5531
        %5663 = vmatpush1.bf16.msra.mxu0 %v5528
        %5664 = vmatprep.subr.bf16.mxu0 0
        %5665 = vmatpush1.bf16.msra.mxu0 0
        %5666 = vmatprep.subr.bf16.mxu0 0
        %5667 = vmatpush1.bf16.msra.mxu0 0
        %5668 = vmatprep.subr.bf16.mxu0 0
        %5669 = vmatpush1.bf16.msra.mxu0 0
        %5670 = vmatprep.subr.bf16.mxu0 0
        %5671 = vmatpush1.bf16.msra.mxu0 0
        %5672 = vmatprep.subr.bf16.mxu0 0
        %5673 = vmatpush1.bf16.msra.mxu0 0
        %5674 = vmatprep.subr.bf16.mxu0 0
        %5675 = vmatpush1.bf16.msra.mxu0 0
        %5676 = vmatprep.subr.bf16.mxu0 0
        %5677 = vmatpush1.bf16.msra.mxu0 0
        %5678 = vmatprep.subr.bf16.mxu0 0
        %5679 = vmatpush1.bf16.msra.mxu0 0
        %5680 = vmatprep.subr.bf16.mxu0 0
        %5681 = vmatpush1.bf16.msra.mxu0 0
        %5682 = vmatprep.subr.bf16.mxu0 0
        %5683 = vmatpush1.bf16.msra.mxu0 0
        %5684 = vmatprep.subr.bf16.mxu0 0
        %5685 = vmatpush1.bf16.msra.mxu0 0
        %5686 = vmatprep.subr.bf16.mxu0 0
        %5687 = vmatpush1.bf16.msra.mxu0 0
        %5688 = vmatprep.subr.bf16.mxu0 0
        %5689 = vmatpush1.bf16.msra.mxu0 0
        %5690 = vmatprep.subr.bf16.mxu0 0
        %5691 = vmatpush1.bf16.msra.mxu0 0
        %5692 = vmatprep.subr.bf16.mxu0 0
        %5693 = vmatpush1.bf16.msra.mxu0 0
        %5694 = vmatprep.mubr.bf16.mxu0 0
        %5695 = vmatmul.mubr.bf16.gmra.mrb[0].mxu0 %v5507
        %v5696 = vpop.f32.mrb[0].mxu0
        %v5697 = vadd.f32 0.0, %v5696
        %v5698 = vpop.f32.mrb[0].mxu0
        %v5699 = vadd.f32 0.0, %v5698
        %v5700 = vpop.f32.mrb[0].mxu0
        %v5701 = vadd.f32 0.0, %v5700
        %v5702 = vpop.f32.mrb[0].mxu0
        %v5703 = vadd.f32 0.0, %v5702
        %5704 = vdwg.mxu0
        %v5705 = vadd.f32 %v5428, %v5568
        %v5706 = vadd.f32 %v5429, %v5570
        %v5707 = vadd.f32 %v5430, %v5611
        %v5708 = vadd.f32 %v5431, %v5613
        %v5709 = vadd.f32 %v5432, %v5654
        %v5710 = vadd.f32 %v5433, %v5656
        %v5711 = vadd.f32 %v5434, %v5697
        %v5712 = vadd.f32 %v5435, %v5699
        %v5713 = vadd.f32 %v5436, %v5572
        %v5714 = vadd.f32 %v5437, %v5574
        %v5715 = vadd.f32 %v5438, %v5615
        %v5716 = vadd.f32 %v5439, %v5617
        %v5717 = vadd.f32 %v5440, %v5658
        %v5718 = vadd.f32 %v5441, %v5660
        %v5719 = vadd.f32 %v5442, %v5701
        %v5720 = vadd.f32 %v5443, %v5703
        %s5721 = scalar_lea.vmem %s3, 56
        %v5722 = vld [vmem:[%s5721] sm:$0xf]
        %v5723 = vld [vmem:[%s5721 + $0x4] sm:$0xf]
        %v5726 = vunpack.c.l.b16 %v5722
        %v5727 = vunpack.c.l.b16 %v5723
        %v5728 = vpack.c.b16 %v5727, %v5726
        %v5734 = vunpack.c.l.b16 %v5138
        %v5735 = vunpack.c.h.b16 %v5138
        %v5736 = vunpack.c.l.b16 %v5139
        %v5737 = vunpack.c.h.b16 %v5139
        %v5738 = vunpack.c.l.b16 %v5140
        %v5739 = vunpack.c.h.b16 %v5140
        %v5740 = vunpack.c.l.b16 %v5141
        %v5741 = vunpack.c.h.b16 %v5141
        %v5742 = vunpack.c.l.b16 %v5142
        %v5743 = vpack.c.b16 %v5734, %v5734
        %v5744 = vpack.c.b16 %v5735, %v5735
        %v5745 = vpack.c.b16 %v5736, %v5736
        %v5746 = vpack.c.b16 %v5737, %v5737
        %v5747 = vpack.c.b16 %v5738, %v5738
        %v5748 = vpack.c.b16 %v5739, %v5739
        %v5749 = vpack.c.b16 %v5740, %v5740
        %v5750 = vpack.c.b16 %v5741, %v5741
        %v5751 = vpack.c.b16 %v5742, %v5742
        %5752 = vrot.lane.b32.xlu0 %v5743, 64
        %v5753 = vpop.permute.xlu0 %5752
        %5754 = vrot.lane.b32.xlu0 %v5744, 64
        %v5755 = vpop.permute.xlu0 %5754
        %5756 = vrot.lane.b32.xlu0 %v5745, 64
        %v5757 = vpop.permute.xlu0 %5756
        %5758 = vrot.lane.b32.xlu0 %v5746, 64
        %v5759 = vpop.permute.xlu0 %5758
        %5760 = vrot.lane.b32.xlu0 %v5747, 64
        %v5761 = vpop.permute.xlu0 %5760
        %5762 = vrot.lane.b32.xlu0 %v5748, 64
        %v5763 = vpop.permute.xlu0 %5762
        %5764 = vrot.lane.b32.xlu0 %v5749, 64
        %v5765 = vpop.permute.xlu0 %5764
        %5766 = vrot.lane.b32.xlu0 %v5750, 64
        %v5767 = vpop.permute.xlu0 %5766
        %5768 = vrot.lane.b32.xlu0 %v5751, 64
        %v5769 = vpop.permute.xlu0 %5768
        %v5770 = vsel %vm454, %v5753, %v5755
        %v5771 = vsel %vm454, %v5755, %v5757
        %v5772 = vsel %vm454, %v5757, %v5759
        %v5773 = vsel %vm454, %v5759, %v5761
        %v5774 = vsel %vm454, %v5761, %v5763
        %v5775 = vsel %vm454, %v5763, %v5765
        %v5776 = vsel %vm454, %v5765, %v5767
        %v5777 = vsel %vm454, %v5767, %v5769
        %v5779 = vsel %vm3746, %v5728, 0
        %v5782 = vsel %vm3750, %v5770, 0
        %v5785 = vsel %vm3750, %v5771, 0
        %v5788 = vsel %vm3750, %v5772, 0
        %v5791 = vsel %vm3750, %v5773, 0
        %v5794 = vsel %vm3750, %v5774, 0
        %v5797 = vsel %vm3750, %v5775, 0
        %v5800 = vsel %vm3750, %v5776, 0
        %v5803 = vsel %vm3750, %v5777, 0
        %5805 = vmatprep.subr.bf16.mxu0 %v5785
        %5806 = vmatpush1.bf16.msra.mxu0 %v5782
        %5807 = vmatprep.subr.bf16.mxu0 0
        %5808 = vmatpush1.bf16.msra.mxu0 0
        %5809 = vmatprep.subr.bf16.mxu0 0
        %5810 = vmatpush1.bf16.msra.mxu0 0
        %5811 = vmatprep.subr.bf16.mxu0 0
        %5812 = vmatpush1.bf16.msra.mxu0 0
        %5813 = vmatprep.subr.bf16.mxu0 0
        %5814 = vmatpush1.bf16.msra.mxu0 0
        %5815 = vmatprep.subr.bf16.mxu0 0
        %5816 = vmatpush1.bf16.msra.mxu0 0
        %5817 = vmatprep.subr.bf16.mxu0 0
        %5818 = vmatpush1.bf16.msra.mxu0 0
        %5819 = vmatprep.subr.bf16.mxu0 0
        %5820 = vmatpush1.bf16.msra.mxu0 0
        %5821 = vmatprep.subr.bf16.mxu0 0
        %5822 = vmatpush1.bf16.msra.mxu0 0
        %5823 = vmatprep.subr.bf16.mxu0 0
        %5824 = vmatpush1.bf16.msra.mxu0 0
        %5825 = vmatprep.subr.bf16.mxu0 0
        %5826 = vmatpush1.bf16.msra.mxu0 0
        %5827 = vmatprep.subr.bf16.mxu0 0
        %5828 = vmatpush1.bf16.msra.mxu0 0
        %5829 = vmatprep.subr.bf16.mxu0 0
        %5830 = vmatpush1.bf16.msra.mxu0 0
        %5831 = vmatprep.subr.bf16.mxu0 0
        %5832 = vmatpush1.bf16.msra.mxu0 0
        %5833 = vmatprep.subr.bf16.mxu0 0
        %5834 = vmatpush1.bf16.msra.mxu0 0
        %5835 = vmatprep.subr.bf16.mxu0 0
        %5836 = vmatpush1.bf16.msra.mxu0 0
        %5837 = vmatprep.mubr.bf16.mxu0 0
        %5838 = vmatmul.mubr.bf16.gmra.mrb[0].mxu0 %v5779
        %v5839 = vpop.f32.mrb[0].mxu0
        %v5840 = vadd.f32 0.0, %v5839
        %v5841 = vpop.f32.mrb[0].mxu0
        %v5842 = vadd.f32 0.0, %v5841
        %v5843 = vpop.f32.mrb[0].mxu0
        %v5844 = vadd.f32 0.0, %v5843
        %v5845 = vpop.f32.mrb[0].mxu0
        %v5846 = vadd.f32 0.0, %v5845
        %5847 = vdwg.mxu0
        %5848 = vmatprep.subr.bf16.mxu0 %v5791
        %5849 = vmatpush1.bf16.msra.mxu0 %v5788
        %5850 = vmatprep.subr.bf16.mxu0 0
        %5851 = vmatpush1.bf16.msra.mxu0 0
        %5852 = vmatprep.subr.bf16.mxu0 0
        %5853 = vmatpush1.bf16.msra.mxu0 0
        %5854 = vmatprep.subr.bf16.mxu0 0
        %5855 = vmatpush1.bf16.msra.mxu0 0
        %5856 = vmatprep.subr.bf16.mxu0 0
        %5857 = vmatpush1.bf16.msra.mxu0 0
        %5858 = vmatprep.subr.bf16.mxu0 0
        %5859 = vmatpush1.bf16.msra.mxu0 0
        %5860 = vmatprep.subr.bf16.mxu0 0
        %5861 = vmatpush1.bf16.msra.mxu0 0
        %5862 = vmatprep.subr.bf16.mxu0 0
        %5863 = vmatpush1.bf16.msra.mxu0 0
        %5864 = vmatprep.subr.bf16.mxu0 0
        %5865 = vmatpush1.bf16.msra.mxu0 0
        %5866 = vmatprep.subr.bf16.mxu0 0
        %5867 = vmatpush1.bf16.msra.mxu0 0
        %5868 = vmatprep.subr.bf16.mxu0 0
        %5869 = vmatpush1.bf16.msra.mxu0 0
        %5870 = vmatprep.subr.bf16.mxu0 0
        %5871 = vmatpush1.bf16.msra.mxu0 0
        %5872 = vmatprep.subr.bf16.mxu0 0
        %5873 = vmatpush1.bf16.msra.mxu0 0
        %5874 = vmatprep.subr.bf16.mxu0 0
        %5875 = vmatpush1.bf16.msra.mxu0 0
        %5876 = vmatprep.subr.bf16.mxu0 0
        %5877 = vmatpush1.bf16.msra.mxu0 0
        %5878 = vmatprep.subr.bf16.mxu0 0
        %5879 = vmatpush1.bf16.msra.mxu0 0
        %5880 = vmatprep.mubr.bf16.mxu0 0
        %5881 = vmatmul.mubr.bf16.gmra.mrb[0].mxu0 %v5779
        %v5882 = vpop.f32.mrb[0].mxu0
        %v5883 = vadd.f32 0.0, %v5882
        %v5884 = vpop.f32.mrb[0].mxu0
        %v5885 = vadd.f32 0.0, %v5884
        %v5886 = vpop.f32.mrb[0].mxu0
        %v5887 = vadd.f32 0.0, %v5886
        %v5888 = vpop.f32.mrb[0].mxu0
        %v5889 = vadd.f32 0.0, %v5888
        %5890 = vdwg.mxu0
        %5891 = vmatprep.subr.bf16.mxu0 %v5797
        %5892 = vmatpush1.bf16.msra.mxu0 %v5794
        %5893 = vmatprep.subr.bf16.mxu0 0
        %5894 = vmatpush1.bf16.msra.mxu0 0
        %5895 = vmatprep.subr.bf16.mxu0 0
        %5896 = vmatpush1.bf16.msra.mxu0 0
        %5897 = vmatprep.subr.bf16.mxu0 0
        %5898 = vmatpush1.bf16.msra.mxu0 0
        %5899 = vmatprep.subr.bf16.mxu0 0
        %5900 = vmatpush1.bf16.msra.mxu0 0
        %5901 = vmatprep.subr.bf16.mxu0 0
        %5902 = vmatpush1.bf16.msra.mxu0 0
        %5903 = vmatprep.subr.bf16.mxu0 0
        %5904 = vmatpush1.bf16.msra.mxu0 0
        %5905 = vmatprep.subr.bf16.mxu0 0
        %5906 = vmatpush1.bf16.msra.mxu0 0
        %5907 = vmatprep.subr.bf16.mxu0 0
        %5908 = vmatpush1.bf16.msra.mxu0 0
        %5909 = vmatprep.subr.bf16.mxu0 0
        %5910 = vmatpush1.bf16.msra.mxu0 0
        %5911 = vmatprep.subr.bf16.mxu0 0
        %5912 = vmatpush1.bf16.msra.mxu0 0
        %5913 = vmatprep.subr.bf16.mxu0 0
        %5914 = vmatpush1.bf16.msra.mxu0 0
        %5915 = vmatprep.subr.bf16.mxu0 0
        %5916 = vmatpush1.bf16.msra.mxu0 0
        %5917 = vmatprep.subr.bf16.mxu0 0
        %5918 = vmatpush1.bf16.msra.mxu0 0
        %5919 = vmatprep.subr.bf16.mxu0 0
        %5920 = vmatpush1.bf16.msra.mxu0 0
        %5921 = vmatprep.subr.bf16.mxu0 0
        %5922 = vmatpush1.bf16.msra.mxu0 0
        %5923 = vmatprep.mubr.bf16.mxu0 0
        %5924 = vmatmul.mubr.bf16.gmra.mrb[0].mxu0 %v5779
        %v5925 = vpop.f32.mrb[0].mxu0
        %v5926 = vadd.f32 0.0, %v5925
        %v5927 = vpop.f32.mrb[0].mxu0
        %v5928 = vadd.f32 0.0, %v5927
        %v5929 = vpop.f32.mrb[0].mxu0
        %v5930 = vadd.f32 0.0, %v5929
        %v5931 = vpop.f32.mrb[0].mxu0
        %v5932 = vadd.f32 0.0, %v5931
        %5933 = vdwg.mxu0
        %5934 = vmatprep.subr.bf16.mxu0 %v5803
        %5935 = vmatpush1.bf16.msra.mxu0 %v5800
        %5936 = vmatprep.subr.bf16.mxu0 0
        %5937 = vmatpush1.bf16.msra.mxu0 0
        %5938 = vmatprep.subr.bf16.mxu0 0
        %5939 = vmatpush1.bf16.msra.mxu0 0
        %5940 = vmatprep.subr.bf16.mxu0 0
        %5941 = vmatpush1.bf16.msra.mxu0 0
        %5942 = vmatprep.subr.bf16.mxu0 0
        %5943 = vmatpush1.bf16.msra.mxu0 0
        %5944 = vmatprep.subr.bf16.mxu0 0
        %5945 = vmatpush1.bf16.msra.mxu0 0
        %5946 = vmatprep.subr.bf16.mxu0 0
        %5947 = vmatpush1.bf16.msra.mxu0 0
        %5948 = vmatprep.subr.bf16.mxu0 0
        %5949 = vmatpush1.bf16.msra.mxu0 0
        %5950 = vmatprep.subr.bf16.mxu0 0
        %5951 = vmatpush1.bf16.msra.mxu0 0
        %5952 = vmatprep.subr.bf16.mxu0 0
        %5953 = vmatpush1.bf16.msra.mxu0 0
        %5954 = vmatprep.subr.bf16.mxu0 0
        %5955 = vmatpush1.bf16.msra.mxu0 0
        %5956 = vmatprep.subr.bf16.mxu0 0
        %5957 = vmatpush1.bf16.msra.mxu0 0
        %5958 = vmatprep.subr.bf16.mxu0 0
        %5959 = vmatpush1.bf16.msra.mxu0 0
        %5960 = vmatprep.subr.bf16.mxu0 0
        %5961 = vmatpush1.bf16.msra.mxu0 0
        %5962 = vmatprep.subr.bf16.mxu0 0
        %5963 = vmatpush1.bf16.msra.mxu0 0
        %5964 = vmatprep.subr.bf16.mxu0 0
        %5965 = vmatpush1.bf16.msra.mxu0 0
        %5966 = vmatprep.mubr.bf16.mxu0 0
        %5967 = vmatmul.mubr.bf16.gmra.mrb[0].mxu0 %v5779
        %v5968 = vpop.f32.mrb[0].mxu0
        %v5969 = vadd.f32 0.0, %v5968
        %v5970 = vpop.f32.mrb[0].mxu0
        %v5971 = vadd.f32 0.0, %v5970
        %v5972 = vpop.f32.mrb[0].mxu0
        %v5973 = vadd.f32 0.0, %v5972
        %v5974 = vpop.f32.mrb[0].mxu0
        %v5975 = vadd.f32 0.0, %v5974
        %5976 = vdwg.mxu0
        %v5977 = vadd.f32 %v5705, %v5840
        %v5978 = vadd.f32 %v5706, %v5842
        %v5979 = vadd.f32 %v5707, %v5883
        %v5980 = vadd.f32 %v5708, %v5885
        %v5981 = vadd.f32 %v5709, %v5926
        %v5982 = vadd.f32 %v5710, %v5928
        %v5983 = vadd.f32 %v5711, %v5969
        %v5984 = vadd.f32 %v5712, %v5971
        %v5985 = vadd.f32 %v5713, %v5844
        %v5986 = vadd.f32 %v5714, %v5846
        %v5987 = vadd.f32 %v5715, %v5887
        %v5988 = vadd.f32 %v5716, %v5889
        %v5989 = vadd.f32 %v5717, %v5930
        %v5990 = vadd.f32 %v5718, %v5932
        %v5991 = vadd.f32 %v5719, %v5973
        %v5992 = vadd.f32 %v5720, %v5975
        %v5993 = vmul.bf16 %v5138, %v4299
        %v5994 = vmul.bf16 %v5139, %v4301
        %v5995 = vmul.bf16 %v5140, %v4303
        %v5996 = vmul.bf16 %v5141, %v4305
        %v5997 = vmul.bf16 %v5142, %v4298
        %s5998 = scalar_lea.vmem %s3, 64
        %v5999 = vld [vmem:[%s5998] sm:$0xf]
        %v6000 = vld [vmem:[%s5998 + $0x4] sm:$0xf]
        %v6003 = vunpack.c.l.b16 %v5999
        %v6004 = vunpack.c.l.b16 %v6000
        %v6005 = vpack.c.b16 %v6004, %v6003
        %v6011 = vunpack.c.l.b16 %v5993
        %v6012 = vunpack.c.h.b16 %v5993
        %v6013 = vunpack.c.l.b16 %v5994
        %v6014 = vunpack.c.h.b16 %v5994
        %v6015 = vunpack.c.l.b16 %v5995
        %v6016 = vunpack.c.h.b16 %v5995
        %v6017 = vunpack.c.l.b16 %v5996
        %v6018 = vunpack.c.h.b16 %v5996
        %v6019 = vunpack.c.l.b16 %v5997
        %v6020 = vpack.c.b16 %v6011, %v6011
        %v6021 = vpack.c.b16 %v6012, %v6012
        %v6022 = vpack.c.b16 %v6013, %v6013
        %v6023 = vpack.c.b16 %v6014, %v6014
        %v6024 = vpack.c.b16 %v6015, %v6015
        %v6025 = vpack.c.b16 %v6016, %v6016
        %v6026 = vpack.c.b16 %v6017, %v6017
        %v6027 = vpack.c.b16 %v6018, %v6018
        %v6028 = vpack.c.b16 %v6019, %v6019
        %6029 = vrot.lane.b32.xlu0 %v6020, 62
        %v6030 = vpop.permute.xlu0 %6029
        %6031 = vrot.lane.b32.xlu0 %v6021, 62
        %v6032 = vpop.permute.xlu0 %6031
        %6033 = vrot.lane.b32.xlu0 %v6022, 62
        %v6034 = vpop.permute.xlu0 %6033
        %6035 = vrot.lane.b32.xlu0 %v6023, 62
        %v6036 = vpop.permute.xlu0 %6035
        %6037 = vrot.lane.b32.xlu0 %v6024, 62
        %v6038 = vpop.permute.xlu0 %6037
        %6039 = vrot.lane.b32.xlu0 %v6025, 62
        %v6040 = vpop.permute.xlu0 %6039
        %6041 = vrot.lane.b32.xlu0 %v6026, 62
        %v6042 = vpop.permute.xlu0 %6041
        %6043 = vrot.lane.b32.xlu0 %v6027, 62
        %v6044 = vpop.permute.xlu0 %6043
        %6045 = vrot.lane.b32.xlu0 %v6028, 62
        %v6046 = vpop.permute.xlu0 %6045
        %v6047 = vsel %vm3670, %v6030, %v6032
        %v6048 = vsel %vm3670, %v6032, %v6034
        %v6049 = vsel %vm3670, %v6034, %v6036
        %v6050 = vsel %vm3670, %v6036, %v6038
        %v6051 = vsel %vm3670, %v6038, %v6040
        %v6052 = vsel %vm3670, %v6040, %v6042
        %v6053 = vsel %vm3670, %v6042, %v6044
        %v6054 = vsel %vm3670, %v6044, %v6046
        %v6056 = vsel %vm3746, %v6005, 0
        %v6059 = vsel %vm3750, %v6047, 0
        %v6062 = vsel %vm3750, %v6048, 0
        %v6065 = vsel %vm3750, %v6049, 0
        %v6068 = vsel %vm3750, %v6050, 0
        %v6071 = vsel %vm3750, %v6051, 0
        %v6074 = vsel %vm3750, %v6052, 0
        %v6077 = vsel %vm3750, %v6053, 0
        %v6080 = vsel %vm3750, %v6054, 0
        %6082 = vmatprep.subr.bf16.mxu0 %v6062
        %6083 = vmatpush1.bf16.msra.mxu0 %v6059
        %6084 = vmatprep.subr.bf16.mxu0 0
        %6085 = vmatpush1.bf16.msra.mxu0 0
        %6086 = vmatprep.subr.bf16.mxu0 0
        %6087 = vmatpush1.bf16.msra.mxu0 0
        %6088 = vmatprep.subr.bf16.mxu0 0
        %6089 = vmatpush1.bf16.msra.mxu0 0
        %6090 = vmatprep.subr.bf16.mxu0 0
        %6091 = vmatpush1.bf16.msra.mxu0 0
        %6092 = vmatprep.subr.bf16.mxu0 0
        %6093 = vmatpush1.bf16.msra.mxu0 0
        %6094 = vmatprep.subr.bf16.mxu0 0
        %6095 = vmatpush1.bf16.msra.mxu0 0
        %6096 = vmatprep.subr.bf16.mxu0 0
        %6097 = vmatpush1.bf16.msra.mxu0 0
        %6098 = vmatprep.subr.bf16.mxu0 0
        %6099 = vmatpush1.bf16.msra.mxu0 0
        %6100 = vmatprep.subr.bf16.mxu0 0
        %6101 = vmatpush1.bf16.msra.mxu0 0
        %6102 = vmatprep.subr.bf16.mxu0 0
        %6103 = vmatpush1.bf16.msra.mxu0 0
        %6104 = vmatprep.subr.bf16.mxu0 0
        %6105 = vmatpush1.bf16.msra.mxu0 0
        %6106 = vmatprep.subr.bf16.mxu0 0
        %6107 = vmatpush1.bf16.msra.mxu0 0
        %6108 = vmatprep.subr.bf16.mxu0 0
        %6109 = vmatpush1.bf16.msra.mxu0 0
        %6110 = vmatprep.subr.bf16.mxu0 0
        %6111 = vmatpush1.bf16.msra.mxu0 0
        %6112 = vmatprep.subr.bf16.mxu0 0
        %6113 = vmatpush1.bf16.msra.mxu0 0
        %6114 = vmatprep.mubr.bf16.mxu0 0
        %6115 = vmatmul.mubr.bf16.gmra.mrb[0].mxu0 %v6056
        %v6116 = vpop.f32.mrb[0].mxu0
        %v6117 = vadd.f32 0.0, %v6116
        %v6118 = vpop.f32.mrb[0].mxu0
        %v6119 = vadd.f32 0.0, %v6118
        %v6120 = vpop.f32.mrb[0].mxu0
        %v6121 = vadd.f32 0.0, %v6120
        %v6122 = vpop.f32.mrb[0].mxu0
        %v6123 = vadd.f32 0.0, %v6122
        %6124 = vdwg.mxu0
        %6125 = vmatprep.subr.bf16.mxu0 %v6068
        %6126 = vmatpush1.bf16.msra.mxu0 %v6065
        %6127 = vmatprep.subr.bf16.mxu0 0
        %6128 = vmatpush1.bf16.msra.mxu0 0
        %6129 = vmatprep.subr.bf16.mxu0 0
        %6130 = vmatpush1.bf16.msra.mxu0 0
        %6131 = vmatprep.subr.bf16.mxu0 0
        %6132 = vmatpush1.bf16.msra.mxu0 0
        %6133 = vmatprep.subr.bf16.mxu0 0
        %6134 = vmatpush1.bf16.msra.mxu0 0
        %6135 = vmatprep.subr.bf16.mxu0 0
        %6136 = vmatpush1.bf16.msra.mxu0 0
        %6137 = vmatprep.subr.bf16.mxu0 0
        %6138 = vmatpush1.bf16.msra.mxu0 0
        %6139 = vmatprep.subr.bf16.mxu0 0
        %6140 = vmatpush1.bf16.msra.mxu0 0
        %6141 = vmatprep.subr.bf16.mxu0 0
        %6142 = vmatpush1.bf16.msra.mxu0 0
        %6143 = vmatprep.subr.bf16.mxu0 0
        %6144 = vmatpush1.bf16.msra.mxu0 0
        %6145 = vmatprep.subr.bf16.mxu0 0
        %6146 = vmatpush1.bf16.msra.mxu0 0
        %6147 = vmatprep.subr.bf16.mxu0 0
        %6148 = vmatpush1.bf16.msra.mxu0 0
        %6149 = vmatprep.subr.bf16.mxu0 0
        %6150 = vmatpush1.bf16.msra.mxu0 0
        %6151 = vmatprep.subr.bf16.mxu0 0
        %6152 = vmatpush1.bf16.msra.mxu0 0
        %6153 = vmatprep.subr.bf16.mxu0 0
        %6154 = vmatpush1.bf16.msra.mxu0 0
        %6155 = vmatprep.subr.bf16.mxu0 0
        %6156 = vmatpush1.bf16.msra.mxu0 0
        %6157 = vmatprep.mubr.bf16.mxu0 0
        %6158 = vmatmul.mubr.bf16.gmra.mrb[0].mxu0 %v6056
        %v6159 = vpop.f32.mrb[0].mxu0
        %v6160 = vadd.f32 0.0, %v6159
        %v6161 = vpop.f32.mrb[0].mxu0
        %v6162 = vadd.f32 0.0, %v6161
        %v6163 = vpop.f32.mrb[0].mxu0
        %v6164 = vadd.f32 0.0, %v6163
        %v6165 = vpop.f32.mrb[0].mxu0
        %v6166 = vadd.f32 0.0, %v6165
        %6167 = vdwg.mxu0
        %6168 = vmatprep.subr.bf16.mxu0 %v6074
        %6169 = vmatpush1.bf16.msra.mxu0 %v6071
        %6170 = vmatprep.subr.bf16.mxu0 0
        %6171 = vmatpush1.bf16.msra.mxu0 0
        %6172 = vmatprep.subr.bf16.mxu0 0
        %6173 = vmatpush1.bf16.msra.mxu0 0
        %6174 = vmatprep.subr.bf16.mxu0 0
        %6175 = vmatpush1.bf16.msra.mxu0 0
        %6176 = vmatprep.subr.bf16.mxu0 0
        %6177 = vmatpush1.bf16.msra.mxu0 0
        %6178 = vmatprep.subr.bf16.mxu0 0
        %6179 = vmatpush1.bf16.msra.mxu0 0
        %6180 = vmatprep.subr.bf16.mxu0 0
        %6181 = vmatpush1.bf16.msra.mxu0 0
        %6182 = vmatprep.subr.bf16.mxu0 0
        %6183 = vmatpush1.bf16.msra.mxu0 0
        %6184 = vmatprep.subr.bf16.mxu0 0
        %6185 = vmatpush1.bf16.msra.mxu0 0
        %6186 = vmatprep.subr.bf16.mxu0 0
        %6187 = vmatpush1.bf16.msra.mxu0 0
        %6188 = vmatprep.subr.bf16.mxu0 0
        %6189 = vmatpush1.bf16.msra.mxu0 0
        %6190 = vmatprep.subr.bf16.mxu0 0
        %6191 = vmatpush1.bf16.msra.mxu0 0
        %6192 = vmatprep.subr.bf16.mxu0 0
        %6193 = vmatpush1.bf16.msra.mxu0 0
        %6194 = vmatprep.subr.bf16.mxu0 0
        %6195 = vmatpush1.bf16.msra.mxu0 0
        %6196 = vmatprep.subr.bf16.mxu0 0
        %6197 = vmatpush1.bf16.msra.mxu0 0
        %6198 = vmatprep.subr.bf16.mxu0 0
        %6199 = vmatpush1.bf16.msra.mxu0 0
        %6200 = vmatprep.mubr.bf16.mxu0 0
        %6201 = vmatmul.mubr.bf16.gmra.mrb[0].mxu0 %v6056
        %v6202 = vpop.f32.mrb[0].mxu0
        %v6203 = vadd.f32 0.0, %v6202
        %v6204 = vpop.f32.mrb[0].mxu0
        %v6205 = vadd.f32 0.0, %v6204
        %v6206 = vpop.f32.mrb[0].mxu0
        %v6207 = vadd.f32 0.0, %v6206
        %v6208 = vpop.f32.mrb[0].mxu0
        %v6209 = vadd.f32 0.0, %v6208
        %6210 = vdwg.mxu0
        %6211 = vmatprep.subr.bf16.mxu0 %v6080
        %6212 = vmatpush1.bf16.msra.mxu0 %v6077
        %6213 = vmatprep.subr.bf16.mxu0 0
        %6214 = vmatpush1.bf16.msra.mxu0 0
        %6215 = vmatprep.subr.bf16.mxu0 0
        %6216 = vmatpush1.bf16.msra.mxu0 0
        %6217 = vmatprep.subr.bf16.mxu0 0
        %6218 = vmatpush1.bf16.msra.mxu0 0
        %6219 = vmatprep.subr.bf16.mxu0 0
        %6220 = vmatpush1.bf16.msra.mxu0 0
        %6221 = vmatprep.subr.bf16.mxu0 0
        %6222 = vmatpush1.bf16.msra.mxu0 0
        %6223 = vmatprep.subr.bf16.mxu0 0
        %6224 = vmatpush1.bf16.msra.mxu0 0
        %6225 = vmatprep.subr.bf16.mxu0 0
        %6226 = vmatpush1.bf16.msra.mxu0 0
        %6227 = vmatprep.subr.bf16.mxu0 0
        %6228 = vmatpush1.bf16.msra.mxu0 0
        %6229 = vmatprep.subr.bf16.mxu0 0
        %6230 = vmatpush1.bf16.msra.mxu0 0
        %6231 = vmatprep.subr.bf16.mxu0 0
        %6232 = vmatpush1.bf16.msra.mxu0 0
        %6233 = vmatprep.subr.bf16.mxu0 0
        %6234 = vmatpush1.bf16.msra.mxu0 0
        %6235 = vmatprep.subr.bf16.mxu0 0
        %6236 = vmatpush1.bf16.msra.mxu0 0
        %6237 = vmatprep.subr.bf16.mxu0 0
        %6238 = vmatpush1.bf16.msra.mxu0 0
        %6239 = vmatprep.subr.bf16.mxu0 0
        %6240 = vmatpush1.bf16.msra.mxu0 0
        %6241 = vmatprep.subr.bf16.mxu0 0
        %6242 = vmatpush1.bf16.msra.mxu0 0
        %6243 = vmatprep.mubr.bf16.mxu0 0
        %6244 = vmatmul.mubr.bf16.gmra.mrb[0].mxu0 %v6056
        %v6245 = vpop.f32.mrb[0].mxu0
        %v6246 = vadd.f32 0.0, %v6245
        %v6247 = vpop.f32.mrb[0].mxu0
        %v6248 = vadd.f32 0.0, %v6247
        %v6249 = vpop.f32.mrb[0].mxu0
        %v6250 = vadd.f32 0.0, %v6249
        %v6251 = vpop.f32.mrb[0].mxu0
        %v6252 = vadd.f32 0.0, %v6251
        %6253 = vdwg.mxu0
        %v6254 = vadd.f32 %v5977, %v6117
        %v6255 = vadd.f32 %v5978, %v6119
        %v6256 = vadd.f32 %v5979, %v6160
        %v6257 = vadd.f32 %v5980, %v6162
        %v6258 = vadd.f32 %v5981, %v6203
        %v6259 = vadd.f32 %v5982, %v6205
        %v6260 = vadd.f32 %v5983, %v6246
        %v6261 = vadd.f32 %v5984, %v6248
        %v6262 = vadd.f32 %v5985, %v6121
        %v6263 = vadd.f32 %v5986, %v6123
        %v6264 = vadd.f32 %v5987, %v6164
        %v6265 = vadd.f32 %v5988, %v6166
        %v6266 = vadd.f32 %v5989, %v6207
        %v6267 = vadd.f32 %v5990, %v6209
        %v6268 = vadd.f32 %v5991, %v6250
        %v6269 = vadd.f32 %v5992, %v6252
        %6270 = vst [vmem:[#allocation5 + $0x40] sm:$0xff] 0.0
        %6271 = vst [vmem:[#allocation5 + $0x88] sm:$0xff] 0.0
        %6272 = vst [vmem:[#allocation5] sm:$0xff] %v6254
        %6273 = vst [vmem:[#allocation5 + $0x8] sm:$0xff] %v6255
        %6274 = vst [vmem:[#allocation5 + $0x10] sm:$0xff] %v6256
        %6275 = vst [vmem:[#allocation5 + $0x18] sm:$0xff] %v6257
        %6276 = vst [vmem:[#allocation5 + $0x20] sm:$0xff] %v6258
        %6277 = vst [vmem:[#allocation5 + $0x28] sm:$0xff] %v6259
        %6278 = vst [vmem:[#allocation5 + $0x30] sm:$0xff] %v6260
        %6279 = vst [vmem:[#allocation5 + $0x38] sm:$0xff] %v6261
        %6280 = vst [vmem:[#allocation5 + $0x48] sm:$0xff] %v6262
        %6281 = vst [vmem:[#allocation5 + $0x50] sm:$0xff] %v6263
        %6282 = vst [vmem:[#allocation5 + $0x58] sm:$0xff] %v6264
        %6283 = vst [vmem:[#allocation5 + $0x60] sm:$0xff] %v6265
        %6284 = vst [vmem:[#allocation5 + $0x68] sm:$0xff] %v6266
        %6285 = vst [vmem:[#allocation5 + $0x70] sm:$0xff] %v6267
        %6286 = vst [vmem:[#allocation5 + $0x78] sm:$0xff] %v6268
        %6287 = vst [vmem:[#allocation5 + $0x80] sm:$0xff] %v6269
        %v6288 = vld [vmem:[#allocation5] sm:$0xff]
        %v6289 = vld [vmem:[#allocation5 + $0x8] sm:$0xff]
        %v6290 = vld [vmem:[#allocation5 + $0x10] sm:$0xff]
        %v6291 = vld [vmem:[#allocation5 + $0x18] sm:$0xff]
        %v6292 = vld [vmem:[#allocation5 + $0x20] sm:$0xff]
        %v6293 = vld [vmem:[#allocation5 + $0x28] sm:$0xff]
        %v6294 = vld [vmem:[#allocation5 + $0x30] sm:$0xff]
        %v6295 = vld [vmem:[#allocation5 + $0x38] sm:$0xff]
        %v6296 = vld [vmem:[#allocation5 + $0x48] sm:$0xff]
        %v6297 = vld [vmem:[#allocation5 + $0x50] sm:$0xff]
        %v6298 = vld [vmem:[#allocation5 + $0x58] sm:$0xff]
        %v6299 = vld [vmem:[#allocation5 + $0x60] sm:$0xff]
        %v6300 = vld [vmem:[#allocation5 + $0x68] sm:$0xff]
        %v6301 = vld [vmem:[#allocation5 + $0x70] sm:$0xff]
        %v6302 = vld [vmem:[#allocation5 + $0x78] sm:$0xff]
        %v6303 = vld [vmem:[#allocation5 + $0x80] sm:$0xff]
        %v6304 = vld [vmem:[#allocation5] sm:$0xff]
        %v6305 = vld [vmem:[#allocation5 + $0x8] sm:$0xff]
        %v6306 = vld [vmem:[#allocation5 + $0x10] sm:$0xff]
        %v6307 = vld [vmem:[#allocation5 + $0x18] sm:$0xff]
        %v6308 = vld [vmem:[#allocation5 + $0x20] sm:$0xff]
        %v6309 = vld [vmem:[#allocation5 + $0x28] sm:$0xff]
        %v6310 = vld [vmem:[#allocation5 + $0x30] sm:$0xff]
        %v6311 = vld [vmem:[#allocation5 + $0x38] sm:$0xff]
        %v6312 = vld [vmem:[#allocation5 + $0x40] sm:$0xff]
        %v6313 = vld [vmem:[#allocation5 + $0x48] sm:$0xff]
        %v6314 = vld [vmem:[#allocation5 + $0x50] sm:$0xff]
        %v6315 = vld [vmem:[#allocation5 + $0x58] sm:$0xff]
        %v6316 = vld [vmem:[#allocation5 + $0x60] sm:$0xff]
        %v6317 = vld [vmem:[#allocation5 + $0x68] sm:$0xff]
        %v6318 = vld [vmem:[#allocation5 + $0x70] sm:$0xff]
        %v6319 = vld [vmem:[#allocation5 + $0x78] sm:$0xff]
        %v6320 = vld [vmem:[#allocation5 + $0x80] sm:$0xff]
        %v6321 = vld [vmem:[#allocation5 + $0x88] sm:$0xff]
        %6340 = vrot.lane.b32.xlu0 %v6304, 126
        %v6341 = vpop.permute.xlu0 %6340
        %6342 = vrot.lane.b32.xlu0 %v6305, 126
        %v6343 = vpop.permute.xlu0 %6342
        %6344 = vrot.lane.b32.xlu0 %v6306, 126
        %v6345 = vpop.permute.xlu0 %6344
        %6346 = vrot.lane.b32.xlu0 %v6307, 126
        %v6347 = vpop.permute.xlu0 %6346
        %6348 = vrot.lane.b32.xlu0 %v6308, 126
        %v6349 = vpop.permute.xlu0 %6348
        %6350 = vrot.lane.b32.xlu0 %v6309, 126
        %v6351 = vpop.permute.xlu0 %6350
        %6352 = vrot.lane.b32.xlu0 %v6310, 126
        %v6353 = vpop.permute.xlu0 %6352
        %6354 = vrot.lane.b32.xlu0 %v6311, 126
        %v6355 = vpop.permute.xlu0 %6354
        %6356 = vrot.lane.b32.xlu0 %v6312, 126
        %v6357 = vpop.permute.xlu0 %6356
        %6358 = vrot.lane.b32.xlu0 %v6313, 126
        %v6359 = vpop.permute.xlu0 %6358
        %6360 = vrot.lane.b32.xlu0 %v6314, 126
        %v6361 = vpop.permute.xlu0 %6360
        %6362 = vrot.lane.b32.xlu0 %v6315, 126
        %v6363 = vpop.permute.xlu0 %6362
        %6364 = vrot.lane.b32.xlu0 %v6316, 126
        %v6365 = vpop.permute.xlu0 %6364
        %6366 = vrot.lane.b32.xlu0 %v6317, 126
        %v6367 = vpop.permute.xlu0 %6366
        %6368 = vrot.lane.b32.xlu0 %v6318, 126
        %v6369 = vpop.permute.xlu0 %6368
        %6370 = vrot.lane.b32.xlu0 %v6319, 126
        %v6371 = vpop.permute.xlu0 %6370
        %6372 = vrot.lane.b32.xlu0 %v6320, 126
        %v6373 = vpop.permute.xlu0 %6372
        %6374 = vrot.lane.b32.xlu0 %v6321, 126
        %v6375 = vpop.permute.xlu0 %6374
        %vm6376 = vcmask 1031168
        %v6377 = vsel %vm6376, %v6341, %v6343
        %v6378 = vsel %vm6376, %v6343, %v6345
        %v6379 = vsel %vm6376, %v6345, %v6347
        %v6380 = vsel %vm6376, %v6347, %v6349
        %v6381 = vsel %vm6376, %v6349, %v6351
        %v6382 = vsel %vm6376, %v6351, %v6353
        %v6383 = vsel %vm6376, %v6353, %v6355
        %v6384 = vsel %vm6376, %v6355, %v6357
        %v6385 = vsel %vm6376, %v6359, %v6361
        %v6386 = vsel %vm6376, %v6361, %v6363
        %v6387 = vsel %vm6376, %v6363, %v6365
        %v6388 = vsel %vm6376, %v6365, %v6367
        %v6389 = vsel %vm6376, %v6367, %v6369
        %v6390 = vsel %vm6376, %v6369, %v6371
        %v6391 = vsel %vm6376, %v6371, %v6373
        %v6392 = vsel %vm6376, %v6373, %v6375
        %v6409 = vmax.f32 %v6288, %v6377
        %v6410 = vmax.f32 %v6289, %v6378
        %v6411 = vmax.f32 %v6290, %v6379
        %v6412 = vmax.f32 %v6291, %v6380
        %v6413 = vmax.f32 %v6292, %v6381
        %v6414 = vmax.f32 %v6293, %v6382
        %v6415 = vmax.f32 %v6294, %v6383
        %v6416 = vmax.f32 %v6295, %v6384
        %v6417 = vmax.f32 %v6296, %v6385
        %v6418 = vmax.f32 %v6297, %v6386
        %v6419 = vmax.f32 %v6298, %v6387
        %v6420 = vmax.f32 %v6299, %v6388
        %v6421 = vmax.f32 %v6300, %v6389
        %v6422 = vmax.f32 %v6301, %v6390
        %v6423 = vmax.f32 %v6302, %v6391
        %v6424 = vmax.f32 %v6303, %v6392
        %v6427 = vmax.f32 %v6304, %v6377
        %v6428 = vmax.f32 %v6305, %v6378
        %v6429 = vmax.f32 %v6306, %v6379
        %v6430 = vmax.f32 %v6307, %v6380
        %v6431 = vmax.f32 %v6308, %v6381
        %v6432 = vmax.f32 %v6309, %v6382
        %v6433 = vmax.f32 %v6310, %v6383
        %v6434 = vmax.f32 %v6311, %v6384
        %v6435 = vmax.f32 %v6312, %v6357
        %v6436 = vmax.f32 %v6313, %v6385
        %v6437 = vmax.f32 %v6314, %v6386
        %v6438 = vmax.f32 %v6315, %v6387
        %v6439 = vmax.f32 %v6316, %v6388
        %v6440 = vmax.f32 %v6317, %v6389
        %v6441 = vmax.f32 %v6318, %v6390
        %v6442 = vmax.f32 %v6319, %v6391
        %v6443 = vmax.f32 %v6320, %v6392
        %v6444 = vmax.f32 %v6321, %v6375
        %6463 = vrot.lane.b32.xlu0 %v6427, 64
        %v6464 = vpop.permute.xlu0 %6463
        %6465 = vrot.lane.b32.xlu0 %v6428, 64
        %v6466 = vpop.permute.xlu0 %6465
        %6467 = vrot.lane.b32.xlu0 %v6429, 64
        %v6468 = vpop.permute.xlu0 %6467
        %6469 = vrot.lane.b32.xlu0 %v6430, 64
        %v6470 = vpop.permute.xlu0 %6469
        %6471 = vrot.lane.b32.xlu0 %v6431, 64
        %v6472 = vpop.permute.xlu0 %6471
        %6473 = vrot.lane.b32.xlu0 %v6432, 64
        %v6474 = vpop.permute.xlu0 %6473
        %6475 = vrot.lane.b32.xlu0 %v6433, 64
        %v6476 = vpop.permute.xlu0 %6475
        %6477 = vrot.lane.b32.xlu0 %v6434, 64
        %v6478 = vpop.permute.xlu0 %6477
        %6479 = vrot.lane.b32.xlu0 %v6435, 64
        %v6480 = vpop.permute.xlu0 %6479
        %6481 = vrot.lane.b32.xlu0 %v6436, 64
        %v6482 = vpop.permute.xlu0 %6481
        %6483 = vrot.lane.b32.xlu0 %v6437, 64
        %v6484 = vpop.permute.xlu0 %6483
        %6485 = vrot.lane.b32.xlu0 %v6438, 64
        %v6486 = vpop.permute.xlu0 %6485
        %6487 = vrot.lane.b32.xlu0 %v6439, 64
        %v6488 = vpop.permute.xlu0 %6487
        %6489 = vrot.lane.b32.xlu0 %v6440, 64
        %v6490 = vpop.permute.xlu0 %6489
        %6491 = vrot.lane.b32.xlu0 %v6441, 64
        %v6492 = vpop.permute.xlu0 %6491
        %6493 = vrot.lane.b32.xlu0 %v6442, 64
        %v6494 = vpop.permute.xlu0 %6493
        %6495 = vrot.lane.b32.xlu0 %v6443, 64
        %v6496 = vpop.permute.xlu0 %6495
        %6497 = vrot.lane.b32.xlu0 %v6444, 64
        %v6498 = vpop.permute.xlu0 %6497
        %vm6499 = vcmask 523264
        %v6500 = vsel %vm6499, %v6464, %v6466
        %v6501 = vsel %vm6499, %v6466, %v6468
        %v6502 = vsel %vm6499, %v6468, %v6470
        %v6503 = vsel %vm6499, %v6470, %v6472
        %v6504 = vsel %vm6499, %v6472, %v6474
        %v6505 = vsel %vm6499, %v6474, %v6476
        %v6506 = vsel %vm6499, %v6476, %v6478
        %v6507 = vsel %vm6499, %v6478, %v6480
        %v6508 = vsel %vm6499, %v6482, %v6484
        %v6509 = vsel %vm6499, %v6484, %v6486
        %v6510 = vsel %vm6499, %v6486, %v6488
        %v6511 = vsel %vm6499, %v6488, %v6490
        %v6512 = vsel %vm6499, %v6490, %v6492
        %v6513 = vsel %vm6499, %v6492, %v6494
        %v6514 = vsel %vm6499, %v6494, %v6496
        %v6515 = vsel %vm6499, %v6496, %v6498
        %v6532 = vmax.f32 %v6409, %v6500
        %v6533 = vmax.f32 %v6410, %v6501
        %v6534 = vmax.f32 %v6411, %v6502
        %v6535 = vmax.f32 %v6412, %v6503
        %v6536 = vmax.f32 %v6413, %v6504
        %v6537 = vmax.f32 %v6414, %v6505
        %v6538 = vmax.f32 %v6415, %v6506
        %v6539 = vmax.f32 %v6416, %v6507
        %v6540 = vmax.f32 %v6417, %v6508
        %v6541 = vmax.f32 %v6418, %v6509
        %v6542 = vmax.f32 %v6419, %v6510
        %v6543 = vmax.f32 %v6420, %v6511
        %v6544 = vmax.f32 %v6421, %v6512
        %v6545 = vmax.f32 %v6422, %v6513
        %v6546 = vmax.f32 %v6423, %v6514
        %v6547 = vmax.f32 %v6424, %v6515
        %v6548 = vmax.f32 %v6532, 0.0
        %v6549 = vmax.f32 %v6533, 0.0
        %v6550 = vmax.f32 %v6534, 0.0
        %v6551 = vmax.f32 %v6535, 0.0
        %v6552 = vmax.f32 %v6536, 0.0
        %v6553 = vmax.f32 %v6537, 0.0
        %v6554 = vmax.f32 %v6538, 0.0
        %v6555 = vmax.f32 %v6539, 0.0
        %v6556 = vmax.f32 %v6540, 0.0
        %v6557 = vmax.f32 %v6541, 0.0
        %v6558 = vmax.f32 %v6542, 0.0
        %v6559 = vmax.f32 %v6543, 0.0
        %v6560 = vmax.f32 %v6544, 0.0
        %v6561 = vmax.f32 %v6545, 0.0
        %v6562 = vmax.f32 %v6546, 0.0
        %v6563 = vmax.f32 %v6547, 0.0
        %v6564 = vpack.c.bf16 %v6556, %v6548
        %v6565 = vpack.c.bf16 %v6557, %v6549
        %v6566 = vpack.c.bf16 %v6558, %v6550
        %v6567 = vpack.c.bf16 %v6559, %v6551
        %v6568 = vpack.c.bf16 %v6560, %v6552
        %v6569 = vpack.c.bf16 %v6561, %v6553
        %v6570 = vpack.c.bf16 %v6562, %v6554
        %v6571 = vpack.c.bf16 %v6563, %v6555
        %v6572 = vld [vmem:[%s5] sm:$0xf]
        %v6573 = vld [vmem:[%s5 + $0x4] sm:$0xf]
        %v6574 = vld [vmem:[%s5 + $0x8] sm:$0xf]
        %v6575 = vld [vmem:[%s5 + $0xc] sm:$0xf]
        %v6576 = vld [vmem:[%s5 + $0x10] sm:$0xf]
        %v6577 = vld [vmem:[%s5 + $0x14] sm:$0xf]
        %v6578 = vld [vmem:[%s5 + $0x18] sm:$0xf]
        %v6579 = vld [vmem:[%s5 + $0x1c] sm:$0xf]
        %v6580 = vld [vmem:[%s5 + $0x20] sm:$0xf]
        %v6581 = vld [vmem:[%s5 + $0x24] sm:$0xf]
        %v6582 = vld [vmem:[%s5 + $0x28] sm:$0xf]
        %v6583 = vld [vmem:[%s5 + $0x2c] sm:$0xf]
        %v6584 = vld [vmem:[%s5 + $0x30] sm:$0xf]
        %v6585 = vld [vmem:[%s5 + $0x34] sm:$0xf]
        %v6586 = vld [vmem:[%s5 + $0x38] sm:$0xf]
        %v6587 = vld [vmem:[%s5 + $0x3c] sm:$0xf]
        %v6588 = vld [vmem:[%s5 + $0x40] sm:$0xf]
        %v6589 = vld [vmem:[%s5 + $0x44] sm:$0xf]
        %v6590 = vld [vmem:[%s5 + $0x48] sm:$0xf]
        %v6591 = vld [vmem:[%s5 + $0x4c] sm:$0xf]
        %v6592 = vld [vmem:[%s5 + $0x50] sm:$0xf]
        %v6593 = vld [vmem:[%s5 + $0x54] sm:$0xf]
        %v6594 = vld [vmem:[%s5 + $0x58] sm:$0xf]
        %v6595 = vld [vmem:[%s5 + $0x5c] sm:$0xf]
        %v6596 = vld [vmem:[%s5 + $0x60] sm:$0xf]
        %v6597 = vld [vmem:[%s5 + $0x64] sm:$0xf]
        %v6598 = vld [vmem:[%s5 + $0x68] sm:$0xf]
        %v6599 = vld [vmem:[%s5 + $0x6c] sm:$0xf]
        %v6600 = vld [vmem:[%s5 + $0x70] sm:$0xf]
        %v6601 = vld [vmem:[%s5 + $0x74] sm:$0xf]
        %v6602 = vld [vmem:[%s5 + $0x78] sm:$0xf]
        %v6603 = vld [vmem:[%s5 + $0x7c] sm:$0xf]
        %v6604 = vld [vmem:[%s5 + $0x80] sm:$0xf]
        %v6605 = vld [vmem:[%s5 + $0x84] sm:$0xf]
        %v6606 = vld [vmem:[%s5 + $0x88] sm:$0xf]
        %v6607 = vld [vmem:[%s5 + $0x8c] sm:$0xf]
        %v6608 = vld [vmem:[%s5 + $0x90] sm:$0xf]
        %v6609 = vld [vmem:[%s5 + $0x94] sm:$0xf]
        %v6610 = vld [vmem:[%s5 + $0x98] sm:$0xf]
        %v6611 = vld [vmem:[%s5 + $0x9c] sm:$0xf]
        %v6612 = vld [vmem:[%s5 + $0xa0] sm:$0xf]
        %v6613 = vld [vmem:[%s5 + $0xa4] sm:$0xf]
        %v6614 = vld [vmem:[%s5 + $0xa8] sm:$0xf]
        %v6615 = vld [vmem:[%s5 + $0xac] sm:$0xf]
        %v6616 = vld [vmem:[%s5 + $0xb0] sm:$0xf]
        %v6617 = vld [vmem:[%s5 + $0xb4] sm:$0xf]
        %v6618 = vld [vmem:[%s5 + $0xb8] sm:$0xf]
        %v6619 = vld [vmem:[%s5 + $0xbc] sm:$0xf]
        %v6620 = vld [vmem:[%s5 + $0xc0] sm:$0xf]
        %v6621 = vld [vmem:[%s5 + $0xc4] sm:$0xf]
        %v6622 = vld [vmem:[%s5 + $0xc8] sm:$0xf]
        %v6623 = vld [vmem:[%s5 + $0xcc] sm:$0xf]
        %v6624 = vld [vmem:[%s5 + $0xd0] sm:$0xf]
        %v6625 = vld [vmem:[%s5 + $0xd4] sm:$0xf]
        %v6626 = vld [vmem:[%s5 + $0xd8] sm:$0xf]
        %v6627 = vld [vmem:[%s5 + $0xdc] sm:$0xf]
        %v6628 = vld [vmem:[%s5 + $0xe0] sm:$0xf]
        %v6629 = vld [vmem:[%s5 + $0xe4] sm:$0xf]
        %v6630 = vld [vmem:[%s5 + $0xe8] sm:$0xf]
        %v6631 = vld [vmem:[%s5 + $0xec] sm:$0xf]
        %v6632 = vld [vmem:[%s5 + $0xf0] sm:$0xf]
        %v6633 = vld [vmem:[%s5 + $0xf4] sm:$0xf]
        %v6634 = vld [vmem:[%s5 + $0xf8] sm:$0xf]
        %v6635 = vld [vmem:[%s5 + $0xfc] sm:$0xf]
        %v6636 = vld [vmem:[%s5 + $0x100] sm:$0xf]
        %v6637 = vld [vmem:[%s5 + $0x104] sm:$0xf]
        %v6638 = vld [vmem:[%s5 + $0x108] sm:$0xf]
        %v6639 = vld [vmem:[%s5 + $0x10c] sm:$0xf]
        %v6640 = vld [vmem:[%s5 + $0x110] sm:$0xf]
        %v6641 = vld [vmem:[%s5 + $0x114] sm:$0xf]
        %v6642 = vld [vmem:[%s5 + $0x118] sm:$0xf]
        %v6643 = vld [vmem:[%s5 + $0x11c] sm:$0xf]
        %v6644 = vld [vmem:[%s5 + $0x120] sm:$0xf]
        %v6645 = vld [vmem:[%s5 + $0x124] sm:$0xf]
        %v6646 = vld [vmem:[%s5 + $0x128] sm:$0xf]
        %v6647 = vld [vmem:[%s5 + $0x12c] sm:$0xf]
        %v6648 = vld [vmem:[%s5 + $0x130] sm:$0xf]
        %v6649 = vld [vmem:[%s5 + $0x134] sm:$0xf]
        %v6650 = vld [vmem:[%s5 + $0x138] sm:$0xf]
        %v6651 = vld [vmem:[%s5 + $0x13c] sm:$0xf]
        %v6652 = vld [vmem:[%s5 + $0x140] sm:$0xf]
        %v6653 = vld [vmem:[%s5 + $0x144] sm:$0xf]
        %v6654 = vld [vmem:[%s5 + $0x148] sm:$0xf]
        %v6655 = vld [vmem:[%s5 + $0x14c] sm:$0xf]
        %v6656 = vld [vmem:[%s5 + $0x150] sm:$0xf]
        %v6657 = vld [vmem:[%s5 + $0x154] sm:$0xf]
        %v6658 = vld [vmem:[%s5 + $0x158] sm:$0xf]
        %v6659 = vld [vmem:[%s5 + $0x15c] sm:$0xf]
        %v6660 = vld [vmem:[%s5 + $0x160] sm:$0xf]
        %v6661 = vld [vmem:[%s5 + $0x164] sm:$0xf]
        %v6662 = vld [vmem:[%s5 + $0x168] sm:$0xf]
        %v6663 = vld [vmem:[%s5 + $0x16c] sm:$0xf]
        %v6664 = vld [vmem:[%s5 + $0x170] sm:$0xf]
        %v6665 = vld [vmem:[%s5 + $0x174] sm:$0xf]
        %v6666 = vld [vmem:[%s5 + $0x178] sm:$0xf]
        %v6667 = vld [vmem:[%s5 + $0x17c] sm:$0xf]
        %v6668 = vld [vmem:[%s5 + $0x180] sm:$0xf]
        %v6669 = vld [vmem:[%s5 + $0x184] sm:$0xf]
        %v6670 = vld [vmem:[%s5 + $0x188] sm:$0xf]
        %v6671 = vld [vmem:[%s5 + $0x18c] sm:$0xf]
        %v6672 = vld [vmem:[%s5 + $0x190] sm:$0xf]
        %v6673 = vld [vmem:[%s5 + $0x194] sm:$0xf]
        %v6674 = vld [vmem:[%s5 + $0x198] sm:$0xf]
        %v6675 = vld [vmem:[%s5 + $0x19c] sm:$0xf]
        %v6676 = vld [vmem:[%s5 + $0x1a0] sm:$0xf]
        %v6677 = vld [vmem:[%s5 + $0x1a4] sm:$0xf]
        %v6678 = vld [vmem:[%s5 + $0x1a8] sm:$0xf]
        %v6679 = vld [vmem:[%s5 + $0x1ac] sm:$0xf]
        %v6680 = vld [vmem:[%s5 + $0x1b0] sm:$0xf]
        %v6681 = vld [vmem:[%s5 + $0x1b4] sm:$0xf]
        %v6682 = vld [vmem:[%s5 + $0x1b8] sm:$0xf]
        %v6683 = vld [vmem:[%s5 + $0x1bc] sm:$0xf]
        %v6684 = vld [vmem:[%s5 + $0x1c0] sm:$0xf]
        %v6685 = vld [vmem:[%s5 + $0x1c4] sm:$0xf]
        %v6686 = vld [vmem:[%s5 + $0x1c8] sm:$0xf]
        %v6687 = vld [vmem:[%s5 + $0x1cc] sm:$0xf]
        %v6688 = vld [vmem:[%s5 + $0x1d0] sm:$0xf]
        %v6689 = vld [vmem:[%s5 + $0x1d4] sm:$0xf]
        %v6690 = vld [vmem:[%s5 + $0x1d8] sm:$0xf]
        %v6691 = vld [vmem:[%s5 + $0x1dc] sm:$0xf]
        %v6692 = vld [vmem:[%s5 + $0x1e0] sm:$0xf]
        %v6693 = vld [vmem:[%s5 + $0x1e4] sm:$0xf]
        %v6694 = vld [vmem:[%s5 + $0x1e8] sm:$0xf]
        %v6695 = vld [vmem:[%s5 + $0x1ec] sm:$0xf]
        %v6696 = vld [vmem:[%s5 + $0x1f0] sm:$0xf]
        %v6697 = vld [vmem:[%s5 + $0x1f4] sm:$0xf]
        %v6698 = vld [vmem:[%s5 + $0x1f8] sm:$0xf]
        %v6699 = vld [vmem:[%s5 + $0x1fc] sm:$0xf]
        %v6828 = vunpack.c.l.b16 %v6572
        %v6829 = vunpack.c.l.b16 %v6573
        %v6830 = vunpack.c.l.b16 %v6574
        %v6831 = vunpack.c.l.b16 %v6575
        %v6832 = vunpack.c.l.b16 %v6576
        %v6833 = vunpack.c.l.b16 %v6577
        %v6834 = vunpack.c.l.b16 %v6578
        %v6835 = vunpack.c.l.b16 %v6579
        %v6836 = vunpack.c.l.b16 %v6580
        %v6837 = vunpack.c.l.b16 %v6581
        %v6838 = vunpack.c.l.b16 %v6582
        %v6839 = vunpack.c.l.b16 %v6583
        %v6840 = vunpack.c.l.b16 %v6584
        %v6841 = vunpack.c.l.b16 %v6585
        %v6842 = vunpack.c.l.b16 %v6586
        %v6843 = vunpack.c.l.b16 %v6587
        %v6844 = vunpack.c.l.b16 %v6588
        %v6845 = vunpack.c.l.b16 %v6589
        %v6846 = vunpack.c.l.b16 %v6590
        %v6847 = vunpack.c.l.b16 %v6591
        %v6848 = vunpack.c.l.b16 %v6592
        %v6849 = vunpack.c.l.b16 %v6593
        %v6850 = vunpack.c.l.b16 %v6594
        %v6851 = vunpack.c.l.b16 %v6595
        %v6852 = vunpack.c.l.b16 %v6596
        %v6853 = vunpack.c.l.b16 %v6597
        %v6854 = vunpack.c.l.b16 %v6598
        %v6855 = vunpack.c.l.b16 %v6599
        %v6856 = vunpack.c.l.b16 %v6600
        %v6857 = vunpack.c.l.b16 %v6601
        %v6858 = vunpack.c.l.b16 %v6602
        %v6859 = vunpack.c.l.b16 %v6603
        %v6860 = vunpack.c.l.b16 %v6604
        %v6861 = vunpack.c.l.b16 %v6605
        %v6862 = vunpack.c.l.b16 %v6606
        %v6863 = vunpack.c.l.b16 %v6607
        %v6864 = vunpack.c.l.b16 %v6608
        %v6865 = vunpack.c.l.b16 %v6609
        %v6866 = vunpack.c.l.b16 %v6610
        %v6867 = vunpack.c.l.b16 %v6611
        %v6868 = vunpack.c.l.b16 %v6612
        %v6869 = vunpack.c.l.b16 %v6613
        %v6870 = vunpack.c.l.b16 %v6614
        %v6871 = vunpack.c.l.b16 %v6615
        %v6872 = vunpack.c.l.b16 %v6616
        %v6873 = vunpack.c.l.b16 %v6617
        %v6874 = vunpack.c.l.b16 %v6618
        %v6875 = vunpack.c.l.b16 %v6619
        %v6876 = vunpack.c.l.b16 %v6620
        %v6877 = vunpack.c.l.b16 %v6621
        %v6878 = vunpack.c.l.b16 %v6622
        %v6879 = vunpack.c.l.b16 %v6623
        %v6880 = vunpack.c.l.b16 %v6624
        %v6881 = vunpack.c.l.b16 %v6625
        %v6882 = vunpack.c.l.b16 %v6626
        %v6883 = vunpack.c.l.b16 %v6627
        %v6884 = vunpack.c.l.b16 %v6628
        %v6885 = vunpack.c.l.b16 %v6629
        %v6886 = vunpack.c.l.b16 %v6630
        %v6887 = vunpack.c.l.b16 %v6631
        %v6888 = vunpack.c.l.b16 %v6632
        %v6889 = vunpack.c.l.b16 %v6633
        %v6890 = vunpack.c.l.b16 %v6634
        %v6891 = vunpack.c.l.b16 %v6635
        %v6892 = vunpack.c.l.b16 %v6636
        %v6893 = vunpack.c.l.b16 %v6637
        %v6894 = vunpack.c.l.b16 %v6638
        %v6895 = vunpack.c.l.b16 %v6639
        %v6896 = vunpack.c.l.b16 %v6640
        %v6897 = vunpack.c.l.b16 %v6641
        %v6898 = vunpack.c.l.b16 %v6642
        %v6899 = vunpack.c.l.b16 %v6643
        %v6900 = vunpack.c.l.b16 %v6644
        %v6901 = vunpack.c.l.b16 %v6645
        %v6902 = vunpack.c.l.b16 %v6646
        %v6903 = vunpack.c.l.b16 %v6647
        %v6904 = vunpack.c.l.b16 %v6648
        %v6905 = vunpack.c.l.b16 %v6649
        %v6906 = vunpack.c.l.b16 %v6650
        %v6907 = vunpack.c.l.b16 %v6651
        %v6908 = vunpack.c.l.b16 %v6652
        %v6909 = vunpack.c.l.b16 %v6653
        %v6910 = vunpack.c.l.b16 %v6654
        %v6911 = vunpack.c.l.b16 %v6655
        %v6912 = vunpack.c.l.b16 %v6656
        %v6913 = vunpack.c.l.b16 %v6657
        %v6914 = vunpack.c.l.b16 %v6658
        %v6915 = vunpack.c.l.b16 %v6659
        %v6916 = vunpack.c.l.b16 %v6660
        %v6917 = vunpack.c.l.b16 %v6661
        %v6918 = vunpack.c.l.b16 %v6662
        %v6919 = vunpack.c.l.b16 %v6663
        %v6920 = vunpack.c.l.b16 %v6664
        %v6921 = vunpack.c.l.b16 %v6665
        %v6922 = vunpack.c.l.b16 %v6666
        %v6923 = vunpack.c.l.b16 %v6667
        %v6924 = vunpack.c.l.b16 %v6668
        %v6925 = vunpack.c.l.b16 %v6669
        %v6926 = vunpack.c.l.b16 %v6670
        %v6927 = vunpack.c.l.b16 %v6671
        %v6928 = vunpack.c.l.b16 %v6672
        %v6929 = vunpack.c.l.b16 %v6673
        %v6930 = vunpack.c.l.b16 %v6674
        %v6931 = vunpack.c.l.b16 %v6675
        %v6932 = vunpack.c.l.b16 %v6676
        %v6933 = vunpack.c.l.b16 %v6677
        %v6934 = vunpack.c.l.b16 %v6678
        %v6935 = vunpack.c.l.b16 %v6679
        %v6936 = vunpack.c.l.b16 %v6680
        %v6937 = vunpack.c.l.b16 %v6681
        %v6938 = vunpack.c.l.b16 %v6682
        %v6939 = vunpack.c.l.b16 %v6683
        %v6940 = vunpack.c.l.b16 %v6684
        %v6941 = vunpack.c.l.b16 %v6685
        %v6942 = vunpack.c.l.b16 %v6686
        %v6943 = vunpack.c.l.b16 %v6687
        %v6944 = vunpack.c.l.b16 %v6688
        %v6945 = vunpack.c.l.b16 %v6689
        %v6946 = vunpack.c.l.b16 %v6690
        %v6947 = vunpack.c.l.b16 %v6691
        %v6948 = vunpack.c.l.b16 %v6692
        %v6949 = vunpack.c.l.b16 %v6693
        %v6950 = vunpack.c.l.b16 %v6694
        %v6951 = vunpack.c.l.b16 %v6695
        %v6952 = vunpack.c.l.b16 %v6696
        %v6953 = vunpack.c.l.b16 %v6697
        %v6954 = vunpack.c.l.b16 %v6698
        %v6955 = vunpack.c.l.b16 %v6699
        %v6956 = vpack.c.b16 %v6829, %v6828
        %v6957 = vpack.c.b16 %v6831, %v6830
        %v6958 = vpack.c.b16 %v6833, %v6832
        %v6959 = vpack.c.b16 %v6835, %v6834
        %v6960 = vpack.c.b16 %v6837, %v6836
        %v6961 = vpack.c.b16 %v6839, %v6838
        %v6962 = vpack.c.b16 %v6841, %v6840
        %v6963 = vpack.c.b16 %v6843, %v6842
        %v6964 = vpack.c.b16 %v6845, %v6844
        %v6965 = vpack.c.b16 %v6847, %v6846
        %v6966 = vpack.c.b16 %v6849, %v6848
        %v6967 = vpack.c.b16 %v6851, %v6850
        %v6968 = vpack.c.b16 %v6853, %v6852
        %v6969 = vpack.c.b16 %v6855, %v6854
        %v6970 = vpack.c.b16 %v6857, %v6856
        %v6971 = vpack.c.b16 %v6859, %v6858
        %v6972 = vpack.c.b16 %v6861, %v6860
        %v6973 = vpack.c.b16 %v6863, %v6862
        %v6974 = vpack.c.b16 %v6865, %v6864
        %v6975 = vpack.c.b16 %v6867, %v6866
        %v6976 = vpack.c.b16 %v6869, %v6868
        %v6977 = vpack.c.b16 %v6871, %v6870
        %v6978 = vpack.c.b16 %v6873, %v6872
        %v6979 = vpack.c.b16 %v6875, %v6874
        %v6980 = vpack.c.b16 %v6877, %v6876
        %v6981 = vpack.c.b16 %v6879, %v6878
        %v6982 = vpack.c.b16 %v6881, %v6880
        %v6983 = vpack.c.b16 %v6883, %v6882
        %v6984 = vpack.c.b16 %v6885, %v6884
        %v6985 = vpack.c.b16 %v6887, %v6886
        %v6986 = vpack.c.b16 %v6889, %v6888
        %v6987 = vpack.c.b16 %v6891, %v6890
        %v6988 = vpack.c.b16 %v6893, %v6892
        %v6989 = vpack.c.b16 %v6895, %v6894
        %v6990 = vpack.c.b16 %v6897, %v6896
        %v6991 = vpack.c.b16 %v6899, %v6898
        %v6992 = vpack.c.b16 %v6901, %v6900
        %v6993 = vpack.c.b16 %v6903, %v6902
        %v6994 = vpack.c.b16 %v6905, %v6904
        %v6995 = vpack.c.b16 %v6907, %v6906
        %v6996 = vpack.c.b16 %v6909, %v6908
        %v6997 = vpack.c.b16 %v6911, %v6910
        %v6998 = vpack.c.b16 %v6913, %v6912
        %v6999 = vpack.c.b16 %v6915, %v6914
        %v7000 = vpack.c.b16 %v6917, %v6916
        %v7001 = vpack.c.b16 %v6919, %v6918
        %v7002 = vpack.c.b16 %v6921, %v6920
        %v7003 = vpack.c.b16 %v6923, %v6922
        %v7004 = vpack.c.b16 %v6925, %v6924
        %v7005 = vpack.c.b16 %v6927, %v6926
        %v7006 = vpack.c.b16 %v6929, %v6928
        %v7007 = vpack.c.b16 %v6931, %v6930
        %v7008 = vpack.c.b16 %v6933, %v6932
        %v7009 = vpack.c.b16 %v6935, %v6934
        %v7010 = vpack.c.b16 %v6937, %v6936
        %v7011 = vpack.c.b16 %v6939, %v6938
        %v7012 = vpack.c.b16 %v6941, %v6940
        %v7013 = vpack.c.b16 %v6943, %v6942
        %v7014 = vpack.c.b16 %v6945, %v6944
        %v7015 = vpack.c.b16 %v6947, %v6946
        %v7016 = vpack.c.b16 %v6949, %v6948
        %v7017 = vpack.c.b16 %v6951, %v6950
        %v7018 = vpack.c.b16 %v6953, %v6952
        %v7019 = vpack.c.b16 %v6955, %v6954
        %7084 = vmatprep.subr.bf16.mxu0 0
        %7085 = vmatpush1.bf16.msra.mxu0 %v6956
        %7086 = vmatprep.subr.bf16.mxu0 0
        %7087 = vmatpush1.bf16.msra.mxu0 %v6957
        %7088 = vmatprep.subr.bf16.mxu0 0
        %7089 = vmatpush1.bf16.msra.mxu0 %v6958
        %7090 = vmatprep.subr.bf16.mxu0 0
        %7091 = vmatpush1.bf16.msra.mxu0 %v6959
        %7092 = vmatprep.subr.bf16.mxu0 0
        %7093 = vmatpush1.bf16.msra.mxu0 %v6960
        %7094 = vmatprep.subr.bf16.mxu0 0
        %7095 = vmatpush1.bf16.msra.mxu0 %v6961
        %7096 = vmatprep.subr.bf16.mxu0 0
        %7097 = vmatpush1.bf16.msra.mxu0 %v6962
        %7098 = vmatprep.subr.bf16.mxu0 0
        %7099 = vmatpush1.bf16.msra.mxu0 %v6963
        %7100 = vmatprep.subr.bf16.mxu0 0
        %7101 = vmatpush1.bf16.msra.mxu0 %v6964
        %7102 = vmatprep.subr.bf16.mxu0 0
        %7103 = vmatpush1.bf16.msra.mxu0 %v6965
        %7104 = vmatprep.subr.bf16.mxu0 0
        %7105 = vmatpush1.bf16.msra.mxu0 %v6966
        %7106 = vmatprep.subr.bf16.mxu0 0
        %7107 = vmatpush1.bf16.msra.mxu0 %v6967
        %7108 = vmatprep.subr.bf16.mxu0 0
        %7109 = vmatpush1.bf16.msra.mxu0 %v6968
        %7110 = vmatprep.subr.bf16.mxu0 0
        %7111 = vmatpush1.bf16.msra.mxu0 %v6969
        %7112 = vmatprep.subr.bf16.mxu0 0
        %7113 = vmatpush1.bf16.msra.mxu0 %v6970
        %7114 = vmatprep.subr.bf16.mxu0 0
        %7115 = vmatpush1.bf16.msra.mxu0 %v6971
        %7116 = vmatprep.mubr.bf16.mxu0 %v6565
        %7117 = vmatmul.mubr.bf16.gmra.mrb[0].mxu0 %v6564
        %v7118 = vpop.f32.mrb[0].mxu0
        %v7119 = vadd.f32 0.0, %v7118
        %v7120 = vpop.f32.mrb[0].mxu0
        %v7121 = vpop.f32.mrb[0].mxu0
        %v7122 = vadd.f32 0.0, %v7121
        %v7123 = vpop.f32.mrb[0].mxu0
        %7124 = vdwg.mxu0
        %7125 = vmatprep.subr.bf16.mxu0 0
        %7126 = vmatpush1.bf16.msra.mxu0 %v6972
        %7127 = vmatprep.subr.bf16.mxu0 0
        %7128 = vmatpush1.bf16.msra.mxu0 %v6973
        %7129 = vmatprep.subr.bf16.mxu0 0
        %7130 = vmatpush1.bf16.msra.mxu0 %v6974
        %7131 = vmatprep.subr.bf16.mxu0 0
        %7132 = vmatpush1.bf16.msra.mxu0 %v6975
        %7133 = vmatprep.subr.bf16.mxu0 0
        %7134 = vmatpush1.bf16.msra.mxu0 %v6976
        %7135 = vmatprep.subr.bf16.mxu0 0
        %7136 = vmatpush1.bf16.msra.mxu0 %v6977
        %7137 = vmatprep.subr.bf16.mxu0 0
        %7138 = vmatpush1.bf16.msra.mxu0 %v6978
        %7139 = vmatprep.subr.bf16.mxu0 0
        %7140 = vmatpush1.bf16.msra.mxu0 %v6979
        %7141 = vmatprep.subr.bf16.mxu0 0
        %7142 = vmatpush1.bf16.msra.mxu0 %v6980
        %7143 = vmatprep.subr.bf16.mxu0 0
        %7144 = vmatpush1.bf16.msra.mxu0 %v6981
        %7145 = vmatprep.subr.bf16.mxu0 0
        %7146 = vmatpush1.bf16.msra.mxu0 %v6982
        %7147 = vmatprep.subr.bf16.mxu0 0
        %7148 = vmatpush1.bf16.msra.mxu0 %v6983
        %7149 = vmatprep.subr.bf16.mxu0 0
        %7150 = vmatpush1.bf16.msra.mxu0 %v6984
        %7151 = vmatprep.subr.bf16.mxu0 0
        %7152 = vmatpush1.bf16.msra.mxu0 %v6985
        %7153 = vmatprep.subr.bf16.mxu0 0
        %7154 = vmatpush1.bf16.msra.mxu0 %v6986
        %7155 = vmatprep.subr.bf16.mxu0 0
        %7156 = vmatpush1.bf16.msra.mxu0 %v6987
        %7157 = vmatprep.mubr.bf16.mxu0 %v6567
        %7158 = vmatmul.mubr.bf16.gmra.mrb[0].mxu0 %v6566
        %v7159 = vpop.f32.mrb[0].mxu0
        %v7160 = vadd.f32 %v7119, %v7159
        %v7161 = vpop.f32.mrb[0].mxu0
        %v7162 = vpop.f32.mrb[0].mxu0
        %v7163 = vadd.f32 %v7122, %v7162
        %v7164 = vpop.f32.mrb[0].mxu0
        %7165 = vdwg.mxu0
        %7166 = vmatprep.subr.bf16.mxu0 0
        %7167 = vmatpush1.bf16.msra.mxu0 %v6988
        %7168 = vmatprep.subr.bf16.mxu0 0
        %7169 = vmatpush1.bf16.msra.mxu0 %v6989
        %7170 = vmatprep.subr.bf16.mxu0 0
        %7171 = vmatpush1.bf16.msra.mxu0 %v6990
        %7172 = vmatprep.subr.bf16.mxu0 0
        %7173 = vmatpush1.bf16.msra.mxu0 %v6991
        %7174 = vmatprep.subr.bf16.mxu0 0
        %7175 = vmatpush1.bf16.msra.mxu0 %v6992
        %7176 = vmatprep.subr.bf16.mxu0 0
        %7177 = vmatpush1.bf16.msra.mxu0 %v6993
        %7178 = vmatprep.subr.bf16.mxu0 0
        %7179 = vmatpush1.bf16.msra.mxu0 %v6994
        %7180 = vmatprep.subr.bf16.mxu0 0
        %7181 = vmatpush1.bf16.msra.mxu0 %v6995
        %7182 = vmatprep.subr.bf16.mxu0 0
        %7183 = vmatpush1.bf16.msra.mxu0 %v6996
        %7184 = vmatprep.subr.bf16.mxu0 0
        %7185 = vmatpush1.bf16.msra.mxu0 %v6997
        %7186 = vmatprep.subr.bf16.mxu0 0
        %7187 = vmatpush1.bf16.msra.mxu0 %v6998
        %7188 = vmatprep.subr.bf16.mxu0 0
        %7189 = vmatpush1.bf16.msra.mxu0 %v6999
        %7190 = vmatprep.subr.bf16.mxu0 0
        %7191 = vmatpush1.bf16.msra.mxu0 %v7000
        %7192 = vmatprep.subr.bf16.mxu0 0
        %7193 = vmatpush1.bf16.msra.mxu0 %v7001
        %7194 = vmatprep.subr.bf16.mxu0 0
        %7195 = vmatpush1.bf16.msra.mxu0 %v7002
        %7196 = vmatprep.subr.bf16.mxu0 0
        %7197 = vmatpush1.bf16.msra.mxu0 %v7003
        %7198 = vmatprep.mubr.bf16.mxu0 %v6569
        %7199 = vmatmul.mubr.bf16.gmra.mrb[0].mxu0 %v6568
        %v7200 = vpop.f32.mrb[0].mxu0
        %v7201 = vadd.f32 %v7160, %v7200
        %v7202 = vpop.f32.mrb[0].mxu0
        %v7203 = vpop.f32.mrb[0].mxu0
        %v7204 = vadd.f32 %v7163, %v7203
        %v7205 = vpop.f32.mrb[0].mxu0
        %7206 = vdwg.mxu0
        %7207 = vmatprep.subr.bf16.mxu0 0
        %7208 = vmatpush1.bf16.msra.mxu0 %v7004
        %7209 = vmatprep.subr.bf16.mxu0 0
        %7210 = vmatpush1.bf16.msra.mxu0 %v7005
        %7211 = vmatprep.subr.bf16.mxu0 0
        %7212 = vmatpush1.bf16.msra.mxu0 %v7006
        %7213 = vmatprep.subr.bf16.mxu0 0
        %7214 = vmatpush1.bf16.msra.mxu0 %v7007
        %7215 = vmatprep.subr.bf16.mxu0 0
        %7216 = vmatpush1.bf16.msra.mxu0 %v7008
        %7217 = vmatprep.subr.bf16.mxu0 0
        %7218 = vmatpush1.bf16.msra.mxu0 %v7009
        %7219 = vmatprep.subr.bf16.mxu0 0
        %7220 = vmatpush1.bf16.msra.mxu0 %v7010
        %7221 = vmatprep.subr.bf16.mxu0 0
        %7222 = vmatpush1.bf16.msra.mxu0 %v7011
        %7223 = vmatprep.subr.bf16.mxu0 0
        %7224 = vmatpush1.bf16.msra.mxu0 %v7012
        %7225 = vmatprep.subr.bf16.mxu0 0
        %7226 = vmatpush1.bf16.msra.mxu0 %v7013
        %7227 = vmatprep.subr.bf16.mxu0 0
        %7228 = vmatpush1.bf16.msra.mxu0 %v7014
        %7229 = vmatprep.subr.bf16.mxu0 0
        %7230 = vmatpush1.bf16.msra.mxu0 %v7015
        %7231 = vmatprep.subr.bf16.mxu0 0
        %7232 = vmatpush1.bf16.msra.mxu0 %v7016
        %7233 = vmatprep.subr.bf16.mxu0 0
        %7234 = vmatpush1.bf16.msra.mxu0 %v7017
        %7235 = vmatprep.subr.bf16.mxu0 0
        %7236 = vmatpush1.bf16.msra.mxu0 %v7018
        %7237 = vmatprep.subr.bf16.mxu0 0
        %7238 = vmatpush1.bf16.msra.mxu0 %v7019
        %7239 = vmatprep.mubr.bf16.mxu0 %v6571
        %7240 = vmatmul.mubr.bf16.gmra.mrb[0].mxu0 %v6570
        %v7241 = vpop.f32.mrb[0].mxu0
        %v7242 = vadd.f32 %v7201, %v7241
        %v7243 = vpop.f32.mrb[0].mxu0
        %v7244 = vpop.f32.mrb[0].mxu0
        %v7245 = vadd.f32 %v7204, %v7244
        %v7246 = vpop.f32.mrb[0].mxu0
        %7247 = vdwg.mxu0
        %v7248 = vpack.c.bf16 %v7245, %v7242
        %7249 = vst.msk [vmem:[#allocation6] sm:$0xff] %vm6499, %v7248
        %v7250 = vld [vmem:[#allocation6] sm:$0x1]
        %vm7251 = vcmask 516096
        %vm7252 = vsmask.f32 256
        %vm7253 = vmand %vm7251, %vm7252
        %v7254 = vld [vmem:[#allocation7] sm:$0x1]
        %v7255 = vsel %vm7253, %v7250, %v7254
        %7256 = vst [vmem:[#allocation7] sm:$0x1] %v7255
        %v7257 = vld [vmem:[#allocation6] sm:$0x1]
        %v7260 = vunpack.c.l.s4 1966171168
        %v7261 = vunpack.c.0.s8 %v7260
        %v7262 = vlaneseq
        %v7263 = vshrl.u32 %v7262, 7
        %v7264 = vsub.s32 %v7261, %v7263
        %v7265 = vrot.slane %v7257, %v7264
        %v7267 = vunpack.c.l.s4 1966171168
        %v7268 = vunpack.c.0.s8 %v7267
        %v7269 = vlaneseq
        %v7270 = vshrl.u32 %v7269, 7
        %v7271 = vsub.s32 %v7268, %v7270
        %v7272 = vrot.slane %v7265, %v7271
        %v7274 = vshrl.u32 %v7272, 16
        %v7276 = vrot.slane %v7274, 7
        %v7277 = vrot.slane %v7276, 1
        %7278 = vrot.lane.b32.xlu0 %v7277, 64
        %v7279 = vpop.permute.xlu0 %7278
        %vm7281 = vcmask 1040896
        %vm7282 = vmand %vm7281, %vm7252
        %v7283 = vld [vmem:[#allocation7] sm:$0x1]
        %v7284 = vsel %vm7282, %v7279, %v7283
        %7285 = vst [vmem:[#allocation7] sm:$0x1] %v7284
        %v7286 = vld [vmem:[#allocation6] sm:$0x2]
        %v7289 = vunpack.c.l.s4 1966171168
        %v7290 = vunpack.c.0.s8 %v7289
        %v7291 = vlaneseq
        %v7292 = vshrl.u32 %v7291, 7
        %v7293 = vsub.s32 %v7290, %v7292
        %v7294 = vrot.slane %v7286, %v7293
        %v7295 = vcombine.high %v7294, %v7294
        %v7297 = vunpack.c.l.s4 1966171168
        %v7298 = vunpack.c.0.s8 %v7297
        %v7299 = vlaneseq
        %v7300 = vshrl.u32 %v7299, 7
        %v7301 = vsub.s32 %v7298, %v7300
        %v7302 = vrot.slane %v7295, %v7301
        %v7304 = vld [vmem:[#allocation7 + $0x1] sm:$0x1]
        %v7305 = vsel %vm7253, %v7302, %v7304
        %7306 = vst [vmem:[#allocation7 + $0x1] sm:$0x1] %v7305
        %v7307 = vld [vmem:[#allocation6] sm:$0x2]
        %v7310 = vunpack.c.l.s4 1966171168
        %v7311 = vunpack.c.0.s8 %v7310
        %v7312 = vlaneseq
        %v7313 = vshrl.u32 %v7312, 7
        %v7314 = vsub.s32 %v7311, %v7313
        %v7315 = vrot.slane %v7307, %v7314
        %v7316 = vcombine.high %v7315, %v7315
        %v7318 = vunpack.c.l.s4 1966171168
        %v7319 = vunpack.c.0.s8 %v7318
        %v7320 = vlaneseq
        %v7321 = vshrl.u32 %v7320, 7
        %v7322 = vsub.s32 %v7319, %v7321
        %v7323 = vrot.slane %v7316, %v7322
        %v7325 = vshrl.u32 %v7323, 16
        %v7327 = vrot.slane %v7325, 7
        %v7328 = vrot.slane %v7327, 1
        %7329 = vrot.lane.b32.xlu0 %v7328, 64
        %v7330 = vpop.permute.xlu0 %7329
        %v7332 = vld [vmem:[#allocation7 + $0x1] sm:$0x1]
        %v7333 = vsel %vm7282, %v7330, %v7332
        %7334 = vst [vmem:[#allocation7 + $0x1] sm:$0x1] %v7333
        %v7335 = vld [vmem:[#allocation6] sm:$0x4]
        %v7338 = vunpack.c.l.s4 1966171168
        %v7339 = vunpack.c.0.s8 %v7338
        %v7340 = vlaneseq
        %v7341 = vshrl.u32 %v7340, 7
        %v7342 = vsub.s32 %v7339, %v7341
        %v7343 = vrot.slane %v7335, %v7342
        %v7345 = vunpack.c.l.s4 1966171168
        %v7346 = vunpack.c.0.s8 %v7345
        %v7347 = vlaneseq
        %v7348 = vshrl.u32 %v7347, 7
        %v7349 = vsub.s32 %v7346, %v7348
        %v7350 = vrot.slane %v7343, %v7349
        %v7351 = vcombine.high %v7350, %v7350
        %v7353 = vld [vmem:[#allocation7 + $0x2] sm:$0x1]
        %v7354 = vsel %vm7253, %v7351, %v7353
        %7355 = vst [vmem:[#allocation7 + $0x2] sm:$0x1] %v7354
        %v7356 = vld [vmem:[#allocation6] sm:$0x4]
        %v7359 = vunpack.c.l.s4 1966171168
        %v7360 = vunpack.c.0.s8 %v7359
        %v7361 = vlaneseq
        %v7362 = vshrl.u32 %v7361, 7
        %v7363 = vsub.s32 %v7360, %v7362
        %v7364 = vrot.slane %v7356, %v7363
        %v7366 = vunpack.c.l.s4 1966171168
        %v7367 = vunpack.c.0.s8 %v7366
        %v7368 = vlaneseq
        %v7369 = vshrl.u32 %v7368, 7
        %v7370 = vsub.s32 %v7367, %v7369
        %v7371 = vrot.slane %v7364, %v7370
        %v7372 = vcombine.high %v7371, %v7371
        %v7374 = vshrl.u32 %v7372, 16
        %v7376 = vrot.slane %v7374, 7
        %v7377 = vrot.slane %v7376, 1
        %7378 = vrot.lane.b32.xlu0 %v7377, 64
        %v7379 = vpop.permute.xlu0 %7378
        %v7381 = vld [vmem:[#allocation7 + $0x2] sm:$0x1]
        %v7382 = vsel %vm7282, %v7379, %v7381
        %7383 = vst [vmem:[#allocation7 + $0x2] sm:$0x1] %v7382
        %v7384 = vld [vmem:[#allocation6] sm:$0x8]
        %v7387 = vunpack.c.l.s4 1966171168
        %v7388 = vunpack.c.0.s8 %v7387
        %v7389 = vlaneseq
        %v7390 = vshrl.u32 %v7389, 7
        %v7391 = vsub.s32 %v7388, %v7390
        %v7392 = vrot.slane %v7384, %v7391
        %v7393 = vcombine.high %v7392, %v7392
        %v7395 = vunpack.c.l.s4 1966171168
        %v7396 = vunpack.c.0.s8 %v7395
        %v7397 = vlaneseq
        %v7398 = vshrl.u32 %v7397, 7
        %v7399 = vsub.s32 %v7396, %v7398
        %v7400 = vrot.slane %v7393, %v7399
        %v7401 = vcombine.high %v7400, %v7400
        %v7403 = vld [vmem:[#allocation7 + $0x3] sm:$0x1]
        %v7404 = vsel %vm7253, %v7401, %v7403
        %7405 = vst [vmem:[#allocation7 + $0x3] sm:$0x1] %v7404
        %v7406 = vld [vmem:[#allocation6] sm:$0x8]
        %v7409 = vunpack.c.l.s4 1966171168
        %v7410 = vunpack.c.0.s8 %v7409
        %v7411 = vlaneseq
        %v7412 = vshrl.u32 %v7411, 7
        %v7413 = vsub.s32 %v7410, %v7412
        %v7414 = vrot.slane %v7406, %v7413
        %v7415 = vcombine.high %v7414, %v7414
        %v7417 = vunpack.c.l.s4 1966171168
        %v7418 = vunpack.c.0.s8 %v7417
        %v7419 = vlaneseq
        %v7420 = vshrl.u32 %v7419, 7
        %v7421 = vsub.s32 %v7418, %v7420
        %v7422 = vrot.slane %v7415, %v7421
        %v7423 = vcombine.high %v7422, %v7422
        %v7425 = vshrl.u32 %v7423, 16
        %v7427 = vrot.slane %v7425, 7
        %v7428 = vrot.slane %v7427, 1
        %7429 = vrot.lane.b32.xlu0 %v7428, 64
        %v7430 = vpop.permute.xlu0 %7429
        %v7432 = vld [vmem:[#allocation7 + $0x3] sm:$0x1]
        %v7433 = vsel %vm7282, %v7430, %v7432
        %7434 = vst [vmem:[#allocation7 + $0x3] sm:$0x1] %v7433
        %v7435 = vld [vmem:[#allocation6] sm:$0x10]
        %v7437 = vcombine.high %v7435, %v7435
        %v7439 = vunpack.c.l.s4 1966171168
        %v7440 = vunpack.c.0.s8 %v7439
        %v7441 = vlaneseq
        %v7442 = vshrl.u32 %v7441, 7
        %v7443 = vsub.s32 %v7440, %v7442
        %v7444 = vrot.slane %v7437, %v7443
        %v7446 = vunpack.c.l.s4 1966171168
        %v7447 = vunpack.c.0.s8 %v7446
        %v7448 = vlaneseq
        %v7449 = vshrl.u32 %v7448, 7
        %v7450 = vsub.s32 %v7447, %v7449
        %v7451 = vrot.slane %v7444, %v7450
        %v7453 = vld [vmem:[#allocation7 + $0x4] sm:$0x1]
        %v7454 = vsel %vm7253, %v7451, %v7453
        %7455 = vst [vmem:[#allocation7 + $0x4] sm:$0x1] %v7454
        %v7456 = vld [vmem:[#allocation6] sm:$0x10]
        %v7458 = vcombine.high %v7456, %v7456
        %v7460 = vunpack.c.l.s4 1966171168
        %v7461 = vunpack.c.0.s8 %v7460
        %v7462 = vlaneseq
        %v7463 = vshrl.u32 %v7462, 7
        %v7464 = vsub.s32 %v7461, %v7463
        %v7465 = vrot.slane %v7458, %v7464
        %v7467 = vunpack.c.l.s4 1966171168
        %v7468 = vunpack.c.0.s8 %v7467
        %v7469 = vlaneseq
        %v7470 = vshrl.u32 %v7469, 7
        %v7471 = vsub.s32 %v7468, %v7470
        %v7472 = vrot.slane %v7465, %v7471
        %v7474 = vshrl.u32 %v7472, 16
        %v7476 = vrot.slane %v7474, 7
        %v7477 = vrot.slane %v7476, 1
        %7478 = vrot.lane.b32.xlu0 %v7477, 64
        %v7479 = vpop.permute.xlu0 %7478
        %v7481 = vld [vmem:[#allocation7 + $0x4] sm:$0x1]
        %v7482 = vsel %vm7282, %v7479, %v7481
        %7483 = vst [vmem:[#allocation7 + $0x4] sm:$0x1] %v7482
        %v7484 = vld [vmem:[#allocation6] sm:$0x20]
        %v7486 = vcombine.high %v7484, %v7484
        %v7488 = vunpack.c.l.s4 1966171168
        %v7489 = vunpack.c.0.s8 %v7488
        %v7490 = vlaneseq
        %v7491 = vshrl.u32 %v7490, 7
        %v7492 = vsub.s32 %v7489, %v7491
        %v7493 = vrot.slane %v7486, %v7492
        %v7494 = vcombine.high %v7493, %v7493
        %v7496 = vunpack.c.l.s4 1966171168
        %v7497 = vunpack.c.0.s8 %v7496
        %v7498 = vlaneseq
        %v7499 = vshrl.u32 %v7498, 7
        %v7500 = vsub.s32 %v7497, %v7499
        %v7501 = vrot.slane %v7494, %v7500
        %v7503 = vld [vmem:[#allocation7 + $0x5] sm:$0x1]
        %v7504 = vsel %vm7253, %v7501, %v7503
        %7505 = vst [vmem:[#allocation7 + $0x5] sm:$0x1] %v7504
        %v7506 = vld [vmem:[#allocation6] sm:$0x20]
        %v7508 = vcombine.high %v7506, %v7506
        %v7510 = vunpack.c.l.s4 1966171168
        %v7511 = vunpack.c.0.s8 %v7510
        %v7512 = vlaneseq
        %v7513 = vshrl.u32 %v7512, 7
        %v7514 = vsub.s32 %v7511, %v7513
        %v7515 = vrot.slane %v7508, %v7514
        %v7516 = vcombine.high %v7515, %v7515
        %v7518 = vunpack.c.l.s4 1966171168
        %v7519 = vunpack.c.0.s8 %v7518
        %v7520 = vlaneseq
        %v7521 = vshrl.u32 %v7520, 7
        %v7522 = vsub.s32 %v7519, %v7521
        %v7523 = vrot.slane %v7516, %v7522
        %v7525 = vshrl.u32 %v7523, 16
        %v7527 = vrot.slane %v7525, 7
        %v7528 = vrot.slane %v7527, 1
        %7529 = vrot.lane.b32.xlu0 %v7528, 64
        %v7530 = vpop.permute.xlu0 %7529
        %v7532 = vld [vmem:[#allocation7 + $0x5] sm:$0x1]
        %v7533 = vsel %vm7282, %v7530, %v7532
        %7534 = vst [vmem:[#allocation7 + $0x5] sm:$0x1] %v7533
        %v7535 = vld [vmem:[#allocation6] sm:$0x40]
        %v7537 = vcombine.high %v7535, %v7535
        %v7539 = vunpack.c.l.s4 1966171168
        %v7540 = vunpack.c.0.s8 %v7539
        %v7541 = vlaneseq
        %v7542 = vshrl.u32 %v7541, 7
        %v7543 = vsub.s32 %v7540, %v7542
        %v7544 = vrot.slane %v7537, %v7543
        %v7546 = vunpack.c.l.s4 1966171168
        %v7547 = vunpack.c.0.s8 %v7546
        %v7548 = vlaneseq
        %v7549 = vshrl.u32 %v7548, 7
        %v7550 = vsub.s32 %v7547, %v7549
        %v7551 = vrot.slane %v7544, %v7550
        %v7552 = vcombine.high %v7551, %v7551
        %v7554 = vld [vmem:[#allocation7 + $0x6] sm:$0x1]
        %v7555 = vsel %vm7253, %v7552, %v7554
        %7556 = vst [vmem:[#allocation7 + $0x6] sm:$0x1] %v7555
        %v7557 = vld [vmem:[#allocation6] sm:$0x40]
        %v7559 = vcombine.high %v7557, %v7557
        %v7561 = vunpack.c.l.s4 1966171168
        %v7562 = vunpack.c.0.s8 %v7561
        %v7563 = vlaneseq
        %v7564 = vshrl.u32 %v7563, 7
        %v7565 = vsub.s32 %v7562, %v7564
        %v7566 = vrot.slane %v7559, %v7565
        %v7568 = vunpack.c.l.s4 1966171168
        %v7569 = vunpack.c.0.s8 %v7568
        %v7570 = vlaneseq
        %v7571 = vshrl.u32 %v7570, 7
        %v7572 = vsub.s32 %v7569, %v7571
        %v7573 = vrot.slane %v7566, %v7572
        %v7574 = vcombine.high %v7573, %v7573
        %v7576 = vshrl.u32 %v7574, 16
        %v7578 = vrot.slane %v7576, 7
        %v7579 = vrot.slane %v7578, 1
        %7580 = vrot.lane.b32.xlu0 %v7579, 64
        %v7581 = vpop.permute.xlu0 %7580
        %v7583 = vld [vmem:[#allocation7 + $0x6] sm:$0x1]
        %v7584 = vsel %vm7282, %v7581, %v7583
        %7585 = vst [vmem:[#allocation7 + $0x6] sm:$0x1] %v7584
        %v7586 = vld [vmem:[#allocation6] sm:$0x80]
        %v7588 = vcombine.high %v7586, %v7586
        %v7590 = vunpack.c.l.s4 1966171168
        %v7591 = vunpack.c.0.s8 %v7590
        %v7592 = vlaneseq
        %v7593 = vshrl.u32 %v7592, 7
        %v7594 = vsub.s32 %v7591, %v7593
        %v7595 = vrot.slane %v7588, %v7594
        %v7596 = vcombine.high %v7595, %v7595
        %v7598 = vunpack.c.l.s4 1966171168
        %v7599 = vunpack.c.0.s8 %v7598
        %v7600 = vlaneseq
        %v7601 = vshrl.u32 %v7600, 7
        %v7602 = vsub.s32 %v7599, %v7601
        %v7603 = vrot.slane %v7596, %v7602
        %v7604 = vcombine.high %v7603, %v7603
        %v7606 = vld [vmem:[#allocation7 + $0x7] sm:$0x1]
        %v7607 = vsel %vm7253, %v7604, %v7606
        %7608 = vst [vmem:[#allocation7 + $0x7] sm:$0x1] %v7607
        %v7609 = vld [vmem:[#allocation6] sm:$0x80]
        %v7611 = vcombine.high %v7609, %v7609
        %v7613 = vunpack.c.l.s4 1966171168
        %v7614 = vunpack.c.0.s8 %v7613
        %v7615 = vlaneseq
        %v7616 = vshrl.u32 %v7615, 7
        %v7617 = vsub.s32 %v7614, %v7616
        %v7618 = vrot.slane %v7611, %v7617
        %v7619 = vcombine.high %v7618, %v7618
        %v7621 = vunpack.c.l.s4 1966171168
        %v7622 = vunpack.c.0.s8 %v7621
        %v7623 = vlaneseq
        %v7624 = vshrl.u32 %v7623, 7
        %v7625 = vsub.s32 %v7622, %v7624
        %v7626 = vrot.slane %v7619, %v7625
        %v7627 = vcombine.high %v7626, %v7626
        %v7629 = vshrl.u32 %v7627, 16
        %v7631 = vrot.slane %v7629, 7
        %v7632 = vrot.slane %v7631, 1
        %7633 = vrot.lane.b32.xlu0 %v7632, 64
        %v7634 = vpop.permute.xlu0 %7633
        %v7636 = vld [vmem:[#allocation7 + $0x7] sm:$0x1]
        %v7637 = vsel %vm7282, %v7634, %v7636
        %7638 = vst [vmem:[#allocation7 + $0x7] sm:$0x1] %v7637
        %v7639 = vld [vmem:[#allocation7] sm:$0xff]
        %v7640 = vld [vmem:[%s6] sm:$0xf]
        %v7641 = vld [vmem:[%s6 + $0x4] sm:$0xf]
        %v7642 = vld [vmem:[%s6 + $0x8] sm:$0xf]
        %v7643 = vld [vmem:[%s6 + $0xc] sm:$0xf]
        %v7644 = vld [vmem:[%s6 + $0x10] sm:$0xf]
        %v7645 = vld [vmem:[%s6 + $0x14] sm:$0xf]
        %v7646 = vld [vmem:[%s6 + $0x18] sm:$0xf]
        %v7647 = vld [vmem:[%s6 + $0x1c] sm:$0xf]
        %v7648 = vld [vmem:[%s6 + $0x20] sm:$0xf]
        %v7649 = vld [vmem:[%s6 + $0x24] sm:$0xf]
        %v7650 = vld [vmem:[%s6 + $0x28] sm:$0xf]
        %v7651 = vld [vmem:[%s6 + $0x2c] sm:$0xf]
        %v7652 = vld [vmem:[%s6 + $0x30] sm:$0xf]
        %v7653 = vld [vmem:[%s6 + $0x34] sm:$0xf]
        %v7654 = vld [vmem:[%s6 + $0x38] sm:$0xf]
        %v7655 = vld [vmem:[%s6 + $0x3c] sm:$0xf]
        %v7656 = vld [vmem:[%s6 + $0x40] sm:$0xf]
        %v7657 = vld [vmem:[%s6 + $0x44] sm:$0xf]
        %v7658 = vld [vmem:[%s6 + $0x48] sm:$0xf]
        %v7659 = vld [vmem:[%s6 + $0x4c] sm:$0xf]
        %v7660 = vld [vmem:[%s6 + $0x50] sm:$0xf]
        %v7661 = vld [vmem:[%s6 + $0x54] sm:$0xf]
        %v7662 = vld [vmem:[%s6 + $0x58] sm:$0xf]
        %v7663 = vld [vmem:[%s6 + $0x5c] sm:$0xf]
        %v7664 = vld [vmem:[%s6 + $0x60] sm:$0xf]
        %v7665 = vld [vmem:[%s6 + $0x64] sm:$0xf]
        %v7666 = vld [vmem:[%s6 + $0x68] sm:$0xf]
        %v7667 = vld [vmem:[%s6 + $0x6c] sm:$0xf]
        %v7668 = vld [vmem:[%s6 + $0x70] sm:$0xf]
        %v7669 = vld [vmem:[%s6 + $0x74] sm:$0xf]
        %v7670 = vld [vmem:[%s6 + $0x78] sm:$0xf]
        %v7671 = vld [vmem:[%s6 + $0x7c] sm:$0xf]
        %v7672 = vld [vmem:[%s6 + $0x80] sm:$0xf]
        %v7673 = vld [vmem:[%s6 + $0x84] sm:$0xf]
        %v7674 = vld [vmem:[%s6 + $0x88] sm:$0xf]
        %v7675 = vld [vmem:[%s6 + $0x8c] sm:$0xf]
        %v7676 = vld [vmem:[%s6 + $0x90] sm:$0xf]
        %v7677 = vld [vmem:[%s6 + $0x94] sm:$0xf]
        %v7678 = vld [vmem:[%s6 + $0x98] sm:$0xf]
        %v7679 = vld [vmem:[%s6 + $0x9c] sm:$0xf]
        %v7680 = vld [vmem:[%s6 + $0xa0] sm:$0xf]
        %v7681 = vld [vmem:[%s6 + $0xa4] sm:$0xf]
        %v7682 = vld [vmem:[%s6 + $0xa8] sm:$0xf]
        %v7683 = vld [vmem:[%s6 + $0xac] sm:$0xf]
        %v7684 = vld [vmem:[%s6 + $0xb0] sm:$0xf]
        %v7685 = vld [vmem:[%s6 + $0xb4] sm:$0xf]
        %v7686 = vld [vmem:[%s6 + $0xb8] sm:$0xf]
        %v7687 = vld [vmem:[%s6 + $0xbc] sm:$0xf]
        %v7688 = vld [vmem:[%s6 + $0xc0] sm:$0xf]
        %v7689 = vld [vmem:[%s6 + $0xc4] sm:$0xf]
        %v7690 = vld [vmem:[%s6 + $0xc8] sm:$0xf]
        %v7691 = vld [vmem:[%s6 + $0xcc] sm:$0xf]
        %v7692 = vld [vmem:[%s6 + $0xd0] sm:$0xf]
        %v7693 = vld [vmem:[%s6 + $0xd4] sm:$0xf]
        %v7694 = vld [vmem:[%s6 + $0xd8] sm:$0xf]
        %v7695 = vld [vmem:[%s6 + $0xdc] sm:$0xf]
        %v7696 = vld [vmem:[%s6 + $0xe0] sm:$0xf]
        %v7697 = vld [vmem:[%s6 + $0xe4] sm:$0xf]
        %v7698 = vld [vmem:[%s6 + $0xe8] sm:$0xf]
        %v7699 = vld [vmem:[%s6 + $0xec] sm:$0xf]
        %v7700 = vld [vmem:[%s6 + $0xf0] sm:$0xf]
        %v7701 = vld [vmem:[%s6 + $0xf4] sm:$0xf]
        %v7702 = vld [vmem:[%s6 + $0xf8] sm:$0xf]
        %v7703 = vld [vmem:[%s6 + $0xfc] sm:$0xf]
        %v7704 = vld [vmem:[%s6 + $0x100] sm:$0xf]
        %v7705 = vld [vmem:[%s6 + $0x104] sm:$0xf]
        %v7706 = vld [vmem:[%s6 + $0x108] sm:$0xf]
        %v7707 = vld [vmem:[%s6 + $0x10c] sm:$0xf]
        %v7708 = vld [vmem:[%s6 + $0x110] sm:$0xf]
        %v7709 = vld [vmem:[%s6 + $0x114] sm:$0xf]
        %v7710 = vld [vmem:[%s6 + $0x118] sm:$0xf]
        %v7711 = vld [vmem:[%s6 + $0x11c] sm:$0xf]
        %v7712 = vld [vmem:[%s6 + $0x120] sm:$0xf]
        %v7713 = vld [vmem:[%s6 + $0x124] sm:$0xf]
        %v7714 = vld [vmem:[%s6 + $0x128] sm:$0xf]
        %v7715 = vld [vmem:[%s6 + $0x12c] sm:$0xf]
        %v7716 = vld [vmem:[%s6 + $0x130] sm:$0xf]
        %v7717 = vld [vmem:[%s6 + $0x134] sm:$0xf]
        %v7718 = vld [vmem:[%s6 + $0x138] sm:$0xf]
        %v7719 = vld [vmem:[%s6 + $0x13c] sm:$0xf]
        %v7720 = vld [vmem:[%s6 + $0x140] sm:$0xf]
        %v7721 = vld [vmem:[%s6 + $0x144] sm:$0xf]
        %v7722 = vld [vmem:[%s6 + $0x148] sm:$0xf]
        %v7723 = vld [vmem:[%s6 + $0x14c] sm:$0xf]
        %v7724 = vld [vmem:[%s6 + $0x150] sm:$0xf]
        %v7725 = vld [vmem:[%s6 + $0x154] sm:$0xf]
        %v7726 = vld [vmem:[%s6 + $0x158] sm:$0xf]
        %v7727 = vld [vmem:[%s6 + $0x15c] sm:$0xf]
        %v7728 = vld [vmem:[%s6 + $0x160] sm:$0xf]
        %v7729 = vld [vmem:[%s6 + $0x164] sm:$0xf]
        %v7730 = vld [vmem:[%s6 + $0x168] sm:$0xf]
        %v7731 = vld [vmem:[%s6 + $0x16c] sm:$0xf]
        %v7732 = vld [vmem:[%s6 + $0x170] sm:$0xf]
        %v7733 = vld [vmem:[%s6 + $0x174] sm:$0xf]
        %v7734 = vld [vmem:[%s6 + $0x178] sm:$0xf]
        %v7735 = vld [vmem:[%s6 + $0x17c] sm:$0xf]
        %v7736 = vld [vmem:[%s6 + $0x180] sm:$0xf]
        %v7737 = vld [vmem:[%s6 + $0x184] sm:$0xf]
        %v7738 = vld [vmem:[%s6 + $0x188] sm:$0xf]
        %v7739 = vld [vmem:[%s6 + $0x18c] sm:$0xf]
        %v7740 = vld [vmem:[%s6 + $0x190] sm:$0xf]
        %v7741 = vld [vmem:[%s6 + $0x194] sm:$0xf]
        %v7742 = vld [vmem:[%s6 + $0x198] sm:$0xf]
        %v7743 = vld [vmem:[%s6 + $0x19c] sm:$0xf]
        %v7744 = vld [vmem:[%s6 + $0x1a0] sm:$0xf]
        %v7745 = vld [vmem:[%s6 + $0x1a4] sm:$0xf]
        %v7746 = vld [vmem:[%s6 + $0x1a8] sm:$0xf]
        %v7747 = vld [vmem:[%s6 + $0x1ac] sm:$0xf]
        %v7748 = vld [vmem:[%s6 + $0x1b0] sm:$0xf]
        %v7749 = vld [vmem:[%s6 + $0x1b4] sm:$0xf]
        %v7750 = vld [vmem:[%s6 + $0x1b8] sm:$0xf]
        %v7751 = vld [vmem:[%s6 + $0x1bc] sm:$0xf]
        %v7752 = vld [vmem:[%s6 + $0x1c0] sm:$0xf]
        %v7753 = vld [vmem:[%s6 + $0x1c4] sm:$0xf]
        %v7754 = vld [vmem:[%s6 + $0x1c8] sm:$0xf]
        %v7755 = vld [vmem:[%s6 + $0x1cc] sm:$0xf]
        %v7756 = vld [vmem:[%s6 + $0x1d0] sm:$0xf]
        %v7757 = vld [vmem:[%s6 + $0x1d4] sm:$0xf]
        %v7758 = vld [vmem:[%s6 + $0x1d8] sm:$0xf]
        %v7759 = vld [vmem:[%s6 + $0x1dc] sm:$0xf]
        %v7760 = vld [vmem:[%s6 + $0x1e0] sm:$0xf]
        %v7761 = vld [vmem:[%s6 + $0x1e4] sm:$0xf]
        %v7762 = vld [vmem:[%s6 + $0x1e8] sm:$0xf]
        %v7763 = vld [vmem:[%s6 + $0x1ec] sm:$0xf]
        %v7764 = vld [vmem:[%s6 + $0x1f0] sm:$0xf]
        %v7765 = vld [vmem:[%s6 + $0x1f4] sm:$0xf]
        %v7766 = vld [vmem:[%s6 + $0x1f8] sm:$0xf]
        %v7767 = vld [vmem:[%s6 + $0x1fc] sm:$0xf]
        %v7768 = vld [vmem:[%s7] sm:$0x1]
        %v7770 = vcombine.high %v7639, %v7639
        %v7772 = vunpack.c.l.s4 1966171168
        %v7773 = vunpack.c.0.s8 %v7772
        %v7774 = vlaneseq
        %v7775 = vshrl.u32 %v7774, 7
        %v7776 = vsub.s32 %v7773, %v7775
        %v7777 = vrot.slane %v7639, %v7776
        %v7779 = vunpack.c.l.s4 1966171168
        %v7780 = vunpack.c.0.s8 %v7779
        %v7781 = vlaneseq
        %v7782 = vshrl.u32 %v7781, 7
        %v7783 = vsub.s32 %v7780, %v7782
        %v7784 = vrot.slane %v7770, %v7783
        %v7785 = vcombine.high %v7777, %v7777
        %v7786 = vcombine.high %v7784, %v7784
        %v7788 = vunpack.c.l.s4 1966171168
        %v7789 = vunpack.c.0.s8 %v7788
        %v7790 = vlaneseq
        %v7791 = vshrl.u32 %v7790, 7
        %v7792 = vsub.s32 %v7789, %v7791
        %v7793 = vrot.slane %v7777, %v7792
        %v7795 = vunpack.c.l.s4 1966171168
        %v7796 = vunpack.c.0.s8 %v7795
        %v7797 = vlaneseq
        %v7798 = vshrl.u32 %v7797, 7
        %v7799 = vsub.s32 %v7796, %v7798
        %v7800 = vrot.slane %v7784, %v7799
        %v7802 = vunpack.c.l.s4 1966171168
        %v7803 = vunpack.c.0.s8 %v7802
        %v7804 = vlaneseq
        %v7805 = vshrl.u32 %v7804, 7
        %v7806 = vsub.s32 %v7803, %v7805
        %v7807 = vrot.slane %v7785, %v7806
        %v7809 = vunpack.c.l.s4 1966171168
        %v7810 = vunpack.c.0.s8 %v7809
        %v7811 = vlaneseq
        %v7812 = vshrl.u32 %v7811, 7
        %v7813 = vsub.s32 %v7810, %v7812
        %v7814 = vrot.slane %v7786, %v7813
        %v7815 = vcombine.high %v7793, %v7793
        %v7816 = vcombine.high %v7800, %v7800
        %v7817 = vcombine.high %v7807, %v7807
        %v7818 = vcombine.high %v7814, %v7814
        %v7955 = vunpack.c.l.b16 %v7640
        %v7956 = vunpack.c.l.b16 %v7641
        %v7957 = vunpack.c.l.b16 %v7642
        %v7958 = vunpack.c.l.b16 %v7643
        %v7959 = vunpack.c.l.b16 %v7644
        %v7960 = vunpack.c.l.b16 %v7645
        %v7961 = vunpack.c.l.b16 %v7646
        %v7962 = vunpack.c.l.b16 %v7647
        %v7963 = vunpack.c.l.b16 %v7648
        %v7964 = vunpack.c.l.b16 %v7649
        %v7965 = vunpack.c.l.b16 %v7650
        %v7966 = vunpack.c.l.b16 %v7651
        %v7967 = vunpack.c.l.b16 %v7652
        %v7968 = vunpack.c.l.b16 %v7653
        %v7969 = vunpack.c.l.b16 %v7654
        %v7970 = vunpack.c.l.b16 %v7655
        %v7971 = vunpack.c.l.b16 %v7656
        %v7972 = vunpack.c.l.b16 %v7657
        %v7973 = vunpack.c.l.b16 %v7658
        %v7974 = vunpack.c.l.b16 %v7659
        %v7975 = vunpack.c.l.b16 %v7660
        %v7976 = vunpack.c.l.b16 %v7661
        %v7977 = vunpack.c.l.b16 %v7662
        %v7978 = vunpack.c.l.b16 %v7663
        %v7979 = vunpack.c.l.b16 %v7664
        %v7980 = vunpack.c.l.b16 %v7665
        %v7981 = vunpack.c.l.b16 %v7666
        %v7982 = vunpack.c.l.b16 %v7667
        %v7983 = vunpack.c.l.b16 %v7668
        %v7984 = vunpack.c.l.b16 %v7669
        %v7985 = vunpack.c.l.b16 %v7670
        %v7986 = vunpack.c.l.b16 %v7671
        %v7987 = vunpack.c.l.b16 %v7672
        %v7988 = vunpack.c.l.b16 %v7673
        %v7989 = vunpack.c.l.b16 %v7674
        %v7990 = vunpack.c.l.b16 %v7675
        %v7991 = vunpack.c.l.b16 %v7676
        %v7992 = vunpack.c.l.b16 %v7677
        %v7993 = vunpack.c.l.b16 %v7678
        %v7994 = vunpack.c.l.b16 %v7679
        %v7995 = vunpack.c.l.b16 %v7680
        %v7996 = vunpack.c.l.b16 %v7681
        %v7997 = vunpack.c.l.b16 %v7682
        %v7998 = vunpack.c.l.b16 %v7683
        %v7999 = vunpack.c.l.b16 %v7684
        %v8000 = vunpack.c.l.b16 %v7685
        %v8001 = vunpack.c.l.b16 %v7686
        %v8002 = vunpack.c.l.b16 %v7687
        %v8003 = vunpack.c.l.b16 %v7688
        %v8004 = vunpack.c.l.b16 %v7689
        %v8005 = vunpack.c.l.b16 %v7690
        %v8006 = vunpack.c.l.b16 %v7691
        %v8007 = vunpack.c.l.b16 %v7692
        %v8008 = vunpack.c.l.b16 %v7693
        %v8009 = vunpack.c.l.b16 %v7694
        %v8010 = vunpack.c.l.b16 %v7695
        %v8011 = vunpack.c.l.b16 %v7696
        %v8012 = vunpack.c.l.b16 %v7697
        %v8013 = vunpack.c.l.b16 %v7698
        %v8014 = vunpack.c.l.b16 %v7699
        %v8015 = vunpack.c.l.b16 %v7700
        %v8016 = vunpack.c.l.b16 %v7701
        %v8017 = vunpack.c.l.b16 %v7702
        %v8018 = vunpack.c.l.b16 %v7703
        %v8019 = vunpack.c.l.b16 %v7704
        %v8020 = vunpack.c.l.b16 %v7705
        %v8021 = vunpack.c.l.b16 %v7706
        %v8022 = vunpack.c.l.b16 %v7707
        %v8023 = vunpack.c.l.b16 %v7708
        %v8024 = vunpack.c.l.b16 %v7709
        %v8025 = vunpack.c.l.b16 %v7710
        %v8026 = vunpack.c.l.b16 %v7711
        %v8027 = vunpack.c.l.b16 %v7712
        %v8028 = vunpack.c.l.b16 %v7713
        %v8029 = vunpack.c.l.b16 %v7714
        %v8030 = vunpack.c.l.b16 %v7715
        %v8031 = vunpack.c.l.b16 %v7716
        %v8032 = vunpack.c.l.b16 %v7717
        %v8033 = vunpack.c.l.b16 %v7718
        %v8034 = vunpack.c.l.b16 %v7719
        %v8035 = vunpack.c.l.b16 %v7720
        %v8036 = vunpack.c.l.b16 %v7721
        %v8037 = vunpack.c.l.b16 %v7722
        %v8038 = vunpack.c.l.b16 %v7723
        %v8039 = vunpack.c.l.b16 %v7724
        %v8040 = vunpack.c.l.b16 %v7725
        %v8041 = vunpack.c.l.b16 %v7726
        %v8042 = vunpack.c.l.b16 %v7727
        %v8043 = vunpack.c.l.b16 %v7728
        %v8044 = vunpack.c.l.b16 %v7729
        %v8045 = vunpack.c.l.b16 %v7730
        %v8046 = vunpack.c.l.b16 %v7731
        %v8047 = vunpack.c.l.b16 %v7732
        %v8048 = vunpack.c.l.b16 %v7733
        %v8049 = vunpack.c.l.b16 %v7734
        %v8050 = vunpack.c.l.b16 %v7735
        %v8051 = vunpack.c.l.b16 %v7736
        %v8052 = vunpack.c.l.b16 %v7737
        %v8053 = vunpack.c.l.b16 %v7738
        %v8054 = vunpack.c.l.b16 %v7739
        %v8055 = vunpack.c.l.b16 %v7740
        %v8056 = vunpack.c.l.b16 %v7741
        %v8057 = vunpack.c.l.b16 %v7742
        %v8058 = vunpack.c.l.b16 %v7743
        %v8059 = vunpack.c.l.b16 %v7744
        %v8060 = vunpack.c.l.b16 %v7745
        %v8061 = vunpack.c.l.b16 %v7746
        %v8062 = vunpack.c.l.b16 %v7747
        %v8063 = vunpack.c.l.b16 %v7748
        %v8064 = vunpack.c.l.b16 %v7749
        %v8065 = vunpack.c.l.b16 %v7750
        %v8066 = vunpack.c.l.b16 %v7751
        %v8067 = vunpack.c.l.b16 %v7752
        %v8068 = vunpack.c.l.b16 %v7753
        %v8069 = vunpack.c.l.b16 %v7754
        %v8070 = vunpack.c.l.b16 %v7755
        %v8071 = vunpack.c.l.b16 %v7756
        %v8072 = vunpack.c.l.b16 %v7757
        %v8073 = vunpack.c.l.b16 %v7758
        %v8074 = vunpack.c.l.b16 %v7759
        %v8075 = vunpack.c.l.b16 %v7760
        %v8076 = vunpack.c.l.b16 %v7761
        %v8077 = vunpack.c.l.b16 %v7762
        %v8078 = vunpack.c.l.b16 %v7763
        %v8079 = vunpack.c.l.b16 %v7764
        %v8080 = vunpack.c.l.b16 %v7765
        %v8081 = vunpack.c.l.b16 %v7766
        %v8082 = vunpack.c.l.b16 %v7767
        %v8083 = vpack.c.b16 %v7956, %v7955
        %v8084 = vpack.c.b16 %v7958, %v7957
        %v8085 = vpack.c.b16 %v7960, %v7959
        %v8086 = vpack.c.b16 %v7962, %v7961
        %v8087 = vpack.c.b16 %v7964, %v7963
        %v8088 = vpack.c.b16 %v7966, %v7965
        %v8089 = vpack.c.b16 %v7968, %v7967
        %v8090 = vpack.c.b16 %v7970, %v7969
        %v8091 = vpack.c.b16 %v7972, %v7971
        %v8092 = vpack.c.b16 %v7974, %v7973
        %v8093 = vpack.c.b16 %v7976, %v7975
        %v8094 = vpack.c.b16 %v7978, %v7977
        %v8095 = vpack.c.b16 %v7980, %v7979
        %v8096 = vpack.c.b16 %v7982, %v7981
        %v8097 = vpack.c.b16 %v7984, %v7983
        %v8098 = vpack.c.b16 %v7986, %v7985
        %v8099 = vpack.c.b16 %v7988, %v7987
        %v8100 = vpack.c.b16 %v7990, %v7989
        %v8101 = vpack.c.b16 %v7992, %v7991
        %v8102 = vpack.c.b16 %v7994, %v7993
        %v8103 = vpack.c.b16 %v7996, %v7995
        %v8104 = vpack.c.b16 %v7998, %v7997
        %v8105 = vpack.c.b16 %v8000, %v7999
        %v8106 = vpack.c.b16 %v8002, %v8001
        %v8107 = vpack.c.b16 %v8004, %v8003
        %v8108 = vpack.c.b16 %v8006, %v8005
        %v8109 = vpack.c.b16 %v8008, %v8007
        %v8110 = vpack.c.b16 %v8010, %v8009
        %v8111 = vpack.c.b16 %v8012, %v8011
        %v8112 = vpack.c.b16 %v8014, %v8013
        %v8113 = vpack.c.b16 %v8016, %v8015
        %v8114 = vpack.c.b16 %v8018, %v8017
        %v8115 = vpack.c.b16 %v8020, %v8019
        %v8116 = vpack.c.b16 %v8022, %v8021
        %v8117 = vpack.c.b16 %v8024, %v8023
        %v8118 = vpack.c.b16 %v8026, %v8025
        %v8119 = vpack.c.b16 %v8028, %v8027
        %v8120 = vpack.c.b16 %v8030, %v8029
        %v8121 = vpack.c.b16 %v8032, %v8031
        %v8122 = vpack.c.b16 %v8034, %v8033
        %v8123 = vpack.c.b16 %v8036, %v8035
        %v8124 = vpack.c.b16 %v8038, %v8037
        %v8125 = vpack.c.b16 %v8040, %v8039
        %v8126 = vpack.c.b16 %v8042, %v8041
        %v8127 = vpack.c.b16 %v8044, %v8043
        %v8128 = vpack.c.b16 %v8046, %v8045
        %v8129 = vpack.c.b16 %v8048, %v8047
        %v8130 = vpack.c.b16 %v8050, %v8049
        %v8131 = vpack.c.b16 %v8052, %v8051
        %v8132 = vpack.c.b16 %v8054, %v8053
        %v8133 = vpack.c.b16 %v8056, %v8055
        %v8134 = vpack.c.b16 %v8058, %v8057
        %v8135 = vpack.c.b16 %v8060, %v8059
        %v8136 = vpack.c.b16 %v8062, %v8061
        %v8137 = vpack.c.b16 %v8064, %v8063
        %v8138 = vpack.c.b16 %v8066, %v8065
        %v8139 = vpack.c.b16 %v8068, %v8067
        %v8140 = vpack.c.b16 %v8070, %v8069
        %v8141 = vpack.c.b16 %v8072, %v8071
        %v8142 = vpack.c.b16 %v8074, %v8073
        %v8143 = vpack.c.b16 %v8076, %v8075
        %v8144 = vpack.c.b16 %v8078, %v8077
        %v8145 = vpack.c.b16 %v8080, %v8079
        %v8146 = vpack.c.b16 %v8082, %v8081
        %8211 = vmatprep.subr.bf16.mxu0 0
        %8212 = vmatpush1.bf16.msra.mxu0 %v8083
        %8213 = vmatprep.subr.bf16.mxu0 0
        %8214 = vmatpush1.bf16.msra.mxu0 %v8084
        %8215 = vmatprep.subr.bf16.mxu0 0
        %8216 = vmatpush1.bf16.msra.mxu0 %v8085
        %8217 = vmatprep.subr.bf16.mxu0 0
        %8218 = vmatpush1.bf16.msra.mxu0 %v8086
        %8219 = vmatprep.subr.bf16.mxu0 0
        %8220 = vmatpush1.bf16.msra.mxu0 %v8087
        %8221 = vmatprep.subr.bf16.mxu0 0
        %8222 = vmatpush1.bf16.msra.mxu0 %v8088
        %8223 = vmatprep.subr.bf16.mxu0 0
        %8224 = vmatpush1.bf16.msra.mxu0 %v8089
        %8225 = vmatprep.subr.bf16.mxu0 0
        %8226 = vmatpush1.bf16.msra.mxu0 %v8090
        %8227 = vmatprep.subr.bf16.mxu0 0
        %8228 = vmatpush1.bf16.msra.mxu0 %v8091
        %8229 = vmatprep.subr.bf16.mxu0 0
        %8230 = vmatpush1.bf16.msra.mxu0 %v8092
        %8231 = vmatprep.subr.bf16.mxu0 0
        %8232 = vmatpush1.bf16.msra.mxu0 %v8093
        %8233 = vmatprep.subr.bf16.mxu0 0
        %8234 = vmatpush1.bf16.msra.mxu0 %v8094
        %8235 = vmatprep.subr.bf16.mxu0 0
        %8236 = vmatpush1.bf16.msra.mxu0 %v8095
        %8237 = vmatprep.subr.bf16.mxu0 0
        %8238 = vmatpush1.bf16.msra.mxu0 %v8096
        %8239 = vmatprep.subr.bf16.mxu0 0
        %8240 = vmatpush1.bf16.msra.mxu0 %v8097
        %8241 = vmatprep.subr.bf16.mxu0 0
        %8242 = vmatpush1.bf16.msra.mxu0 %v8098
        %8243 = vmatprep.mubr.bf16.mxu0 %v7807
        %8244 = vmatmul.mubr.bf16.gmra.mrb[0].mxu0 %v7793
        %v8245 = vpop.f32.mrb[0].mxu0
        %v8246 = vadd.f32 %v7768, %v8245
        %v8247 = vpop.f32.mrb[0].mxu0
        %v8248 = vpop.f32.mrb[0].mxu0
        %v8249 = vpop.f32.mrb[0].mxu0
        %8250 = vdwg.mxu0
        %8251 = vmatprep.subr.bf16.mxu0 0
        %8252 = vmatpush1.bf16.msra.mxu0 %v8099
        %8253 = vmatprep.subr.bf16.mxu0 0
        %8254 = vmatpush1.bf16.msra.mxu0 %v8100
        %8255 = vmatprep.subr.bf16.mxu0 0
        %8256 = vmatpush1.bf16.msra.mxu0 %v8101
        %8257 = vmatprep.subr.bf16.mxu0 0
        %8258 = vmatpush1.bf16.msra.mxu0 %v8102
        %8259 = vmatprep.subr.bf16.mxu0 0
        %8260 = vmatpush1.bf16.msra.mxu0 %v8103
        %8261 = vmatprep.subr.bf16.mxu0 0
        %8262 = vmatpush1.bf16.msra.mxu0 %v8104
        %8263 = vmatprep.subr.bf16.mxu0 0
        %8264 = vmatpush1.bf16.msra.mxu0 %v8105
        %8265 = vmatprep.subr.bf16.mxu0 0
        %8266 = vmatpush1.bf16.msra.mxu0 %v8106
        %8267 = vmatprep.subr.bf16.mxu0 0
        %8268 = vmatpush1.bf16.msra.mxu0 %v8107
        %8269 = vmatprep.subr.bf16.mxu0 0
        %8270 = vmatpush1.bf16.msra.mxu0 %v8108
        %8271 = vmatprep.subr.bf16.mxu0 0
        %8272 = vmatpush1.bf16.msra.mxu0 %v8109
        %8273 = vmatprep.subr.bf16.mxu0 0
        %8274 = vmatpush1.bf16.msra.mxu0 %v8110
        %8275 = vmatprep.subr.bf16.mxu0 0
        %8276 = vmatpush1.bf16.msra.mxu0 %v8111
        %8277 = vmatprep.subr.bf16.mxu0 0
        %8278 = vmatpush1.bf16.msra.mxu0 %v8112
        %8279 = vmatprep.subr.bf16.mxu0 0
        %8280 = vmatpush1.bf16.msra.mxu0 %v8113
        %8281 = vmatprep.subr.bf16.mxu0 0
        %8282 = vmatpush1.bf16.msra.mxu0 %v8114
        %8283 = vmatprep.mubr.bf16.mxu0 %v7817
        %8284 = vmatmul.mubr.bf16.gmra.mrb[0].mxu0 %v7815
        %v8285 = vpop.f32.mrb[0].mxu0
        %v8286 = vadd.f32 %v8246, %v8285
        %v8287 = vpop.f32.mrb[0].mxu0
        %v8288 = vpop.f32.mrb[0].mxu0
        %v8289 = vpop.f32.mrb[0].mxu0
        %8290 = vdwg.mxu0
        %8291 = vmatprep.subr.bf16.mxu0 0
        %8292 = vmatpush1.bf16.msra.mxu0 %v8115
        %8293 = vmatprep.subr.bf16.mxu0 0
        %8294 = vmatpush1.bf16.msra.mxu0 %v8116
        %8295 = vmatprep.subr.bf16.mxu0 0
        %8296 = vmatpush1.bf16.msra.mxu0 %v8117
        %8297 = vmatprep.subr.bf16.mxu0 0
        %8298 = vmatpush1.bf16.msra.mxu0 %v8118
        %8299 = vmatprep.subr.bf16.mxu0 0
        %8300 = vmatpush1.bf16.msra.mxu0 %v8119
        %8301 = vmatprep.subr.bf16.mxu0 0
        %8302 = vmatpush1.bf16.msra.mxu0 %v8120
        %8303 = vmatprep.subr.bf16.mxu0 0
        %8304 = vmatpush1.bf16.msra.mxu0 %v8121
        %8305 = vmatprep.subr.bf16.mxu0 0
        %8306 = vmatpush1.bf16.msra.mxu0 %v8122
        %8307 = vmatprep.subr.bf16.mxu0 0
        %8308 = vmatpush1.bf16.msra.mxu0 %v8123
        %8309 = vmatprep.subr.bf16.mxu0 0
        %8310 = vmatpush1.bf16.msra.mxu0 %v8124
        %8311 = vmatprep.subr.bf16.mxu0 0
        %8312 = vmatpush1.bf16.msra.mxu0 %v8125
        %8313 = vmatprep.subr.bf16.mxu0 0
        %8314 = vmatpush1.bf16.msra.mxu0 %v8126
        %8315 = vmatprep.subr.bf16.mxu0 0
        %8316 = vmatpush1.bf16.msra.mxu0 %v8127
        %8317 = vmatprep.subr.bf16.mxu0 0
        %8318 = vmatpush1.bf16.msra.mxu0 %v8128
        %8319 = vmatprep.subr.bf16.mxu0 0
        %8320 = vmatpush1.bf16.msra.mxu0 %v8129
        %8321 = vmatprep.subr.bf16.mxu0 0
        %8322 = vmatpush1.bf16.msra.mxu0 %v8130
        %8323 = vmatprep.mubr.bf16.mxu0 %v7814
        %8324 = vmatmul.mubr.bf16.gmra.mrb[0].mxu0 %v7800
        %v8325 = vpop.f32.mrb[0].mxu0
        %v8326 = vadd.f32 %v8286, %v8325
        %v8327 = vpop.f32.mrb[0].mxu0
        %v8328 = vpop.f32.mrb[0].mxu0
        %v8329 = vpop.f32.mrb[0].mxu0
        %8330 = vdwg.mxu0
        %8331 = vmatprep.subr.bf16.mxu0 0
        %8332 = vmatpush1.bf16.msra.mxu0 %v8131
        %8333 = vmatprep.subr.bf16.mxu0 0
        %8334 = vmatpush1.bf16.msra.mxu0 %v8132
        %8335 = vmatprep.subr.bf16.mxu0 0
        %8336 = vmatpush1.bf16.msra.mxu0 %v8133
        %8337 = vmatprep.subr.bf16.mxu0 0
        %8338 = vmatpush1.bf16.msra.mxu0 %v8134
        %8339 = vmatprep.subr.bf16.mxu0 0
        %8340 = vmatpush1.bf16.msra.mxu0 %v8135
        %8341 = vmatprep.subr.bf16.mxu0 0
        %8342 = vmatpush1.bf16.msra.mxu0 %v8136
        %8343 = vmatprep.subr.bf16.mxu0 0
        %8344 = vmatpush1.bf16.msra.mxu0 %v8137
        %8345 = vmatprep.subr.bf16.mxu0 0
        %8346 = vmatpush1.bf16.msra.mxu0 %v8138
        %8347 = vmatprep.subr.bf16.mxu0 0
        %8348 = vmatpush1.bf16.msra.mxu0 %v8139
        %8349 = vmatprep.subr.bf16.mxu0 0
        %8350 = vmatpush1.bf16.msra.mxu0 %v8140
        %8351 = vmatprep.subr.bf16.mxu0 0
        %8352 = vmatpush1.bf16.msra.mxu0 %v8141
        %8353 = vmatprep.subr.bf16.mxu0 0
        %8354 = vmatpush1.bf16.msra.mxu0 %v8142
        %8355 = vmatprep.subr.bf16.mxu0 0
        %8356 = vmatpush1.bf16.msra.mxu0 %v8143
        %8357 = vmatprep.subr.bf16.mxu0 0
        %8358 = vmatpush1.bf16.msra.mxu0 %v8144
        %8359 = vmatprep.subr.bf16.mxu0 0
        %8360 = vmatpush1.bf16.msra.mxu0 %v8145
        %8361 = vmatprep.subr.bf16.mxu0 0
        %8362 = vmatpush1.bf16.msra.mxu0 %v8146
        %8363 = vmatprep.mubr.bf16.mxu0 %v7818
        %8364 = vmatmul.mubr.bf16.gmra.mrb[0].mxu0 %v7816
        %v8365 = vpop.f32.mrb[0].mxu0
        %v8366 = vadd.f32 %v8326, %v8365
        %v8367 = vpop.f32.mrb[0].mxu0
        %v8368 = vpop.f32.mrb[0].mxu0
        %v8369 = vpop.f32.mrb[0].mxu0
        %8370 = vdwg.mxu0
        %v8371 = vmax.f32 %v8366, 0.0
        %v8372 = vpack.c.bf16 %v8371, %v8371
        %v8373 = vld [vmem:[%s8] sm:$0xf]
        %v8374 = vld [vmem:[%s8 + $0x4] sm:$0xf]
        %v8375 = vld [vmem:[%s8 + $0x8] sm:$0xf]
        %v8376 = vld [vmem:[%s8 + $0xc] sm:$0xf]
        %v8377 = vld [vmem:[%s8 + $0x10] sm:$0xf]
        %v8378 = vld [vmem:[%s8 + $0x14] sm:$0xf]
        %v8379 = vld [vmem:[%s8 + $0x18] sm:$0xf]
        %v8380 = vld [vmem:[%s8 + $0x1c] sm:$0xf]
        %v8381 = vld [vmem:[%s9] sm:$0x1]
        %v8390 = vunpack.c.l.b16 %v8373
        %v8391 = vunpack.c.l.b16 %v8374
        %v8392 = vunpack.c.l.b16 %v8375
        %v8393 = vunpack.c.l.b16 %v8376
        %v8394 = vunpack.c.l.b16 %v8377
        %v8395 = vunpack.c.l.b16 %v8378
        %v8396 = vunpack.c.l.b16 %v8379
        %v8397 = vunpack.c.l.b16 %v8380
        %v8398 = vpack.c.b16 %v8391, %v8390
        %v8399 = vpack.c.b16 %v8393, %v8392
        %v8400 = vpack.c.b16 %v8395, %v8394
        %v8401 = vpack.c.b16 %v8397, %v8396
        %v8407 = vsel %vm6499, %v8372, 0
        %8409 = vmatprep.subr.bf16.mxu0 0
        %8410 = vmatpush1.bf16.msra.mxu0 %v8398
        %8411 = vmatprep.subr.bf16.mxu0 0
        %8412 = vmatpush1.bf16.msra.mxu0 %v8399
        %8413 = vmatprep.subr.bf16.mxu0 0
        %8414 = vmatpush1.bf16.msra.mxu0 %v8400
        %8415 = vmatprep.subr.bf16.mxu0 0
        %8416 = vmatpush1.bf16.msra.mxu0 %v8401
        %8417 = vmatprep.subr.bf16.mxu0 0
        %8418 = vmatpush1.bf16.msra.mxu0 0
        %8419 = vmatprep.subr.bf16.mxu0 0
        %8420 = vmatpush1.bf16.msra.mxu0 0
        %8421 = vmatprep.subr.bf16.mxu0 0
        %8422 = vmatpush1.bf16.msra.mxu0 0
        %8423 = vmatprep.subr.bf16.mxu0 0
        %8424 = vmatpush1.bf16.msra.mxu0 0
        %8425 = vmatprep.subr.bf16.mxu0 0
        %8426 = vmatpush1.bf16.msra.mxu0 0
        %8427 = vmatprep.subr.bf16.mxu0 0
        %8428 = vmatpush1.bf16.msra.mxu0 0
        %8429 = vmatprep.subr.bf16.mxu0 0
        %8430 = vmatpush1.bf16.msra.mxu0 0
        %8431 = vmatprep.subr.bf16.mxu0 0
        %8432 = vmatpush1.bf16.msra.mxu0 0
        %8433 = vmatprep.subr.bf16.mxu0 0
        %8434 = vmatpush1.bf16.msra.mxu0 0
        %8435 = vmatprep.subr.bf16.mxu0 0
        %8436 = vmatpush1.bf16.msra.mxu0 0
        %8437 = vmatprep.subr.bf16.mxu0 0
        %8438 = vmatpush1.bf16.msra.mxu0 0
        %8439 = vmatprep.subr.bf16.mxu0 0
        %8440 = vmatpush1.bf16.msra.mxu0 0
        %8441 = vmatprep.mubr.bf16.mxu0 0
        %8442 = vmatmul.mubr.bf16.gmra.mrb[0].mxu0 %v8407
        %v8443 = vpop.f32.mrb[0].mxu0
        %v8444 = vadd.f32 %v8381, %v8443
        %v8445 = vpop.f32.mrb[0].mxu0
        %v8446 = vpop.f32.mrb[0].mxu0
        %v8447 = vpop.f32.mrb[0].mxu0
        %8448 = vdwg.mxu0
        %vm8449 = vcmask 73728
        %8450 = vst.msk [vmem:[%s351] sm:$0x1] %vm8449, %v8444
        %s8451 = sand.u32 %s247, 1
        %s8452 = scalar_lea.sflag [#allocation9], %s8451
        %s8453 = sand.u32 %s247, 1
        %s8454 = scalar_lea.vmem [#allocation8], %s8453
        // Predicated region
        $region61: #{cnn_forward.1} parent=59 // pred_check
          %p8455 = pneg %p257
        $region62: #{cnn_forward.1} parent=59 // pred_check_branch
          %8457 = sbr.rel (%p8455) target = $region64
        $region63: #{cnn_forward.1} parent=59 // pred_region
          %s8459 = ssub.s32 16, 16
          %8460 = vsyncadd %s8452, %s8459
          %s8461 = smul.addr %s24, 16
          %s8462 = scalar_lea.hbm %s10, %s8461
          %s8464 = sshll.u32 %s8454, 4
          %s8465 = int_to_ptr.vmem [resolvable:$true] %s8464
          %8467 = dma.vmem_to_hbm [thread:$0]  %s8465, 16, %s8462, %s8452
        $region64: #{cnn_forward.1} parent=59 // pred_fallthru
          _
      $region60: #{cnn_forward.1} parent=5 // pred_fallthru
        _
      %p8468 = scmp.le.s32.totalorder 2, %s19
      // Predicated region
      $region65: #{cnn_forward.1} parent=5 // pred_check
        %p8469 = pneg %p8468
      $region66: #{cnn_forward.1} parent=5 // pred_check_branch
        %8471 = sbr.rel (%p8469) target = $region68
      $region67: #{cnn_forward.1} parent=5 // pred_region
        %s8472 = ssub.s32 %s19, 2
        // Predicated region
        $region69: #{cnn_forward.1} parent=67 // pred_check
          %p8473 = pneg %p263
        $region70: #{cnn_forward.1} parent=67 // pred_check_branch
          %8475 = sbr.rel (%p8473) target = $region72
        $region71: #{cnn_forward.1} parent=67 // pred_region
          %s8476 = sand.u32 %s248, 1
          %s8477 = scalar_lea.sflag [#allocation9], %s8476
          %s8478 = sand.u32 %s248, 1
          %s8479 = scalar_lea.vmem [#allocation8], %s8478
          %8480 = dma.done %s8477, 16
        $region72: #{cnn_forward.1} parent=67 // pred_fallthru
          _
      $region68: #{cnn_forward.1} parent=5 // pred_fallthru
        _
    $region6: #{cnn_forward.1} parent=1 // loop_footer
      %s23 = sadd.s32 1, %s19
    $region7: #{cnn_forward.1} parent=1 // loop_footer_branch
      %18 = sbr.rel target = $region3
    $region8: #{cnn_forward.1} parent=1 // loop_exit
      _
    %8481 = vsyncpa [#allocation9], 1
    %s8482 = scalar_lea.sflag [#allocation9], 1
    %8483 = vsyncpa %s8482, 1

</llo_original>
